<compile_context>
chip_gen: v6e
topology: v6e:2x2x1
jax: 0.10.0
libtpu: 0.0.40
codegen_flags: <defaults>
</compile_context>

<pallas_src>
import functools

import jax
import jax.numpy as jnp
from jax import lax
from jax.experimental import pallas as pl
from jax.experimental.pallas import tpu as pltpu

EPS = 1e-5  # nn.BatchNorm2d default eps


def _vmem_limit_bytes():
    """Per-generation scoped VMEM: ~96 MiB on 128-MiB parts, ~48 MiB on v7x."""
    default = 48 * 1024 * 1024          # safe on every generation
    try:
        cap = int(pltpu.get_tpu_info().vmem_capacity_bytes)
        if cap <= 0:
            return default
        return int(min(96 * 1024 * 1024, (cap * 3) // 4))
    except Exception:
        return default


_VMEM_LIMIT = _vmem_limit_bytes()


def _pick_row_tile(m):
    """Largest row tile (<=1024, multiple of 8) that divides M."""
    for t in (1024, 512, 256, 128, 64, 32, 16, 8):
        if m % t == 0:
            return t
    # TODO(synk): ragged M (not a multiple of 8) needs masked / BoundedSlice tiles.
    return m


def _pick_chunk(h, w):
    """Rows-per-chunk * W for the in-kernel conv2 loop (<=512 output rows)."""
    best = w
    for r in range(1, h + 1):
        if h % r == 0 and r * w <= 512:
            best = r * w
    return best


# ----------------------------------------------------------------------------
# Pass 1: (M,Cin)f32 -> bf16 @ (Cin,P)bf16 -> f32; y stored bf16; per-tile stats.
# ----------------------------------------------------------------------------
def _matmul_stats_kernel(x_ref, w_ref, y_ref, s_ref, q_ref):
    y = jnp.dot(x_ref[...].astype(jnp.bfloat16), w_ref[...],
                preferred_element_type=jnp.float32)
    y_ref[...] = y.astype(y_ref.dtype)
    s_ref[0] = jnp.sum(y, axis=0, keepdims=True)
    q_ref[0] = jnp.sum(y * y, axis=0, keepdims=True)


def _matmul_stats(x2d, w, tm):
    m, cin = x2d.shape
    cout = w.shape[1]
    g = m // tm
    return pl.pallas_call(
        _matmul_stats_kernel,
        out_shape=(jax.ShapeDtypeStruct((m, cout), jnp.bfloat16),
                   jax.ShapeDtypeStruct((g, 1, cout), jnp.float32),
                   jax.ShapeDtypeStruct((g, 1, cout), jnp.float32)),
        grid_spec=pltpu.PrefetchScalarGridSpec(
            num_scalar_prefetch=0,
            grid=(g,),
            in_specs=[pl.BlockSpec((tm, cin), lambda i: (i, 0)),
                      pl.BlockSpec((cin, cout), lambda i: (0, 0))],
            out_specs=[pl.BlockSpec((tm, cout), lambda i: (i, 0)),
                       pl.BlockSpec((1, 1, cout), lambda i: (i, 0, 0)),
                       pl.BlockSpec((1, 1, cout), lambda i: (i, 0, 0))]),
        compiler_params=pltpu.CompilerParams(
            dimension_semantics=("parallel",),
            vmem_limit_bytes=_VMEM_LIMIT),
    )(x2d, w)


# ----------------------------------------------------------------------------
# Pass 3: fused bn2+relu (f32 math on bf16 y2) -> 1x1 conv matmul; per-tile stats.
# ----------------------------------------------------------------------------
def _affine_relu_matmul_stats_kernel(x_ref, sc_ref, sh_ref, w_ref, y_ref, s_ref, q_ref):
    a = jnp.maximum(x_ref[...].astype(jnp.float32) * sc_ref[...] + sh_ref[...], 0.0)
    y = jnp.dot(a.astype(jnp.bfloat16), w_ref[...], preferred_element_type=jnp.float32)
    y_ref[...] = y
    s_ref[0] = jnp.sum(y, axis=0, keepdims=True)
    q_ref[0] = jnp.sum(y * y, axis=0, keepdims=True)


def _affine_relu_matmul_stats(x2d, scale, shift, w, tm):
    m, cin = x2d.shape
    cout = w.shape[1]
    g = m // tm
    return pl.pallas_call(
        _affine_relu_matmul_stats_kernel,
        out_shape=(jax.ShapeDtypeStruct((m, cout), jnp.float32),
                   jax.ShapeDtypeStruct((g, 1, cout), jnp.float32),
                   jax.ShapeDtypeStruct((g, 1, cout), jnp.float32)),
        grid_spec=pltpu.PrefetchScalarGridSpec(
            num_scalar_prefetch=0,
            grid=(g,),
            in_specs=[pl.BlockSpec((tm, cin), lambda i: (i, 0)),
                      pl.BlockSpec((1, cin), lambda i: (0, 0)),
                      pl.BlockSpec((1, cin), lambda i: (0, 0)),
                      pl.BlockSpec((cin, cout), lambda i: (0, 0))],
            out_specs=[pl.BlockSpec((tm, cout), lambda i: (i, 0)),
                       pl.BlockSpec((1, 1, cout), lambda i: (i, 0, 0)),
                       pl.BlockSpec((1, 1, cout), lambda i: (i, 0, 0))]),
        compiler_params=pltpu.CompilerParams(
            dimension_semantics=("parallel",),
            vmem_limit_bytes=_VMEM_LIMIT),
    )(x2d, scale, shift, w)


# ----------------------------------------------------------------------------
# Pass 2: per image, fused bn1+relu then 3x3 conv (stride 1, pad 1).
#
# The padded f32 scratch ap has lane layout [dw=-1 | dw=0 | dw=+1] (3*Pin wide);
# the three dw-shifted copies of the activation are stored with row offsets
# PAD+1 / PAD / PAD-1 and the horizontal boundary masks already applied, so the
# scratch row r holds  [ap_pad[r-1], ap_pad[r], ap_pad[r+1]]  per channel block.
# For output rows [base, base+CHUNK) and tap row dh, one contiguous slab read at
# row PAD+base+dh*W yields the full (CHUNK, 3*Pin) operand for a single matmul.
# The HW axis is chunked with fori_loop so the f32 accumulator stays in vregs.
# ----------------------------------------------------------------------------
def _conv3x3_bn_stats_kernel(y1_ref, sc_ref, sh_ref, ml_ref, mf_ref, w_ref,
                             y2_ref, s_ref, q_ref, ap_ref, *, H, W, PAD, CHUNK):
    HW = H * W
    pin = sc_ref.shape[1]
    pout = w_ref.shape[2]
    rows = ap_ref.shape[0]
    width = ap_ref.shape[1]            # == 3 * pin
    n_chunks = HW // CHUNK

    # Zero the vertical halo strips every grid step (cheap) so the kernel stays
    # correct when the image grid axis is split across TensorCores ('parallel').
    ap_ref[0:PAD + 1, :] = jnp.zeros((PAD + 1, width), jnp.float32)
    ap_ref[PAD + HW - 1:rows, :] = jnp.zeros((rows - (PAD + HW - 1), width),
                                             jnp.float32)

    # Fused bn1 + relu (f32 math on bf16 conv1 output).
    a = jnp.maximum(y1_ref[0].astype(jnp.float32) * sc_ref[...] + sh_ref[...], 0.0)

    # Three dw-shifted copies, boundary masks baked in (input col W-1 never
    # legitimately feeds a dw=-1 tap; input col 0 never feeds a dw=+1 tap).
    ap_ref[PAD + 1:PAD + 1 + HW, 0:pin] = a * ml_ref[...]             # dw = -1
    ap_ref[PAD:PAD + HW, pin:2 * pin] = a                             # dw =  0
    ap_ref[PAD - 1:PAD - 1 + HW, 2 * pin:3 * pin] = a * mf_ref[...]   # dw = +1

    s_ref[...] = jnp.zeros_like(s_ref)
    q_ref[...] = jnp.zeros_like(q_ref)

    def chunk_body(c, carry):
        idx = c * CHUNK
        base = idx if isinstance(idx, int) else pl.multiple_of(idx, CHUNK)
        acc = jnp.zeros((CHUNK, pout), jnp.float32)
        for dh in (-1, 0, 1):                          # 3 matmuls, K = 3*Pin each
            slab = ap_ref[pl.ds(PAD + base + dh * W, CHUNK), :]
            acc = acc + jnp.dot(slab.astype(jnp.bfloat16), w_ref[dh + 1],
                                preferred_element_type=jnp.float32)
        y2_ref[0, pl.ds(base, CHUNK), :] = acc.astype(y2_ref.dtype)
        s_ref[0] += jnp.sum(acc, axis=0, keepdims=True)
        q_ref[0] += jnp.sum(acc * acc, axis=0, keepdims=True)
        return carry

    lax.fori_loop(0, n_chunks, chunk_body, 0, unroll=n_chunks <= 4)


def _conv3x3_stats(y1_img, scale, shift, mask_last, mask_first, w3x3, h, w):
    n, hw, pin = y1_img.shape
    pout = w3x3.shape[2]
    pad = ((w + 1 + 7) // 8) * 8           # sublane-aligned halo, >= W + 1
    chunk = _pick_chunk(h, w)
    rows = hw + 2 * pad
    kern = functools.partial(_conv3x3_bn_stats_kernel, H=h, W=w, PAD=pad, CHUNK=chunk)
    return pl.pallas_call(
        kern,
        out_shape=(jax.ShapeDtypeStruct((n, hw, pout), jnp.bfloat16),
                   jax.ShapeDtypeStruct((n, 1, pout), jnp.float32),
                   jax.ShapeDtypeStruct((n, 1, pout), jnp.float32)),
        grid_spec=pltpu.PrefetchScalarGridSpec(
            num_scalar_prefetch=0,
            grid=(n,),
            in_specs=[pl.BlockSpec((1, hw, pin), lambda i: (i, 0, 0)),
                      pl.BlockSpec((1, pin), lambda i: (0, 0)),
                      pl.BlockSpec((1, pin), lambda i: (0, 0)),
                      pl.BlockSpec((hw, 1), lambda i: (0, 0)),
                      pl.BlockSpec((hw, 1), lambda i: (0, 0)),
                      pl.BlockSpec((3, 3 * pin, pout), lambda i: (0, 0, 0))],
            out_specs=[pl.BlockSpec((1, hw, pout), lambda i: (i, 0, 0)),
                       pl.BlockSpec((1, 1, pout), lambda i: (i, 0, 0)),
                       pl.BlockSpec((1, 1, pout), lambda i: (i, 0, 0))],
            scratch_shapes=[pltpu.VMEM((rows, 3 * pin), jnp.float32)]),
        compiler_params=pltpu.CompilerParams(
            dimension_semantics=("parallel",),
            vmem_limit_bytes=_VMEM_LIMIT),
    )(y1_img, scale, shift, mask_last, mask_first, w3x3)


# ----------------------------------------------------------------------------
# Pass 4: bn3 (scale/shift) + residual add + ReLU, purely elementwise.
# ----------------------------------------------------------------------------
def _bn_residual_relu_kernel(y_ref, sc_ref, sh_ref, r_ref, o_ref):
    o_ref[...] = jnp.maximum(y_ref[...] * sc_ref[...] + sh_ref[...] + r_ref[...], 0.0)


def _bn_residual_relu(y, scale, shift, res, tm):
    m, c = y.shape
    return pl.pallas_call(
        _bn_residual_relu_kernel,
        out_shape=jax.ShapeDtypeStruct((m, c), jnp.float32),
        grid_spec=pltpu.PrefetchScalarGridSpec(
            num_scalar_prefetch=0,
            grid=(m // tm,),
            in_specs=[pl.BlockSpec((tm, c), lambda i: (i, 0)),
                      pl.BlockSpec((1, c), lambda i: (0, 0)),
                      pl.BlockSpec((1, c), lambda i: (0, 0)),
                      pl.BlockSpec((tm, c), lambda i: (i, 0))],
            out_specs=pl.BlockSpec((tm, c), lambda i: (i, 0))),
        compiler_params=pltpu.CompilerParams(
            dimension_semantics=("parallel",),
            vmem_limit_bytes=_VMEM_LIMIT),
    )(y, scale, shift, res)


# ----------------------------------------------------------------------------
# BN finalize (tiny per-channel vectors, plain JAX): reduce per-tile partial
# sums / sums-of-squares and turn them into a scale/shift pair.
# ----------------------------------------------------------------------------
def _bn_scale_shift(s_parts, q_parts, gamma, beta, m):
    s = jnp.sum(s_parts, axis=0)                        # (1, C)
    q = jnp.sum(q_parts, axis=0)                        # (1, C)
    mean = s / m
    var = jnp.maximum(q / m - mean * mean, 0.0)         # biased variance (training BN)
    scale = gamma * lax.rsqrt(var + EPS)
    shift = beta - mean * scale
    return scale, shift


# ----------------------------------------------------------------------------
# Bottleneck forward (glue in plain JAX, hot paths in Pallas kernels)
# ----------------------------------------------------------------------------
def bottleneck_forward(x_nchw, params):
    n, cin, h, w = x_nchw.shape
    p = params["w1"].shape[1]
    cout = params["w3"].shape[1]
    # TODO(synk): stride > 1 / non-None downsample branch not implemented.
    assert cin == cout, "stride=1 / downsample=None path requires inplanes == planes*4"
    m = n * h * w
    tm = _pick_row_tile(m)

    # NCHW -> NHWC (channels on lanes) -> (M, C); stays f32 (also the residual).
    x2d = jnp.transpose(x_nchw, (0, 2, 3, 1)).reshape(m, cin)

    # pass 1: conv1 (1x1) + BN1 partial statistics
    y1, s1, q1 = _matmul_stats(x2d, params["w1"], tm)
    sc1, sh1 = _bn_scale_shift(s1, q1, params["g1"], params["b1"], m)

    # pass 2: fused bn1+relu -> conv2 (3x3, no im2col) + BN2 partial statistics
    col = (jnp.arange(h * w, dtype=jnp.int32) % w).reshape(h * w, 1)
    mask_last = (col != (w - 1)).astype(jnp.float32)    # input col W-1 invalid for dw=-1
    mask_first = (col != 0).astype(jnp.float32)         # input col 0   invalid for dw=+1
    y2, s2, q2 = _conv3x3_stats(y1.reshape(n, h * w, p), sc1, sh1,
                                mask_last, mask_first, params["w2"], h, w)
    sc2, sh2 = _bn_scale_shift(s2, q2, params["g2"], params["b2"], m)

    # pass 3: fused bn2+relu -> conv3 (1x1) + BN3 partial statistics
    y3, s3, q3 = _affine_relu_matmul_stats(y2.reshape(m, p), sc2, sh2, params["w3"], tm)
    sc3, sh3 = _bn_scale_shift(s3, q3, params["g3"], params["b3"], m)

    # pass 4: bn3 + residual (original f32 x) + relu
    out2d = _bn_residual_relu(y3, sc3, sh3, x2d, tm)

    # TODO(synk): emit NHWC directly if the surrounding model consumes NHWC.
    return jnp.transpose(out2d.reshape(n, h, w, cout), (0, 3, 1, 2))


# ----------------------------------------------------------------------------
# Pure-JAX reference.  It mirrors the kernel's precision choices (bf16 MXU
# inputs, f32 accumulation, bf16-stored y1/y2) so that only accumulation-order
# differences remain; the computation graph is exactly the PyTorch Bottleneck
# in training mode (batch statistics).
# ----------------------------------------------------------------------------
def bottleneck_reference(x_nchw, params):
    x = jnp.transpose(x_nchw, (0, 2, 3, 1))  # NHWC, f32
    dn = ("NHWC", "HWIO", "NHWC")

    def conv(inp_f32, w_hwio):
        return lax.conv_general_dilated(
            inp_f32.astype(jnp.bfloat16), w_hwio.astype(jnp.bfloat16),
            (1, 1), "SAME", dimension_numbers=dn,
            preferred_element_type=jnp.float32)

    def bn_affine(y_f32, gamma, beta):
        mean = jnp.mean(y_f32, axis=(0, 1, 2))
        var = jnp.mean((y_f32 - mean) ** 2, axis=(0, 1, 2))
        scale = gamma * lax.rsqrt(var + EPS)
        shift = beta - mean * scale
        return scale, shift

    y1 = conv(x, params["w1_hwio"])
    sc1, sh1 = bn_affine(y1, params["g1"][0], params["b1"][0])
    a1 = jax.nn.relu(y1.astype(jnp.bfloat16).astype(jnp.float32) * sc1 + sh1)

    y2 = conv(a1, params["w2_hwio"])
    sc2, sh2 = bn_affine(y2, params["g2"][0], params["b2"][0])
    a2 = jax.nn.relu(y2.astype(jnp.bfloat16).astype(jnp.float32) * sc2 + sh2)

    y3 = conv(a2, params["w3_hwio"])
    sc3, sh3 = bn_affine(y3, params["g3"][0], params["b3"][0])
    out = jax.nn.relu(y3 * sc3 + sh3 + x)
    return jnp.transpose(out, (0, 3, 1, 2))


# ----------------------------------------------------------------------------
# Deterministic parameter construction (shapes from Bottleneck.__init__)
# ----------------------------------------------------------------------------
def make_params(key, inplanes, planes):
    k = jax.random.split(key, 9)
    expansion = 4
    # PyTorch conv weight shapes: (out, in, kh, kw)
    w1_t = jax.random.normal(k[0], (planes, inplanes, 1, 1), jnp.float32) * (2.0 / inplanes) ** 0.5
    w2_t = jax.random.normal(k[1], (planes, planes, 3, 3), jnp.float32) * (2.0 / (9 * planes)) ** 0.5
    w3_t = jax.random.normal(k[2], (planes * expansion, planes, 1, 1), jnp.float32) * (2.0 / planes) ** 0.5

    g1 = 0.5 + jax.random.uniform(k[3], (1, planes), jnp.float32)
    b1 = 0.1 * jax.random.normal(k[4], (1, planes), jnp.float32)
    g2 = 0.5 + jax.random.uniform(k[5], (1, planes), jnp.float32)
    b2 = 0.1 * jax.random.normal(k[6], (1, planes), jnp.float32)
    g3 = 0.5 + jax.random.uniform(k[7], (1, planes * expansion), jnp.float32)
    b3 = 0.1 * jax.random.normal(k[8], (1, planes * expansion), jnp.float32)

    w1_hwio = jnp.transpose(w1_t, (2, 3, 1, 0))        # (1,1,Cin,P)
    w2_hwio = jnp.transpose(w2_t, (2, 3, 1, 0))        # (3,3,P,P)  index [kh, kw, I, O]
    w3_hwio = jnp.transpose(w3_t, (2, 3, 1, 0))        # (1,1,P,4P)

    return dict(
        # kernel layouts (bf16 for the MXU; accumulation is f32 in-kernel)
        w1=w1_hwio[0, 0].astype(jnp.bfloat16),                               # (Cin, P)
        # per-kh slabs with the kw (dw=-1,0,+1) taps concatenated along input
        # channels, matching the kernel's (CHUNK, 3*Pin) operand slabs.
        w2=w2_hwio.reshape(3, 3 * planes, planes).astype(jnp.bfloat16),      # (3, 3P, P)
        w3=w3_hwio[0, 0].astype(jnp.bfloat16),                               # (P, 4P)
        g1=g1, b1=b1, g2=g2, b2=b2, g3=g3, b3=b3,
        # f32 HWIO copies for the reference convs
        w1_hwio=w1_hwio, w2_hwio=w2_hwio, w3_hwio=w3_hwio,
    )


if __name__ == "__main__":
    key = jax.random.PRNGKey(0)
    planes = 4
    inplanes = planes * 4          # so the residual add works with downsample=None
    N, H, W = 4, 16, 16            # M = 1024 -> single 1024-row tile

    kx, kp = jax.random.split(key)
    x = jax.random.normal(kx, (N, inplanes, H, W), jnp.float32)   # NCHW, like PyTorch
    params = make_params(kp, inplanes, planes)

    fwd = jax.jit(bottleneck_forward)
    out = jax.block_until_ready(fwd(x, params))

    ref = jax.block_until_ready(bottleneck_reference(x, params))
    assert out.shape == (N, planes * 4, H, W)
    max_err = float(jnp.max(jnp.abs(out - ref)))
    assert jnp.allclose(out, ref, atol=1e-2, rtol=1e-2), f"max abs err = {max_err}"

    print("KERNEL_OK")
</pallas_src>

<mosaic_0001>
module attributes {stable_mosaic.version = 11 : i64} {
  func.func @_matmul_stats_kernel(%arg0: i32, %arg1: memref<1024x16xf32, #tpu.memory_space<vmem>>, %arg2: memref<16x4xbf16, #tpu.memory_space<vmem>>, %arg3: memref<1024x4xbf16, #tpu.memory_space<vmem>>, %arg4: memref<1x1x4xf32, #tpu.memory_space<vmem>>, %arg5: memref<1x1x4xf32, #tpu.memory_space<vmem>>) attributes {dimension_semantics = [#tpu.dimension_semantics<parallel>], iteration_bounds = array<i64: 1>, scalar_prefetch = 0 : i64, scratch_operands = 0 : i64, tpu.core_type = #tpu.core_type<tc>, window_params = [{transform_indices = @transform_0, window_bounds = array<i64: 1024, 16>}, {pipeline_mode = #tpu.pipeline_mode<synchronous>, transform_indices = @transform_1, window_bounds = array<i64: 16, 4>}, {transform_indices = @transform_2, window_bounds = array<i64: 1024, 4>}, {transform_indices = @transform_3, window_bounds = array<i64: 1, 1, 4>}, {transform_indices = @transform_4, window_bounds = array<i64: 1, 1, 4>}]} {
    %c0 = arith.constant 0 : index
    %c0_0 = arith.constant 0 : index
    %0 = vector.load %arg1[%c0, %c0_0] : memref<1024x16xf32, #tpu.memory_space<vmem>>, vector<1024x16xf32>
    %1 = arith.truncf %0 : vector<1024x16xf32> to vector<1024x16xbf16>
    %c0_1 = arith.constant 0 : index
    %c0_2 = arith.constant 0 : index
    %2 = vector.load %arg2[%c0_1, %c0_2] : memref<16x4xbf16, #tpu.memory_space<vmem>>, vector<16x4xbf16>
    %cst = arith.constant dense<0.000000e+00> : vector<1024x4xf32>
    %3 = tpu.matmul %1, %2, %cst {dimension_numbers = #tpu.dot_dimension_numbers<[1], [0], [0], [1], [0, 0, 1, 1], [], []>} : vector<1024x16xbf16>, vector<16x4xbf16>, vector<1024x4xf32> -> vector<1024x4xf32>
    %4 = arith.truncf %3 : vector<1024x4xf32> to vector<1024x4xbf16>
    %c0_3 = arith.constant 0 : index
    %c0_4 = arith.constant 0 : index
    %5 = vector.load %arg3[%c0_3, %c0_4] : memref<1024x4xbf16, #tpu.memory_space<vmem>>, vector<1024x4xbf16>
    tpu.vector_store %arg3[%c0_3, %c0_4], %4 {strides = array<i32>} : memref<1024x4xbf16, #tpu.memory_space<vmem>>, vector<1024x4xbf16>,
    %cst_5 = arith.constant dense<0.000000e+00> : vector<4xf32>
    %6 = vector.multi_reduction <add>, %3, %cst_5 [0] : vector<1024x4xf32> to vector<4xf32>
    %7 = vector.shape_cast %6 : vector<4xf32> to vector<1x4xf32>
    %c0_6 = arith.constant 0 : index
    %c0_7 = arith.constant 0 : index
    %c0_8 = arith.constant 0 : index
    %8 = vector.load %arg4[%c0_6, %c0_7, %c0_8] : memref<1x1x4xf32, #tpu.memory_space<vmem>>, vector<1x1x4xf32>
    %9 = vector.shape_cast %8 : vector<1x1x4xf32> to vector<1x4xf32>
    %10 = vector.shape_cast %7 : vector<1x4xf32> to vector<1x1x4xf32>
    tpu.vector_store %arg4[%c0_6, %c0_7, %c0_8], %10 {strides = array<i32>} : memref<1x1x4xf32, #tpu.memory_space<vmem>>, vector<1x1x4xf32>,
    %11 = arith.mulf %3, %3 : vector<1024x4xf32>
    %cst_9 = arith.constant dense<0.000000e+00> : vector<4xf32>
    %12 = vector.multi_reduction <add>, %11, %cst_9 [0] : vector<1024x4xf32> to vector<4xf32>
    %13 = vector.shape_cast %12 : vector<4xf32> to vector<1x4xf32>
    %c0_10 = arith.constant 0 : index
    %c0_11 = arith.constant 0 : index
    %c0_12 = arith.constant 0 : index
    %14 = vector.load %arg5[%c0_10, %c0_11, %c0_12] : memref<1x1x4xf32, #tpu.memory_space<vmem>>, vector<1x1x4xf32>
    %15 = vector.shape_cast %14 : vector<1x1x4xf32> to vector<1x4xf32>
    %16 = vector.shape_cast %13 : vector<1x4xf32> to vector<1x1x4xf32>
    tpu.vector_store %arg5[%c0_10, %c0_11, %c0_12], %16 {strides = array<i32>} : memref<1x1x4xf32, #tpu.memory_space<vmem>>, vector<1x1x4xf32>,
    return
  }
  func.func @transform_0(%arg0: i32) -> (i32, i32) {
    %c0_i32 = arith.constant 0 : i32
    %c0_i32_0 = arith.constant 0 : i32
    return %arg0, %c0_i32 : i32, i32
  }
  func.func @transform_1(%arg0: i32) -> (i32, i32) {
    %c0_i32 = arith.constant 0 : i32
    %c0_i32_0 = arith.constant 0 : i32
    %c0_i32_1 = arith.constant 0 : i32
    return %c0_i32, %c0_i32_0 : i32, i32
  }
  func.func @transform_2(%arg0: i32) -> (i32, i32) {
    %c0_i32 = arith.constant 0 : i32
    %c0_i32_0 = arith.constant 0 : i32
    return %arg0, %c0_i32 : i32, i32
  }
  func.func @transform_3(%arg0: i32) -> (i32, i32, i32) {
    %c0_i32 = arith.constant 0 : i32
    %c0_i32_0 = arith.constant 0 : i32
    %c0_i32_1 = arith.constant 0 : i32
    return %arg0, %c0_i32, %c0_i32_0 : i32, i32, i32
  }
  func.func @transform_4(%arg0: i32) -> (i32, i32, i32) {
    %c0_i32 = arith.constant 0 : i32
    %c0_i32_0 = arith.constant 0 : i32
    %c0_i32_1 = arith.constant 0 : i32
    return %arg0, %c0_i32, %c0_i32_0 : i32, i32, i32
  }
}

module attributes {stable_mosaic.version = 11 : i64} {
  func.func @_conv3x3_bn_stats_kernel(%arg0: i32, %arg1: memref<1x256x4xbf16, #tpu.memory_space<vmem>>, %arg2: memref<1x4xf32, #tpu.memory_space<vmem>>, %arg3: memref<1x4xf32, #tpu.memory_space<vmem>>, %arg4: memref<256x1xf32, #tpu.memory_space<vmem>>, %arg5: memref<256x1xf32, #tpu.memory_space<vmem>>, %arg6: memref<3x12x4xbf16, #tpu.memory_space<vmem>>, %arg7: memref<1x256x4xbf16, #tpu.memory_space<vmem>>, %arg8: memref<1x1x4xf32, #tpu.memory_space<vmem>>, %arg9: memref<1x1x4xf32, #tpu.memory_space<vmem>>, %arg10: memref<304x12xf32, #tpu.memory_space<vmem>>) attributes {dimension_semantics = [#tpu.dimension_semantics<parallel>], iteration_bounds = array<i64: 4>, scalar_prefetch = 0 : i64, scratch_operands = 1 : i64, tpu.core_type = #tpu.core_type<tc>, window_params = [{transform_indices = @transform_0, window_bounds = array<i64: 1, 256, 4>}, {pipeline_mode = #tpu.pipeline_mode<synchronous>, transform_indices = @transform_1, window_bounds = array<i64: 1, 4>}, {pipeline_mode = #tpu.pipeline_mode<synchronous>, transform_indices = @transform_2, window_bounds = array<i64: 1, 4>}, {pipeline_mode = #tpu.pipeline_mode<synchronous>, transform_indices = @transform_3, window_bounds = array<i64: 256, 1>}, {pipeline_mode = #tpu.pipeline_mode<synchronous>, transform_indices = @transform_4, window_bounds = array<i64: 256, 1>}, {pipeline_mode = #tpu.pipeline_mode<synchronous>, transform_indices = @transform_5, window_bounds = array<i64: 3, 12, 4>}, {transform_indices = @transform_6, window_bounds = array<i64: 1, 256, 4>}, {transform_indices = @transform_7, window_bounds = array<i64: 1, 1, 4>}, {transform_indices = @transform_8, window_bounds = array<i64: 1, 1, 4>}]} {
    %cst = arith.constant 0.000000e+00 : f32
    %0 = vector.broadcast %cst : f32 to vector<25x12xf32>
    %c0 = arith.constant 0 : index
    %c0_0 = arith.constant 0 : index
    %1 = vector.load %arg10[%c0, %c0_0] : memref<304x12xf32, #tpu.memory_space<vmem>>, vector<25x12xf32>
    tpu.vector_store %arg10[%c0, %c0_0], %0 {strides = array<i32>} : memref<304x12xf32, #tpu.memory_space<vmem>>, vector<25x12xf32>,
    %cst_1 = arith.constant 0.000000e+00 : f32
    %2 = vector.broadcast %cst_1 : f32 to vector<25x12xf32>
    %c279 = arith.constant 279 : index
    %c0_2 = arith.constant 0 : index
    %3 = vector.load %arg10[%c279, %c0_2] : memref<304x12xf32, #tpu.memory_space<vmem>>, vector<25x12xf32>
    tpu.vector_store %arg10[%c279, %c0_2], %2 {strides = array<i32>} : memref<304x12xf32, #tpu.memory_space<vmem>>, vector<25x12xf32>,
    %c0_3 = arith.constant 0 : index
    %c0_4 = arith.constant 0 : index
    %c0_5 = arith.constant 0 : index
    %4 = vector.load %arg1[%c0_3, %c0_4, %c0_5] : memref<1x256x4xbf16, #tpu.memory_space<vmem>>, vector<1x256x4xbf16>
    %5 = vector.shape_cast %4 : vector<1x256x4xbf16> to vector<256x4xbf16>
    %6 = arith.extf %5 : vector<256x4xbf16> to vector<256x4xf32>
    %c0_6 = arith.constant 0 : index
    %c0_7 = arith.constant 0 : index
    %7 = vector.load %arg2[%c0_6, %c0_7] : memref<1x4xf32, #tpu.memory_space<vmem>>, vector<1x4xf32>
    %8 = vector.broadcast %7 : vector<1x4xf32> to vector<256x4xf32>
    %9 = arith.mulf %6, %8 : vector<256x4xf32>
    %c0_8 = arith.constant 0 : index
    %c0_9 = arith.constant 0 : index
    %10 = vector.load %arg3[%c0_8, %c0_9] : memref<1x4xf32, #tpu.memory_space<vmem>>, vector<1x4xf32>
    %11 = vector.broadcast %10 : vector<1x4xf32> to vector<256x4xf32>
    %12 = arith.addf %9, %11 : vector<256x4xf32>
    %cst_10 = arith.constant 0.000000e+00 : f32
    %13 = vector.broadcast %cst_10 : f32 to vector<256x4xf32>
    %14 = arith.maximumf %12, %13 : vector<256x4xf32>
    %c0_11 = arith.constant 0 : index
    %c0_12 = arith.constant 0 : index
    %15 = vector.load %arg4[%c0_11, %c0_12] : memref<256x1xf32, #tpu.memory_space<vmem>>, vector<256x1xf32>
    %16 = vector.broadcast %15 : vector<256x1xf32> to vector<256x4xf32>
    %17 = arith.mulf %14, %16 : vector<256x4xf32>
    %c25 = arith.constant 25 : index
    %c0_13 = arith.constant 0 : index
    %18 = vector.load %arg10[%c25, %c0_13] : memref<304x12xf32, #tpu.memory_space<vmem>>, vector<256x4xf32>
    tpu.vector_store %arg10[%c25, %c0_13], %17 {strides = array<i32>} : memref<304x12xf32, #tpu.memory_space<vmem>>, vector<256x4xf32>,
    %c24 = arith.constant 24 : index
    %c4 = arith.constant 4 : index
    %19 = vector.load %arg10[%c24, %c4] : memref<304x12xf32, #tpu.memory_space<vmem>>, vector<256x4xf32>
    tpu.vector_store %arg10[%c24, %c4], %14 {strides = array<i32>} : memref<304x12xf32, #tpu.memory_space<vmem>>, vector<256x4xf32>,
    %c0_14 = arith.constant 0 : index
    %c0_15 = arith.constant 0 : index
    %20 = vector.load %arg5[%c0_14, %c0_15] : memref<256x1xf32, #tpu.memory_space<vmem>>, vector<256x1xf32>
    %21 = vector.broadcast %20 : vector<256x1xf32> to vector<256x4xf32>
    %22 = arith.mulf %14, %21 : vector<256x4xf32>
    %c23 = arith.constant 23 : index
    %c8 = arith.constant 8 : index
    %23 = vector.load %arg10[%c23, %c8] : memref<304x12xf32, #tpu.memory_space<vmem>>, vector<256x4xf32>
    tpu.vector_store %arg10[%c23, %c8], %22 {strides = array<i32>} : memref<304x12xf32, #tpu.memory_space<vmem>>, vector<256x4xf32>,
    %cst_16 = arith.constant 0.000000e+00 : f32
    %24 = vector.broadcast %cst_16 : f32 to vector<1x1x4xf32>
    %c0_17 = arith.constant 0 : index
    %c0_18 = arith.constant 0 : index
    %c0_19 = arith.constant 0 : index
    %25 = vector.load %arg8[%c0_17, %c0_18, %c0_19] : memref<1x1x4xf32, #tpu.memory_space<vmem>>, vector<1x1x4xf32>
    tpu.vector_store %arg8[%c0_17, %c0_18, %c0_19], %24 {strides = array<i32>} : memref<1x1x4xf32, #tpu.memory_space<vmem>>, vector<1x1x4xf32>,
    %cst_20 = arith.constant 0.000000e+00 : f32
    %26 = vector.broadcast %cst_20 : f32 to vector<1x1x4xf32>
    %c0_21 = arith.constant 0 : index
    %c0_22 = arith.constant 0 : index
    %c0_23 = arith.constant 0 : index
    %27 = vector.load %arg9[%c0_21, %c0_22, %c0_23] : memref<1x1x4xf32, #tpu.memory_space<vmem>>, vector<1x1x4xf32>
    tpu.vector_store %arg9[%c0_21, %c0_22, %c0_23], %26 {strides = array<i32>} : memref<1x1x4xf32, #tpu.memory_space<vmem>>, vector<1x1x4xf32>,
    %c0_i32 = arith.constant 0 : i32
    %c256_i32 = arith.constant 256 : i32
    %28 = arith.muli %c0_i32, %c256_i32 : i32
    %29 = tpu.assume_multiple %28, 256 : i32
    %cst_24 = arith.constant 0.000000e+00 : f32
    %30 = vector.broadcast %cst_24 : f32 to vector<256x4xf32>
    %c24_i32 = arith.constant 24 : i32
    %31 = arith.addi %c24_i32, %29 : i32
    %c-16_i32 = arith.constant -16 : i32
    %32 = arith.addi %31, %c-16_i32 : i32
    %33 = arith.index_cast %32 : i32 to index
    %c0_25 = arith.constant 0 : index
    %34 = vector.load %arg10[%33, %c0_25] : memref<304x12xf32, #tpu.memory_space<vmem>>, vector<256x12xf32>
    %35 = arith.truncf %34 : vector<256x12xf32> to vector<256x12xbf16>
    %c0_26 = arith.constant 0 : index
    %c0_27 = arith.constant 0 : index
    %c0_28 = arith.constant 0 : index
    %36 = vector.load %arg6[%c0_26, %c0_27, %c0_28] : memref<3x12x4xbf16, #tpu.memory_space<vmem>>, vector<1x12x4xbf16>
    %37 = vector.shape_cast %36 : vector<1x12x4xbf16> to vector<12x4xbf16>
    %cst_29 = arith.constant dense<0.000000e+00> : vector<256x4xf32>
    %38 = tpu.matmul %35, %37, %cst_29 {dimension_numbers = #tpu.dot_dimension_numbers<[1], [0], [0], [1], [0, 0, 1, 1], [], []>} : vector<256x12xbf16>, vector<12x4xbf16>, vector<256x4xf32> -> vector<256x4xf32>
    %39 = arith.addf %30, %38 : vector<256x4xf32>
    %c24_i32_30 = arith.constant 24 : i32
    %40 = arith.addi %c24_i32_30, %29 : i32
    %c0_i32_31 = arith.constant 0 : i32
    %41 = arith.addi %40, %c0_i32_31 : i32
    %42 = arith.index_cast %41 : i32 to index
    %c0_32 = arith.constant 0 : index
    %43 = vector.load %arg10[%42, %c0_32] : memref<304x12xf32, #tpu.memory_space<vmem>>, vector<256x12xf32>
    %44 = arith.truncf %43 : vector<256x12xf32> to vector<256x12xbf16>
    %c1 = arith.constant 1 : index
    %c0_33 = arith.constant 0 : index
    %c0_34 = arith.constant 0 : index
    %45 = vector.load %arg6[%c1, %c0_33, %c0_34] : memref<3x12x4xbf16, #tpu.memory_space<vmem>>, vector<1x12x4xbf16>
    %46 = vector.shape_cast %45 : vector<1x12x4xbf16> to vector<12x4xbf16>
    %cst_35 = arith.constant dense<0.000000e+00> : vector<256x4xf32>
    %47 = tpu.matmul %44, %46, %cst_35 {dimension_numbers = #tpu.dot_dimension_numbers<[1], [0], [0], [1], [0, 0, 1, 1], [], []>} : vector<256x12xbf16>, vector<12x4xbf16>, vector<256x4xf32> -> vector<256x4xf32>
    %48 = arith.addf %39, %47 : vector<256x4xf32>
    %c24_i32_36 = arith.constant 24 : i32
    %49 = arith.addi %c24_i32_36, %29 : i32
    %c16_i32 = arith.constant 16 : i32
    %50 = arith.addi %49, %c16_i32 : i32
    %51 = arith.index_cast %50 : i32 to index
    %c0_37 = arith.constant 0 : index
    %52 = vector.load %arg10[%51, %c0_37] : memref<304x12xf32, #tpu.memory_space<vmem>>, vector<256x12xf32>
    %53 = arith.truncf %52 : vector<256x12xf32> to vector<256x12xbf16>
    %c2 = arith.constant 2 : index
    %c0_38 = arith.constant 0 : index
    %c0_39 = arith.constant 0 : index
    %54 = vector.load %arg6[%c2, %c0_38, %c0_39] : memref<3x12x4xbf16, #tpu.memory_space<vmem>>, vector<1x12x4xbf16>
    %55 = vector.shape_cast %54 : vector<1x12x4xbf16> to vector<12x4xbf16>
    %cst_40 = arith.constant dense<0.000000e+00> : vector<256x4xf32>
    %56 = tpu.matmul %53, %55, %cst_40 {dimension_numbers = #tpu.dot_dimension_numbers<[1], [0], [0], [1], [0, 0, 1, 1], [], []>} : vector<256x12xbf16>, vector<12x4xbf16>, vector<256x4xf32> -> vector<256x4xf32>
    %57 = arith.addf %48, %56 : vector<256x4xf32>
    %58 = arith.truncf %57 : vector<256x4xf32> to vector<256x4xbf16>
    %c0_41 = arith.constant 0 : index
    %59 = arith.index_cast %29 : i32 to index
    %c0_42 = arith.constant 0 : index
    %60 = vector.load %arg7[%c0_41, %59, %c0_42] : memref<1x256x4xbf16, #tpu.memory_space<vmem>>, vector<1x256x4xbf16>
    %61 = vector.shape_cast %60 : vector<1x256x4xbf16> to vector<256x4xbf16>
    %62 = vector.shape_cast %58 : vector<256x4xbf16> to vector<1x256x4xbf16>
    tpu.vector_store %arg7[%c0_41, %59, %c0_42], %62 {strides = array<i32>} : memref<1x256x4xbf16, #tpu.memory_space<vmem>>, vector<1x256x4xbf16>,
    %c0_43 = arith.constant 0 : index
    %c0_44 = arith.constant 0 : index
    %c0_45 = arith.constant 0 : index
    %63 = vector.load %arg8[%c0_43, %c0_44, %c0_45] : memref<1x1x4xf32, #tpu.memory_space<vmem>>, vector<1x1x4xf32>
    %64 = vector.shape_cast %63 : vector<1x1x4xf32> to vector<1x4xf32>
    %cst_46 = arith.constant dense<0.000000e+00> : vector<4xf32>
    %65 = vector.multi_reduction <add>, %57, %cst_46 [0] : vector<256x4xf32> to vector<4xf32>
    %66 = vector.shape_cast %65 : vector<4xf32> to vector<1x4xf32>
    %67 = arith.addf %64, %66 : vector<1x4xf32>
    %c0_47 = arith.constant 0 : index
    %c0_48 = arith.constant 0 : index
    %c0_49 = arith.constant 0 : index
    %68 = vector.load %arg8[%c0_47, %c0_48, %c0_49] : memref<1x1x4xf32, #tpu.memory_space<vmem>>, vector<1x1x4xf32>
    %69 = vector.shape_cast %68 : vector<1x1x4xf32> to vector<1x4xf32>
    %70 = vector.shape_cast %67 : vector<1x4xf32> to vector<1x1x4xf32>
    tpu.vector_store %arg8[%c0_47, %c0_48, %c0_49], %70 {strides = array<i32>} : memref<1x1x4xf32, #tpu.memory_space<vmem>>, vector<1x1x4xf32>,
    %c0_50 = arith.constant 0 : index
    %c0_51 = arith.constant 0 : index
    %c0_52 = arith.constant 0 : index
    %71 = vector.load %arg9[%c0_50, %c0_51, %c0_52] : memref<1x1x4xf32, #tpu.memory_space<vmem>>, vector<1x1x4xf32>
    %72 = vector.shape_cast %71 : vector<1x1x4xf32> to vector<1x4xf32>
    %73 = arith.mulf %57, %57 : vector<256x4xf32>
    %cst_53 = arith.constant dense<0.000000e+00> : vector<4xf32>
    %74 = vector.multi_reduction <add>, %73, %cst_53 [0] : vector<256x4xf32> to vector<4xf32>
    %75 = vector.shape_cast %74 : vector<4xf32> to vector<1x4xf32>
    %76 = arith.addf %72, %75 : vector<1x4xf32>
    %c0_54 = arith.constant 0 : index
    %c0_55 = arith.constant 0 : index
    %c0_56 = arith.constant 0 : index
    %77 = vector.load %arg9[%c0_54, %c0_55, %c0_56] : memref<1x1x4xf32, #tpu.memory_space<vmem>>, vector<1x1x4xf32>
    %78 = vector.shape_cast %77 : vector<1x1x4xf32> to vector<1x4xf32>
    %79 = vector.shape_cast %76 : vector<1x4xf32> to vector<1x1x4xf32>
    tpu.vector_store %arg9[%c0_54, %c0_55, %c0_56], %79 {strides = array<i32>} : memref<1x1x4xf32, #tpu.memory_space<vmem>>, vector<1x1x4xf32>,
    %c1_i32 = arith.constant 1 : i32
    return
  }
  func.func @transform_0(%arg0: i32) -> (i32, i32, i32) {
    %c0_i32 = arith.constant 0 : i32
    %c0_i32_0 = arith.constant 0 : i32
    %c0_i32_1 = arith.constant 0 : i32
    return %arg0, %c0_i32, %c0_i32_0 : i32, i32, i32
  }
  func.func @transform_1(%arg0: i32) -> (i32, i32) {
    %c0_i32 = arith.constant 0 : i32
    %c0_i32_0 = arith.constant 0 : i32
    %c0_i32_1 = arith.constant 0 : i32
    return %c0_i32, %c0_i32_0 : i32, i32
  }
  func.func @transform_2(%arg0: i32) -> (i32, i32) {
    %c0_i32 = arith.constant 0 : i32
    %c0_i32_0 = arith.constant 0 : i32
    %c0_i32_1 = arith.constant 0 : i32
    return %c0_i32, %c0_i32_0 : i32, i32
  }
  func.func @transform_3(%arg0: i32) -> (i32, i32) {
    %c0_i32 = arith.constant 0 : i32
    %c0_i32_0 = arith.constant 0 : i32
    %c0_i32_1 = arith.constant 0 : i32
    return %c0_i32, %c0_i32_0 : i32, i32
  }
  func.func @transform_4(%arg0: i32) -> (i32, i32) {
    %c0_i32 = arith.constant 0 : i32
    %c0_i32_0 = arith.constant 0 : i32
    %c0_i32_1 = arith.constant 0 : i32
    return %c0_i32, %c0_i32_0 : i32, i32
  }
  func.func @transform_5(%arg0: i32) -> (i32, i32, i32) {
    %c0_i32 = arith.constant 0 : i32
    %c0_i32_0 = arith.constant 0 : i32
    %c0_i32_1 = arith.constant 0 : i32
    %c0_i32_2 = arith.constant 0 : i32
    return %c0_i32, %c0_i32_0, %c0_i32_1 : i32, i32, i32
  }
  func.func @transform_6(%arg0: i32) -> (i32, i32, i32) {
    %c0_i32 = arith.constant 0 : i32
    %c0_i32_0 = arith.constant 0 : i32
    %c0_i32_1 = arith.constant 0 : i32
    return %arg0, %c0_i32, %c0_i32_0 : i32, i32, i32
  }
  func.func @transform_7(%arg0: i32) -> (i32, i32, i32) {
    %c0_i32 = arith.constant 0 : i32
    %c0_i32_0 = arith.constant 0 : i32
    %c0_i32_1 = arith.constant 0 : i32
    return %arg0, %c0_i32, %c0_i32_0 : i32, i32, i32
  }
  func.func @transform_8(%arg0: i32) -> (i32, i32, i32) {
    %c0_i32 = arith.constant 0 : i32
    %c0_i32_0 = arith.constant 0 : i32
    %c0_i32_1 = arith.constant 0 : i32
    return %arg0, %c0_i32, %c0_i32_0 : i32, i32, i32
  }
}

module attributes {stable_mosaic.version = 11 : i64} {
  func.func @_affine_relu_matmul_stats_kernel(%arg0: i32, %arg1: memref<1024x4xbf16, #tpu.memory_space<vmem>>, %arg2: memref<1x4xf32, #tpu.memory_space<vmem>>, %arg3: memref<1x4xf32, #tpu.memory_space<vmem>>, %arg4: memref<4x16xbf16, #tpu.memory_space<vmem>>, %arg5: memref<1024x16xf32, #tpu.memory_space<vmem>>, %arg6: memref<1x1x16xf32, #tpu.memory_space<vmem>>, %arg7: memref<1x1x16xf32, #tpu.memory_space<vmem>>) attributes {dimension_semantics = [#tpu.dimension_semantics<parallel>], iteration_bounds = array<i64: 1>, scalar_prefetch = 0 : i64, scratch_operands = 0 : i64, tpu.core_type = #tpu.core_type<tc>, window_params = [{transform_indices = @transform_0, window_bounds = array<i64: 1024, 4>}, {pipeline_mode = #tpu.pipeline_mode<synchronous>, transform_indices = @transform_1, window_bounds = array<i64: 1, 4>}, {pipeline_mode = #tpu.pipeline_mode<synchronous>, transform_indices = @transform_2, window_bounds = array<i64: 1, 4>}, {pipeline_mode = #tpu.pipeline_mode<synchronous>, transform_indices = @transform_3, window_bounds = array<i64: 4, 16>}, {transform_indices = @transform_4, window_bounds = array<i64: 1024, 16>}, {transform_indices = @transform_5, window_bounds = array<i64: 1, 1, 16>}, {transform_indices = @transform_6, window_bounds = array<i64: 1, 1, 16>}]} {
    %c0 = arith.constant 0 : index
    %c0_0 = arith.constant 0 : index
    %0 = vector.load %arg1[%c0, %c0_0] : memref<1024x4xbf16, #tpu.memory_space<vmem>>, vector<1024x4xbf16>
    %1 = arith.extf %0 : vector<1024x4xbf16> to vector<1024x4xf32>
    %c0_1 = arith.constant 0 : index
    %c0_2 = arith.constant 0 : index
    %2 = vector.load %arg2[%c0_1, %c0_2] : memref<1x4xf32, #tpu.memory_space<vmem>>, vector<1x4xf32>
    %3 = vector.broadcast %2 : vector<1x4xf32> to vector<1024x4xf32>
    %4 = arith.mulf %1, %3 : vector<1024x4xf32>
    %c0_3 = arith.constant 0 : index
    %c0_4 = arith.constant 0 : index
    %5 = vector.load %arg3[%c0_3, %c0_4] : memref<1x4xf32, #tpu.memory_space<vmem>>, vector<1x4xf32>
    %6 = vector.broadcast %5 : vector<1x4xf32> to vector<1024x4xf32>
    %7 = arith.addf %4, %6 : vector<1024x4xf32>
    %cst = arith.constant 0.000000e+00 : f32
    %8 = vector.broadcast %cst : f32 to vector<1024x4xf32>
    %9 = arith.maximumf %7, %8 : vector<1024x4xf32>
    %10 = arith.truncf %9 : vector<1024x4xf32> to vector<1024x4xbf16>
    %c0_5 = arith.constant 0 : index
    %c0_6 = arith.constant 0 : index
    %11 = vector.load %arg4[%c0_5, %c0_6] : memref<4x16xbf16, #tpu.memory_space<vmem>>, vector<4x16xbf16>
    %cst_7 = arith.constant dense<0.000000e+00> : vector<1024x16xf32>
    %12 = tpu.matmul %10, %11, %cst_7 {dimension_numbers = #tpu.dot_dimension_numbers<[1], [0], [0], [1], [0, 0, 1, 1], [], []>} : vector<1024x4xbf16>, vector<4x16xbf16>, vector<1024x16xf32> -> vector<1024x16xf32>
    %c0_8 = arith.constant 0 : index
    %c0_9 = arith.constant 0 : index
    %13 = vector.load %arg5[%c0_8, %c0_9] : memref<1024x16xf32, #tpu.memory_space<vmem>>, vector<1024x16xf32>
    tpu.vector_store %arg5[%c0_8, %c0_9], %12 {strides = array<i32>} : memref<1024x16xf32, #tpu.memory_space<vmem>>, vector<1024x16xf32>,
    %cst_10 = arith.constant dense<0.000000e+00> : vector<16xf32>
    %14 = vector.multi_reduction <add>, %12, %cst_10 [0] : vector<1024x16xf32> to vector<16xf32>
    %15 = vector.shape_cast %14 : vector<16xf32> to vector<1x16xf32>
    %c0_11 = arith.constant 0 : index
    %c0_12 = arith.constant 0 : index
    %c0_13 = arith.constant 0 : index
    %16 = vector.load %arg6[%c0_11, %c0_12, %c0_13] : memref<1x1x16xf32, #tpu.memory_space<vmem>>, vector<1x1x16xf32>
    %17 = vector.shape_cast %16 : vector<1x1x16xf32> to vector<1x16xf32>
    %18 = vector.shape_cast %15 : vector<1x16xf32> to vector<1x1x16xf32>
    tpu.vector_store %arg6[%c0_11, %c0_12, %c0_13], %18 {strides = array<i32>} : memref<1x1x16xf32, #tpu.memory_space<vmem>>, vector<1x1x16xf32>,
    %19 = arith.mulf %12, %12 : vector<1024x16xf32>
    %cst_14 = arith.constant dense<0.000000e+00> : vector<16xf32>
    %20 = vector.multi_reduction <add>, %19, %cst_14 [0] : vector<1024x16xf32> to vector<16xf32>
    %21 = vector.shape_cast %20 : vector<16xf32> to vector<1x16xf32>
    %c0_15 = arith.constant 0 : index
    %c0_16 = arith.constant 0 : index
    %c0_17 = arith.constant 0 : index
    %22 = vector.load %arg7[%c0_15, %c0_16, %c0_17] : memref<1x1x16xf32, #tpu.memory_space<vmem>>, vector<1x1x16xf32>
    %23 = vector.shape_cast %22 : vector<1x1x16xf32> to vector<1x16xf32>
    %24 = vector.shape_cast %21 : vector<1x16xf32> to vector<1x1x16xf32>
    tpu.vector_store %arg7[%c0_15, %c0_16, %c0_17], %24 {strides = array<i32>} : memref<1x1x16xf32, #tpu.memory_space<vmem>>, vector<1x1x16xf32>,
    return
  }
  func.func @transform_0(%arg0: i32) -> (i32, i32) {
    %c0_i32 = arith.constant 0 : i32
    %c0_i32_0 = arith.constant 0 : i32
    return %arg0, %c0_i32 : i32, i32
  }
  func.func @transform_1(%arg0: i32) -> (i32, i32) {
    %c0_i32 = arith.constant 0 : i32
    %c0_i32_0 = arith.constant 0 : i32
    %c0_i32_1 = arith.constant 0 : i32
    return %c0_i32, %c0_i32_0 : i32, i32
  }
  func.func @transform_2(%arg0: i32) -> (i32, i32) {
    %c0_i32 = arith.constant 0 : i32
    %c0_i32_0 = arith.constant 0 : i32
    %c0_i32_1 = arith.constant 0 : i32
    return %c0_i32, %c0_i32_0 : i32, i32
  }
  func.func @transform_3(%arg0: i32) -> (i32, i32) {
    %c0_i32 = arith.constant 0 : i32
    %c0_i32_0 = arith.constant 0 : i32
    %c0_i32_1 = arith.constant 0 : i32
    return %c0_i32, %c0_i32_0 : i32, i32
  }
  func.func @transform_4(%arg0: i32) -> (i32, i32) {
    %c0_i32 = arith.constant 0 : i32
    %c0_i32_0 = arith.constant 0 : i32
    return %arg0, %c0_i32 : i32, i32
  }
  func.func @transform_5(%arg0: i32) -> (i32, i32, i32) {
    %c0_i32 = arith.constant 0 : i32
    %c0_i32_0 = arith.constant 0 : i32
    %c0_i32_1 = arith.constant 0 : i32
    return %arg0, %c0_i32, %c0_i32_0 : i32, i32, i32
  }
  func.func @transform_6(%arg0: i32) -> (i32, i32, i32) {
    %c0_i32 = arith.constant 0 : i32
    %c0_i32_0 = arith.constant 0 : i32
    %c0_i32_1 = arith.constant 0 : i32
    return %arg0, %c0_i32, %c0_i32_0 : i32, i32, i32
  }
}

module attributes {stable_mosaic.version = 11 : i64} {
  func.func @_bn_residual_relu_kernel(%arg0: i32, %arg1: memref<1024x16xf32, #tpu.memory_space<vmem>>, %arg2: memref<1x16xf32, #tpu.memory_space<vmem>>, %arg3: memref<1x16xf32, #tpu.memory_space<vmem>>, %arg4: memref<1024x16xf32, #tpu.memory_space<vmem>>, %arg5: memref<1024x16xf32, #tpu.memory_space<vmem>>) attributes {dimension_semantics = [#tpu.dimension_semantics<parallel>], iteration_bounds = array<i64: 1>, scalar_prefetch = 0 : i64, scratch_operands = 0 : i64, tpu.core_type = #tpu.core_type<tc>, window_params = [{transform_indices = @transform_0, window_bounds = array<i64: 1024, 16>}, {pipeline_mode = #tpu.pipeline_mode<synchronous>, transform_indices = @transform_1, window_bounds = array<i64: 1, 16>}, {pipeline_mode = #tpu.pipeline_mode<synchronous>, transform_indices = @transform_2, window_bounds = array<i64: 1, 16>}, {transform_indices = @transform_3, window_bounds = array<i64: 1024, 16>}, {transform_indices = @transform_4, window_bounds = array<i64: 1024, 16>}]} {
    %c0 = arith.constant 0 : index
    %c0_0 = arith.constant 0 : index
    %0 = vector.load %arg1[%c0, %c0_0] : memref<1024x16xf32, #tpu.memory_space<vmem>>, vector<1024x16xf32>
    %c0_1 = arith.constant 0 : index
    %c0_2 = arith.constant 0 : index
    %1 = vector.load %arg2[%c0_1, %c0_2] : memref<1x16xf32, #tpu.memory_space<vmem>>, vector<1x16xf32>
    %2 = vector.broadcast %1 : vector<1x16xf32> to vector<1024x16xf32>
    %3 = arith.mulf %0, %2 : vector<1024x16xf32>
    %c0_3 = arith.constant 0 : index
    %c0_4 = arith.constant 0 : index
    %4 = vector.load %arg3[%c0_3, %c0_4] : memref<1x16xf32, #tpu.memory_space<vmem>>, vector<1x16xf32>
    %5 = vector.broadcast %4 : vector<1x16xf32> to vector<1024x16xf32>
    %6 = arith.addf %3, %5 : vector<1024x16xf32>
    %c0_5 = arith.constant 0 : index
    %c0_6 = arith.constant 0 : index
    %7 = vector.load %arg4[%c0_5, %c0_6] : memref<1024x16xf32, #tpu.memory_space<vmem>>, vector<1024x16xf32>
    %8 = arith.addf %6, %7 : vector<1024x16xf32>
    %cst = arith.constant 0.000000e+00 : f32
    %9 = vector.broadcast %cst : f32 to vector<1024x16xf32>
    %10 = arith.maximumf %8, %9 : vector<1024x16xf32>
    %c0_7 = arith.constant 0 : index
    %c0_8 = arith.constant 0 : index
    %11 = vector.load %arg5[%c0_7, %c0_8] : memref<1024x16xf32, #tpu.memory_space<vmem>>, vector<1024x16xf32>
    tpu.vector_store %arg5[%c0_7, %c0_8], %10 {strides = array<i32>} : memref<1024x16xf32, #tpu.memory_space<vmem>>, vector<1024x16xf32>,
    return
  }
  func.func @transform_0(%arg0: i32) -> (i32, i32) {
    %c0_i32 = arith.constant 0 : i32
    %c0_i32_0 = arith.constant 0 : i32
    return %arg0, %c0_i32 : i32, i32
  }
  func.func @transform_1(%arg0: i32) -> (i32, i32) {
    %c0_i32 = arith.constant 0 : i32
    %c0_i32_0 = arith.constant 0 : i32
    %c0_i32_1 = arith.constant 0 : i32
    return %c0_i32, %c0_i32_0 : i32, i32
  }
  func.func @transform_2(%arg0: i32) -> (i32, i32) {
    %c0_i32 = arith.constant 0 : i32
    %c0_i32_0 = arith.constant 0 : i32
    %c0_i32_1 = arith.constant 0 : i32
    return %c0_i32, %c0_i32_0 : i32, i32
  }
  func.func @transform_3(%arg0: i32) -> (i32, i32) {
    %c0_i32 = arith.constant 0 : i32
    %c0_i32_0 = arith.constant 0 : i32
    return %arg0, %c0_i32 : i32, i32
  }
  func.func @transform_4(%arg0: i32) -> (i32, i32) {
    %c0_i32 = arith.constant 0 : i32
    %c0_i32_0 = arith.constant 0 : i32
    return %arg0, %c0_i32 : i32, i32
  }
}

</mosaic_0001>

<llo_original>
// kernel: bottleneck_forward.4
$region0: #{bottleneck_forward.4}
  #allocation0 [shape = 'u32[]', space=smem, size = 0x4, offset = 0x4, fixed_abs, tag = 'smem constant byte address 0x4 - core index']
  #allocation1 [shape = 'u32[144,128]{1,0:T(1,128)}', space=vmem, size = 0x12000, scoped, tag = 'internal scratch']
  %s0 = inlined_call_operand.vmem [shape: f32[1024,16], index: 0, kind: input, shape index: {}]
  %s1 = inlined_call_operand.vmem [shape: bf16[16,4], index: 1, kind: input, shape index: {}]
  %s2 = inlined_call_operand.vmem [shape: bf16[1024,4], index: 2, kind: output, shape index: {0}]
  %s3 = inlined_call_operand.vmem [shape: f32[1,1,4], index: 3, kind: output, shape index: {1}]
  %s4 = inlined_call_operand.vmem [shape: f32[1,1,4], index: 4, kind: output, shape index: {2}]
  %5 = xla_tuple %s2, %s3, %s4
  %s6 = sld [smem:[#allocation0]]
  $region34: #{bottleneck_forward.4} parent=0
    _
  %s8 = ssub.s32 1, %s6
  %s9 = scalar_select 0, %s8, %s6
  // Predicated region
  $region2: #{bottleneck_forward.4} parent=0 // pred_check
    _
  $region3: #{bottleneck_forward.4} parent=0 // pred_check_branch
    %11 = sbr.rel (0) target = $region5
  $region4: #{bottleneck_forward.4} parent=0 // pred_region
    _
  $region5: #{bottleneck_forward.4} parent=0 // pred_fallthru
    _
  // Predicated region
  $region6: #{bottleneck_forward.4} parent=0 // pred_check
    _
  $region7: #{bottleneck_forward.4} parent=0 // pred_check_branch
    %13 = sbr.rel (0) target = $region9
  $region8: #{bottleneck_forward.4} parent=0 // pred_region
    _
  $region9: #{bottleneck_forward.4} parent=0 // pred_fallthru
    _
  %v15 = vld [vmem:[%s0] sm:$0xff]
  %v16 = vld [vmem:[%s0 + $0x8] sm:$0xff]
  %v17 = vld [vmem:[%s0 + $0x10] sm:$0xff]
  %v18 = vld [vmem:[%s0 + $0x18] sm:$0xff]
  %v19 = vld [vmem:[%s0 + $0x20] sm:$0xff]
  %v20 = vld [vmem:[%s0 + $0x28] sm:$0xff]
  %v21 = vld [vmem:[%s0 + $0x30] sm:$0xff]
  %v22 = vld [vmem:[%s0 + $0x38] sm:$0xff]
  %v23 = vld [vmem:[%s0 + $0x40] sm:$0xff]
  %v24 = vld [vmem:[%s0 + $0x48] sm:$0xff]
  %v25 = vld [vmem:[%s0 + $0x50] sm:$0xff]
  %v26 = vld [vmem:[%s0 + $0x58] sm:$0xff]
  %v27 = vld [vmem:[%s0 + $0x60] sm:$0xff]
  %v28 = vld [vmem:[%s0 + $0x68] sm:$0xff]
  %v29 = vld [vmem:[%s0 + $0x70] sm:$0xff]
  %v30 = vld [vmem:[%s0 + $0x78] sm:$0xff]
  %v31 = vld [vmem:[%s0 + $0x80] sm:$0xff]
  %v32 = vld [vmem:[%s0 + $0x88] sm:$0xff]
  %v33 = vld [vmem:[%s0 + $0x90] sm:$0xff]
  %v34 = vld [vmem:[%s0 + $0x98] sm:$0xff]
  %v35 = vld [vmem:[%s0 + $0xa0] sm:$0xff]
  %v36 = vld [vmem:[%s0 + $0xa8] sm:$0xff]
  %v37 = vld [vmem:[%s0 + $0xb0] sm:$0xff]
  %v38 = vld [vmem:[%s0 + $0xb8] sm:$0xff]
  %v39 = vld [vmem:[%s0 + $0xc0] sm:$0xff]
  %v40 = vld [vmem:[%s0 + $0xc8] sm:$0xff]
  %v41 = vld [vmem:[%s0 + $0xd0] sm:$0xff]
  %v42 = vld [vmem:[%s0 + $0xd8] sm:$0xff]
  %v43 = vld [vmem:[%s0 + $0xe0] sm:$0xff]
  %v44 = vld [vmem:[%s0 + $0xe8] sm:$0xff]
  %v45 = vld [vmem:[%s0 + $0xf0] sm:$0xff]
  %v46 = vld [vmem:[%s0 + $0xf8] sm:$0xff]
  %v47 = vld [vmem:[%s0 + $0x100] sm:$0xff]
  %v48 = vld [vmem:[%s0 + $0x108] sm:$0xff]
  %v49 = vld [vmem:[%s0 + $0x110] sm:$0xff]
  %v50 = vld [vmem:[%s0 + $0x118] sm:$0xff]
  %v51 = vld [vmem:[%s0 + $0x120] sm:$0xff]
  %v52 = vld [vmem:[%s0 + $0x128] sm:$0xff]
  %v53 = vld [vmem:[%s0 + $0x130] sm:$0xff]
  %v54 = vld [vmem:[%s0 + $0x138] sm:$0xff]
  %v55 = vld [vmem:[%s0 + $0x140] sm:$0xff]
  %v56 = vld [vmem:[%s0 + $0x148] sm:$0xff]
  %v57 = vld [vmem:[%s0 + $0x150] sm:$0xff]
  %v58 = vld [vmem:[%s0 + $0x158] sm:$0xff]
  %v59 = vld [vmem:[%s0 + $0x160] sm:$0xff]
  %v60 = vld [vmem:[%s0 + $0x168] sm:$0xff]
  %v61 = vld [vmem:[%s0 + $0x170] sm:$0xff]
  %v62 = vld [vmem:[%s0 + $0x178] sm:$0xff]
  %v63 = vld [vmem:[%s0 + $0x180] sm:$0xff]
  %v64 = vld [vmem:[%s0 + $0x188] sm:$0xff]
  %v65 = vld [vmem:[%s0 + $0x190] sm:$0xff]
  %v66 = vld [vmem:[%s0 + $0x198] sm:$0xff]
  %v67 = vld [vmem:[%s0 + $0x1a0] sm:$0xff]
  %v68 = vld [vmem:[%s0 + $0x1a8] sm:$0xff]
  %v69 = vld [vmem:[%s0 + $0x1b0] sm:$0xff]
  %v70 = vld [vmem:[%s0 + $0x1b8] sm:$0xff]
  %v71 = vld [vmem:[%s0 + $0x1c0] sm:$0xff]
  %v72 = vld [vmem:[%s0 + $0x1c8] sm:$0xff]
  %v73 = vld [vmem:[%s0 + $0x1d0] sm:$0xff]
  %v74 = vld [vmem:[%s0 + $0x1d8] sm:$0xff]
  %v75 = vld [vmem:[%s0 + $0x1e0] sm:$0xff]
  %v76 = vld [vmem:[%s0 + $0x1e8] sm:$0xff]
  %v77 = vld [vmem:[%s0 + $0x1f0] sm:$0xff]
  %v78 = vld [vmem:[%s0 + $0x1f8] sm:$0xff]
  %v79 = vld [vmem:[%s0 + $0x200] sm:$0xff]
  %v80 = vld [vmem:[%s0 + $0x208] sm:$0xff]
  %v81 = vld [vmem:[%s0 + $0x210] sm:$0xff]
  %v82 = vld [vmem:[%s0 + $0x218] sm:$0xff]
  %v83 = vld [vmem:[%s0 + $0x220] sm:$0xff]
  %v84 = vld [vmem:[%s0 + $0x228] sm:$0xff]
  %v85 = vld [vmem:[%s0 + $0x230] sm:$0xff]
  %v86 = vld [vmem:[%s0 + $0x238] sm:$0xff]
  %v87 = vld [vmem:[%s0 + $0x240] sm:$0xff]
  %v88 = vld [vmem:[%s0 + $0x248] sm:$0xff]
  %v89 = vld [vmem:[%s0 + $0x250] sm:$0xff]
  %v90 = vld [vmem:[%s0 + $0x258] sm:$0xff]
  %v91 = vld [vmem:[%s0 + $0x260] sm:$0xff]
  %v92 = vld [vmem:[%s0 + $0x268] sm:$0xff]
  %v93 = vld [vmem:[%s0 + $0x270] sm:$0xff]
  %v94 = vld [vmem:[%s0 + $0x278] sm:$0xff]
  %v95 = vld [vmem:[%s0 + $0x280] sm:$0xff]
  %v96 = vld [vmem:[%s0 + $0x288] sm:$0xff]
  %v97 = vld [vmem:[%s0 + $0x290] sm:$0xff]
  %v98 = vld [vmem:[%s0 + $0x298] sm:$0xff]
  %v99 = vld [vmem:[%s0 + $0x2a0] sm:$0xff]
  %v100 = vld [vmem:[%s0 + $0x2a8] sm:$0xff]
  %v101 = vld [vmem:[%s0 + $0x2b0] sm:$0xff]
  %v102 = vld [vmem:[%s0 + $0x2b8] sm:$0xff]
  %v103 = vld [vmem:[%s0 + $0x2c0] sm:$0xff]
  %v104 = vld [vmem:[%s0 + $0x2c8] sm:$0xff]
  %v105 = vld [vmem:[%s0 + $0x2d0] sm:$0xff]
  %v106 = vld [vmem:[%s0 + $0x2d8] sm:$0xff]
  %v107 = vld [vmem:[%s0 + $0x2e0] sm:$0xff]
  %v108 = vld [vmem:[%s0 + $0x2e8] sm:$0xff]
  %v109 = vld [vmem:[%s0 + $0x2f0] sm:$0xff]
  %v110 = vld [vmem:[%s0 + $0x2f8] sm:$0xff]
  %v111 = vld [vmem:[%s0 + $0x300] sm:$0xff]
  %v112 = vld [vmem:[%s0 + $0x308] sm:$0xff]
  %v113 = vld [vmem:[%s0 + $0x310] sm:$0xff]
  %v114 = vld [vmem:[%s0 + $0x318] sm:$0xff]
  %v115 = vld [vmem:[%s0 + $0x320] sm:$0xff]
  %v116 = vld [vmem:[%s0 + $0x328] sm:$0xff]
  %v117 = vld [vmem:[%s0 + $0x330] sm:$0xff]
  %v118 = vld [vmem:[%s0 + $0x338] sm:$0xff]
  %v119 = vld [vmem:[%s0 + $0x340] sm:$0xff]
  %v120 = vld [vmem:[%s0 + $0x348] sm:$0xff]
  %v121 = vld [vmem:[%s0 + $0x350] sm:$0xff]
  %v122 = vld [vmem:[%s0 + $0x358] sm:$0xff]
  %v123 = vld [vmem:[%s0 + $0x360] sm:$0xff]
  %v124 = vld [vmem:[%s0 + $0x368] sm:$0xff]
  %v125 = vld [vmem:[%s0 + $0x370] sm:$0xff]
  %v126 = vld [vmem:[%s0 + $0x378] sm:$0xff]
  %v127 = vld [vmem:[%s0 + $0x380] sm:$0xff]
  %v128 = vld [vmem:[%s0 + $0x388] sm:$0xff]
  %v129 = vld [vmem:[%s0 + $0x390] sm:$0xff]
  %v130 = vld [vmem:[%s0 + $0x398] sm:$0xff]
  %v131 = vld [vmem:[%s0 + $0x3a0] sm:$0xff]
  %v132 = vld [vmem:[%s0 + $0x3a8] sm:$0xff]
  %v133 = vld [vmem:[%s0 + $0x3b0] sm:$0xff]
  %v134 = vld [vmem:[%s0 + $0x3b8] sm:$0xff]
  %v135 = vld [vmem:[%s0 + $0x3c0] sm:$0xff]
  %v136 = vld [vmem:[%s0 + $0x3c8] sm:$0xff]
  %v137 = vld [vmem:[%s0 + $0x3d0] sm:$0xff]
  %v138 = vld [vmem:[%s0 + $0x3d8] sm:$0xff]
  %v139 = vld [vmem:[%s0 + $0x3e0] sm:$0xff]
  %v140 = vld [vmem:[%s0 + $0x3e8] sm:$0xff]
  %v141 = vld [vmem:[%s0 + $0x3f0] sm:$0xff]
  %v142 = vld [vmem:[%s0 + $0x3f8] sm:$0xff]
  %v143 = vpack.c.bf16 %v16, %v15
  %v144 = vpack.c.bf16 %v18, %v17
  %v145 = vpack.c.bf16 %v20, %v19
  %v146 = vpack.c.bf16 %v22, %v21
  %v147 = vpack.c.bf16 %v24, %v23
  %v148 = vpack.c.bf16 %v26, %v25
  %v149 = vpack.c.bf16 %v28, %v27
  %v150 = vpack.c.bf16 %v30, %v29
  %v151 = vpack.c.bf16 %v32, %v31
  %v152 = vpack.c.bf16 %v34, %v33
  %v153 = vpack.c.bf16 %v36, %v35
  %v154 = vpack.c.bf16 %v38, %v37
  %v155 = vpack.c.bf16 %v40, %v39
  %v156 = vpack.c.bf16 %v42, %v41
  %v157 = vpack.c.bf16 %v44, %v43
  %v158 = vpack.c.bf16 %v46, %v45
  %v159 = vpack.c.bf16 %v48, %v47
  %v160 = vpack.c.bf16 %v50, %v49
  %v161 = vpack.c.bf16 %v52, %v51
  %v162 = vpack.c.bf16 %v54, %v53
  %v163 = vpack.c.bf16 %v56, %v55
  %v164 = vpack.c.bf16 %v58, %v57
  %v165 = vpack.c.bf16 %v60, %v59
  %v166 = vpack.c.bf16 %v62, %v61
  %v167 = vpack.c.bf16 %v64, %v63
  %v168 = vpack.c.bf16 %v66, %v65
  %v169 = vpack.c.bf16 %v68, %v67
  %v170 = vpack.c.bf16 %v70, %v69
  %v171 = vpack.c.bf16 %v72, %v71
  %v172 = vpack.c.bf16 %v74, %v73
  %v173 = vpack.c.bf16 %v76, %v75
  %v174 = vpack.c.bf16 %v78, %v77
  %v175 = vpack.c.bf16 %v80, %v79
  %v176 = vpack.c.bf16 %v82, %v81
  %v177 = vpack.c.bf16 %v84, %v83
  %v178 = vpack.c.bf16 %v86, %v85
  %v179 = vpack.c.bf16 %v88, %v87
  %v180 = vpack.c.bf16 %v90, %v89
  %v181 = vpack.c.bf16 %v92, %v91
  %v182 = vpack.c.bf16 %v94, %v93
  %v183 = vpack.c.bf16 %v96, %v95
  %v184 = vpack.c.bf16 %v98, %v97
  %v185 = vpack.c.bf16 %v100, %v99
  %v186 = vpack.c.bf16 %v102, %v101
  %v187 = vpack.c.bf16 %v104, %v103
  %v188 = vpack.c.bf16 %v106, %v105
  %v189 = vpack.c.bf16 %v108, %v107
  %v190 = vpack.c.bf16 %v110, %v109
  %v191 = vpack.c.bf16 %v112, %v111
  %v192 = vpack.c.bf16 %v114, %v113
  %v193 = vpack.c.bf16 %v116, %v115
  %v194 = vpack.c.bf16 %v118, %v117
  %v195 = vpack.c.bf16 %v120, %v119
  %v196 = vpack.c.bf16 %v122, %v121
  %v197 = vpack.c.bf16 %v124, %v123
  %v198 = vpack.c.bf16 %v126, %v125
  %v199 = vpack.c.bf16 %v128, %v127
  %v200 = vpack.c.bf16 %v130, %v129
  %v201 = vpack.c.bf16 %v132, %v131
  %v202 = vpack.c.bf16 %v134, %v133
  %v203 = vpack.c.bf16 %v136, %v135
  %v204 = vpack.c.bf16 %v138, %v137
  %v205 = vpack.c.bf16 %v140, %v139
  %v206 = vpack.c.bf16 %v142, %v141
  %v207 = vld [vmem:[%s1] sm:$0xf]
  %v208 = vld [vmem:[%s1 + $0x4] sm:$0xf]
  %v211 = vunpack.c.l.b16 %v207
  %v212 = vunpack.c.l.b16 %v208
  %v213 = vpack.c.b16 %v212, %v211
  %vm215 = vcmask 130048
  %v217 = vsel %vm215, %v143, 0
  %v220 = vsel %vm215, %v144, 0
  %v223 = vsel %vm215, %v145, 0
  %v226 = vsel %vm215, %v146, 0
  %v229 = vsel %vm215, %v147, 0
  %v232 = vsel %vm215, %v148, 0
  %v235 = vsel %vm215, %v149, 0
  %v238 = vsel %vm215, %v150, 0
  %v241 = vsel %vm215, %v151, 0
  %v244 = vsel %vm215, %v152, 0
  %v247 = vsel %vm215, %v153, 0
  %v250 = vsel %vm215, %v154, 0
  %v253 = vsel %vm215, %v155, 0
  %v256 = vsel %vm215, %v156, 0
  %v259 = vsel %vm215, %v157, 0
  %v262 = vsel %vm215, %v158, 0
  %v265 = vsel %vm215, %v159, 0
  %v268 = vsel %vm215, %v160, 0
  %v271 = vsel %vm215, %v161, 0
  %v274 = vsel %vm215, %v162, 0
  %v277 = vsel %vm215, %v163, 0
  %v280 = vsel %vm215, %v164, 0
  %v283 = vsel %vm215, %v165, 0
  %v286 = vsel %vm215, %v166, 0
  %v289 = vsel %vm215, %v167, 0
  %v292 = vsel %vm215, %v168, 0
  %v295 = vsel %vm215, %v169, 0
  %v298 = vsel %vm215, %v170, 0
  %v301 = vsel %vm215, %v171, 0
  %v304 = vsel %vm215, %v172, 0
  %v307 = vsel %vm215, %v173, 0
  %v310 = vsel %vm215, %v174, 0
  %v313 = vsel %vm215, %v175, 0
  %v316 = vsel %vm215, %v176, 0
  %v319 = vsel %vm215, %v177, 0
  %v322 = vsel %vm215, %v178, 0
  %v325 = vsel %vm215, %v179, 0
  %v328 = vsel %vm215, %v180, 0
  %v331 = vsel %vm215, %v181, 0
  %v334 = vsel %vm215, %v182, 0
  %v337 = vsel %vm215, %v183, 0
  %v340 = vsel %vm215, %v184, 0
  %v343 = vsel %vm215, %v185, 0
  %v346 = vsel %vm215, %v186, 0
  %v349 = vsel %vm215, %v187, 0
  %v352 = vsel %vm215, %v188, 0
  %v355 = vsel %vm215, %v189, 0
  %v358 = vsel %vm215, %v190, 0
  %v361 = vsel %vm215, %v191, 0
  %v364 = vsel %vm215, %v192, 0
  %v367 = vsel %vm215, %v193, 0
  %v370 = vsel %vm215, %v194, 0
  %v373 = vsel %vm215, %v195, 0
  %v376 = vsel %vm215, %v196, 0
  %v379 = vsel %vm215, %v197, 0
  %v382 = vsel %vm215, %v198, 0
  %v385 = vsel %vm215, %v199, 0
  %v388 = vsel %vm215, %v200, 0
  %v391 = vsel %vm215, %v201, 0
  %v394 = vsel %vm215, %v202, 0
  %v397 = vsel %vm215, %v203, 0
  %v400 = vsel %vm215, %v204, 0
  %v403 = vsel %vm215, %v205, 0
  %v406 = vsel %vm215, %v206, 0
  %408 = vmatprep.subr.bf16.mxu0 0
  %409 = vmatpush1.bf16.msra.mxu0 0
  %410 = vmatprep.subr.bf16.mxu0 0
  %411 = vmatpush1.bf16.msra.mxu0 0
  %412 = vmatprep.subr.bf16.mxu0 0
  %413 = vmatpush1.bf16.msra.mxu0 0
  %414 = vmatprep.subr.bf16.mxu0 0
  %415 = vmatpush1.bf16.msra.mxu0 0
  %416 = vmatprep.subr.bf16.mxu0 0
  %417 = vmatpush1.bf16.msra.mxu0 0
  %418 = vmatprep.subr.bf16.mxu0 0
  %419 = vmatpush1.bf16.msra.mxu0 0
  %420 = vmatprep.subr.bf16.mxu0 0
  %421 = vmatpush1.bf16.msra.mxu0 0
  %422 = vmatprep.subr.bf16.mxu0 0
  %423 = vmatpush1.bf16.msra.mxu0 %v213
  %424 = vmatprep.subr.bf16.mxu0 0
  %425 = vmatpush2.bf16.msra.mxu0 0
  %426 = vmatprep.subr.bf16.mxu0 0
  %427 = vmatpush2.bf16.msra.mxu0 0
  %428 = vmatprep.subr.bf16.mxu0 0
  %429 = vmatpush2.bf16.msra.mxu0 0
  %430 = vmatprep.subr.bf16.mxu0 0
  %431 = vmatpush2.bf16.msra.mxu0 0
  %432 = vmatprep.subr.bf16.mxu0 0
  %433 = vmatpush2.bf16.msra.mxu0 0
  %434 = vmatprep.subr.bf16.mxu0 0
  %435 = vmatpush2.bf16.msra.mxu0 0
  %436 = vmatprep.subr.bf16.mxu0 0
  %437 = vmatpush2.bf16.msra.mxu0 0
  %438 = vmatprep.subr.bf16.mxu0 0
  %439 = vmatpush2.bf16.msra.mxu0 0
  %440 = vmatprep.mubr.bf16.mxu0 0
  %441 = vmatmul.mubr.bf16.gmra.mxu0 %v217
  %v442 = vpop.f32.mrf.mxu0
  %v443 = vadd.f32 0.0, %v442
  %v444 = vpop.f32.mrf.mxu0
  %v445 = vpop.f32.mrf.mxu0
  %v446 = vadd.f32 0.0, %v445
  %v447 = vpop.f32.mrf.mxu0
  %448 = vmatprep.mubr.bf16.mxu0 0
  %449 = vmatmul.mubr.bf16.gmra.mxu0 %v220
  %v450 = vpop.f32.mrf.mxu0
  %v451 = vadd.f32 0.0, %v450
  %v452 = vpop.f32.mrf.mxu0
  %v453 = vpop.f32.mrf.mxu0
  %v454 = vadd.f32 0.0, %v453
  %v455 = vpop.f32.mrf.mxu0
  %456 = vmatprep.mubr.bf16.mxu0 0
  %457 = vmatmul.mubr.bf16.gmra.mxu0 %v223
  %v458 = vpop.f32.mrf.mxu0
  %v459 = vadd.f32 0.0, %v458
  %v460 = vpop.f32.mrf.mxu0
  %v461 = vpop.f32.mrf.mxu0
  %v462 = vadd.f32 0.0, %v461
  %v463 = vpop.f32.mrf.mxu0
  %464 = vmatprep.mubr.bf16.mxu0 0
  %465 = vmatmul.mubr.bf16.gmra.mxu0 %v226
  %v466 = vpop.f32.mrf.mxu0
  %v467 = vadd.f32 0.0, %v466
  %v468 = vpop.f32.mrf.mxu0
  %v469 = vpop.f32.mrf.mxu0
  %v470 = vadd.f32 0.0, %v469
  %v471 = vpop.f32.mrf.mxu0
  %472 = vmatprep.mubr.bf16.mxu0 0
  %473 = vmatmul.mubr.bf16.gmra.mxu0 %v229
  %v474 = vpop.f32.mrf.mxu0
  %v475 = vadd.f32 0.0, %v474
  %v476 = vpop.f32.mrf.mxu0
  %v477 = vpop.f32.mrf.mxu0
  %v478 = vadd.f32 0.0, %v477
  %v479 = vpop.f32.mrf.mxu0
  %480 = vmatprep.mubr.bf16.mxu0 0
  %481 = vmatmul.mubr.bf16.gmra.mxu0 %v232
  %v482 = vpop.f32.mrf.mxu0
  %v483 = vadd.f32 0.0, %v482
  %v484 = vpop.f32.mrf.mxu0
  %v485 = vpop.f32.mrf.mxu0
  %v486 = vadd.f32 0.0, %v485
  %v487 = vpop.f32.mrf.mxu0
  %488 = vmatprep.mubr.bf16.mxu0 0
  %489 = vmatmul.mubr.bf16.gmra.mxu0 %v235
  %v490 = vpop.f32.mrf.mxu0
  %v491 = vadd.f32 0.0, %v490
  %v492 = vpop.f32.mrf.mxu0
  %v493 = vpop.f32.mrf.mxu0
  %v494 = vadd.f32 0.0, %v493
  %v495 = vpop.f32.mrf.mxu0
  %496 = vmatprep.mubr.bf16.mxu0 0
  %497 = vmatmul.mubr.bf16.gmra.mxu0 %v238
  %v498 = vpop.f32.mrf.mxu0
  %v499 = vadd.f32 0.0, %v498
  %v500 = vpop.f32.mrf.mxu0
  %v501 = vpop.f32.mrf.mxu0
  %v502 = vadd.f32 0.0, %v501
  %v503 = vpop.f32.mrf.mxu0
  %504 = vmatprep.mubr.bf16.mxu0 0
  %505 = vmatmul.mubr.bf16.gmra.mxu0 %v241
  %v506 = vpop.f32.mrf.mxu0
  %v507 = vadd.f32 0.0, %v506
  %v508 = vpop.f32.mrf.mxu0
  %v509 = vpop.f32.mrf.mxu0
  %v510 = vadd.f32 0.0, %v509
  %v511 = vpop.f32.mrf.mxu0
  %512 = vmatprep.mubr.bf16.mxu0 0
  %513 = vmatmul.mubr.bf16.gmra.mxu0 %v244
  %v514 = vpop.f32.mrf.mxu0
  %v515 = vadd.f32 0.0, %v514
  %v516 = vpop.f32.mrf.mxu0
  %v517 = vpop.f32.mrf.mxu0
  %v518 = vadd.f32 0.0, %v517
  %v519 = vpop.f32.mrf.mxu0
  %520 = vmatprep.mubr.bf16.mxu0 0
  %521 = vmatmul.mubr.bf16.gmra.mxu0 %v247
  %v522 = vpop.f32.mrf.mxu0
  %v523 = vadd.f32 0.0, %v522
  %v524 = vpop.f32.mrf.mxu0
  %v525 = vpop.f32.mrf.mxu0
  %v526 = vadd.f32 0.0, %v525
  %v527 = vpop.f32.mrf.mxu0
  %528 = vmatprep.mubr.bf16.mxu0 0
  %529 = vmatmul.mubr.bf16.gmra.mxu0 %v250
  %v530 = vpop.f32.mrf.mxu0
  %v531 = vadd.f32 0.0, %v530
  %v532 = vpop.f32.mrf.mxu0
  %v533 = vpop.f32.mrf.mxu0
  %v534 = vadd.f32 0.0, %v533
  %v535 = vpop.f32.mrf.mxu0
  %536 = vmatprep.mubr.bf16.mxu0 0
  %537 = vmatmul.mubr.bf16.gmra.mxu0 %v253
  %v538 = vpop.f32.mrf.mxu0
  %v539 = vadd.f32 0.0, %v538
  %v540 = vpop.f32.mrf.mxu0
  %v541 = vpop.f32.mrf.mxu0
  %v542 = vadd.f32 0.0, %v541
  %v543 = vpop.f32.mrf.mxu0
  %544 = vmatprep.mubr.bf16.mxu0 0
  %545 = vmatmul.mubr.bf16.gmra.mxu0 %v256
  %v546 = vpop.f32.mrf.mxu0
  %v547 = vadd.f32 0.0, %v546
  %v548 = vpop.f32.mrf.mxu0
  %v549 = vpop.f32.mrf.mxu0
  %v550 = vadd.f32 0.0, %v549
  %v551 = vpop.f32.mrf.mxu0
  %552 = vmatprep.mubr.bf16.mxu0 0
  %553 = vmatmul.mubr.bf16.gmra.mxu0 %v259
  %v554 = vpop.f32.mrf.mxu0
  %v555 = vadd.f32 0.0, %v554
  %v556 = vpop.f32.mrf.mxu0
  %v557 = vpop.f32.mrf.mxu0
  %v558 = vadd.f32 0.0, %v557
  %v559 = vpop.f32.mrf.mxu0
  %560 = vmatprep.mubr.bf16.mxu0 0
  %561 = vmatmul.mubr.bf16.gmra.mxu0 %v262
  %v562 = vpop.f32.mrf.mxu0
  %v563 = vadd.f32 0.0, %v562
  %v564 = vpop.f32.mrf.mxu0
  %v565 = vpop.f32.mrf.mxu0
  %v566 = vadd.f32 0.0, %v565
  %v567 = vpop.f32.mrf.mxu0
  %568 = vmatprep.mubr.bf16.mxu0 0
  %569 = vmatmul.mubr.bf16.gmra.mxu0 %v265
  %v570 = vpop.f32.mrf.mxu0
  %v571 = vadd.f32 0.0, %v570
  %v572 = vpop.f32.mrf.mxu0
  %v573 = vpop.f32.mrf.mxu0
  %v574 = vadd.f32 0.0, %v573
  %v575 = vpop.f32.mrf.mxu0
  %576 = vmatprep.mubr.bf16.mxu0 0
  %577 = vmatmul.mubr.bf16.gmra.mxu0 %v268
  %v578 = vpop.f32.mrf.mxu0
  %v579 = vadd.f32 0.0, %v578
  %v580 = vpop.f32.mrf.mxu0
  %v581 = vpop.f32.mrf.mxu0
  %v582 = vadd.f32 0.0, %v581
  %v583 = vpop.f32.mrf.mxu0
  %584 = vmatprep.mubr.bf16.mxu0 0
  %585 = vmatmul.mubr.bf16.gmra.mxu0 %v271
  %v586 = vpop.f32.mrf.mxu0
  %v587 = vadd.f32 0.0, %v586
  %v588 = vpop.f32.mrf.mxu0
  %v589 = vpop.f32.mrf.mxu0
  %v590 = vadd.f32 0.0, %v589
  %v591 = vpop.f32.mrf.mxu0
  %592 = vmatprep.mubr.bf16.mxu0 0
  %593 = vmatmul.mubr.bf16.gmra.mxu0 %v274
  %v594 = vpop.f32.mrf.mxu0
  %v595 = vadd.f32 0.0, %v594
  %v596 = vpop.f32.mrf.mxu0
  %v597 = vpop.f32.mrf.mxu0
  %v598 = vadd.f32 0.0, %v597
  %v599 = vpop.f32.mrf.mxu0
  %600 = vmatprep.mubr.bf16.mxu0 0
  %601 = vmatmul.mubr.bf16.gmra.mxu0 %v277
  %v602 = vpop.f32.mrf.mxu0
  %v603 = vadd.f32 0.0, %v602
  %v604 = vpop.f32.mrf.mxu0
  %v605 = vpop.f32.mrf.mxu0
  %v606 = vadd.f32 0.0, %v605
  %v607 = vpop.f32.mrf.mxu0
  %608 = vmatprep.mubr.bf16.mxu0 0
  %609 = vmatmul.mubr.bf16.gmra.mxu0 %v280
  %v610 = vpop.f32.mrf.mxu0
  %v611 = vadd.f32 0.0, %v610
  %v612 = vpop.f32.mrf.mxu0
  %v613 = vpop.f32.mrf.mxu0
  %v614 = vadd.f32 0.0, %v613
  %v615 = vpop.f32.mrf.mxu0
  %616 = vmatprep.mubr.bf16.mxu0 0
  %617 = vmatmul.mubr.bf16.gmra.mxu0 %v283
  %v618 = vpop.f32.mrf.mxu0
  %v619 = vadd.f32 0.0, %v618
  %v620 = vpop.f32.mrf.mxu0
  %v621 = vpop.f32.mrf.mxu0
  %v622 = vadd.f32 0.0, %v621
  %v623 = vpop.f32.mrf.mxu0
  %624 = vmatprep.mubr.bf16.mxu0 0
  %625 = vmatmul.mubr.bf16.gmra.mxu0 %v286
  %v626 = vpop.f32.mrf.mxu0
  %v627 = vadd.f32 0.0, %v626
  %v628 = vpop.f32.mrf.mxu0
  %v629 = vpop.f32.mrf.mxu0
  %v630 = vadd.f32 0.0, %v629
  %v631 = vpop.f32.mrf.mxu0
  %632 = vmatprep.mubr.bf16.mxu0 0
  %633 = vmatmul.mubr.bf16.gmra.mxu0 %v289
  %v634 = vpop.f32.mrf.mxu0
  %v635 = vadd.f32 0.0, %v634
  %v636 = vpop.f32.mrf.mxu0
  %v637 = vpop.f32.mrf.mxu0
  %v638 = vadd.f32 0.0, %v637
  %v639 = vpop.f32.mrf.mxu0
  %640 = vmatprep.mubr.bf16.mxu0 0
  %641 = vmatmul.mubr.bf16.gmra.mxu0 %v292
  %v642 = vpop.f32.mrf.mxu0
  %v643 = vadd.f32 0.0, %v642
  %v644 = vpop.f32.mrf.mxu0
  %v645 = vpop.f32.mrf.mxu0
  %v646 = vadd.f32 0.0, %v645
  %v647 = vpop.f32.mrf.mxu0
  %648 = vmatprep.mubr.bf16.mxu0 0
  %649 = vmatmul.mubr.bf16.gmra.mxu0 %v295
  %v650 = vpop.f32.mrf.mxu0
  %v651 = vadd.f32 0.0, %v650
  %v652 = vpop.f32.mrf.mxu0
  %v653 = vpop.f32.mrf.mxu0
  %v654 = vadd.f32 0.0, %v653
  %v655 = vpop.f32.mrf.mxu0
  %656 = vmatprep.mubr.bf16.mxu0 0
  %657 = vmatmul.mubr.bf16.gmra.mxu0 %v298
  %v658 = vpop.f32.mrf.mxu0
  %v659 = vadd.f32 0.0, %v658
  %v660 = vpop.f32.mrf.mxu0
  %v661 = vpop.f32.mrf.mxu0
  %v662 = vadd.f32 0.0, %v661
  %v663 = vpop.f32.mrf.mxu0
  %664 = vmatprep.mubr.bf16.mxu0 0
  %665 = vmatmul.mubr.bf16.gmra.mxu0 %v301
  %v666 = vpop.f32.mrf.mxu0
  %v667 = vadd.f32 0.0, %v666
  %v668 = vpop.f32.mrf.mxu0
  %v669 = vpop.f32.mrf.mxu0
  %v670 = vadd.f32 0.0, %v669
  %v671 = vpop.f32.mrf.mxu0
  %672 = vmatprep.mubr.bf16.mxu0 0
  %673 = vmatmul.mubr.bf16.gmra.mxu0 %v304
  %v674 = vpop.f32.mrf.mxu0
  %v675 = vadd.f32 0.0, %v674
  %v676 = vpop.f32.mrf.mxu0
  %v677 = vpop.f32.mrf.mxu0
  %v678 = vadd.f32 0.0, %v677
  %v679 = vpop.f32.mrf.mxu0
  %680 = vmatprep.mubr.bf16.mxu0 0
  %681 = vmatmul.mubr.bf16.gmra.mxu0 %v307
  %v682 = vpop.f32.mrf.mxu0
  %v683 = vadd.f32 0.0, %v682
  %v684 = vpop.f32.mrf.mxu0
  %v685 = vpop.f32.mrf.mxu0
  %v686 = vadd.f32 0.0, %v685
  %v687 = vpop.f32.mrf.mxu0
  %688 = vmatprep.mubr.bf16.mxu0 0
  %689 = vmatmul.mubr.bf16.gmra.mxu0 %v310
  %v690 = vpop.f32.mrf.mxu0
  %v691 = vadd.f32 0.0, %v690
  %v692 = vpop.f32.mrf.mxu0
  %v693 = vpop.f32.mrf.mxu0
  %v694 = vadd.f32 0.0, %v693
  %v695 = vpop.f32.mrf.mxu0
  %696 = vmatprep.mubr.bf16.mxu0 0
  %697 = vmatmul.mubr.bf16.gmra.mxu0 %v313
  %v698 = vpop.f32.mrf.mxu0
  %v699 = vadd.f32 0.0, %v698
  %v700 = vpop.f32.mrf.mxu0
  %v701 = vpop.f32.mrf.mxu0
  %v702 = vadd.f32 0.0, %v701
  %v703 = vpop.f32.mrf.mxu0
  %704 = vmatprep.mubr.bf16.mxu0 0
  %705 = vmatmul.mubr.bf16.gmra.mxu0 %v316
  %v706 = vpop.f32.mrf.mxu0
  %v707 = vadd.f32 0.0, %v706
  %v708 = vpop.f32.mrf.mxu0
  %v709 = vpop.f32.mrf.mxu0
  %v710 = vadd.f32 0.0, %v709
  %v711 = vpop.f32.mrf.mxu0
  %712 = vmatprep.mubr.bf16.mxu0 0
  %713 = vmatmul.mubr.bf16.gmra.mxu0 %v319
  %v714 = vpop.f32.mrf.mxu0
  %v715 = vadd.f32 0.0, %v714
  %v716 = vpop.f32.mrf.mxu0
  %v717 = vpop.f32.mrf.mxu0
  %v718 = vadd.f32 0.0, %v717
  %v719 = vpop.f32.mrf.mxu0
  %720 = vmatprep.mubr.bf16.mxu0 0
  %721 = vmatmul.mubr.bf16.gmra.mxu0 %v322
  %v722 = vpop.f32.mrf.mxu0
  %v723 = vadd.f32 0.0, %v722
  %v724 = vpop.f32.mrf.mxu0
  %v725 = vpop.f32.mrf.mxu0
  %v726 = vadd.f32 0.0, %v725
  %v727 = vpop.f32.mrf.mxu0
  %728 = vmatprep.mubr.bf16.mxu0 0
  %729 = vmatmul.mubr.bf16.gmra.mxu0 %v325
  %v730 = vpop.f32.mrf.mxu0
  %v731 = vadd.f32 0.0, %v730
  %v732 = vpop.f32.mrf.mxu0
  %v733 = vpop.f32.mrf.mxu0
  %v734 = vadd.f32 0.0, %v733
  %v735 = vpop.f32.mrf.mxu0
  %736 = vmatprep.mubr.bf16.mxu0 0
  %737 = vmatmul.mubr.bf16.gmra.mxu0 %v328
  %v738 = vpop.f32.mrf.mxu0
  %v739 = vadd.f32 0.0, %v738
  %v740 = vpop.f32.mrf.mxu0
  %v741 = vpop.f32.mrf.mxu0
  %v742 = vadd.f32 0.0, %v741
  %v743 = vpop.f32.mrf.mxu0
  %744 = vmatprep.mubr.bf16.mxu0 0
  %745 = vmatmul.mubr.bf16.gmra.mxu0 %v331
  %v746 = vpop.f32.mrf.mxu0
  %v747 = vadd.f32 0.0, %v746
  %v748 = vpop.f32.mrf.mxu0
  %v749 = vpop.f32.mrf.mxu0
  %v750 = vadd.f32 0.0, %v749
  %v751 = vpop.f32.mrf.mxu0
  %752 = vmatprep.mubr.bf16.mxu0 0
  %753 = vmatmul.mubr.bf16.gmra.mxu0 %v334
  %v754 = vpop.f32.mrf.mxu0
  %v755 = vadd.f32 0.0, %v754
  %v756 = vpop.f32.mrf.mxu0
  %v757 = vpop.f32.mrf.mxu0
  %v758 = vadd.f32 0.0, %v757
  %v759 = vpop.f32.mrf.mxu0
  %760 = vmatprep.mubr.bf16.mxu0 0
  %761 = vmatmul.mubr.bf16.gmra.mxu0 %v337
  %v762 = vpop.f32.mrf.mxu0
  %v763 = vadd.f32 0.0, %v762
  %v764 = vpop.f32.mrf.mxu0
  %v765 = vpop.f32.mrf.mxu0
  %v766 = vadd.f32 0.0, %v765
  %v767 = vpop.f32.mrf.mxu0
  %768 = vmatprep.mubr.bf16.mxu0 0
  %769 = vmatmul.mubr.bf16.gmra.mxu0 %v340
  %v770 = vpop.f32.mrf.mxu0
  %v771 = vadd.f32 0.0, %v770
  %v772 = vpop.f32.mrf.mxu0
  %v773 = vpop.f32.mrf.mxu0
  %v774 = vadd.f32 0.0, %v773
  %v775 = vpop.f32.mrf.mxu0
  %776 = vmatprep.mubr.bf16.mxu0 0
  %777 = vmatmul.mubr.bf16.gmra.mxu0 %v343
  %v778 = vpop.f32.mrf.mxu0
  %v779 = vadd.f32 0.0, %v778
  %v780 = vpop.f32.mrf.mxu0
  %v781 = vpop.f32.mrf.mxu0
  %v782 = vadd.f32 0.0, %v781
  %v783 = vpop.f32.mrf.mxu0
  %784 = vmatprep.mubr.bf16.mxu0 0
  %785 = vmatmul.mubr.bf16.gmra.mxu0 %v346
  %v786 = vpop.f32.mrf.mxu0
  %v787 = vadd.f32 0.0, %v786
  %v788 = vpop.f32.mrf.mxu0
  %v789 = vpop.f32.mrf.mxu0
  %v790 = vadd.f32 0.0, %v789
  %v791 = vpop.f32.mrf.mxu0
  %792 = vmatprep.mubr.bf16.mxu0 0
  %793 = vmatmul.mubr.bf16.gmra.mxu0 %v349
  %v794 = vpop.f32.mrf.mxu0
  %v795 = vadd.f32 0.0, %v794
  %v796 = vpop.f32.mrf.mxu0
  %v797 = vpop.f32.mrf.mxu0
  %v798 = vadd.f32 0.0, %v797
  %v799 = vpop.f32.mrf.mxu0
  %800 = vmatprep.mubr.bf16.mxu0 0
  %801 = vmatmul.mubr.bf16.gmra.mxu0 %v352
  %v802 = vpop.f32.mrf.mxu0
  %v803 = vadd.f32 0.0, %v802
  %v804 = vpop.f32.mrf.mxu0
  %v805 = vpop.f32.mrf.mxu0
  %v806 = vadd.f32 0.0, %v805
  %v807 = vpop.f32.mrf.mxu0
  %808 = vmatprep.mubr.bf16.mxu0 0
  %809 = vmatmul.mubr.bf16.gmra.mxu0 %v355
  %v810 = vpop.f32.mrf.mxu0
  %v811 = vadd.f32 0.0, %v810
  %v812 = vpop.f32.mrf.mxu0
  %v813 = vpop.f32.mrf.mxu0
  %v814 = vadd.f32 0.0, %v813
  %v815 = vpop.f32.mrf.mxu0
  %816 = vmatprep.mubr.bf16.mxu0 0
  %817 = vmatmul.mubr.bf16.gmra.mxu0 %v358
  %v818 = vpop.f32.mrf.mxu0
  %v819 = vadd.f32 0.0, %v818
  %v820 = vpop.f32.mrf.mxu0
  %v821 = vpop.f32.mrf.mxu0
  %v822 = vadd.f32 0.0, %v821
  %v823 = vpop.f32.mrf.mxu0
  %824 = vmatprep.mubr.bf16.mxu0 0
  %825 = vmatmul.mubr.bf16.gmra.mxu0 %v361
  %v826 = vpop.f32.mrf.mxu0
  %v827 = vadd.f32 0.0, %v826
  %v828 = vpop.f32.mrf.mxu0
  %v829 = vpop.f32.mrf.mxu0
  %v830 = vadd.f32 0.0, %v829
  %v831 = vpop.f32.mrf.mxu0
  %832 = vmatprep.mubr.bf16.mxu0 0
  %833 = vmatmul.mubr.bf16.gmra.mxu0 %v364
  %v834 = vpop.f32.mrf.mxu0
  %v835 = vadd.f32 0.0, %v834
  %v836 = vpop.f32.mrf.mxu0
  %v837 = vpop.f32.mrf.mxu0
  %v838 = vadd.f32 0.0, %v837
  %v839 = vpop.f32.mrf.mxu0
  %840 = vmatprep.mubr.bf16.mxu0 0
  %841 = vmatmul.mubr.bf16.gmra.mxu0 %v367
  %v842 = vpop.f32.mrf.mxu0
  %v843 = vadd.f32 0.0, %v842
  %v844 = vpop.f32.mrf.mxu0
  %v845 = vpop.f32.mrf.mxu0
  %v846 = vadd.f32 0.0, %v845
  %v847 = vpop.f32.mrf.mxu0
  %848 = vmatprep.mubr.bf16.mxu0 0
  %849 = vmatmul.mubr.bf16.gmra.mxu0 %v370
  %v850 = vpop.f32.mrf.mxu0
  %v851 = vadd.f32 0.0, %v850
  %v852 = vpop.f32.mrf.mxu0
  %v853 = vpop.f32.mrf.mxu0
  %v854 = vadd.f32 0.0, %v853
  %v855 = vpop.f32.mrf.mxu0
  %856 = vmatprep.mubr.bf16.mxu0 0
  %857 = vmatmul.mubr.bf16.gmra.mxu0 %v373
  %v858 = vpop.f32.mrf.mxu0
  %v859 = vadd.f32 0.0, %v858
  %v860 = vpop.f32.mrf.mxu0
  %v861 = vpop.f32.mrf.mxu0
  %v862 = vadd.f32 0.0, %v861
  %v863 = vpop.f32.mrf.mxu0
  %864 = vmatprep.mubr.bf16.mxu0 0
  %865 = vmatmul.mubr.bf16.gmra.mxu0 %v376
  %v866 = vpop.f32.mrf.mxu0
  %v867 = vadd.f32 0.0, %v866
  %v868 = vpop.f32.mrf.mxu0
  %v869 = vpop.f32.mrf.mxu0
  %v870 = vadd.f32 0.0, %v869
  %v871 = vpop.f32.mrf.mxu0
  %872 = vmatprep.mubr.bf16.mxu0 0
  %873 = vmatmul.mubr.bf16.gmra.mxu0 %v379
  %v874 = vpop.f32.mrf.mxu0
  %v875 = vadd.f32 0.0, %v874
  %v876 = vpop.f32.mrf.mxu0
  %v877 = vpop.f32.mrf.mxu0
  %v878 = vadd.f32 0.0, %v877
  %v879 = vpop.f32.mrf.mxu0
  %880 = vmatprep.mubr.bf16.mxu0 0
  %881 = vmatmul.mubr.bf16.gmra.mxu0 %v382
  %v882 = vpop.f32.mrf.mxu0
  %v883 = vadd.f32 0.0, %v882
  %v884 = vpop.f32.mrf.mxu0
  %v885 = vpop.f32.mrf.mxu0
  %v886 = vadd.f32 0.0, %v885
  %v887 = vpop.f32.mrf.mxu0
  %888 = vmatprep.mubr.bf16.mxu0 0
  %889 = vmatmul.mubr.bf16.gmra.mxu0 %v385
  %v890 = vpop.f32.mrf.mxu0
  %v891 = vadd.f32 0.0, %v890
  %v892 = vpop.f32.mrf.mxu0
  %v893 = vpop.f32.mrf.mxu0
  %v894 = vadd.f32 0.0, %v893
  %v895 = vpop.f32.mrf.mxu0
  %896 = vmatprep.mubr.bf16.mxu0 0
  %897 = vmatmul.mubr.bf16.gmra.mxu0 %v388
  %v898 = vpop.f32.mrf.mxu0
  %v899 = vadd.f32 0.0, %v898
  %v900 = vpop.f32.mrf.mxu0
  %v901 = vpop.f32.mrf.mxu0
  %v902 = vadd.f32 0.0, %v901
  %v903 = vpop.f32.mrf.mxu0
  %904 = vmatprep.mubr.bf16.mxu0 0
  %905 = vmatmul.mubr.bf16.gmra.mxu0 %v391
  %v906 = vpop.f32.mrf.mxu0
  %v907 = vadd.f32 0.0, %v906
  %v908 = vpop.f32.mrf.mxu0
  %v909 = vpop.f32.mrf.mxu0
  %v910 = vadd.f32 0.0, %v909
  %v911 = vpop.f32.mrf.mxu0
  %912 = vmatprep.mubr.bf16.mxu0 0
  %913 = vmatmul.mubr.bf16.gmra.mxu0 %v394
  %v914 = vpop.f32.mrf.mxu0
  %v915 = vadd.f32 0.0, %v914
  %v916 = vpop.f32.mrf.mxu0
  %v917 = vpop.f32.mrf.mxu0
  %v918 = vadd.f32 0.0, %v917
  %v919 = vpop.f32.mrf.mxu0
  %920 = vmatprep.mubr.bf16.mxu0 0
  %921 = vmatmul.mubr.bf16.gmra.mxu0 %v397
  %v922 = vpop.f32.mrf.mxu0
  %v923 = vadd.f32 0.0, %v922
  %v924 = vpop.f32.mrf.mxu0
  %v925 = vpop.f32.mrf.mxu0
  %v926 = vadd.f32 0.0, %v925
  %v927 = vpop.f32.mrf.mxu0
  %928 = vmatprep.mubr.bf16.mxu0 0
  %929 = vmatmul.mubr.bf16.gmra.mxu0 %v400
  %v930 = vpop.f32.mrf.mxu0
  %v931 = vadd.f32 0.0, %v930
  %v932 = vpop.f32.mrf.mxu0
  %v933 = vpop.f32.mrf.mxu0
  %v934 = vadd.f32 0.0, %v933
  %v935 = vpop.f32.mrf.mxu0
  %936 = vmatprep.mubr.bf16.mxu0 0
  %937 = vmatmul.mubr.bf16.gmra.mxu0 %v403
  %v938 = vpop.f32.mrf.mxu0
  %v939 = vadd.f32 0.0, %v938
  %v940 = vpop.f32.mrf.mxu0
  %v941 = vpop.f32.mrf.mxu0
  %v942 = vadd.f32 0.0, %v941
  %v943 = vpop.f32.mrf.mxu0
  %944 = vmatprep.mubr.bf16.mxu0 0
  %945 = vmatmul.mubr.bf16.gmra.mxu0 %v406
  %v946 = vpop.f32.mrf.mxu0
  %v947 = vadd.f32 0.0, %v946
  %v948 = vpop.f32.mrf.mxu0
  %v949 = vpop.f32.mrf.mxu0
  %v950 = vadd.f32 0.0, %v949
  %v951 = vpop.f32.mrf.mxu0
  %952 = vdwg.mxu0
  %v953 = vpack.c.bf16 %v446, %v443
  %v954 = vpack.c.bf16 %v454, %v451
  %v955 = vpack.c.bf16 %v462, %v459
  %v956 = vpack.c.bf16 %v470, %v467
  %v957 = vpack.c.bf16 %v478, %v475
  %v958 = vpack.c.bf16 %v486, %v483
  %v959 = vpack.c.bf16 %v494, %v491
  %v960 = vpack.c.bf16 %v502, %v499
  %v961 = vpack.c.bf16 %v510, %v507
  %v962 = vpack.c.bf16 %v518, %v515
  %v963 = vpack.c.bf16 %v526, %v523
  %v964 = vpack.c.bf16 %v534, %v531
  %v965 = vpack.c.bf16 %v542, %v539
  %v966 = vpack.c.bf16 %v550, %v547
  %v967 = vpack.c.bf16 %v558, %v555
  %v968 = vpack.c.bf16 %v566, %v563
  %v969 = vpack.c.bf16 %v574, %v571
  %v970 = vpack.c.bf16 %v582, %v579
  %v971 = vpack.c.bf16 %v590, %v587
  %v972 = vpack.c.bf16 %v598, %v595
  %v973 = vpack.c.bf16 %v606, %v603
  %v974 = vpack.c.bf16 %v614, %v611
  %v975 = vpack.c.bf16 %v622, %v619
  %v976 = vpack.c.bf16 %v630, %v627
  %v977 = vpack.c.bf16 %v638, %v635
  %v978 = vpack.c.bf16 %v646, %v643
  %v979 = vpack.c.bf16 %v654, %v651
  %v980 = vpack.c.bf16 %v662, %v659
  %v981 = vpack.c.bf16 %v670, %v667
  %v982 = vpack.c.bf16 %v678, %v675
  %v983 = vpack.c.bf16 %v686, %v683
  %v984 = vpack.c.bf16 %v694, %v691
  %v985 = vpack.c.bf16 %v702, %v699
  %v986 = vpack.c.bf16 %v710, %v707
  %v987 = vpack.c.bf16 %v718, %v715
  %v988 = vpack.c.bf16 %v726, %v723
  %v989 = vpack.c.bf16 %v734, %v731
  %v990 = vpack.c.bf16 %v742, %v739
  %v991 = vpack.c.bf16 %v750, %v747
  %v992 = vpack.c.bf16 %v758, %v755
  %v993 = vpack.c.bf16 %v766, %v763
  %v994 = vpack.c.bf16 %v774, %v771
  %v995 = vpack.c.bf16 %v782, %v779
  %v996 = vpack.c.bf16 %v790, %v787
  %v997 = vpack.c.bf16 %v798, %v795
  %v998 = vpack.c.bf16 %v806, %v803
  %v999 = vpack.c.bf16 %v814, %v811
  %v1000 = vpack.c.bf16 %v822, %v819
  %v1001 = vpack.c.bf16 %v830, %v827
  %v1002 = vpack.c.bf16 %v838, %v835
  %v1003 = vpack.c.bf16 %v846, %v843
  %v1004 = vpack.c.bf16 %v854, %v851
  %v1005 = vpack.c.bf16 %v862, %v859
  %v1006 = vpack.c.bf16 %v870, %v867
  %v1007 = vpack.c.bf16 %v878, %v875
  %v1008 = vpack.c.bf16 %v886, %v883
  %v1009 = vpack.c.bf16 %v894, %v891
  %v1010 = vpack.c.bf16 %v902, %v899
  %v1011 = vpack.c.bf16 %v910, %v907
  %v1012 = vpack.c.bf16 %v918, %v915
  %v1013 = vpack.c.bf16 %v926, %v923
  %v1014 = vpack.c.bf16 %v934, %v931
  %v1015 = vpack.c.bf16 %v942, %v939
  %v1016 = vpack.c.bf16 %v950, %v947
  %v1081 = vunpack.c.l.b16 %v953
  %v1082 = vunpack.c.h.b16 %v953
  %v1083 = vunpack.c.l.b16 %v954
  %v1084 = vunpack.c.h.b16 %v954
  %v1085 = vunpack.c.l.b16 %v955
  %v1086 = vunpack.c.h.b16 %v955
  %v1087 = vunpack.c.l.b16 %v956
  %v1088 = vunpack.c.h.b16 %v956
  %v1089 = vunpack.c.l.b16 %v957
  %v1090 = vunpack.c.h.b16 %v957
  %v1091 = vunpack.c.l.b16 %v958
  %v1092 = vunpack.c.h.b16 %v958
  %v1093 = vunpack.c.l.b16 %v959
  %v1094 = vunpack.c.h.b16 %v959
  %v1095 = vunpack.c.l.b16 %v960
  %v1096 = vunpack.c.h.b16 %v960
  %v1097 = vunpack.c.l.b16 %v961
  %v1098 = vunpack.c.h.b16 %v961
  %v1099 = vunpack.c.l.b16 %v962
  %v1100 = vunpack.c.h.b16 %v962
  %v1101 = vunpack.c.l.b16 %v963
  %v1102 = vunpack.c.h.b16 %v963
  %v1103 = vunpack.c.l.b16 %v964
  %v1104 = vunpack.c.h.b16 %v964
  %v1105 = vunpack.c.l.b16 %v965
  %v1106 = vunpack.c.h.b16 %v965
  %v1107 = vunpack.c.l.b16 %v966
  %v1108 = vunpack.c.h.b16 %v966
  %v1109 = vunpack.c.l.b16 %v967
  %v1110 = vunpack.c.h.b16 %v967
  %v1111 = vunpack.c.l.b16 %v968
  %v1112 = vunpack.c.h.b16 %v968
  %v1113 = vunpack.c.l.b16 %v969
  %v1114 = vunpack.c.h.b16 %v969
  %v1115 = vunpack.c.l.b16 %v970
  %v1116 = vunpack.c.h.b16 %v970
  %v1117 = vunpack.c.l.b16 %v971
  %v1118 = vunpack.c.h.b16 %v971
  %v1119 = vunpack.c.l.b16 %v972
  %v1120 = vunpack.c.h.b16 %v972
  %v1121 = vunpack.c.l.b16 %v973
  %v1122 = vunpack.c.h.b16 %v973
  %v1123 = vunpack.c.l.b16 %v974
  %v1124 = vunpack.c.h.b16 %v974
  %v1125 = vunpack.c.l.b16 %v975
  %v1126 = vunpack.c.h.b16 %v975
  %v1127 = vunpack.c.l.b16 %v976
  %v1128 = vunpack.c.h.b16 %v976
  %v1129 = vunpack.c.l.b16 %v977
  %v1130 = vunpack.c.h.b16 %v977
  %v1131 = vunpack.c.l.b16 %v978
  %v1132 = vunpack.c.h.b16 %v978
  %v1133 = vunpack.c.l.b16 %v979
  %v1134 = vunpack.c.h.b16 %v979
  %v1135 = vunpack.c.l.b16 %v980
  %v1136 = vunpack.c.h.b16 %v980
  %v1137 = vunpack.c.l.b16 %v981
  %v1138 = vunpack.c.h.b16 %v981
  %v1139 = vunpack.c.l.b16 %v982
  %v1140 = vunpack.c.h.b16 %v982
  %v1141 = vunpack.c.l.b16 %v983
  %v1142 = vunpack.c.h.b16 %v983
  %v1143 = vunpack.c.l.b16 %v984
  %v1144 = vunpack.c.h.b16 %v984
  %v1145 = vunpack.c.l.b16 %v985
  %v1146 = vunpack.c.h.b16 %v985
  %v1147 = vunpack.c.l.b16 %v986
  %v1148 = vunpack.c.h.b16 %v986
  %v1149 = vunpack.c.l.b16 %v987
  %v1150 = vunpack.c.h.b16 %v987
  %v1151 = vunpack.c.l.b16 %v988
  %v1152 = vunpack.c.h.b16 %v988
  %v1153 = vunpack.c.l.b16 %v989
  %v1154 = vunpack.c.h.b16 %v989
  %v1155 = vunpack.c.l.b16 %v990
  %v1156 = vunpack.c.h.b16 %v990
  %v1157 = vunpack.c.l.b16 %v991
  %v1158 = vunpack.c.h.b16 %v991
  %v1159 = vunpack.c.l.b16 %v992
  %v1160 = vunpack.c.h.b16 %v992
  %v1161 = vunpack.c.l.b16 %v993
  %v1162 = vunpack.c.h.b16 %v993
  %v1163 = vunpack.c.l.b16 %v994
  %v1164 = vunpack.c.h.b16 %v994
  %v1165 = vunpack.c.l.b16 %v995
  %v1166 = vunpack.c.h.b16 %v995
  %v1167 = vunpack.c.l.b16 %v996
  %v1168 = vunpack.c.h.b16 %v996
  %v1169 = vunpack.c.l.b16 %v997
  %v1170 = vunpack.c.h.b16 %v997
  %v1171 = vunpack.c.l.b16 %v998
  %v1172 = vunpack.c.h.b16 %v998
  %v1173 = vunpack.c.l.b16 %v999
  %v1174 = vunpack.c.h.b16 %v999
  %v1175 = vunpack.c.l.b16 %v1000
  %v1176 = vunpack.c.h.b16 %v1000
  %v1177 = vunpack.c.l.b16 %v1001
  %v1178 = vunpack.c.h.b16 %v1001
  %v1179 = vunpack.c.l.b16 %v1002
  %v1180 = vunpack.c.h.b16 %v1002
  %v1181 = vunpack.c.l.b16 %v1003
  %v1182 = vunpack.c.h.b16 %v1003
  %v1183 = vunpack.c.l.b16 %v1004
  %v1184 = vunpack.c.h.b16 %v1004
  %v1185 = vunpack.c.l.b16 %v1005
  %v1186 = vunpack.c.h.b16 %v1005
  %v1187 = vunpack.c.l.b16 %v1006
  %v1188 = vunpack.c.h.b16 %v1006
  %v1189 = vunpack.c.l.b16 %v1007
  %v1190 = vunpack.c.h.b16 %v1007
  %v1191 = vunpack.c.l.b16 %v1008
  %v1192 = vunpack.c.h.b16 %v1008
  %v1193 = vunpack.c.l.b16 %v1009
  %v1194 = vunpack.c.h.b16 %v1009
  %v1195 = vunpack.c.l.b16 %v1010
  %v1196 = vunpack.c.h.b16 %v1010
  %v1197 = vunpack.c.l.b16 %v1011
  %v1198 = vunpack.c.h.b16 %v1011
  %v1199 = vunpack.c.l.b16 %v1012
  %v1200 = vunpack.c.h.b16 %v1012
  %v1201 = vunpack.c.l.b16 %v1013
  %v1202 = vunpack.c.h.b16 %v1013
  %v1203 = vunpack.c.l.b16 %v1014
  %v1204 = vunpack.c.h.b16 %v1014
  %v1205 = vunpack.c.l.b16 %v1015
  %v1206 = vunpack.c.h.b16 %v1015
  %v1207 = vunpack.c.l.b16 %v1016
  %v1208 = vunpack.c.h.b16 %v1016
  %v1209 = vpack.c.b16 %v1081, %v1081
  %v1210 = vpack.c.b16 %v1082, %v1082
  %v1211 = vpack.c.b16 %v1083, %v1083
  %v1212 = vpack.c.b16 %v1084, %v1084
  %v1213 = vpack.c.b16 %v1085, %v1085
  %v1214 = vpack.c.b16 %v1086, %v1086
  %v1215 = vpack.c.b16 %v1087, %v1087
  %v1216 = vpack.c.b16 %v1088, %v1088
  %v1217 = vpack.c.b16 %v1089, %v1089
  %v1218 = vpack.c.b16 %v1090, %v1090
  %v1219 = vpack.c.b16 %v1091, %v1091
  %v1220 = vpack.c.b16 %v1092, %v1092
  %v1221 = vpack.c.b16 %v1093, %v1093
  %v1222 = vpack.c.b16 %v1094, %v1094
  %v1223 = vpack.c.b16 %v1095, %v1095
  %v1224 = vpack.c.b16 %v1096, %v1096
  %v1225 = vpack.c.b16 %v1097, %v1097
  %v1226 = vpack.c.b16 %v1098, %v1098
  %v1227 = vpack.c.b16 %v1099, %v1099
  %v1228 = vpack.c.b16 %v1100, %v1100
  %v1229 = vpack.c.b16 %v1101, %v1101
  %v1230 = vpack.c.b16 %v1102, %v1102
  %v1231 = vpack.c.b16 %v1103, %v1103
  %v1232 = vpack.c.b16 %v1104, %v1104
  %v1233 = vpack.c.b16 %v1105, %v1105
  %v1234 = vpack.c.b16 %v1106, %v1106
  %v1235 = vpack.c.b16 %v1107, %v1107
  %v1236 = vpack.c.b16 %v1108, %v1108
  %v1237 = vpack.c.b16 %v1109, %v1109
  %v1238 = vpack.c.b16 %v1110, %v1110
  %v1239 = vpack.c.b16 %v1111, %v1111
  %v1240 = vpack.c.b16 %v1112, %v1112
  %v1241 = vpack.c.b16 %v1113, %v1113
  %v1242 = vpack.c.b16 %v1114, %v1114
  %v1243 = vpack.c.b16 %v1115, %v1115
  %v1244 = vpack.c.b16 %v1116, %v1116
  %v1245 = vpack.c.b16 %v1117, %v1117
  %v1246 = vpack.c.b16 %v1118, %v1118
  %v1247 = vpack.c.b16 %v1119, %v1119
  %v1248 = vpack.c.b16 %v1120, %v1120
  %v1249 = vpack.c.b16 %v1121, %v1121
  %v1250 = vpack.c.b16 %v1122, %v1122
  %v1251 = vpack.c.b16 %v1123, %v1123
  %v1252 = vpack.c.b16 %v1124, %v1124
  %v1253 = vpack.c.b16 %v1125, %v1125
  %v1254 = vpack.c.b16 %v1126, %v1126
  %v1255 = vpack.c.b16 %v1127, %v1127
  %v1256 = vpack.c.b16 %v1128, %v1128
  %v1257 = vpack.c.b16 %v1129, %v1129
  %v1258 = vpack.c.b16 %v1130, %v1130
  %v1259 = vpack.c.b16 %v1131, %v1131
  %v1260 = vpack.c.b16 %v1132, %v1132
  %v1261 = vpack.c.b16 %v1133, %v1133
  %v1262 = vpack.c.b16 %v1134, %v1134
  %v1263 = vpack.c.b16 %v1135, %v1135
  %v1264 = vpack.c.b16 %v1136, %v1136
  %v1265 = vpack.c.b16 %v1137, %v1137
  %v1266 = vpack.c.b16 %v1138, %v1138
  %v1267 = vpack.c.b16 %v1139, %v1139
  %v1268 = vpack.c.b16 %v1140, %v1140
  %v1269 = vpack.c.b16 %v1141, %v1141
  %v1270 = vpack.c.b16 %v1142, %v1142
  %v1271 = vpack.c.b16 %v1143, %v1143
  %v1272 = vpack.c.b16 %v1144, %v1144
  %v1273 = vpack.c.b16 %v1145, %v1145
  %v1274 = vpack.c.b16 %v1146, %v1146
  %v1275 = vpack.c.b16 %v1147, %v1147
  %v1276 = vpack.c.b16 %v1148, %v1148
  %v1277 = vpack.c.b16 %v1149, %v1149
  %v1278 = vpack.c.b16 %v1150, %v1150
  %v1279 = vpack.c.b16 %v1151, %v1151
  %v1280 = vpack.c.b16 %v1152, %v1152
  %v1281 = vpack.c.b16 %v1153, %v1153
  %v1282 = vpack.c.b16 %v1154, %v1154
  %v1283 = vpack.c.b16 %v1155, %v1155
  %v1284 = vpack.c.b16 %v1156, %v1156
  %v1285 = vpack.c.b16 %v1157, %v1157
  %v1286 = vpack.c.b16 %v1158, %v1158
  %v1287 = vpack.c.b16 %v1159, %v1159
  %v1288 = vpack.c.b16 %v1160, %v1160
  %v1289 = vpack.c.b16 %v1161, %v1161
  %v1290 = vpack.c.b16 %v1162, %v1162
  %v1291 = vpack.c.b16 %v1163, %v1163
  %v1292 = vpack.c.b16 %v1164, %v1164
  %v1293 = vpack.c.b16 %v1165, %v1165
  %v1294 = vpack.c.b16 %v1166, %v1166
  %v1295 = vpack.c.b16 %v1167, %v1167
  %v1296 = vpack.c.b16 %v1168, %v1168
  %v1297 = vpack.c.b16 %v1169, %v1169
  %v1298 = vpack.c.b16 %v1170, %v1170
  %v1299 = vpack.c.b16 %v1171, %v1171
  %v1300 = vpack.c.b16 %v1172, %v1172
  %v1301 = vpack.c.b16 %v1173, %v1173
  %v1302 = vpack.c.b16 %v1174, %v1174
  %v1303 = vpack.c.b16 %v1175, %v1175
  %v1304 = vpack.c.b16 %v1176, %v1176
  %v1305 = vpack.c.b16 %v1177, %v1177
  %v1306 = vpack.c.b16 %v1178, %v1178
  %v1307 = vpack.c.b16 %v1179, %v1179
  %v1308 = vpack.c.b16 %v1180, %v1180
  %v1309 = vpack.c.b16 %v1181, %v1181
  %v1310 = vpack.c.b16 %v1182, %v1182
  %v1311 = vpack.c.b16 %v1183, %v1183
  %v1312 = vpack.c.b16 %v1184, %v1184
  %v1313 = vpack.c.b16 %v1185, %v1185
  %v1314 = vpack.c.b16 %v1186, %v1186
  %v1315 = vpack.c.b16 %v1187, %v1187
  %v1316 = vpack.c.b16 %v1188, %v1188
  %v1317 = vpack.c.b16 %v1189, %v1189
  %v1318 = vpack.c.b16 %v1190, %v1190
  %v1319 = vpack.c.b16 %v1191, %v1191
  %v1320 = vpack.c.b16 %v1192, %v1192
  %v1321 = vpack.c.b16 %v1193, %v1193
  %v1322 = vpack.c.b16 %v1194, %v1194
  %v1323 = vpack.c.b16 %v1195, %v1195
  %v1324 = vpack.c.b16 %v1196, %v1196
  %v1325 = vpack.c.b16 %v1197, %v1197
  %v1326 = vpack.c.b16 %v1198, %v1198
  %v1327 = vpack.c.b16 %v1199, %v1199
  %v1328 = vpack.c.b16 %v1200, %v1200
  %v1329 = vpack.c.b16 %v1201, %v1201
  %v1330 = vpack.c.b16 %v1202, %v1202
  %v1331 = vpack.c.b16 %v1203, %v1203
  %v1332 = vpack.c.b16 %v1204, %v1204
  %v1333 = vpack.c.b16 %v1205, %v1205
  %v1334 = vpack.c.b16 %v1206, %v1206
  %v1335 = vpack.c.b16 %v1207, %v1207
  %v1336 = vpack.c.b16 %v1208, %v1208
  %vm1465 = vcmask 27648
  %1466 = vst.msk [vmem:[%s2] sm:$0xf] %vm1465, %v1209
  %1467 = vst.msk [vmem:[%s2 + $0x4] sm:$0xf] %vm1465, %v1210
  %1468 = vst.msk [vmem:[%s2 + $0x8] sm:$0xf] %vm1465, %v1211
  %1469 = vst.msk [vmem:[%s2 + $0xc] sm:$0xf] %vm1465, %v1212
  %1470 = vst.msk [vmem:[%s2 + $0x10] sm:$0xf] %vm1465, %v1213
  %1471 = vst.msk [vmem:[%s2 + $0x14] sm:$0xf] %vm1465, %v1214
  %1472 = vst.msk [vmem:[%s2 + $0x18] sm:$0xf] %vm1465, %v1215
  %1473 = vst.msk [vmem:[%s2 + $0x1c] sm:$0xf] %vm1465, %v1216
  %1474 = vst.msk [vmem:[%s2 + $0x20] sm:$0xf] %vm1465, %v1217
  %1475 = vst.msk [vmem:[%s2 + $0x24] sm:$0xf] %vm1465, %v1218
  %1476 = vst.msk [vmem:[%s2 + $0x28] sm:$0xf] %vm1465, %v1219
  %1477 = vst.msk [vmem:[%s2 + $0x2c] sm:$0xf] %vm1465, %v1220
  %1478 = vst.msk [vmem:[%s2 + $0x30] sm:$0xf] %vm1465, %v1221
  %1479 = vst.msk [vmem:[%s2 + $0x34] sm:$0xf] %vm1465, %v1222
  %1480 = vst.msk [vmem:[%s2 + $0x38] sm:$0xf] %vm1465, %v1223
  %1481 = vst.msk [vmem:[%s2 + $0x3c] sm:$0xf] %vm1465, %v1224
  %1482 = vst.msk [vmem:[%s2 + $0x40] sm:$0xf] %vm1465, %v1225
  %1483 = vst.msk [vmem:[%s2 + $0x44] sm:$0xf] %vm1465, %v1226
  %1484 = vst.msk [vmem:[%s2 + $0x48] sm:$0xf] %vm1465, %v1227
  %1485 = vst.msk [vmem:[%s2 + $0x4c] sm:$0xf] %vm1465, %v1228
  %1486 = vst.msk [vmem:[%s2 + $0x50] sm:$0xf] %vm1465, %v1229
  %1487 = vst.msk [vmem:[%s2 + $0x54] sm:$0xf] %vm1465, %v1230
  %1488 = vst.msk [vmem:[%s2 + $0x58] sm:$0xf] %vm1465, %v1231
  %1489 = vst.msk [vmem:[%s2 + $0x5c] sm:$0xf] %vm1465, %v1232
  %1490 = vst.msk [vmem:[%s2 + $0x60] sm:$0xf] %vm1465, %v1233
  %1491 = vst.msk [vmem:[%s2 + $0x64] sm:$0xf] %vm1465, %v1234
  %1492 = vst.msk [vmem:[%s2 + $0x68] sm:$0xf] %vm1465, %v1235
  %1493 = vst.msk [vmem:[%s2 + $0x6c] sm:$0xf] %vm1465, %v1236
  %1494 = vst.msk [vmem:[%s2 + $0x70] sm:$0xf] %vm1465, %v1237
  %1495 = vst.msk [vmem:[%s2 + $0x74] sm:$0xf] %vm1465, %v1238
  %1496 = vst.msk [vmem:[%s2 + $0x78] sm:$0xf] %vm1465, %v1239
  %1497 = vst.msk [vmem:[%s2 + $0x7c] sm:$0xf] %vm1465, %v1240
  %1498 = vst.msk [vmem:[%s2 + $0x80] sm:$0xf] %vm1465, %v1241
  %1499 = vst.msk [vmem:[%s2 + $0x84] sm:$0xf] %vm1465, %v1242
  %1500 = vst.msk [vmem:[%s2 + $0x88] sm:$0xf] %vm1465, %v1243
  %1501 = vst.msk [vmem:[%s2 + $0x8c] sm:$0xf] %vm1465, %v1244
  %1502 = vst.msk [vmem:[%s2 + $0x90] sm:$0xf] %vm1465, %v1245
  %1503 = vst.msk [vmem:[%s2 + $0x94] sm:$0xf] %vm1465, %v1246
  %1504 = vst.msk [vmem:[%s2 + $0x98] sm:$0xf] %vm1465, %v1247
  %1505 = vst.msk [vmem:[%s2 + $0x9c] sm:$0xf] %vm1465, %v1248
  %1506 = vst.msk [vmem:[%s2 + $0xa0] sm:$0xf] %vm1465, %v1249
  %1507 = vst.msk [vmem:[%s2 + $0xa4] sm:$0xf] %vm1465, %v1250
  %1508 = vst.msk [vmem:[%s2 + $0xa8] sm:$0xf] %vm1465, %v1251
  %1509 = vst.msk [vmem:[%s2 + $0xac] sm:$0xf] %vm1465, %v1252
  %1510 = vst.msk [vmem:[%s2 + $0xb0] sm:$0xf] %vm1465, %v1253
  %1511 = vst.msk [vmem:[%s2 + $0xb4] sm:$0xf] %vm1465, %v1254
  %1512 = vst.msk [vmem:[%s2 + $0xb8] sm:$0xf] %vm1465, %v1255
  %1513 = vst.msk [vmem:[%s2 + $0xbc] sm:$0xf] %vm1465, %v1256
  %1514 = vst.msk [vmem:[%s2 + $0xc0] sm:$0xf] %vm1465, %v1257
  %1515 = vst.msk [vmem:[%s2 + $0xc4] sm:$0xf] %vm1465, %v1258
  %1516 = vst.msk [vmem:[%s2 + $0xc8] sm:$0xf] %vm1465, %v1259
  %1517 = vst.msk [vmem:[%s2 + $0xcc] sm:$0xf] %vm1465, %v1260
  %1518 = vst.msk [vmem:[%s2 + $0xd0] sm:$0xf] %vm1465, %v1261
  %1519 = vst.msk [vmem:[%s2 + $0xd4] sm:$0xf] %vm1465, %v1262
  %1520 = vst.msk [vmem:[%s2 + $0xd8] sm:$0xf] %vm1465, %v1263
  %1521 = vst.msk [vmem:[%s2 + $0xdc] sm:$0xf] %vm1465, %v1264
  %1522 = vst.msk [vmem:[%s2 + $0xe0] sm:$0xf] %vm1465, %v1265
  %1523 = vst.msk [vmem:[%s2 + $0xe4] sm:$0xf] %vm1465, %v1266
  %1524 = vst.msk [vmem:[%s2 + $0xe8] sm:$0xf] %vm1465, %v1267
  %1525 = vst.msk [vmem:[%s2 + $0xec] sm:$0xf] %vm1465, %v1268
  %1526 = vst.msk [vmem:[%s2 + $0xf0] sm:$0xf] %vm1465, %v1269
  %1527 = vst.msk [vmem:[%s2 + $0xf4] sm:$0xf] %vm1465, %v1270
  %1528 = vst.msk [vmem:[%s2 + $0xf8] sm:$0xf] %vm1465, %v1271
  %1529 = vst.msk [vmem:[%s2 + $0xfc] sm:$0xf] %vm1465, %v1272
  %1530 = vst.msk [vmem:[%s2 + $0x100] sm:$0xf] %vm1465, %v1273
  %1531 = vst.msk [vmem:[%s2 + $0x104] sm:$0xf] %vm1465, %v1274
  %1532 = vst.msk [vmem:[%s2 + $0x108] sm:$0xf] %vm1465, %v1275
  %1533 = vst.msk [vmem:[%s2 + $0x10c] sm:$0xf] %vm1465, %v1276
  %1534 = vst.msk [vmem:[%s2 + $0x110] sm:$0xf] %vm1465, %v1277
  %1535 = vst.msk [vmem:[%s2 + $0x114] sm:$0xf] %vm1465, %v1278
  %1536 = vst.msk [vmem:[%s2 + $0x118] sm:$0xf] %vm1465, %v1279
  %1537 = vst.msk [vmem:[%s2 + $0x11c] sm:$0xf] %vm1465, %v1280
  %1538 = vst.msk [vmem:[%s2 + $0x120] sm:$0xf] %vm1465, %v1281
  %1539 = vst.msk [vmem:[%s2 + $0x124] sm:$0xf] %vm1465, %v1282
  %1540 = vst.msk [vmem:[%s2 + $0x128] sm:$0xf] %vm1465, %v1283
  %1541 = vst.msk [vmem:[%s2 + $0x12c] sm:$0xf] %vm1465, %v1284
  %1542 = vst.msk [vmem:[%s2 + $0x130] sm:$0xf] %vm1465, %v1285
  %1543 = vst.msk [vmem:[%s2 + $0x134] sm:$0xf] %vm1465, %v1286
  %1544 = vst.msk [vmem:[%s2 + $0x138] sm:$0xf] %vm1465, %v1287
  %1545 = vst.msk [vmem:[%s2 + $0x13c] sm:$0xf] %vm1465, %v1288
  %1546 = vst.msk [vmem:[%s2 + $0x140] sm:$0xf] %vm1465, %v1289
  %1547 = vst.msk [vmem:[%s2 + $0x144] sm:$0xf] %vm1465, %v1290
  %1548 = vst.msk [vmem:[%s2 + $0x148] sm:$0xf] %vm1465, %v1291
  %1549 = vst.msk [vmem:[%s2 + $0x14c] sm:$0xf] %vm1465, %v1292
  %1550 = vst.msk [vmem:[%s2 + $0x150] sm:$0xf] %vm1465, %v1293
  %1551 = vst.msk [vmem:[%s2 + $0x154] sm:$0xf] %vm1465, %v1294
  %1552 = vst.msk [vmem:[%s2 + $0x158] sm:$0xf] %vm1465, %v1295
  %1553 = vst.msk [vmem:[%s2 + $0x15c] sm:$0xf] %vm1465, %v1296
  %1554 = vst.msk [vmem:[%s2 + $0x160] sm:$0xf] %vm1465, %v1297
  %1555 = vst.msk [vmem:[%s2 + $0x164] sm:$0xf] %vm1465, %v1298
  %1556 = vst.msk [vmem:[%s2 + $0x168] sm:$0xf] %vm1465, %v1299
  %1557 = vst.msk [vmem:[%s2 + $0x16c] sm:$0xf] %vm1465, %v1300
  %1558 = vst.msk [vmem:[%s2 + $0x170] sm:$0xf] %vm1465, %v1301
  %1559 = vst.msk [vmem:[%s2 + $0x174] sm:$0xf] %vm1465, %v1302
  %1560 = vst.msk [vmem:[%s2 + $0x178] sm:$0xf] %vm1465, %v1303
  %1561 = vst.msk [vmem:[%s2 + $0x17c] sm:$0xf] %vm1465, %v1304
  %1562 = vst.msk [vmem:[%s2 + $0x180] sm:$0xf] %vm1465, %v1305
  %1563 = vst.msk [vmem:[%s2 + $0x184] sm:$0xf] %vm1465, %v1306
  %1564 = vst.msk [vmem:[%s2 + $0x188] sm:$0xf] %vm1465, %v1307
  %1565 = vst.msk [vmem:[%s2 + $0x18c] sm:$0xf] %vm1465, %v1308
  %1566 = vst.msk [vmem:[%s2 + $0x190] sm:$0xf] %vm1465, %v1309
  %1567 = vst.msk [vmem:[%s2 + $0x194] sm:$0xf] %vm1465, %v1310
  %1568 = vst.msk [vmem:[%s2 + $0x198] sm:$0xf] %vm1465, %v1311
  %1569 = vst.msk [vmem:[%s2 + $0x19c] sm:$0xf] %vm1465, %v1312
  %1570 = vst.msk [vmem:[%s2 + $0x1a0] sm:$0xf] %vm1465, %v1313
  %1571 = vst.msk [vmem:[%s2 + $0x1a4] sm:$0xf] %vm1465, %v1314
  %1572 = vst.msk [vmem:[%s2 + $0x1a8] sm:$0xf] %vm1465, %v1315
  %1573 = vst.msk [vmem:[%s2 + $0x1ac] sm:$0xf] %vm1465, %v1316
  %1574 = vst.msk [vmem:[%s2 + $0x1b0] sm:$0xf] %vm1465, %v1317
  %1575 = vst.msk [vmem:[%s2 + $0x1b4] sm:$0xf] %vm1465, %v1318
  %1576 = vst.msk [vmem:[%s2 + $0x1b8] sm:$0xf] %vm1465, %v1319
  %1577 = vst.msk [vmem:[%s2 + $0x1bc] sm:$0xf] %vm1465, %v1320
  %1578 = vst.msk [vmem:[%s2 + $0x1c0] sm:$0xf] %vm1465, %v1321
  %1579 = vst.msk [vmem:[%s2 + $0x1c4] sm:$0xf] %vm1465, %v1322
  %1580 = vst.msk [vmem:[%s2 + $0x1c8] sm:$0xf] %vm1465, %v1323
  %1581 = vst.msk [vmem:[%s2 + $0x1cc] sm:$0xf] %vm1465, %v1324
  %1582 = vst.msk [vmem:[%s2 + $0x1d0] sm:$0xf] %vm1465, %v1325
  %1583 = vst.msk [vmem:[%s2 + $0x1d4] sm:$0xf] %vm1465, %v1326
  %1584 = vst.msk [vmem:[%s2 + $0x1d8] sm:$0xf] %vm1465, %v1327
  %1585 = vst.msk [vmem:[%s2 + $0x1dc] sm:$0xf] %vm1465, %v1328
  %1586 = vst.msk [vmem:[%s2 + $0x1e0] sm:$0xf] %vm1465, %v1329
  %1587 = vst.msk [vmem:[%s2 + $0x1e4] sm:$0xf] %vm1465, %v1330
  %1588 = vst.msk [vmem:[%s2 + $0x1e8] sm:$0xf] %vm1465, %v1331
  %1589 = vst.msk [vmem:[%s2 + $0x1ec] sm:$0xf] %vm1465, %v1332
  %1590 = vst.msk [vmem:[%s2 + $0x1f0] sm:$0xf] %vm1465, %v1333
  %1591 = vst.msk [vmem:[%s2 + $0x1f4] sm:$0xf] %vm1465, %v1334
  %1592 = vst.msk [vmem:[%s2 + $0x1f8] sm:$0xf] %vm1465, %v1335
  %1593 = vst.msk [vmem:[%s2 + $0x1fc] sm:$0xf] %vm1465, %v1336
  %vm1594 = vcmask 31744
  %v1595 = vsel %vm1594, %v443, 0.0
  %v1596 = vsel %vm1594, %v446, 0.0
  %v1597 = vadd.f32 %v1595, %v1596
  %v1598 = vsel %vm1594, %v451, 0.0
  %v1599 = vadd.f32 %v1597, %v1598
  %v1600 = vsel %vm1594, %v454, 0.0
  %v1601 = vadd.f32 %v1599, %v1600
  %v1602 = vsel %vm1594, %v459, 0.0
  %v1603 = vadd.f32 %v1601, %v1602
  %v1604 = vsel %vm1594, %v462, 0.0
  %v1605 = vadd.f32 %v1603, %v1604
  %v1606 = vsel %vm1594, %v467, 0.0
  %v1607 = vadd.f32 %v1605, %v1606
  %v1608 = vsel %vm1594, %v470, 0.0
  %v1609 = vadd.f32 %v1607, %v1608
  %v1610 = vsel %vm1594, %v475, 0.0
  %v1611 = vadd.f32 %v1609, %v1610
  %v1612 = vsel %vm1594, %v478, 0.0
  %v1613 = vadd.f32 %v1611, %v1612
  %v1614 = vsel %vm1594, %v483, 0.0
  %v1615 = vadd.f32 %v1613, %v1614
  %v1616 = vsel %vm1594, %v486, 0.0
  %v1617 = vadd.f32 %v1615, %v1616
  %v1618 = vsel %vm1594, %v491, 0.0
  %v1619 = vadd.f32 %v1617, %v1618
  %v1620 = vsel %vm1594, %v494, 0.0
  %v1621 = vadd.f32 %v1619, %v1620
  %v1622 = vsel %vm1594, %v499, 0.0
  %v1623 = vadd.f32 %v1621, %v1622
  %v1624 = vsel %vm1594, %v502, 0.0
  %v1625 = vadd.f32 %v1623, %v1624
  %v1626 = vsel %vm1594, %v507, 0.0
  %v1627 = vadd.f32 %v1625, %v1626
  %v1628 = vsel %vm1594, %v510, 0.0
  %v1629 = vadd.f32 %v1627, %v1628
  %v1630 = vsel %vm1594, %v515, 0.0
  %v1631 = vadd.f32 %v1629, %v1630
  %v1632 = vsel %vm1594, %v518, 0.0
  %v1633 = vadd.f32 %v1631, %v1632
  %v1634 = vsel %vm1594, %v523, 0.0
  %v1635 = vadd.f32 %v1633, %v1634
  %v1636 = vsel %vm1594, %v526, 0.0
  %v1637 = vadd.f32 %v1635, %v1636
  %v1638 = vsel %vm1594, %v531, 0.0
  %v1639 = vadd.f32 %v1637, %v1638
  %v1640 = vsel %vm1594, %v534, 0.0
  %v1641 = vadd.f32 %v1639, %v1640
  %v1642 = vsel %vm1594, %v539, 0.0
  %v1643 = vadd.f32 %v1641, %v1642
  %v1644 = vsel %vm1594, %v542, 0.0
  %v1645 = vadd.f32 %v1643, %v1644
  %v1646 = vsel %vm1594, %v547, 0.0
  %v1647 = vadd.f32 %v1645, %v1646
  %v1648 = vsel %vm1594, %v550, 0.0
  %v1649 = vadd.f32 %v1647, %v1648
  %v1650 = vsel %vm1594, %v555, 0.0
  %v1651 = vadd.f32 %v1649, %v1650
  %v1652 = vsel %vm1594, %v558, 0.0
  %v1653 = vadd.f32 %v1651, %v1652
  %v1654 = vsel %vm1594, %v563, 0.0
  %v1655 = vadd.f32 %v1653, %v1654
  %v1656 = vsel %vm1594, %v566, 0.0
  %v1657 = vadd.f32 %v1655, %v1656
  %v1658 = vsel %vm1594, %v571, 0.0
  %v1659 = vadd.f32 %v1657, %v1658
  %v1660 = vsel %vm1594, %v574, 0.0
  %v1661 = vadd.f32 %v1659, %v1660
  %v1662 = vsel %vm1594, %v579, 0.0
  %v1663 = vadd.f32 %v1661, %v1662
  %v1664 = vsel %vm1594, %v582, 0.0
  %v1665 = vadd.f32 %v1663, %v1664
  %v1666 = vsel %vm1594, %v587, 0.0
  %v1667 = vadd.f32 %v1665, %v1666
  %v1668 = vsel %vm1594, %v590, 0.0
  %v1669 = vadd.f32 %v1667, %v1668
  %v1670 = vsel %vm1594, %v595, 0.0
  %v1671 = vadd.f32 %v1669, %v1670
  %v1672 = vsel %vm1594, %v598, 0.0
  %v1673 = vadd.f32 %v1671, %v1672
  %v1674 = vsel %vm1594, %v603, 0.0
  %v1675 = vadd.f32 %v1673, %v1674
  %v1676 = vsel %vm1594, %v606, 0.0
  %v1677 = vadd.f32 %v1675, %v1676
  %v1678 = vsel %vm1594, %v611, 0.0
  %v1679 = vadd.f32 %v1677, %v1678
  %v1680 = vsel %vm1594, %v614, 0.0
  %v1681 = vadd.f32 %v1679, %v1680
  %v1682 = vsel %vm1594, %v619, 0.0
  %v1683 = vadd.f32 %v1681, %v1682
  %v1684 = vsel %vm1594, %v622, 0.0
  %v1685 = vadd.f32 %v1683, %v1684
  %v1686 = vsel %vm1594, %v627, 0.0
  %v1687 = vadd.f32 %v1685, %v1686
  %v1688 = vsel %vm1594, %v630, 0.0
  %v1689 = vadd.f32 %v1687, %v1688
  %v1690 = vsel %vm1594, %v635, 0.0
  %v1691 = vadd.f32 %v1689, %v1690
  %v1692 = vsel %vm1594, %v638, 0.0
  %v1693 = vadd.f32 %v1691, %v1692
  %v1694 = vsel %vm1594, %v643, 0.0
  %v1695 = vadd.f32 %v1693, %v1694
  %v1696 = vsel %vm1594, %v646, 0.0
  %v1697 = vadd.f32 %v1695, %v1696
  %v1698 = vsel %vm1594, %v651, 0.0
  %v1699 = vadd.f32 %v1697, %v1698
  %v1700 = vsel %vm1594, %v654, 0.0
  %v1701 = vadd.f32 %v1699, %v1700
  %v1702 = vsel %vm1594, %v659, 0.0
  %v1703 = vadd.f32 %v1701, %v1702
  %v1704 = vsel %vm1594, %v662, 0.0
  %v1705 = vadd.f32 %v1703, %v1704
  %v1706 = vsel %vm1594, %v667, 0.0
  %v1707 = vadd.f32 %v1705, %v1706
  %v1708 = vsel %vm1594, %v670, 0.0
  %v1709 = vadd.f32 %v1707, %v1708
  %v1710 = vsel %vm1594, %v675, 0.0
  %v1711 = vadd.f32 %v1709, %v1710
  %v1712 = vsel %vm1594, %v678, 0.0
  %v1713 = vadd.f32 %v1711, %v1712
  %v1714 = vsel %vm1594, %v683, 0.0
  %v1715 = vadd.f32 %v1713, %v1714
  %v1716 = vsel %vm1594, %v686, 0.0
  %v1717 = vadd.f32 %v1715, %v1716
  %v1718 = vsel %vm1594, %v691, 0.0
  %v1719 = vadd.f32 %v1717, %v1718
  %v1720 = vsel %vm1594, %v694, 0.0
  %v1721 = vadd.f32 %v1719, %v1720
  %v1722 = vsel %vm1594, %v699, 0.0
  %v1723 = vadd.f32 %v1721, %v1722
  %v1724 = vsel %vm1594, %v702, 0.0
  %v1725 = vadd.f32 %v1723, %v1724
  %v1726 = vsel %vm1594, %v707, 0.0
  %v1727 = vadd.f32 %v1725, %v1726
  %v1728 = vsel %vm1594, %v710, 0.0
  %v1729 = vadd.f32 %v1727, %v1728
  %v1730 = vsel %vm1594, %v715, 0.0
  %v1731 = vadd.f32 %v1729, %v1730
  %v1732 = vsel %vm1594, %v718, 0.0
  %v1733 = vadd.f32 %v1731, %v1732
  %v1734 = vsel %vm1594, %v723, 0.0
  %v1735 = vadd.f32 %v1733, %v1734
  %v1736 = vsel %vm1594, %v726, 0.0
  %v1737 = vadd.f32 %v1735, %v1736
  %v1738 = vsel %vm1594, %v731, 0.0
  %v1739 = vadd.f32 %v1737, %v1738
  %v1740 = vsel %vm1594, %v734, 0.0
  %v1741 = vadd.f32 %v1739, %v1740
  %v1742 = vsel %vm1594, %v739, 0.0
  %v1743 = vadd.f32 %v1741, %v1742
  %v1744 = vsel %vm1594, %v742, 0.0
  %v1745 = vadd.f32 %v1743, %v1744
  %v1746 = vsel %vm1594, %v747, 0.0
  %v1747 = vadd.f32 %v1745, %v1746
  %v1748 = vsel %vm1594, %v750, 0.0
  %v1749 = vadd.f32 %v1747, %v1748
  %v1750 = vsel %vm1594, %v755, 0.0
  %v1751 = vadd.f32 %v1749, %v1750
  %v1752 = vsel %vm1594, %v758, 0.0
  %v1753 = vadd.f32 %v1751, %v1752
  %v1754 = vsel %vm1594, %v763, 0.0
  %v1755 = vadd.f32 %v1753, %v1754
  %v1756 = vsel %vm1594, %v766, 0.0
  %v1757 = vadd.f32 %v1755, %v1756
  %v1758 = vsel %vm1594, %v771, 0.0
  %v1759 = vadd.f32 %v1757, %v1758
  %v1760 = vsel %vm1594, %v774, 0.0
  %v1761 = vadd.f32 %v1759, %v1760
  %v1762 = vsel %vm1594, %v779, 0.0
  %v1763 = vadd.f32 %v1761, %v1762
  %v1764 = vsel %vm1594, %v782, 0.0
  %v1765 = vadd.f32 %v1763, %v1764
  %v1766 = vsel %vm1594, %v787, 0.0
  %v1767 = vadd.f32 %v1765, %v1766
  %v1768 = vsel %vm1594, %v790, 0.0
  %v1769 = vadd.f32 %v1767, %v1768
  %v1770 = vsel %vm1594, %v795, 0.0
  %v1771 = vadd.f32 %v1769, %v1770
  %v1772 = vsel %vm1594, %v798, 0.0
  %v1773 = vadd.f32 %v1771, %v1772
  %v1774 = vsel %vm1594, %v803, 0.0
  %v1775 = vadd.f32 %v1773, %v1774
  %v1776 = vsel %vm1594, %v806, 0.0
  %v1777 = vadd.f32 %v1775, %v1776
  %v1778 = vsel %vm1594, %v811, 0.0
  %v1779 = vadd.f32 %v1777, %v1778
  %v1780 = vsel %vm1594, %v814, 0.0
  %v1781 = vadd.f32 %v1779, %v1780
  %v1782 = vsel %vm1594, %v819, 0.0
  %v1783 = vadd.f32 %v1781, %v1782
  %v1784 = vsel %vm1594, %v822, 0.0
  %v1785 = vadd.f32 %v1783, %v1784
  %v1786 = vsel %vm1594, %v827, 0.0
  %v1787 = vadd.f32 %v1785, %v1786
  %v1788 = vsel %vm1594, %v830, 0.0
  %v1789 = vadd.f32 %v1787, %v1788
  %v1790 = vsel %vm1594, %v835, 0.0
  %v1791 = vadd.f32 %v1789, %v1790
  %v1792 = vsel %vm1594, %v838, 0.0
  %v1793 = vadd.f32 %v1791, %v1792
  %v1794 = vsel %vm1594, %v843, 0.0
  %v1795 = vadd.f32 %v1793, %v1794
  %v1796 = vsel %vm1594, %v846, 0.0
  %v1797 = vadd.f32 %v1795, %v1796
  %v1798 = vsel %vm1594, %v851, 0.0
  %v1799 = vadd.f32 %v1797, %v1798
  %v1800 = vsel %vm1594, %v854, 0.0
  %v1801 = vadd.f32 %v1799, %v1800
  %v1802 = vsel %vm1594, %v859, 0.0
  %v1803 = vadd.f32 %v1801, %v1802
  %v1804 = vsel %vm1594, %v862, 0.0
  %v1805 = vadd.f32 %v1803, %v1804
  %v1806 = vsel %vm1594, %v867, 0.0
  %v1807 = vadd.f32 %v1805, %v1806
  %v1808 = vsel %vm1594, %v870, 0.0
  %v1809 = vadd.f32 %v1807, %v1808
  %v1810 = vsel %vm1594, %v875, 0.0
  %v1811 = vadd.f32 %v1809, %v1810
  %v1812 = vsel %vm1594, %v878, 0.0
  %v1813 = vadd.f32 %v1811, %v1812
  %v1814 = vsel %vm1594, %v883, 0.0
  %v1815 = vadd.f32 %v1813, %v1814
  %v1816 = vsel %vm1594, %v886, 0.0
  %v1817 = vadd.f32 %v1815, %v1816
  %v1818 = vsel %vm1594, %v891, 0.0
  %v1819 = vadd.f32 %v1817, %v1818
  %v1820 = vsel %vm1594, %v894, 0.0
  %v1821 = vadd.f32 %v1819, %v1820
  %v1822 = vsel %vm1594, %v899, 0.0
  %v1823 = vadd.f32 %v1821, %v1822
  %v1824 = vsel %vm1594, %v902, 0.0
  %v1825 = vadd.f32 %v1823, %v1824
  %v1826 = vsel %vm1594, %v907, 0.0
  %v1827 = vadd.f32 %v1825, %v1826
  %v1828 = vsel %vm1594, %v910, 0.0
  %v1829 = vadd.f32 %v1827, %v1828
  %v1830 = vsel %vm1594, %v915, 0.0
  %v1831 = vadd.f32 %v1829, %v1830
  %v1832 = vsel %vm1594, %v918, 0.0
  %v1833 = vadd.f32 %v1831, %v1832
  %v1834 = vsel %vm1594, %v923, 0.0
  %v1835 = vadd.f32 %v1833, %v1834
  %v1836 = vsel %vm1594, %v926, 0.0
  %v1837 = vadd.f32 %v1835, %v1836
  %v1838 = vsel %vm1594, %v931, 0.0
  %v1839 = vadd.f32 %v1837, %v1838
  %v1840 = vsel %vm1594, %v934, 0.0
  %v1841 = vadd.f32 %v1839, %v1840
  %v1842 = vsel %vm1594, %v939, 0.0
  %v1843 = vadd.f32 %v1841, %v1842
  %v1844 = vsel %vm1594, %v942, 0.0
  %v1845 = vadd.f32 %v1843, %v1844
  %v1846 = vsel %vm1594, %v947, 0.0
  %v1847 = vadd.f32 %v1845, %v1846
  %v1848 = vsel %vm1594, %v950, 0.0
  %v1849 = vadd.f32 %v1847, %v1848
  %v1850 = vrot.slane %v1849, 4
  %v1851 = vadd.f32 %v1849, %v1850
  %v1852 = vrot.slane %v1851, 2
  %v1853 = vadd.f32 %v1851, %v1852
  %v1854 = vrot.slane %v1853, 1
  %v1855 = vadd.f32 %v1853, %v1854
  %vm1856 = vcmask 24576
  %1857 = vst.msk [vmem:[%s3] sm:$0x1] %vm1856, %v1855
  %v1858 = vmul.f32 %v443, %v443
  %v1859 = vmul.f32 %v446, %v446
  %v1860 = vmul.f32 %v451, %v451
  %v1861 = vmul.f32 %v454, %v454
  %v1862 = vmul.f32 %v459, %v459
  %v1863 = vmul.f32 %v462, %v462
  %v1864 = vmul.f32 %v467, %v467
  %v1865 = vmul.f32 %v470, %v470
  %v1866 = vmul.f32 %v475, %v475
  %v1867 = vmul.f32 %v478, %v478
  %v1868 = vmul.f32 %v483, %v483
  %v1869 = vmul.f32 %v486, %v486
  %v1870 = vmul.f32 %v491, %v491
  %v1871 = vmul.f32 %v494, %v494
  %v1872 = vmul.f32 %v499, %v499
  %v1873 = vmul.f32 %v502, %v502
  %v1874 = vmul.f32 %v507, %v507
  %v1875 = vmul.f32 %v510, %v510
  %v1876 = vmul.f32 %v515, %v515
  %v1877 = vmul.f32 %v518, %v518
  %v1878 = vmul.f32 %v523, %v523
  %v1879 = vmul.f32 %v526, %v526
  %v1880 = vmul.f32 %v531, %v531
  %v1881 = vmul.f32 %v534, %v534
  %v1882 = vmul.f32 %v539, %v539
  %v1883 = vmul.f32 %v542, %v542
  %v1884 = vmul.f32 %v547, %v547
  %v1885 = vmul.f32 %v550, %v550
  %v1886 = vmul.f32 %v555, %v555
  %v1887 = vmul.f32 %v558, %v558
  %v1888 = vmul.f32 %v563, %v563
  %v1889 = vmul.f32 %v566, %v566
  %v1890 = vmul.f32 %v571, %v571
  %v1891 = vmul.f32 %v574, %v574
  %v1892 = vmul.f32 %v579, %v579
  %v1893 = vmul.f32 %v582, %v582
  %v1894 = vmul.f32 %v587, %v587
  %v1895 = vmul.f32 %v590, %v590
  %v1896 = vmul.f32 %v595, %v595
  %v1897 = vmul.f32 %v598, %v598
  %v1898 = vmul.f32 %v603, %v603
  %v1899 = vmul.f32 %v606, %v606
  %v1900 = vmul.f32 %v611, %v611
  %v1901 = vmul.f32 %v614, %v614
  %v1902 = vmul.f32 %v619, %v619
  %v1903 = vmul.f32 %v622, %v622
  %v1904 = vmul.f32 %v627, %v627
  %v1905 = vmul.f32 %v630, %v630
  %v1906 = vmul.f32 %v635, %v635
  %v1907 = vmul.f32 %v638, %v638
  %v1908 = vmul.f32 %v643, %v643
  %v1909 = vmul.f32 %v646, %v646
  %v1910 = vmul.f32 %v651, %v651
  %v1911 = vmul.f32 %v654, %v654
  %v1912 = vmul.f32 %v659, %v659
  %v1913 = vmul.f32 %v662, %v662
  %v1914 = vmul.f32 %v667, %v667
  %v1915 = vmul.f32 %v670, %v670
  %v1916 = vmul.f32 %v675, %v675
  %v1917 = vmul.f32 %v678, %v678
  %v1918 = vmul.f32 %v683, %v683
  %v1919 = vmul.f32 %v686, %v686
  %v1920 = vmul.f32 %v691, %v691
  %v1921 = vmul.f32 %v694, %v694
  %v1922 = vmul.f32 %v699, %v699
  %v1923 = vmul.f32 %v702, %v702
  %v1924 = vmul.f32 %v707, %v707
  %v1925 = vmul.f32 %v710, %v710
  %v1926 = vmul.f32 %v715, %v715
  %v1927 = vmul.f32 %v718, %v718
  %v1928 = vmul.f32 %v723, %v723
  %v1929 = vmul.f32 %v726, %v726
  %v1930 = vmul.f32 %v731, %v731
  %v1931 = vmul.f32 %v734, %v734
  %v1932 = vmul.f32 %v739, %v739
  %v1933 = vmul.f32 %v742, %v742
  %v1934 = vmul.f32 %v747, %v747
  %v1935 = vmul.f32 %v750, %v750
  %v1936 = vmul.f32 %v755, %v755
  %v1937 = vmul.f32 %v758, %v758
  %v1938 = vmul.f32 %v763, %v763
  %v1939 = vmul.f32 %v766, %v766
  %v1940 = vmul.f32 %v771, %v771
  %v1941 = vmul.f32 %v774, %v774
  %v1942 = vmul.f32 %v779, %v779
  %v1943 = vmul.f32 %v782, %v782
  %v1944 = vmul.f32 %v787, %v787
  %v1945 = vmul.f32 %v790, %v790
  %v1946 = vmul.f32 %v795, %v795
  %v1947 = vmul.f32 %v798, %v798
  %v1948 = vmul.f32 %v803, %v803
  %v1949 = vmul.f32 %v806, %v806
  %v1950 = vmul.f32 %v811, %v811
  %v1951 = vmul.f32 %v814, %v814
  %v1952 = vmul.f32 %v819, %v819
  %v1953 = vmul.f32 %v822, %v822
  %v1954 = vmul.f32 %v827, %v827
  %v1955 = vmul.f32 %v830, %v830
  %v1956 = vmul.f32 %v835, %v835
  %v1957 = vmul.f32 %v838, %v838
  %v1958 = vmul.f32 %v843, %v843
  %v1959 = vmul.f32 %v846, %v846
  %v1960 = vmul.f32 %v851, %v851
  %v1961 = vmul.f32 %v854, %v854
  %v1962 = vmul.f32 %v859, %v859
  %v1963 = vmul.f32 %v862, %v862
  %v1964 = vmul.f32 %v867, %v867
  %v1965 = vmul.f32 %v870, %v870
  %v1966 = vmul.f32 %v875, %v875
  %v1967 = vmul.f32 %v878, %v878
  %v1968 = vmul.f32 %v883, %v883
  %v1969 = vmul.f32 %v886, %v886
  %v1970 = vmul.f32 %v891, %v891
  %v1971 = vmul.f32 %v894, %v894
  %v1972 = vmul.f32 %v899, %v899
  %v1973 = vmul.f32 %v902, %v902
  %v1974 = vmul.f32 %v907, %v907
  %v1975 = vmul.f32 %v910, %v910
  %v1976 = vmul.f32 %v915, %v915
  %v1977 = vmul.f32 %v918, %v918
  %v1978 = vmul.f32 %v923, %v923
  %v1979 = vmul.f32 %v926, %v926
  %v1980 = vmul.f32 %v931, %v931
  %v1981 = vmul.f32 %v934, %v934
  %v1982 = vmul.f32 %v939, %v939
  %v1983 = vmul.f32 %v942, %v942
  %v1984 = vmul.f32 %v947, %v947
  %v1985 = vmul.f32 %v950, %v950
  %v1986 = vsel %vm1594, %v1858, 0.0
  %v1987 = vsel %vm1594, %v1859, 0.0
  %v1988 = vadd.f32 %v1986, %v1987
  %v1989 = vsel %vm1594, %v1860, 0.0
  %v1990 = vadd.f32 %v1988, %v1989
  %v1991 = vsel %vm1594, %v1861, 0.0
  %v1992 = vadd.f32 %v1990, %v1991
  %v1993 = vsel %vm1594, %v1862, 0.0
  %v1994 = vadd.f32 %v1992, %v1993
  %v1995 = vsel %vm1594, %v1863, 0.0
  %v1996 = vadd.f32 %v1994, %v1995
  %v1997 = vsel %vm1594, %v1864, 0.0
  %v1998 = vadd.f32 %v1996, %v1997
  %v1999 = vsel %vm1594, %v1865, 0.0
  %v2000 = vadd.f32 %v1998, %v1999
  %v2001 = vsel %vm1594, %v1866, 0.0
  %v2002 = vadd.f32 %v2000, %v2001
  %v2003 = vsel %vm1594, %v1867, 0.0
  %v2004 = vadd.f32 %v2002, %v2003
  %v2005 = vsel %vm1594, %v1868, 0.0
  %v2006 = vadd.f32 %v2004, %v2005
  %v2007 = vsel %vm1594, %v1869, 0.0
  %v2008 = vadd.f32 %v2006, %v2007
  %v2009 = vsel %vm1594, %v1870, 0.0
  %v2010 = vadd.f32 %v2008, %v2009
  %v2011 = vsel %vm1594, %v1871, 0.0
  %v2012 = vadd.f32 %v2010, %v2011
  %v2013 = vsel %vm1594, %v1872, 0.0
  %v2014 = vadd.f32 %v2012, %v2013
  %v2015 = vsel %vm1594, %v1873, 0.0
  %v2016 = vadd.f32 %v2014, %v2015
  %v2017 = vsel %vm1594, %v1874, 0.0
  %v2018 = vadd.f32 %v2016, %v2017
  %v2019 = vsel %vm1594, %v1875, 0.0
  %v2020 = vadd.f32 %v2018, %v2019
  %v2021 = vsel %vm1594, %v1876, 0.0
  %v2022 = vadd.f32 %v2020, %v2021
  %v2023 = vsel %vm1594, %v1877, 0.0
  %v2024 = vadd.f32 %v2022, %v2023
  %v2025 = vsel %vm1594, %v1878, 0.0
  %v2026 = vadd.f32 %v2024, %v2025
  %v2027 = vsel %vm1594, %v1879, 0.0
  %v2028 = vadd.f32 %v2026, %v2027
  %v2029 = vsel %vm1594, %v1880, 0.0
  %v2030 = vadd.f32 %v2028, %v2029
  %v2031 = vsel %vm1594, %v1881, 0.0
  %v2032 = vadd.f32 %v2030, %v2031
  %v2033 = vsel %vm1594, %v1882, 0.0
  %v2034 = vadd.f32 %v2032, %v2033
  %v2035 = vsel %vm1594, %v1883, 0.0
  %v2036 = vadd.f32 %v2034, %v2035
  %v2037 = vsel %vm1594, %v1884, 0.0
  %v2038 = vadd.f32 %v2036, %v2037
  %v2039 = vsel %vm1594, %v1885, 0.0
  %v2040 = vadd.f32 %v2038, %v2039
  %v2041 = vsel %vm1594, %v1886, 0.0
  %v2042 = vadd.f32 %v2040, %v2041
  %v2043 = vsel %vm1594, %v1887, 0.0
  %v2044 = vadd.f32 %v2042, %v2043
  %v2045 = vsel %vm1594, %v1888, 0.0
  %v2046 = vadd.f32 %v2044, %v2045
  %v2047 = vsel %vm1594, %v1889, 0.0
  %v2048 = vadd.f32 %v2046, %v2047
  %v2049 = vsel %vm1594, %v1890, 0.0
  %v2050 = vadd.f32 %v2048, %v2049
  %v2051 = vsel %vm1594, %v1891, 0.0
  %v2052 = vadd.f32 %v2050, %v2051
  %v2053 = vsel %vm1594, %v1892, 0.0
  %v2054 = vadd.f32 %v2052, %v2053
  %v2055 = vsel %vm1594, %v1893, 0.0
  %v2056 = vadd.f32 %v2054, %v2055
  %v2057 = vsel %vm1594, %v1894, 0.0
  %v2058 = vadd.f32 %v2056, %v2057
  %v2059 = vsel %vm1594, %v1895, 0.0
  %v2060 = vadd.f32 %v2058, %v2059
  %v2061 = vsel %vm1594, %v1896, 0.0
  %v2062 = vadd.f32 %v2060, %v2061
  %v2063 = vsel %vm1594, %v1897, 0.0
  %v2064 = vadd.f32 %v2062, %v2063
  %v2065 = vsel %vm1594, %v1898, 0.0
  %v2066 = vadd.f32 %v2064, %v2065
  %v2067 = vsel %vm1594, %v1899, 0.0
  %v2068 = vadd.f32 %v2066, %v2067
  %v2069 = vsel %vm1594, %v1900, 0.0
  %v2070 = vadd.f32 %v2068, %v2069
  %v2071 = vsel %vm1594, %v1901, 0.0
  %v2072 = vadd.f32 %v2070, %v2071
  %v2073 = vsel %vm1594, %v1902, 0.0
  %v2074 = vadd.f32 %v2072, %v2073
  %v2075 = vsel %vm1594, %v1903, 0.0
  %v2076 = vadd.f32 %v2074, %v2075
  %v2077 = vsel %vm1594, %v1904, 0.0
  %v2078 = vadd.f32 %v2076, %v2077
  %v2079 = vsel %vm1594, %v1905, 0.0
  %v2080 = vadd.f32 %v2078, %v2079
  %v2081 = vsel %vm1594, %v1906, 0.0
  %v2082 = vadd.f32 %v2080, %v2081
  %v2083 = vsel %vm1594, %v1907, 0.0
  %v2084 = vadd.f32 %v2082, %v2083
  %v2085 = vsel %vm1594, %v1908, 0.0
  %v2086 = vadd.f32 %v2084, %v2085
  %v2087 = vsel %vm1594, %v1909, 0.0
  %v2088 = vadd.f32 %v2086, %v2087
  %v2089 = vsel %vm1594, %v1910, 0.0
  %v2090 = vadd.f32 %v2088, %v2089
  %v2091 = vsel %vm1594, %v1911, 0.0
  %v2092 = vadd.f32 %v2090, %v2091
  %v2093 = vsel %vm1594, %v1912, 0.0
  %v2094 = vadd.f32 %v2092, %v2093
  %v2095 = vsel %vm1594, %v1913, 0.0
  %v2096 = vadd.f32 %v2094, %v2095
  %v2097 = vsel %vm1594, %v1914, 0.0
  %v2098 = vadd.f32 %v2096, %v2097
  %v2099 = vsel %vm1594, %v1915, 0.0
  %v2100 = vadd.f32 %v2098, %v2099
  %v2101 = vsel %vm1594, %v1916, 0.0
  %v2102 = vadd.f32 %v2100, %v2101
  %v2103 = vsel %vm1594, %v1917, 0.0
  %v2104 = vadd.f32 %v2102, %v2103
  %v2105 = vsel %vm1594, %v1918, 0.0
  %v2106 = vadd.f32 %v2104, %v2105
  %v2107 = vsel %vm1594, %v1919, 0.0
  %v2108 = vadd.f32 %v2106, %v2107
  %v2109 = vsel %vm1594, %v1920, 0.0
  %v2110 = vadd.f32 %v2108, %v2109
  %v2111 = vsel %vm1594, %v1921, 0.0
  %v2112 = vadd.f32 %v2110, %v2111
  %v2113 = vsel %vm1594, %v1922, 0.0
  %v2114 = vadd.f32 %v2112, %v2113
  %v2115 = vsel %vm1594, %v1923, 0.0
  %v2116 = vadd.f32 %v2114, %v2115
  %v2117 = vsel %vm1594, %v1924, 0.0
  %v2118 = vadd.f32 %v2116, %v2117
  %v2119 = vsel %vm1594, %v1925, 0.0
  %v2120 = vadd.f32 %v2118, %v2119
  %v2121 = vsel %vm1594, %v1926, 0.0
  %v2122 = vadd.f32 %v2120, %v2121
  %v2123 = vsel %vm1594, %v1927, 0.0
  %v2124 = vadd.f32 %v2122, %v2123
  %v2125 = vsel %vm1594, %v1928, 0.0
  %v2126 = vadd.f32 %v2124, %v2125
  %v2127 = vsel %vm1594, %v1929, 0.0
  %v2128 = vadd.f32 %v2126, %v2127
  %v2129 = vsel %vm1594, %v1930, 0.0
  %v2130 = vadd.f32 %v2128, %v2129
  %v2131 = vsel %vm1594, %v1931, 0.0
  %v2132 = vadd.f32 %v2130, %v2131
  %v2133 = vsel %vm1594, %v1932, 0.0
  %v2134 = vadd.f32 %v2132, %v2133
  %v2135 = vsel %vm1594, %v1933, 0.0
  %v2136 = vadd.f32 %v2134, %v2135
  %v2137 = vsel %vm1594, %v1934, 0.0
  %v2138 = vadd.f32 %v2136, %v2137
  %v2139 = vsel %vm1594, %v1935, 0.0
  %v2140 = vadd.f32 %v2138, %v2139
  %v2141 = vsel %vm1594, %v1936, 0.0
  %v2142 = vadd.f32 %v2140, %v2141
  %v2143 = vsel %vm1594, %v1937, 0.0
  %v2144 = vadd.f32 %v2142, %v2143
  %v2145 = vsel %vm1594, %v1938, 0.0
  %v2146 = vadd.f32 %v2144, %v2145
  %v2147 = vsel %vm1594, %v1939, 0.0
  %v2148 = vadd.f32 %v2146, %v2147
  %v2149 = vsel %vm1594, %v1940, 0.0
  %v2150 = vadd.f32 %v2148, %v2149
  %v2151 = vsel %vm1594, %v1941, 0.0
  %v2152 = vadd.f32 %v2150, %v2151
  %v2153 = vsel %vm1594, %v1942, 0.0
  %v2154 = vadd.f32 %v2152, %v2153
  %v2155 = vsel %vm1594, %v1943, 0.0
  %v2156 = vadd.f32 %v2154, %v2155
  %v2157 = vsel %vm1594, %v1944, 0.0
  %v2158 = vadd.f32 %v2156, %v2157
  %v2159 = vsel %vm1594, %v1945, 0.0
  %v2160 = vadd.f32 %v2158, %v2159
  %v2161 = vsel %vm1594, %v1946, 0.0
  %v2162 = vadd.f32 %v2160, %v2161
  %v2163 = vsel %vm1594, %v1947, 0.0
  %v2164 = vadd.f32 %v2162, %v2163
  %v2165 = vsel %vm1594, %v1948, 0.0
  %v2166 = vadd.f32 %v2164, %v2165
  %v2167 = vsel %vm1594, %v1949, 0.0
  %v2168 = vadd.f32 %v2166, %v2167
  %v2169 = vsel %vm1594, %v1950, 0.0
  %v2170 = vadd.f32 %v2168, %v2169
  %v2171 = vsel %vm1594, %v1951, 0.0
  %v2172 = vadd.f32 %v2170, %v2171
  %v2173 = vsel %vm1594, %v1952, 0.0
  %v2174 = vadd.f32 %v2172, %v2173
  %v2175 = vsel %vm1594, %v1953, 0.0
  %v2176 = vadd.f32 %v2174, %v2175
  %v2177 = vsel %vm1594, %v1954, 0.0
  %v2178 = vadd.f32 %v2176, %v2177
  %v2179 = vsel %vm1594, %v1955, 0.0
  %v2180 = vadd.f32 %v2178, %v2179
  %v2181 = vsel %vm1594, %v1956, 0.0
  %v2182 = vadd.f32 %v2180, %v2181
  %v2183 = vsel %vm1594, %v1957, 0.0
  %v2184 = vadd.f32 %v2182, %v2183
  %v2185 = vsel %vm1594, %v1958, 0.0
  %v2186 = vadd.f32 %v2184, %v2185
  %v2187 = vsel %vm1594, %v1959, 0.0
  %v2188 = vadd.f32 %v2186, %v2187
  %v2189 = vsel %vm1594, %v1960, 0.0
  %v2190 = vadd.f32 %v2188, %v2189
  %v2191 = vsel %vm1594, %v1961, 0.0
  %v2192 = vadd.f32 %v2190, %v2191
  %v2193 = vsel %vm1594, %v1962, 0.0
  %v2194 = vadd.f32 %v2192, %v2193
  %v2195 = vsel %vm1594, %v1963, 0.0
  %v2196 = vadd.f32 %v2194, %v2195
  %v2197 = vsel %vm1594, %v1964, 0.0
  %v2198 = vadd.f32 %v2196, %v2197
  %v2199 = vsel %vm1594, %v1965, 0.0
  %v2200 = vadd.f32 %v2198, %v2199
  %v2201 = vsel %vm1594, %v1966, 0.0
  %v2202 = vadd.f32 %v2200, %v2201
  %v2203 = vsel %vm1594, %v1967, 0.0
  %v2204 = vadd.f32 %v2202, %v2203
  %v2205 = vsel %vm1594, %v1968, 0.0
  %v2206 = vadd.f32 %v2204, %v2205
  %v2207 = vsel %vm1594, %v1969, 0.0
  %v2208 = vadd.f32 %v2206, %v2207
  %v2209 = vsel %vm1594, %v1970, 0.0
  %v2210 = vadd.f32 %v2208, %v2209
  %v2211 = vsel %vm1594, %v1971, 0.0
  %v2212 = vadd.f32 %v2210, %v2211
  %v2213 = vsel %vm1594, %v1972, 0.0
  %v2214 = vadd.f32 %v2212, %v2213
  %v2215 = vsel %vm1594, %v1973, 0.0
  %v2216 = vadd.f32 %v2214, %v2215
  %v2217 = vsel %vm1594, %v1974, 0.0
  %v2218 = vadd.f32 %v2216, %v2217
  %v2219 = vsel %vm1594, %v1975, 0.0
  %v2220 = vadd.f32 %v2218, %v2219
  %v2221 = vsel %vm1594, %v1976, 0.0
  %v2222 = vadd.f32 %v2220, %v2221
  %v2223 = vsel %vm1594, %v1977, 0.0
  %v2224 = vadd.f32 %v2222, %v2223
  %v2225 = vsel %vm1594, %v1978, 0.0
  %v2226 = vadd.f32 %v2224, %v2225
  %v2227 = vsel %vm1594, %v1979, 0.0
  %v2228 = vadd.f32 %v2226, %v2227
  %v2229 = vsel %vm1594, %v1980, 0.0
  %v2230 = vadd.f32 %v2228, %v2229
  %v2231 = vsel %vm1594, %v1981, 0.0
  %v2232 = vadd.f32 %v2230, %v2231
  %v2233 = vsel %vm1594, %v1982, 0.0
  %v2234 = vadd.f32 %v2232, %v2233
  %v2235 = vsel %vm1594, %v1983, 0.0
  %v2236 = vadd.f32 %v2234, %v2235
  %v2237 = vsel %vm1594, %v1984, 0.0
  %v2238 = vadd.f32 %v2236, %v2237
  %v2239 = vsel %vm1594, %v1985, 0.0
  %v2240 = vadd.f32 %v2238, %v2239
  %v2241 = vrot.slane %v2240, 4
  %v2242 = vadd.f32 %v2240, %v2241
  %v2243 = vrot.slane %v2242, 2
  %v2244 = vadd.f32 %v2242, %v2243
  %v2245 = vrot.slane %v2244, 1
  %v2246 = vadd.f32 %v2244, %v2245
  %2247 = vst.msk [vmem:[%s4] sm:$0x1] %vm1856, %v2246
  // Predicated region
  $region10: #{bottleneck_forward.4} parent=0 // pred_check
    _
  $region11: #{bottleneck_forward.4} parent=0 // pred_check_branch
    %2249 = sbr.rel (0) target = $region13
  $region12: #{bottleneck_forward.4} parent=0 // pred_region
    _
  $region13: #{bottleneck_forward.4} parent=0 // pred_fallthru
    _
  // Predicated region
  $region14: #{bottleneck_forward.4} parent=0 // pred_check
    _
  $region15: #{bottleneck_forward.4} parent=0 // pred_check_branch
    %2251 = sbr.rel (0) target = $region17
  $region16: #{bottleneck_forward.4} parent=0 // pred_region
    _
  $region17: #{bottleneck_forward.4} parent=0 // pred_fallthru
    _
  // Predicated region
  $region18: #{bottleneck_forward.4} parent=0 // pred_check
    _
  $region19: #{bottleneck_forward.4} parent=0 // pred_check_branch
    %2253 = sbr.rel (0) target = $region21
  $region20: #{bottleneck_forward.4} parent=0 // pred_region
    _
  $region21: #{bottleneck_forward.4} parent=0 // pred_fallthru
    _
  // Predicated region
  $region22: #{bottleneck_forward.4} parent=0 // pred_check
    _
  $region23: #{bottleneck_forward.4} parent=0 // pred_check_branch
    %2255 = sbr.rel (0) target = $region25
  $region24: #{bottleneck_forward.4} parent=0 // pred_region
    _
  $region25: #{bottleneck_forward.4} parent=0 // pred_fallthru
    _
  // Predicated region
  $region26: #{bottleneck_forward.4} parent=0 // pred_check
    _
  $region27: #{bottleneck_forward.4} parent=0 // pred_check_branch
    %2257 = sbr.rel (0) target = $region29
  $region28: #{bottleneck_forward.4} parent=0 // pred_region
    _
  $region29: #{bottleneck_forward.4} parent=0 // pred_fallthru
    _
  // Predicated region
  $region30: #{bottleneck_forward.4} parent=0 // pred_check
    _
  $region31: #{bottleneck_forward.4} parent=0 // pred_check_branch
    %2259 = sbr.rel (0) target = $region33
  $region32: #{bottleneck_forward.4} parent=0 // pred_region
    _
  $region33: #{bottleneck_forward.4} parent=0 // pred_fallthru
    _

// kernel: bottleneck_forward.5
$region0: #{bottleneck_forward.5}
  #allocation0 [shape = 'u32[]', space=smem, size = 0x4, offset = 0x4, fixed_abs, tag = 'smem constant byte address 0x4 - core index']
  #allocation1 [shape = 'u32[144,128]{1,0:T(1,128)}', space=vmem, size = 0x12000, scoped, tag = 'internal scratch']
  #allocation2 [shape = 'f32[304,12]{1,0:T(8,128)}', space=vmem, size = 0x26000, scoped, tag = 'scratch operand']
  %s0 = inlined_call_operand.vmem [shape: bf16[4,256,4], index: 0, kind: input, shape index: {}]
  %s1 = inlined_call_operand.vmem [shape: f32[1,4], index: 1, kind: input, shape index: {}]
  %s2 = inlined_call_operand.vmem [shape: f32[1,4], index: 2, kind: input, shape index: {}]
  %s3 = inlined_call_operand.vmem [shape: f32[256,1], index: 3, kind: input, shape index: {}]
  %s4 = inlined_call_operand.vmem [shape: f32[256,1], index: 4, kind: input, shape index: {}]
  %s5 = inlined_call_operand.vmem [shape: bf16[3,12,4], index: 5, kind: input, shape index: {}]
  %s6 = inlined_call_operand.vmem [shape: bf16[4,256,4], index: 6, kind: output, shape index: {0}]
  %s7 = inlined_call_operand.vmem [shape: f32[4,1,4], index: 7, kind: output, shape index: {1}]
  %s8 = inlined_call_operand.vmem [shape: f32[4,1,4], index: 8, kind: output, shape index: {2}]
  %9 = xla_tuple %s6, %s7, %s8
  %s10 = sld [smem:[#allocation0]]
  $region73: #{bottleneck_forward.5} parent=0
    _
  %s12 = ssub.s32 1, %s10
  %s13 = scalar_select 0, %s12, %s10
  loop: start=0, step=1, limit=6
  $region2: #{bottleneck_forward.5} parent=0 // loop_pre_header
    _
  $region3: #{bottleneck_forward.5} parent=0 // loop_header
    %s15 = sphi 0, %s19
    %p16 = scmp.ge.s32.totalorder %s15, 6
    %s25 = sphi 0, %s27
    %s28 = sphi 0, %s25
    %s29 = sphi 0, %s28
    %s45 = sphi 0, %s29
    %s49 = sphi 0, %s49
    %s51 = sphi 0, %s49
    %s52 = sphi 0, %s51
    %s66 = sphi 0, %s52
    %s70 = sphi 0, %s70
    %s72 = sphi 0, %s70
    %s73 = sphi 0, %s72
    %s87 = sphi 0, %s73
    %s91 = sphi 0, %s91
    %s93 = sphi 0, %s91
    %s94 = sphi 0, %s93
    %s108 = sphi 0, %s94
    %s112 = sphi 0, %s112
    %s114 = sphi 0, %s112
    %s115 = sphi 0, %s114
    %s129 = sphi 0, %s115
    %s133 = sphi 0, %s133
    %s135 = sphi 0, %s133
    %s136 = sphi 0, %s135
    %s150 = sphi 0, %s136
    %s156 = sphi 0, %s158
    %s159 = sphi 0, %s156
    %s160 = sphi 0, %s159
    %s176 = sphi 0, %s160
    %s182 = sphi 0, %s184
    %s185 = sphi 0, %s182
    %s186 = sphi 0, %s185
    %s202 = sphi 0, %s186
    %s208 = sphi 0, %s210
    %s211 = sphi 0, %s208
    %s212 = sphi 0, %s211
    %s228 = sphi 0, %s212
  $region4: #{bottleneck_forward.5} parent=0 // loop_header_branch
    %18 = sbr.rel (%p16) target = $region8
  $region5: #{bottleneck_forward.5} parent=0 // loop_body
    %s20 = ssub.s32 %s15, 1
    %s21 = ssub.s32 %s15, 2
    %s22 = sadd.s32 %s15, 1
    %s23 = ssub.s32 %s15, %s22
    %p24 = scmp.eq.s32.totalorder %s23, 0
    %s26 = sadd.s32 %s25, 1
    %s27 = scalar_select %p24, %s25, %s26
    %p30 = pneg %p24
    %p31 = scmp.eq.s32.totalorder %s15, 3
    %p32 = por %p30, %p31
    %p33 = scmp.ne.s32.totalorder %s25, %s28
    %p34 = scmp.eq.s32.totalorder %s15, 0
    %p35 = por %p33, %p34
    %p36 = scmp.ne.s32.totalorder %s25, %s28
    %p37 = scmp.eq.s32.totalorder %s20, 3
    %p38 = por %p36, %p37
    %p39 = scmp.ne.s32.totalorder %s28, %s29
    %p40 = scmp.eq.s32.totalorder %s20, 0
    %p41 = por %p39, %p40
    %p42 = scmp.ne.s32.totalorder %s28, %s29
    %p43 = scmp.eq.s32.totalorder %s21, 3
    %p44 = por %p42, %p43
    %p46 = scmp.ne.s32.totalorder %s29, %s45
    %p47 = scmp.eq.s32.totalorder %s21, 0
    %p48 = por %p46, %p47
    %s50 = sadd.s32 %s49, 1
    %p53 = scmp.eq.s32.totalorder %s15, 3
    %p54 = scmp.ne.s32.totalorder %s49, %s51
    %p55 = scmp.eq.s32.totalorder %s15, 0
    %p56 = por %p54, %p55
    %p57 = scmp.ne.s32.totalorder %s49, %s51
    %p58 = scmp.eq.s32.totalorder %s20, 3
    %p59 = por %p57, %p58
    %p60 = scmp.ne.s32.totalorder %s51, %s52
    %p61 = scmp.eq.s32.totalorder %s20, 0
    %p62 = por %p60, %p61
    %p63 = scmp.ne.s32.totalorder %s51, %s52
    %p64 = scmp.eq.s32.totalorder %s21, 3
    %p65 = por %p63, %p64
    %p67 = scmp.ne.s32.totalorder %s52, %s66
    %p68 = scmp.eq.s32.totalorder %s21, 0
    %p69 = por %p67, %p68
    %s71 = sadd.s32 %s70, 1
    %p74 = scmp.eq.s32.totalorder %s15, 3
    %p75 = scmp.ne.s32.totalorder %s70, %s72
    %p76 = scmp.eq.s32.totalorder %s15, 0
    %p77 = por %p75, %p76
    %p78 = scmp.ne.s32.totalorder %s70, %s72
    %p79 = scmp.eq.s32.totalorder %s20, 3
    %p80 = por %p78, %p79
    %p81 = scmp.ne.s32.totalorder %s72, %s73
    %p82 = scmp.eq.s32.totalorder %s20, 0
    %p83 = por %p81, %p82
    %p84 = scmp.ne.s32.totalorder %s72, %s73
    %p85 = scmp.eq.s32.totalorder %s21, 3
    %p86 = por %p84, %p85
    %p88 = scmp.ne.s32.totalorder %s73, %s87
    %p89 = scmp.eq.s32.totalorder %s21, 0
    %p90 = por %p88, %p89
    %s92 = sadd.s32 %s91, 1
    %p95 = scmp.eq.s32.totalorder %s15, 3
    %p96 = scmp.ne.s32.totalorder %s91, %s93
    %p97 = scmp.eq.s32.totalorder %s15, 0
    %p98 = por %p96, %p97
    %p99 = scmp.ne.s32.totalorder %s91, %s93
    %p100 = scmp.eq.s32.totalorder %s20, 3
    %p101 = por %p99, %p100
    %p102 = scmp.ne.s32.totalorder %s93, %s94
    %p103 = scmp.eq.s32.totalorder %s20, 0
    %p104 = por %p102, %p103
    %p105 = scmp.ne.s32.totalorder %s93, %s94
    %p106 = scmp.eq.s32.totalorder %s21, 3
    %p107 = por %p105, %p106
    %p109 = scmp.ne.s32.totalorder %s94, %s108
    %p110 = scmp.eq.s32.totalorder %s21, 0
    %p111 = por %p109, %p110
    %s113 = sadd.s32 %s112, 1
    %p116 = scmp.eq.s32.totalorder %s15, 3
    %p117 = scmp.ne.s32.totalorder %s112, %s114
    %p118 = scmp.eq.s32.totalorder %s15, 0
    %p119 = por %p117, %p118
    %p120 = scmp.ne.s32.totalorder %s112, %s114
    %p121 = scmp.eq.s32.totalorder %s20, 3
    %p122 = por %p120, %p121
    %p123 = scmp.ne.s32.totalorder %s114, %s115
    %p124 = scmp.eq.s32.totalorder %s20, 0
    %p125 = por %p123, %p124
    %p126 = scmp.ne.s32.totalorder %s114, %s115
    %p127 = scmp.eq.s32.totalorder %s21, 3
    %p128 = por %p126, %p127
    %p130 = scmp.ne.s32.totalorder %s115, %s129
    %p131 = scmp.eq.s32.totalorder %s21, 0
    %p132 = por %p130, %p131
    %s134 = sadd.s32 %s133, 1
    %p137 = scmp.eq.s32.totalorder %s15, 3
    %p138 = scmp.ne.s32.totalorder %s133, %s135
    %p139 = scmp.eq.s32.totalorder %s15, 0
    %p140 = por %p138, %p139
    %p141 = scmp.ne.s32.totalorder %s133, %s135
    %p142 = scmp.eq.s32.totalorder %s20, 3
    %p143 = por %p141, %p142
    %p144 = scmp.ne.s32.totalorder %s135, %s136
    %p145 = scmp.eq.s32.totalorder %s20, 0
    %p146 = por %p144, %p145
    %p147 = scmp.ne.s32.totalorder %s135, %s136
    %p148 = scmp.eq.s32.totalorder %s21, 3
    %p149 = por %p147, %p148
    %p151 = scmp.ne.s32.totalorder %s136, %s150
    %p152 = scmp.eq.s32.totalorder %s21, 0
    %p153 = por %p151, %p152
    %s154 = ssub.s32 %s15, %s22
    %p155 = scmp.eq.s32.totalorder %s154, 0
    %s157 = sadd.s32 %s156, 1
    %s158 = scalar_select %p155, %s156, %s157
    %p161 = pneg %p155
    %p162 = scmp.eq.s32.totalorder %s15, 3
    %p163 = por %p161, %p162
    %p164 = scmp.ne.s32.totalorder %s156, %s159
    %p165 = scmp.eq.s32.totalorder %s15, 0
    %p166 = por %p164, %p165
    %p167 = scmp.ne.s32.totalorder %s156, %s159
    %p168 = scmp.eq.s32.totalorder %s20, 3
    %p169 = por %p167, %p168
    %p170 = scmp.ne.s32.totalorder %s159, %s160
    %p171 = scmp.eq.s32.totalorder %s20, 0
    %p172 = por %p170, %p171
    %p173 = scmp.ne.s32.totalorder %s159, %s160
    %p174 = scmp.eq.s32.totalorder %s21, 3
    %p175 = por %p173, %p174
    %p177 = scmp.ne.s32.totalorder %s160, %s176
    %p178 = scmp.eq.s32.totalorder %s21, 0
    %p179 = por %p177, %p178
    %s180 = ssub.s32 %s15, %s22
    %p181 = scmp.eq.s32.totalorder %s180, 0
    %s183 = sadd.s32 %s182, 1
    %s184 = scalar_select %p181, %s182, %s183
    %p187 = pneg %p181
    %p188 = scmp.eq.s32.totalorder %s15, 3
    %p189 = por %p187, %p188
    %p190 = scmp.ne.s32.totalorder %s182, %s185
    %p191 = scmp.eq.s32.totalorder %s15, 0
    %p192 = por %p190, %p191
    %p193 = scmp.ne.s32.totalorder %s182, %s185
    %p194 = scmp.eq.s32.totalorder %s20, 3
    %p195 = por %p193, %p194
    %p196 = scmp.ne.s32.totalorder %s185, %s186
    %p197 = scmp.eq.s32.totalorder %s20, 0
    %p198 = por %p196, %p197
    %p199 = scmp.ne.s32.totalorder %s185, %s186
    %p200 = scmp.eq.s32.totalorder %s21, 3
    %p201 = por %p199, %p200
    %p203 = scmp.ne.s32.totalorder %s186, %s202
    %p204 = scmp.eq.s32.totalorder %s21, 0
    %p205 = por %p203, %p204
    %s206 = ssub.s32 %s15, %s22
    %p207 = scmp.eq.s32.totalorder %s206, 0
    %s209 = sadd.s32 %s208, 1
    %s210 = scalar_select %p207, %s208, %s209
    %p213 = pneg %p207
    %p214 = scmp.eq.s32.totalorder %s15, 3
    %p215 = por %p213, %p214
    %p216 = scmp.ne.s32.totalorder %s208, %s211
    %p217 = scmp.eq.s32.totalorder %s15, 0
    %p218 = por %p216, %p217
    %p219 = scmp.ne.s32.totalorder %s208, %s211
    %p220 = scmp.eq.s32.totalorder %s20, 3
    %p221 = por %p219, %p220
    %p222 = scmp.ne.s32.totalorder %s211, %s212
    %p223 = scmp.eq.s32.totalorder %s20, 0
    %p224 = por %p222, %p223
    %p225 = scmp.ne.s32.totalorder %s211, %s212
    %p226 = scmp.eq.s32.totalorder %s21, 3
    %p227 = por %p225, %p226
    %p229 = scmp.ne.s32.totalorder %s212, %s228
    %p230 = scmp.eq.s32.totalorder %s21, 0
    %p231 = por %p229, %p230
    %p232 = scmp.le.s32.totalorder 1, %s15
    %p233 = scmp.lt.s32.totalorder %s15, 5
    %p234 = pnand %p232, %p233
    %p235 = pneg %p234
    // Predicated region
    $region9: #{bottleneck_forward.5} parent=5 // pred_check
      _
    $region10: #{bottleneck_forward.5} parent=5 // pred_check_branch
      %237 = sbr.rel (%p234) target = $region12
    $region11: #{bottleneck_forward.5} parent=5 // pred_region
      %s238 = ssub.s32 %s15, 1
      // Predicated region
      $region13: #{bottleneck_forward.5} parent=11 // pred_check
        %p239 = pneg %p62
      $region14: #{bottleneck_forward.5} parent=11 // pred_check_branch
        %241 = sbr.rel (%p239) target = $region16
      $region15: #{bottleneck_forward.5} parent=11 // pred_region
        _
      $region16: #{bottleneck_forward.5} parent=11 // pred_fallthru
        _
      // Predicated region
      $region17: #{bottleneck_forward.5} parent=11 // pred_check
        %p242 = pneg %p83
      $region18: #{bottleneck_forward.5} parent=11 // pred_check_branch
        %244 = sbr.rel (%p242) target = $region20
      $region19: #{bottleneck_forward.5} parent=11 // pred_region
        _
      $region20: #{bottleneck_forward.5} parent=11 // pred_fallthru
        _
      // Predicated region
      $region21: #{bottleneck_forward.5} parent=11 // pred_check
        %p245 = pneg %p104
      $region22: #{bottleneck_forward.5} parent=11 // pred_check_branch
        %247 = sbr.rel (%p245) target = $region24
      $region23: #{bottleneck_forward.5} parent=11 // pred_region
        _
      $region24: #{bottleneck_forward.5} parent=11 // pred_fallthru
        _
      // Predicated region
      $region25: #{bottleneck_forward.5} parent=11 // pred_check
        %p248 = pneg %p125
      $region26: #{bottleneck_forward.5} parent=11 // pred_check_branch
        %250 = sbr.rel (%p248) target = $region28
      $region27: #{bottleneck_forward.5} parent=11 // pred_region
        _
      $region28: #{bottleneck_forward.5} parent=11 // pred_fallthru
        _
      // Predicated region
      $region29: #{bottleneck_forward.5} parent=11 // pred_check
        %p251 = pneg %p146
      $region30: #{bottleneck_forward.5} parent=11 // pred_check_branch
        %253 = sbr.rel (%p251) target = $region32
      $region31: #{bottleneck_forward.5} parent=11 // pred_region
        _
      $region32: #{bottleneck_forward.5} parent=11 // pred_fallthru
        _
    $region12: #{bottleneck_forward.5} parent=5 // pred_fallthru
      _
    %p254 = scmp.lt.s32.totalorder %s15, 4
    // Predicated region
    $region33: #{bottleneck_forward.5} parent=5 // pred_check
      %p255 = pneg %p254
    $region34: #{bottleneck_forward.5} parent=5 // pred_check_branch
      %257 = sbr.rel (%p255) target = $region36
    $region35: #{bottleneck_forward.5} parent=5 // pred_region
      // Predicated region
      $region37: #{bottleneck_forward.5} parent=35 // pred_check
        %p258 = pneg %p35
      $region38: #{bottleneck_forward.5} parent=35 // pred_check_branch
        %260 = sbr.rel (%p258) target = $region40
      $region39: #{bottleneck_forward.5} parent=35 // pred_region
        %p261 = scmp.lt.s32.totalorder %s15, 3
        %s262 = scalar_select %p261, %s15, 3
        %s263 = smul.addr %s262, 32
        %s264 = smul.addr %s263, 4
        %s265 = scalar_lea.vmem %s0, %s264
      $region40: #{bottleneck_forward.5} parent=35 // pred_fallthru
        _
    $region36: #{bottleneck_forward.5} parent=5 // pred_fallthru
      _
    %p266 = scmp.le.s32.totalorder 1, %s15
    %p267 = scmp.lt.s32.totalorder %s15, 5
    %p268 = pnand %p266, %p267
    %p269 = pneg %p268
    // Predicated region
    $region41: #{bottleneck_forward.5} parent=5 // pred_check
      _
    $region42: #{bottleneck_forward.5} parent=5 // pred_check_branch
      %271 = sbr.rel (%p268) target = $region44
    $region43: #{bottleneck_forward.5} parent=5 // pred_region
      %s272 = ssub.s32 %s15, 1
      %p273 = scmp.lt.s32.totalorder %s20, 3
      %s274 = scalar_select %p273, %s20, 3
      %s275 = smul.addr %s274, 32
      %s276 = smul.addr %s275, 4
      %s277 = scalar_lea.vmem %s0, %s276
      %p278 = pneg %p41
      %p279 = pneg %p38
      %p280 = pneg %p62
      %p281 = pneg %p59
      %p282 = pneg %p83
      %p283 = pneg %p80
      %p284 = pneg %p104
      %p285 = pneg %p101
      %p286 = pneg %p125
      %p287 = pneg %p122
      %p288 = pneg %p146
      %p289 = pneg %p143
      %p290 = pneg %p172
      %p291 = pneg %p169
      %p292 = scmp.lt.s32.totalorder %s20, 3
      %s293 = scalar_select %p292, %s20, 3
      %s294 = smul.addr %s293, 32
      %s295 = smul.addr %s294, 4
      %s296 = scalar_lea.vmem %s6, %s295
      %p297 = pneg %p198
      %p298 = pneg %p195
      %p299 = scmp.lt.s32.totalorder %s20, 3
      %s300 = scalar_select %p299, %s20, 3
      %s301 = scalar_lea.vmem %s7, %s300
      %p302 = pneg %p224
      %p303 = pneg %p221
      %p304 = scmp.lt.s32.totalorder %s20, 3
      %s305 = scalar_select %p304, %s20, 3
      %s306 = scalar_lea.vmem %s8, %s305
      %p307 = scmp.lt.s32.totalorder %s20, 3
      %s308 = scalar_select %p307, %s20, 3
      %s309 = smul.addr %s308, 32
      %s310 = smul.addr %s309, 4
      %s311 = scalar_lea.vmem %s0, %s310
      %p312 = scmp.lt.s32.totalorder %s20, 3
      %s313 = scalar_select %p312, %s20, 3
      %s314 = smul.addr %s313, 32
      %s315 = smul.addr %s314, 4
      %s316 = scalar_lea.vmem %s6, %s315
      %p317 = scmp.lt.s32.totalorder %s20, 3
      %s318 = scalar_select %p317, %s20, 3
      %s319 = scalar_lea.vmem %s7, %s318
      %p320 = scmp.lt.s32.totalorder %s20, 3
      %s321 = scalar_select %p320, %s20, 3
      %s322 = scalar_lea.vmem %s8, %s321
      %vm324 = vcmask 97280
      %325 = vst.msk [vmem:[#allocation2] sm:$0xff] %vm324, 0.0
      %326 = vst.msk [vmem:[#allocation2 + $0x8] sm:$0xff] %vm324, 0.0
      %327 = vst.msk [vmem:[#allocation2 + $0x10] sm:$0xff] %vm324, 0.0
      %vm328 = vcmask 90112
      %329 = vst.msk [vmem:[#allocation2 + $0x18] sm:$0x1] %vm328, 0.0
      %330 = vst.msk [vmem:[#allocation2 + $0x117] sm:$0xff] %vm324, 0.0
      %331 = vst.msk [vmem:[#allocation2 + $0x11f] sm:$0xff] %vm324, 0.0
      %332 = vst.msk [vmem:[#allocation2 + $0x127] sm:$0xff] %vm324, 0.0
      %333 = vst.msk [vmem:[#allocation2 + $0x12f] sm:$0x1] %vm328, 0.0
      %v334 = vld [vmem:[%s311] sm:$0xf]
      %v335 = vld [vmem:[%s311 + $0x4] sm:$0xf]
      %v336 = vld [vmem:[%s311 + $0x8] sm:$0xf]
      %v337 = vld [vmem:[%s311 + $0xc] sm:$0xf]
      %v338 = vld [vmem:[%s311 + $0x10] sm:$0xf]
      %v339 = vld [vmem:[%s311 + $0x14] sm:$0xf]
      %v340 = vld [vmem:[%s311 + $0x18] sm:$0xf]
      %v341 = vld [vmem:[%s311 + $0x1c] sm:$0xf]
      %v342 = vld [vmem:[%s311 + $0x20] sm:$0xf]
      %v343 = vld [vmem:[%s311 + $0x24] sm:$0xf]
      %v344 = vld [vmem:[%s311 + $0x28] sm:$0xf]
      %v345 = vld [vmem:[%s311 + $0x2c] sm:$0xf]
      %v346 = vld [vmem:[%s311 + $0x30] sm:$0xf]
      %v347 = vld [vmem:[%s311 + $0x34] sm:$0xf]
      %v348 = vld [vmem:[%s311 + $0x38] sm:$0xf]
      %v349 = vld [vmem:[%s311 + $0x3c] sm:$0xf]
      %v350 = vld [vmem:[%s311 + $0x40] sm:$0xf]
      %v351 = vld [vmem:[%s311 + $0x44] sm:$0xf]
      %v352 = vld [vmem:[%s311 + $0x48] sm:$0xf]
      %v353 = vld [vmem:[%s311 + $0x4c] sm:$0xf]
      %v354 = vld [vmem:[%s311 + $0x50] sm:$0xf]
      %v355 = vld [vmem:[%s311 + $0x54] sm:$0xf]
      %v356 = vld [vmem:[%s311 + $0x58] sm:$0xf]
      %v357 = vld [vmem:[%s311 + $0x5c] sm:$0xf]
      %v358 = vld [vmem:[%s311 + $0x60] sm:$0xf]
      %v359 = vld [vmem:[%s311 + $0x64] sm:$0xf]
      %v360 = vld [vmem:[%s311 + $0x68] sm:$0xf]
      %v361 = vld [vmem:[%s311 + $0x6c] sm:$0xf]
      %v362 = vld [vmem:[%s311 + $0x70] sm:$0xf]
      %v363 = vld [vmem:[%s311 + $0x74] sm:$0xf]
      %v364 = vld [vmem:[%s311 + $0x78] sm:$0xf]
      %v365 = vld [vmem:[%s311 + $0x7c] sm:$0xf]
      %v366 = vunpack.c.l.bf16 %v334
      %v367 = vunpack.c.l.bf16 %v335
      %v368 = vunpack.c.l.bf16 %v336
      %v369 = vunpack.c.l.bf16 %v337
      %v370 = vunpack.c.l.bf16 %v338
      %v371 = vunpack.c.l.bf16 %v339
      %v372 = vunpack.c.l.bf16 %v340
      %v373 = vunpack.c.l.bf16 %v341
      %v374 = vunpack.c.l.bf16 %v342
      %v375 = vunpack.c.l.bf16 %v343
      %v376 = vunpack.c.l.bf16 %v344
      %v377 = vunpack.c.l.bf16 %v345
      %v378 = vunpack.c.l.bf16 %v346
      %v379 = vunpack.c.l.bf16 %v347
      %v380 = vunpack.c.l.bf16 %v348
      %v381 = vunpack.c.l.bf16 %v349
      %v382 = vunpack.c.l.bf16 %v350
      %v383 = vunpack.c.l.bf16 %v351
      %v384 = vunpack.c.l.bf16 %v352
      %v385 = vunpack.c.l.bf16 %v353
      %v386 = vunpack.c.l.bf16 %v354
      %v387 = vunpack.c.l.bf16 %v355
      %v388 = vunpack.c.l.bf16 %v356
      %v389 = vunpack.c.l.bf16 %v357
      %v390 = vunpack.c.l.bf16 %v358
      %v391 = vunpack.c.l.bf16 %v359
      %v392 = vunpack.c.l.bf16 %v360
      %v393 = vunpack.c.l.bf16 %v361
      %v394 = vunpack.c.l.bf16 %v362
      %v395 = vunpack.c.l.bf16 %v363
      %v396 = vunpack.c.l.bf16 %v364
      %v397 = vunpack.c.l.bf16 %v365
      %v398 = vld [vmem:[%s1] sm:$0x1]
      %v400 = vlaneseq
      %v401 = vshrl.u32 %v400, 7
      %v402 = vsub.s32 0, %v401
      %v403 = vrot.slane %v398, %v402
      %v405 = vmul.f32 %v366, %v403
      %v406 = vmul.f32 %v367, %v403
      %v407 = vmul.f32 %v368, %v403
      %v408 = vmul.f32 %v369, %v403
      %v409 = vmul.f32 %v370, %v403
      %v410 = vmul.f32 %v371, %v403
      %v411 = vmul.f32 %v372, %v403
      %v412 = vmul.f32 %v373, %v403
      %v413 = vmul.f32 %v374, %v403
      %v414 = vmul.f32 %v375, %v403
      %v415 = vmul.f32 %v376, %v403
      %v416 = vmul.f32 %v377, %v403
      %v417 = vmul.f32 %v378, %v403
      %v418 = vmul.f32 %v379, %v403
      %v419 = vmul.f32 %v380, %v403
      %v420 = vmul.f32 %v381, %v403
      %v421 = vmul.f32 %v382, %v403
      %v422 = vmul.f32 %v383, %v403
      %v423 = vmul.f32 %v384, %v403
      %v424 = vmul.f32 %v385, %v403
      %v425 = vmul.f32 %v386, %v403
      %v426 = vmul.f32 %v387, %v403
      %v427 = vmul.f32 %v388, %v403
      %v428 = vmul.f32 %v389, %v403
      %v429 = vmul.f32 %v390, %v403
      %v430 = vmul.f32 %v391, %v403
      %v431 = vmul.f32 %v392, %v403
      %v432 = vmul.f32 %v393, %v403
      %v433 = vmul.f32 %v394, %v403
      %v434 = vmul.f32 %v395, %v403
      %v435 = vmul.f32 %v396, %v403
      %v436 = vmul.f32 %v397, %v403
      %v437 = vld [vmem:[%s2] sm:$0x1]
      %v439 = vlaneseq
      %v440 = vshrl.u32 %v439, 7
      %v441 = vsub.s32 0, %v440
      %v442 = vrot.slane %v437, %v441
      %v444 = vadd.f32 %v405, %v442
      %v445 = vadd.f32 %v406, %v442
      %v446 = vadd.f32 %v407, %v442
      %v447 = vadd.f32 %v408, %v442
      %v448 = vadd.f32 %v409, %v442
      %v449 = vadd.f32 %v410, %v442
      %v450 = vadd.f32 %v411, %v442
      %v451 = vadd.f32 %v412, %v442
      %v452 = vadd.f32 %v413, %v442
      %v453 = vadd.f32 %v414, %v442
      %v454 = vadd.f32 %v415, %v442
      %v455 = vadd.f32 %v416, %v442
      %v456 = vadd.f32 %v417, %v442
      %v457 = vadd.f32 %v418, %v442
      %v458 = vadd.f32 %v419, %v442
      %v459 = vadd.f32 %v420, %v442
      %v460 = vadd.f32 %v421, %v442
      %v461 = vadd.f32 %v422, %v442
      %v462 = vadd.f32 %v423, %v442
      %v463 = vadd.f32 %v424, %v442
      %v464 = vadd.f32 %v425, %v442
      %v465 = vadd.f32 %v426, %v442
      %v466 = vadd.f32 %v427, %v442
      %v467 = vadd.f32 %v428, %v442
      %v468 = vadd.f32 %v429, %v442
      %v469 = vadd.f32 %v430, %v442
      %v470 = vadd.f32 %v431, %v442
      %v471 = vadd.f32 %v432, %v442
      %v472 = vadd.f32 %v433, %v442
      %v473 = vadd.f32 %v434, %v442
      %v474 = vadd.f32 %v435, %v442
      %v475 = vadd.f32 %v436, %v442
      %v476 = vmax.f32 %v444, 0.0
      %v477 = vmax.f32 %v445, 0.0
      %v478 = vmax.f32 %v446, 0.0
      %v479 = vmax.f32 %v447, 0.0
      %v480 = vmax.f32 %v448, 0.0
      %v481 = vmax.f32 %v449, 0.0
      %v482 = vmax.f32 %v450, 0.0
      %v483 = vmax.f32 %v451, 0.0
      %v484 = vmax.f32 %v452, 0.0
      %v485 = vmax.f32 %v453, 0.0
      %v486 = vmax.f32 %v454, 0.0
      %v487 = vmax.f32 %v455, 0.0
      %v488 = vmax.f32 %v456, 0.0
      %v489 = vmax.f32 %v457, 0.0
      %v490 = vmax.f32 %v458, 0.0
      %v491 = vmax.f32 %v459, 0.0
      %v492 = vmax.f32 %v460, 0.0
      %v493 = vmax.f32 %v461, 0.0
      %v494 = vmax.f32 %v462, 0.0
      %v495 = vmax.f32 %v463, 0.0
      %v496 = vmax.f32 %v464, 0.0
      %v497 = vmax.f32 %v465, 0.0
      %v498 = vmax.f32 %v466, 0.0
      %v499 = vmax.f32 %v467, 0.0
      %v500 = vmax.f32 %v468, 0.0
      %v501 = vmax.f32 %v469, 0.0
      %v502 = vmax.f32 %v470, 0.0
      %v503 = vmax.f32 %v471, 0.0
      %v504 = vmax.f32 %v472, 0.0
      %v505 = vmax.f32 %v473, 0.0
      %v506 = vmax.f32 %v474, 0.0
      %v507 = vmax.f32 %v475, 0.0
      %v508 = vld [vmem:[%s3] sm:$0xff]
      %v509 = vld [vmem:[%s3 + $0x8] sm:$0xff]
      %v510 = vld [vmem:[%s3 + $0x10] sm:$0xff]
      %v511 = vld [vmem:[%s3 + $0x18] sm:$0xff]
      %v512 = vld [vmem:[%s3 + $0x20] sm:$0xff]
      %v513 = vld [vmem:[%s3 + $0x28] sm:$0xff]
      %v514 = vld [vmem:[%s3 + $0x30] sm:$0xff]
      %v515 = vld [vmem:[%s3 + $0x38] sm:$0xff]
      %v516 = vld [vmem:[%s3 + $0x40] sm:$0xff]
      %v517 = vld [vmem:[%s3 + $0x48] sm:$0xff]
      %v518 = vld [vmem:[%s3 + $0x50] sm:$0xff]
      %v519 = vld [vmem:[%s3 + $0x58] sm:$0xff]
      %v520 = vld [vmem:[%s3 + $0x60] sm:$0xff]
      %v521 = vld [vmem:[%s3 + $0x68] sm:$0xff]
      %v522 = vld [vmem:[%s3 + $0x70] sm:$0xff]
      %v523 = vld [vmem:[%s3 + $0x78] sm:$0xff]
      %v524 = vld [vmem:[%s3 + $0x80] sm:$0xff]
      %v525 = vld [vmem:[%s3 + $0x88] sm:$0xff]
      %v526 = vld [vmem:[%s3 + $0x90] sm:$0xff]
      %v527 = vld [vmem:[%s3 + $0x98] sm:$0xff]
      %v528 = vld [vmem:[%s3 + $0xa0] sm:$0xff]
      %v529 = vld [vmem:[%s3 + $0xa8] sm:$0xff]
      %v530 = vld [vmem:[%s3 + $0xb0] sm:$0xff]
      %v531 = vld [vmem:[%s3 + $0xb8] sm:$0xff]
      %v532 = vld [vmem:[%s3 + $0xc0] sm:$0xff]
      %v533 = vld [vmem:[%s3 + $0xc8] sm:$0xff]
      %v534 = vld [vmem:[%s3 + $0xd0] sm:$0xff]
      %v535 = vld [vmem:[%s3 + $0xd8] sm:$0xff]
      %v536 = vld [vmem:[%s3 + $0xe0] sm:$0xff]
      %v537 = vld [vmem:[%s3 + $0xe8] sm:$0xff]
      %v538 = vld [vmem:[%s3 + $0xf0] sm:$0xff]
      %v539 = vld [vmem:[%s3 + $0xf8] sm:$0xff]
      %541 = vset.pattern.permute.xlu0 0
      %542 = vperm.xlu0 %541, %v508
      %v543 = vpop.permute.xlu0 %542
      %546 = vset.pattern.permute.xlu0 0
      %547 = vperm.xlu0 %546, %v509
      %v548 = vpop.permute.xlu0 %547
      %551 = vset.pattern.permute.xlu0 0
      %552 = vperm.xlu0 %551, %v510
      %v553 = vpop.permute.xlu0 %552
      %556 = vset.pattern.permute.xlu0 0
      %557 = vperm.xlu0 %556, %v511
      %v558 = vpop.permute.xlu0 %557
      %561 = vset.pattern.permute.xlu0 0
      %562 = vperm.xlu0 %561, %v512
      %v563 = vpop.permute.xlu0 %562
      %566 = vset.pattern.permute.xlu0 0
      %567 = vperm.xlu0 %566, %v513
      %v568 = vpop.permute.xlu0 %567
      %571 = vset.pattern.permute.xlu0 0
      %572 = vperm.xlu0 %571, %v514
      %v573 = vpop.permute.xlu0 %572
      %576 = vset.pattern.permute.xlu0 0
      %577 = vperm.xlu0 %576, %v515
      %v578 = vpop.permute.xlu0 %577
      %581 = vset.pattern.permute.xlu0 0
      %582 = vperm.xlu0 %581, %v516
      %v583 = vpop.permute.xlu0 %582
      %586 = vset.pattern.permute.xlu0 0
      %587 = vperm.xlu0 %586, %v517
      %v588 = vpop.permute.xlu0 %587
      %591 = vset.pattern.permute.xlu0 0
      %592 = vperm.xlu0 %591, %v518
      %v593 = vpop.permute.xlu0 %592
      %596 = vset.pattern.permute.xlu0 0
      %597 = vperm.xlu0 %596, %v519
      %v598 = vpop.permute.xlu0 %597
      %601 = vset.pattern.permute.xlu0 0
      %602 = vperm.xlu0 %601, %v520
      %v603 = vpop.permute.xlu0 %602
      %606 = vset.pattern.permute.xlu0 0
      %607 = vperm.xlu0 %606, %v521
      %v608 = vpop.permute.xlu0 %607
      %611 = vset.pattern.permute.xlu0 0
      %612 = vperm.xlu0 %611, %v522
      %v613 = vpop.permute.xlu0 %612
      %616 = vset.pattern.permute.xlu0 0
      %617 = vperm.xlu0 %616, %v523
      %v618 = vpop.permute.xlu0 %617
      %621 = vset.pattern.permute.xlu0 0
      %622 = vperm.xlu0 %621, %v524
      %v623 = vpop.permute.xlu0 %622
      %626 = vset.pattern.permute.xlu0 0
      %627 = vperm.xlu0 %626, %v525
      %v628 = vpop.permute.xlu0 %627
      %631 = vset.pattern.permute.xlu0 0
      %632 = vperm.xlu0 %631, %v526
      %v633 = vpop.permute.xlu0 %632
      %636 = vset.pattern.permute.xlu0 0
      %637 = vperm.xlu0 %636, %v527
      %v638 = vpop.permute.xlu0 %637
      %641 = vset.pattern.permute.xlu0 0
      %642 = vperm.xlu0 %641, %v528
      %v643 = vpop.permute.xlu0 %642
      %646 = vset.pattern.permute.xlu0 0
      %647 = vperm.xlu0 %646, %v529
      %v648 = vpop.permute.xlu0 %647
      %651 = vset.pattern.permute.xlu0 0
      %652 = vperm.xlu0 %651, %v530
      %v653 = vpop.permute.xlu0 %652
      %656 = vset.pattern.permute.xlu0 0
      %657 = vperm.xlu0 %656, %v531
      %v658 = vpop.permute.xlu0 %657
      %661 = vset.pattern.permute.xlu0 0
      %662 = vperm.xlu0 %661, %v532
      %v663 = vpop.permute.xlu0 %662
      %666 = vset.pattern.permute.xlu0 0
      %667 = vperm.xlu0 %666, %v533
      %v668 = vpop.permute.xlu0 %667
      %671 = vset.pattern.permute.xlu0 0
      %672 = vperm.xlu0 %671, %v534
      %v673 = vpop.permute.xlu0 %672
      %676 = vset.pattern.permute.xlu0 0
      %677 = vperm.xlu0 %676, %v535
      %v678 = vpop.permute.xlu0 %677
      %681 = vset.pattern.permute.xlu0 0
      %682 = vperm.xlu0 %681, %v536
      %v683 = vpop.permute.xlu0 %682
      %686 = vset.pattern.permute.xlu0 0
      %687 = vperm.xlu0 %686, %v537
      %v688 = vpop.permute.xlu0 %687
      %691 = vset.pattern.permute.xlu0 0
      %692 = vperm.xlu0 %691, %v538
      %v693 = vpop.permute.xlu0 %692
      %696 = vset.pattern.permute.xlu0 0
      %697 = vperm.xlu0 %696, %v539
      %v698 = vpop.permute.xlu0 %697
      %v700 = vmul.f32 %v476, %v543
      %v701 = vmul.f32 %v477, %v548
      %v702 = vmul.f32 %v478, %v553
      %v703 = vmul.f32 %v479, %v558
      %v704 = vmul.f32 %v480, %v563
      %v705 = vmul.f32 %v481, %v568
      %v706 = vmul.f32 %v482, %v573
      %v707 = vmul.f32 %v483, %v578
      %v708 = vmul.f32 %v484, %v583
      %v709 = vmul.f32 %v485, %v588
      %v710 = vmul.f32 %v486, %v593
      %v711 = vmul.f32 %v487, %v598
      %v712 = vmul.f32 %v488, %v603
      %v713 = vmul.f32 %v489, %v608
      %v714 = vmul.f32 %v490, %v613
      %v715 = vmul.f32 %v491, %v618
      %v716 = vmul.f32 %v492, %v623
      %v717 = vmul.f32 %v493, %v628
      %v718 = vmul.f32 %v494, %v633
      %v719 = vmul.f32 %v495, %v638
      %v720 = vmul.f32 %v496, %v643
      %v721 = vmul.f32 %v497, %v648
      %v722 = vmul.f32 %v498, %v653
      %v723 = vmul.f32 %v499, %v658
      %v724 = vmul.f32 %v500, %v663
      %v725 = vmul.f32 %v501, %v668
      %v726 = vmul.f32 %v502, %v673
      %v727 = vmul.f32 %v503, %v678
      %v728 = vmul.f32 %v504, %v683
      %v729 = vmul.f32 %v505, %v688
      %v730 = vmul.f32 %v506, %v693
      %v731 = vmul.f32 %v507, %v698
      %vm732 = vcmask 31744
      %733 = vst.msk [vmem:[#allocation2 + $0x19] sm:$0xff] %vm732, %v700
      %734 = vst.msk [vmem:[#allocation2 + $0x21] sm:$0xff] %vm732, %v701
      %735 = vst.msk [vmem:[#allocation2 + $0x29] sm:$0xff] %vm732, %v702
      %736 = vst.msk [vmem:[#allocation2 + $0x31] sm:$0xff] %vm732, %v703
      %737 = vst.msk [vmem:[#allocation2 + $0x39] sm:$0xff] %vm732, %v704
      %738 = vst.msk [vmem:[#allocation2 + $0x41] sm:$0xff] %vm732, %v705
      %739 = vst.msk [vmem:[#allocation2 + $0x49] sm:$0xff] %vm732, %v706
      %740 = vst.msk [vmem:[#allocation2 + $0x51] sm:$0xff] %vm732, %v707
      %741 = vst.msk [vmem:[#allocation2 + $0x59] sm:$0xff] %vm732, %v708
      %742 = vst.msk [vmem:[#allocation2 + $0x61] sm:$0xff] %vm732, %v709
      %743 = vst.msk [vmem:[#allocation2 + $0x69] sm:$0xff] %vm732, %v710
      %744 = vst.msk [vmem:[#allocation2 + $0x71] sm:$0xff] %vm732, %v711
      %745 = vst.msk [vmem:[#allocation2 + $0x79] sm:$0xff] %vm732, %v712
      %746 = vst.msk [vmem:[#allocation2 + $0x81] sm:$0xff] %vm732, %v713
      %747 = vst.msk [vmem:[#allocation2 + $0x89] sm:$0xff] %vm732, %v714
      %748 = vst.msk [vmem:[#allocation2 + $0x91] sm:$0xff] %vm732, %v715
      %749 = vst.msk [vmem:[#allocation2 + $0x99] sm:$0xff] %vm732, %v716
      %750 = vst.msk [vmem:[#allocation2 + $0xa1] sm:$0xff] %vm732, %v717
      %751 = vst.msk [vmem:[#allocation2 + $0xa9] sm:$0xff] %vm732, %v718
      %752 = vst.msk [vmem:[#allocation2 + $0xb1] sm:$0xff] %vm732, %v719
      %753 = vst.msk [vmem:[#allocation2 + $0xb9] sm:$0xff] %vm732, %v720
      %754 = vst.msk [vmem:[#allocation2 + $0xc1] sm:$0xff] %vm732, %v721
      %755 = vst.msk [vmem:[#allocation2 + $0xc9] sm:$0xff] %vm732, %v722
      %756 = vst.msk [vmem:[#allocation2 + $0xd1] sm:$0xff] %vm732, %v723
      %757 = vst.msk [vmem:[#allocation2 + $0xd9] sm:$0xff] %vm732, %v724
      %758 = vst.msk [vmem:[#allocation2 + $0xe1] sm:$0xff] %vm732, %v725
      %759 = vst.msk [vmem:[#allocation2 + $0xe9] sm:$0xff] %vm732, %v726
      %760 = vst.msk [vmem:[#allocation2 + $0xf1] sm:$0xff] %vm732, %v727
      %761 = vst.msk [vmem:[#allocation2 + $0xf9] sm:$0xff] %vm732, %v728
      %762 = vst.msk [vmem:[#allocation2 + $0x101] sm:$0xff] %vm732, %v729
      %763 = vst.msk [vmem:[#allocation2 + $0x109] sm:$0xff] %vm732, %v730
      %764 = vst.msk [vmem:[#allocation2 + $0x111] sm:$0xff] %vm732, %v731
      %797 = vrot.lane.b32.xlu0 %v476, 4
      %v798 = vpop.permute.xlu0 %797
      %799 = vrot.lane.b32.xlu0 %v477, 4
      %v800 = vpop.permute.xlu0 %799
      %801 = vrot.lane.b32.xlu0 %v478, 4
      %v802 = vpop.permute.xlu0 %801
      %803 = vrot.lane.b32.xlu0 %v479, 4
      %v804 = vpop.permute.xlu0 %803
      %805 = vrot.lane.b32.xlu0 %v480, 4
      %v806 = vpop.permute.xlu0 %805
      %807 = vrot.lane.b32.xlu0 %v481, 4
      %v808 = vpop.permute.xlu0 %807
      %809 = vrot.lane.b32.xlu0 %v482, 4
      %v810 = vpop.permute.xlu0 %809
      %811 = vrot.lane.b32.xlu0 %v483, 4
      %v812 = vpop.permute.xlu0 %811
      %813 = vrot.lane.b32.xlu0 %v484, 4
      %v814 = vpop.permute.xlu0 %813
      %815 = vrot.lane.b32.xlu0 %v485, 4
      %v816 = vpop.permute.xlu0 %815
      %817 = vrot.lane.b32.xlu0 %v486, 4
      %v818 = vpop.permute.xlu0 %817
      %819 = vrot.lane.b32.xlu0 %v487, 4
      %v820 = vpop.permute.xlu0 %819
      %821 = vrot.lane.b32.xlu0 %v488, 4
      %v822 = vpop.permute.xlu0 %821
      %823 = vrot.lane.b32.xlu0 %v489, 4
      %v824 = vpop.permute.xlu0 %823
      %825 = vrot.lane.b32.xlu0 %v490, 4
      %v826 = vpop.permute.xlu0 %825
      %827 = vrot.lane.b32.xlu0 %v491, 4
      %v828 = vpop.permute.xlu0 %827
      %829 = vrot.lane.b32.xlu0 %v492, 4
      %v830 = vpop.permute.xlu0 %829
      %831 = vrot.lane.b32.xlu0 %v493, 4
      %v832 = vpop.permute.xlu0 %831
      %833 = vrot.lane.b32.xlu0 %v494, 4
      %v834 = vpop.permute.xlu0 %833
      %835 = vrot.lane.b32.xlu0 %v495, 4
      %v836 = vpop.permute.xlu0 %835
      %837 = vrot.lane.b32.xlu0 %v496, 4
      %v838 = vpop.permute.xlu0 %837
      %839 = vrot.lane.b32.xlu0 %v497, 4
      %v840 = vpop.permute.xlu0 %839
      %841 = vrot.lane.b32.xlu0 %v498, 4
      %v842 = vpop.permute.xlu0 %841
      %843 = vrot.lane.b32.xlu0 %v499, 4
      %v844 = vpop.permute.xlu0 %843
      %845 = vrot.lane.b32.xlu0 %v500, 4
      %v846 = vpop.permute.xlu0 %845
      %847 = vrot.lane.b32.xlu0 %v501, 4
      %v848 = vpop.permute.xlu0 %847
      %849 = vrot.lane.b32.xlu0 %v502, 4
      %v850 = vpop.permute.xlu0 %849
      %851 = vrot.lane.b32.xlu0 %v503, 4
      %v852 = vpop.permute.xlu0 %851
      %853 = vrot.lane.b32.xlu0 %v504, 4
      %v854 = vpop.permute.xlu0 %853
      %855 = vrot.lane.b32.xlu0 %v505, 4
      %v856 = vpop.permute.xlu0 %855
      %857 = vrot.lane.b32.xlu0 %v506, 4
      %v858 = vpop.permute.xlu0 %857
      %859 = vrot.lane.b32.xlu0 %v507, 4
      %v860 = vpop.permute.xlu0 %859
      %vm893 = vcmask 64544
      %894 = vst.msk [vmem:[#allocation2 + $0x18] sm:$0xff] %vm893, %v798
      %895 = vst.msk [vmem:[#allocation2 + $0x20] sm:$0xff] %vm893, %v800
      %896 = vst.msk [vmem:[#allocation2 + $0x28] sm:$0xff] %vm893, %v802
      %897 = vst.msk [vmem:[#allocation2 + $0x30] sm:$0xff] %vm893, %v804
      %898 = vst.msk [vmem:[#allocation2 + $0x38] sm:$0xff] %vm893, %v806
      %899 = vst.msk [vmem:[#allocation2 + $0x40] sm:$0xff] %vm893, %v808
      %900 = vst.msk [vmem:[#allocation2 + $0x48] sm:$0xff] %vm893, %v810
      %901 = vst.msk [vmem:[#allocation2 + $0x50] sm:$0xff] %vm893, %v812
      %902 = vst.msk [vmem:[#allocation2 + $0x58] sm:$0xff] %vm893, %v814
      %903 = vst.msk [vmem:[#allocation2 + $0x60] sm:$0xff] %vm893, %v816
      %904 = vst.msk [vmem:[#allocation2 + $0x68] sm:$0xff] %vm893, %v818
      %905 = vst.msk [vmem:[#allocation2 + $0x70] sm:$0xff] %vm893, %v820
      %906 = vst.msk [vmem:[#allocation2 + $0x78] sm:$0xff] %vm893, %v822
      %907 = vst.msk [vmem:[#allocation2 + $0x80] sm:$0xff] %vm893, %v824
      %908 = vst.msk [vmem:[#allocation2 + $0x88] sm:$0xff] %vm893, %v826
      %909 = vst.msk [vmem:[#allocation2 + $0x90] sm:$0xff] %vm893, %v828
      %910 = vst.msk [vmem:[#allocation2 + $0x98] sm:$0xff] %vm893, %v830
      %911 = vst.msk [vmem:[#allocation2 + $0xa0] sm:$0xff] %vm893, %v832
      %912 = vst.msk [vmem:[#allocation2 + $0xa8] sm:$0xff] %vm893, %v834
      %913 = vst.msk [vmem:[#allocation2 + $0xb0] sm:$0xff] %vm893, %v836
      %914 = vst.msk [vmem:[#allocation2 + $0xb8] sm:$0xff] %vm893, %v838
      %915 = vst.msk [vmem:[#allocation2 + $0xc0] sm:$0xff] %vm893, %v840
      %916 = vst.msk [vmem:[#allocation2 + $0xc8] sm:$0xff] %vm893, %v842
      %917 = vst.msk [vmem:[#allocation2 + $0xd0] sm:$0xff] %vm893, %v844
      %918 = vst.msk [vmem:[#allocation2 + $0xd8] sm:$0xff] %vm893, %v846
      %919 = vst.msk [vmem:[#allocation2 + $0xe0] sm:$0xff] %vm893, %v848
      %920 = vst.msk [vmem:[#allocation2 + $0xe8] sm:$0xff] %vm893, %v850
      %921 = vst.msk [vmem:[#allocation2 + $0xf0] sm:$0xff] %vm893, %v852
      %922 = vst.msk [vmem:[#allocation2 + $0xf8] sm:$0xff] %vm893, %v854
      %923 = vst.msk [vmem:[#allocation2 + $0x100] sm:$0xff] %vm893, %v856
      %924 = vst.msk [vmem:[#allocation2 + $0x108] sm:$0xff] %vm893, %v858
      %925 = vst.msk [vmem:[#allocation2 + $0x110] sm:$0xff] %vm893, %v860
      %v926 = vld [vmem:[%s4] sm:$0xff]
      %v927 = vld [vmem:[%s4 + $0x8] sm:$0xff]
      %v928 = vld [vmem:[%s4 + $0x10] sm:$0xff]
      %v929 = vld [vmem:[%s4 + $0x18] sm:$0xff]
      %v930 = vld [vmem:[%s4 + $0x20] sm:$0xff]
      %v931 = vld [vmem:[%s4 + $0x28] sm:$0xff]
      %v932 = vld [vmem:[%s4 + $0x30] sm:$0xff]
      %v933 = vld [vmem:[%s4 + $0x38] sm:$0xff]
      %v934 = vld [vmem:[%s4 + $0x40] sm:$0xff]
      %v935 = vld [vmem:[%s4 + $0x48] sm:$0xff]
      %v936 = vld [vmem:[%s4 + $0x50] sm:$0xff]
      %v937 = vld [vmem:[%s4 + $0x58] sm:$0xff]
      %v938 = vld [vmem:[%s4 + $0x60] sm:$0xff]
      %v939 = vld [vmem:[%s4 + $0x68] sm:$0xff]
      %v940 = vld [vmem:[%s4 + $0x70] sm:$0xff]
      %v941 = vld [vmem:[%s4 + $0x78] sm:$0xff]
      %v942 = vld [vmem:[%s4 + $0x80] sm:$0xff]
      %v943 = vld [vmem:[%s4 + $0x88] sm:$0xff]
      %v944 = vld [vmem:[%s4 + $0x90] sm:$0xff]
      %v945 = vld [vmem:[%s4 + $0x98] sm:$0xff]
      %v946 = vld [vmem:[%s4 + $0xa0] sm:$0xff]
      %v947 = vld [vmem:[%s4 + $0xa8] sm:$0xff]
      %v948 = vld [vmem:[%s4 + $0xb0] sm:$0xff]
      %v949 = vld [vmem:[%s4 + $0xb8] sm:$0xff]
      %v950 = vld [vmem:[%s4 + $0xc0] sm:$0xff]
      %v951 = vld [vmem:[%s4 + $0xc8] sm:$0xff]
      %v952 = vld [vmem:[%s4 + $0xd0] sm:$0xff]
      %v953 = vld [vmem:[%s4 + $0xd8] sm:$0xff]
      %v954 = vld [vmem:[%s4 + $0xe0] sm:$0xff]
      %v955 = vld [vmem:[%s4 + $0xe8] sm:$0xff]
      %v956 = vld [vmem:[%s4 + $0xf0] sm:$0xff]
      %v957 = vld [vmem:[%s4 + $0xf8] sm:$0xff]
      %959 = vset.pattern.permute.xlu0 0
      %960 = vperm.xlu0 %959, %v926
      %v961 = vpop.permute.xlu0 %960
      %964 = vset.pattern.permute.xlu0 0
      %965 = vperm.xlu0 %964, %v927
      %v966 = vpop.permute.xlu0 %965
      %969 = vset.pattern.permute.xlu0 0
      %970 = vperm.xlu0 %969, %v928
      %v971 = vpop.permute.xlu0 %970
      %974 = vset.pattern.permute.xlu0 0
      %975 = vperm.xlu0 %974, %v929
      %v976 = vpop.permute.xlu0 %975
      %979 = vset.pattern.permute.xlu0 0
      %980 = vperm.xlu0 %979, %v930
      %v981 = vpop.permute.xlu0 %980
      %984 = vset.pattern.permute.xlu0 0
      %985 = vperm.xlu0 %984, %v931
      %v986 = vpop.permute.xlu0 %985
      %989 = vset.pattern.permute.xlu0 0
      %990 = vperm.xlu0 %989, %v932
      %v991 = vpop.permute.xlu0 %990
      %994 = vset.pattern.permute.xlu0 0
      %995 = vperm.xlu0 %994, %v933
      %v996 = vpop.permute.xlu0 %995
      %999 = vset.pattern.permute.xlu0 0
      %1000 = vperm.xlu0 %999, %v934
      %v1001 = vpop.permute.xlu0 %1000
      %1004 = vset.pattern.permute.xlu0 0
      %1005 = vperm.xlu0 %1004, %v935
      %v1006 = vpop.permute.xlu0 %1005
      %1009 = vset.pattern.permute.xlu0 0
      %1010 = vperm.xlu0 %1009, %v936
      %v1011 = vpop.permute.xlu0 %1010
      %1014 = vset.pattern.permute.xlu0 0
      %1015 = vperm.xlu0 %1014, %v937
      %v1016 = vpop.permute.xlu0 %1015
      %1019 = vset.pattern.permute.xlu0 0
      %1020 = vperm.xlu0 %1019, %v938
      %v1021 = vpop.permute.xlu0 %1020
      %1024 = vset.pattern.permute.xlu0 0
      %1025 = vperm.xlu0 %1024, %v939
      %v1026 = vpop.permute.xlu0 %1025
      %1029 = vset.pattern.permute.xlu0 0
      %1030 = vperm.xlu0 %1029, %v940
      %v1031 = vpop.permute.xlu0 %1030
      %1034 = vset.pattern.permute.xlu0 0
      %1035 = vperm.xlu0 %1034, %v941
      %v1036 = vpop.permute.xlu0 %1035
      %1039 = vset.pattern.permute.xlu0 0
      %1040 = vperm.xlu0 %1039, %v942
      %v1041 = vpop.permute.xlu0 %1040
      %1044 = vset.pattern.permute.xlu0 0
      %1045 = vperm.xlu0 %1044, %v943
      %v1046 = vpop.permute.xlu0 %1045
      %1049 = vset.pattern.permute.xlu0 0
      %1050 = vperm.xlu0 %1049, %v944
      %v1051 = vpop.permute.xlu0 %1050
      %1054 = vset.pattern.permute.xlu0 0
      %1055 = vperm.xlu0 %1054, %v945
      %v1056 = vpop.permute.xlu0 %1055
      %1059 = vset.pattern.permute.xlu0 0
      %1060 = vperm.xlu0 %1059, %v946
      %v1061 = vpop.permute.xlu0 %1060
      %1064 = vset.pattern.permute.xlu0 0
      %1065 = vperm.xlu0 %1064, %v947
      %v1066 = vpop.permute.xlu0 %1065
      %1069 = vset.pattern.permute.xlu0 0
      %1070 = vperm.xlu0 %1069, %v948
      %v1071 = vpop.permute.xlu0 %1070
      %1074 = vset.pattern.permute.xlu0 0
      %1075 = vperm.xlu0 %1074, %v949
      %v1076 = vpop.permute.xlu0 %1075
      %1079 = vset.pattern.permute.xlu0 0
      %1080 = vperm.xlu0 %1079, %v950
      %v1081 = vpop.permute.xlu0 %1080
      %1084 = vset.pattern.permute.xlu0 0
      %1085 = vperm.xlu0 %1084, %v951
      %v1086 = vpop.permute.xlu0 %1085
      %1089 = vset.pattern.permute.xlu0 0
      %1090 = vperm.xlu0 %1089, %v952
      %v1091 = vpop.permute.xlu0 %1090
      %1094 = vset.pattern.permute.xlu0 0
      %1095 = vperm.xlu0 %1094, %v953
      %v1096 = vpop.permute.xlu0 %1095
      %1099 = vset.pattern.permute.xlu0 0
      %1100 = vperm.xlu0 %1099, %v954
      %v1101 = vpop.permute.xlu0 %1100
      %1104 = vset.pattern.permute.xlu0 0
      %1105 = vperm.xlu0 %1104, %v955
      %v1106 = vpop.permute.xlu0 %1105
      %1109 = vset.pattern.permute.xlu0 0
      %1110 = vperm.xlu0 %1109, %v956
      %v1111 = vpop.permute.xlu0 %1110
      %1114 = vset.pattern.permute.xlu0 0
      %1115 = vperm.xlu0 %1114, %v957
      %v1116 = vpop.permute.xlu0 %1115
      %v1118 = vmul.f32 %v476, %v961
      %v1119 = vmul.f32 %v477, %v966
      %v1120 = vmul.f32 %v478, %v971
      %v1121 = vmul.f32 %v479, %v976
      %v1122 = vmul.f32 %v480, %v981
      %v1123 = vmul.f32 %v481, %v986
      %v1124 = vmul.f32 %v482, %v991
      %v1125 = vmul.f32 %v483, %v996
      %v1126 = vmul.f32 %v484, %v1001
      %v1127 = vmul.f32 %v485, %v1006
      %v1128 = vmul.f32 %v486, %v1011
      %v1129 = vmul.f32 %v487, %v1016
      %v1130 = vmul.f32 %v488, %v1021
      %v1131 = vmul.f32 %v489, %v1026
      %v1132 = vmul.f32 %v490, %v1031
      %v1133 = vmul.f32 %v491, %v1036
      %v1134 = vmul.f32 %v492, %v1041
      %v1135 = vmul.f32 %v493, %v1046
      %v1136 = vmul.f32 %v494, %v1051
      %v1137 = vmul.f32 %v495, %v1056
      %v1138 = vmul.f32 %v496, %v1061
      %v1139 = vmul.f32 %v497, %v1066
      %v1140 = vmul.f32 %v498, %v1071
      %v1141 = vmul.f32 %v499, %v1076
      %v1142 = vmul.f32 %v500, %v1081
      %v1143 = vmul.f32 %v501, %v1086
      %v1144 = vmul.f32 %v502, %v1091
      %v1145 = vmul.f32 %v503, %v1096
      %v1146 = vmul.f32 %v504, %v1101
      %v1147 = vmul.f32 %v505, %v1106
      %v1148 = vmul.f32 %v506, %v1111
      %v1149 = vmul.f32 %v507, %v1116
      %1182 = vrot.lane.b32.xlu0 %v1118, 8
      %v1183 = vpop.permute.xlu0 %1182
      %1184 = vrot.lane.b32.xlu0 %v1119, 8
      %v1185 = vpop.permute.xlu0 %1184
      %1186 = vrot.lane.b32.xlu0 %v1120, 8
      %v1187 = vpop.permute.xlu0 %1186
      %1188 = vrot.lane.b32.xlu0 %v1121, 8
      %v1189 = vpop.permute.xlu0 %1188
      %1190 = vrot.lane.b32.xlu0 %v1122, 8
      %v1191 = vpop.permute.xlu0 %1190
      %1192 = vrot.lane.b32.xlu0 %v1123, 8
      %v1193 = vpop.permute.xlu0 %1192
      %1194 = vrot.lane.b32.xlu0 %v1124, 8
      %v1195 = vpop.permute.xlu0 %1194
      %1196 = vrot.lane.b32.xlu0 %v1125, 8
      %v1197 = vpop.permute.xlu0 %1196
      %1198 = vrot.lane.b32.xlu0 %v1126, 8
      %v1199 = vpop.permute.xlu0 %1198
      %1200 = vrot.lane.b32.xlu0 %v1127, 8
      %v1201 = vpop.permute.xlu0 %1200
      %1202 = vrot.lane.b32.xlu0 %v1128, 8
      %v1203 = vpop.permute.xlu0 %1202
      %1204 = vrot.lane.b32.xlu0 %v1129, 8
      %v1205 = vpop.permute.xlu0 %1204
      %1206 = vrot.lane.b32.xlu0 %v1130, 8
      %v1207 = vpop.permute.xlu0 %1206
      %1208 = vrot.lane.b32.xlu0 %v1131, 8
      %v1209 = vpop.permute.xlu0 %1208
      %1210 = vrot.lane.b32.xlu0 %v1132, 8
      %v1211 = vpop.permute.xlu0 %1210
      %1212 = vrot.lane.b32.xlu0 %v1133, 8
      %v1213 = vpop.permute.xlu0 %1212
      %1214 = vrot.lane.b32.xlu0 %v1134, 8
      %v1215 = vpop.permute.xlu0 %1214
      %1216 = vrot.lane.b32.xlu0 %v1135, 8
      %v1217 = vpop.permute.xlu0 %1216
      %1218 = vrot.lane.b32.xlu0 %v1136, 8
      %v1219 = vpop.permute.xlu0 %1218
      %1220 = vrot.lane.b32.xlu0 %v1137, 8
      %v1221 = vpop.permute.xlu0 %1220
      %1222 = vrot.lane.b32.xlu0 %v1138, 8
      %v1223 = vpop.permute.xlu0 %1222
      %1224 = vrot.lane.b32.xlu0 %v1139, 8
      %v1225 = vpop.permute.xlu0 %1224
      %1226 = vrot.lane.b32.xlu0 %v1140, 8
      %v1227 = vpop.permute.xlu0 %1226
      %1228 = vrot.lane.b32.xlu0 %v1141, 8
      %v1229 = vpop.permute.xlu0 %1228
      %1230 = vrot.lane.b32.xlu0 %v1142, 8
      %v1231 = vpop.permute.xlu0 %1230
      %1232 = vrot.lane.b32.xlu0 %v1143, 8
      %v1233 = vpop.permute.xlu0 %1232
      %1234 = vrot.lane.b32.xlu0 %v1144, 8
      %v1235 = vpop.permute.xlu0 %1234
      %1236 = vrot.lane.b32.xlu0 %v1145, 8
      %v1237 = vpop.permute.xlu0 %1236
      %1238 = vrot.lane.b32.xlu0 %v1146, 8
      %v1239 = vpop.permute.xlu0 %1238
      %1240 = vrot.lane.b32.xlu0 %v1147, 8
      %v1241 = vpop.permute.xlu0 %1240
      %1242 = vrot.lane.b32.xlu0 %v1148, 8
      %v1243 = vpop.permute.xlu0 %1242
      %1244 = vrot.lane.b32.xlu0 %v1149, 8
      %v1245 = vpop.permute.xlu0 %1244
      %vm1278 = vcmask 97344
      %1279 = vst.msk [vmem:[#allocation2 + $0x17] sm:$0xff] %vm1278, %v1183
      %1280 = vst.msk [vmem:[#allocation2 + $0x1f] sm:$0xff] %vm1278, %v1185
      %1281 = vst.msk [vmem:[#allocation2 + $0x27] sm:$0xff] %vm1278, %v1187
      %1282 = vst.msk [vmem:[#allocation2 + $0x2f] sm:$0xff] %vm1278, %v1189
      %1283 = vst.msk [vmem:[#allocation2 + $0x37] sm:$0xff] %vm1278, %v1191
      %1284 = vst.msk [vmem:[#allocation2 + $0x3f] sm:$0xff] %vm1278, %v1193
      %1285 = vst.msk [vmem:[#allocation2 + $0x47] sm:$0xff] %vm1278, %v1195
      %1286 = vst.msk [vmem:[#allocation2 + $0x4f] sm:$0xff] %vm1278, %v1197
      %1287 = vst.msk [vmem:[#allocation2 + $0x57] sm:$0xff] %vm1278, %v1199
      %1288 = vst.msk [vmem:[#allocation2 + $0x5f] sm:$0xff] %vm1278, %v1201
      %1289 = vst.msk [vmem:[#allocation2 + $0x67] sm:$0xff] %vm1278, %v1203
      %1290 = vst.msk [vmem:[#allocation2 + $0x6f] sm:$0xff] %vm1278, %v1205
      %1291 = vst.msk [vmem:[#allocation2 + $0x77] sm:$0xff] %vm1278, %v1207
      %1292 = vst.msk [vmem:[#allocation2 + $0x7f] sm:$0xff] %vm1278, %v1209
      %1293 = vst.msk [vmem:[#allocation2 + $0x87] sm:$0xff] %vm1278, %v1211
      %1294 = vst.msk [vmem:[#allocation2 + $0x8f] sm:$0xff] %vm1278, %v1213
      %1295 = vst.msk [vmem:[#allocation2 + $0x97] sm:$0xff] %vm1278, %v1215
      %1296 = vst.msk [vmem:[#allocation2 + $0x9f] sm:$0xff] %vm1278, %v1217
      %1297 = vst.msk [vmem:[#allocation2 + $0xa7] sm:$0xff] %vm1278, %v1219
      %1298 = vst.msk [vmem:[#allocation2 + $0xaf] sm:$0xff] %vm1278, %v1221
      %1299 = vst.msk [vmem:[#allocation2 + $0xb7] sm:$0xff] %vm1278, %v1223
      %1300 = vst.msk [vmem:[#allocation2 + $0xbf] sm:$0xff] %vm1278, %v1225
      %1301 = vst.msk [vmem:[#allocation2 + $0xc7] sm:$0xff] %vm1278, %v1227
      %1302 = vst.msk [vmem:[#allocation2 + $0xcf] sm:$0xff] %vm1278, %v1229
      %1303 = vst.msk [vmem:[#allocation2 + $0xd7] sm:$0xff] %vm1278, %v1231
      %1304 = vst.msk [vmem:[#allocation2 + $0xdf] sm:$0xff] %vm1278, %v1233
      %1305 = vst.msk [vmem:[#allocation2 + $0xe7] sm:$0xff] %vm1278, %v1235
      %1306 = vst.msk [vmem:[#allocation2 + $0xef] sm:$0xff] %vm1278, %v1237
      %1307 = vst.msk [vmem:[#allocation2 + $0xf7] sm:$0xff] %vm1278, %v1239
      %1308 = vst.msk [vmem:[#allocation2 + $0xff] sm:$0xff] %vm1278, %v1241
      %1309 = vst.msk [vmem:[#allocation2 + $0x107] sm:$0xff] %vm1278, %v1243
      %1310 = vst.msk [vmem:[#allocation2 + $0x10f] sm:$0xff] %vm1278, %v1245
      %vm1311 = vcmask 24576
      %1312 = vst.msk [vmem:[%s319] sm:$0x1] %vm1311, 0.0
      %1313 = vst.msk [vmem:[%s322] sm:$0x1] %vm1311, 0.0
      %s1314 = sadd.s32 0, 8
      %s1315 = scalar_lea.vmem [#allocation2], %s1314
      %v1316 = vld [vmem:[%s1315] sm:$0xff]
      %v1317 = vld [vmem:[%s1315 + $0x8] sm:$0xff]
      %v1318 = vld [vmem:[%s1315 + $0x10] sm:$0xff]
      %v1319 = vld [vmem:[%s1315 + $0x18] sm:$0xff]
      %v1320 = vld [vmem:[%s1315 + $0x20] sm:$0xff]
      %v1321 = vld [vmem:[%s1315 + $0x28] sm:$0xff]
      %v1322 = vld [vmem:[%s1315 + $0x30] sm:$0xff]
      %v1323 = vld [vmem:[%s1315 + $0x38] sm:$0xff]
      %v1324 = vld [vmem:[%s1315 + $0x40] sm:$0xff]
      %v1325 = vld [vmem:[%s1315 + $0x48] sm:$0xff]
      %v1326 = vld [vmem:[%s1315 + $0x50] sm:$0xff]
      %v1327 = vld [vmem:[%s1315 + $0x58] sm:$0xff]
      %v1328 = vld [vmem:[%s1315 + $0x60] sm:$0xff]
      %v1329 = vld [vmem:[%s1315 + $0x68] sm:$0xff]
      %v1330 = vld [vmem:[%s1315 + $0x70] sm:$0xff]
      %v1331 = vld [vmem:[%s1315 + $0x78] sm:$0xff]
      %v1332 = vld [vmem:[%s1315 + $0x80] sm:$0xff]
      %v1333 = vld [vmem:[%s1315 + $0x88] sm:$0xff]
      %v1334 = vld [vmem:[%s1315 + $0x90] sm:$0xff]
      %v1335 = vld [vmem:[%s1315 + $0x98] sm:$0xff]
      %v1336 = vld [vmem:[%s1315 + $0xa0] sm:$0xff]
      %v1337 = vld [vmem:[%s1315 + $0xa8] sm:$0xff]
      %v1338 = vld [vmem:[%s1315 + $0xb0] sm:$0xff]
      %v1339 = vld [vmem:[%s1315 + $0xb8] sm:$0xff]
      %v1340 = vld [vmem:[%s1315 + $0xc0] sm:$0xff]
      %v1341 = vld [vmem:[%s1315 + $0xc8] sm:$0xff]
      %v1342 = vld [vmem:[%s1315 + $0xd0] sm:$0xff]
      %v1343 = vld [vmem:[%s1315 + $0xd8] sm:$0xff]
      %v1344 = vld [vmem:[%s1315 + $0xe0] sm:$0xff]
      %v1345 = vld [vmem:[%s1315 + $0xe8] sm:$0xff]
      %v1346 = vld [vmem:[%s1315 + $0xf0] sm:$0xff]
      %v1347 = vld [vmem:[%s1315 + $0xf8] sm:$0xff]
      %v1348 = vpack.c.bf16 %v1317, %v1316
      %v1349 = vpack.c.bf16 %v1319, %v1318
      %v1350 = vpack.c.bf16 %v1321, %v1320
      %v1351 = vpack.c.bf16 %v1323, %v1322
      %v1352 = vpack.c.bf16 %v1325, %v1324
      %v1353 = vpack.c.bf16 %v1327, %v1326
      %v1354 = vpack.c.bf16 %v1329, %v1328
      %v1355 = vpack.c.bf16 %v1331, %v1330
      %v1356 = vpack.c.bf16 %v1333, %v1332
      %v1357 = vpack.c.bf16 %v1335, %v1334
      %v1358 = vpack.c.bf16 %v1337, %v1336
      %v1359 = vpack.c.bf16 %v1339, %v1338
      %v1360 = vpack.c.bf16 %v1341, %v1340
      %v1361 = vpack.c.bf16 %v1343, %v1342
      %v1362 = vpack.c.bf16 %v1345, %v1344
      %v1363 = vpack.c.bf16 %v1347, %v1346
      %v1364 = vld [vmem:[%s5] sm:$0xf]
      %v1365 = vld [vmem:[%s5 + $0x4] sm:$0x3]
      %s1366 = sadd.s32 0, 24
      %s1367 = scalar_lea.vmem [#allocation2], %s1366
      %v1368 = vld [vmem:[%s1367] sm:$0xff]
      %v1369 = vld [vmem:[%s1367 + $0x8] sm:$0xff]
      %v1370 = vld [vmem:[%s1367 + $0x10] sm:$0xff]
      %v1371 = vld [vmem:[%s1367 + $0x18] sm:$0xff]
      %v1372 = vld [vmem:[%s1367 + $0x20] sm:$0xff]
      %v1373 = vld [vmem:[%s1367 + $0x28] sm:$0xff]
      %v1374 = vld [vmem:[%s1367 + $0x30] sm:$0xff]
      %v1375 = vld [vmem:[%s1367 + $0x38] sm:$0xff]
      %v1376 = vld [vmem:[%s1367 + $0x40] sm:$0xff]
      %v1377 = vld [vmem:[%s1367 + $0x48] sm:$0xff]
      %v1378 = vld [vmem:[%s1367 + $0x50] sm:$0xff]
      %v1379 = vld [vmem:[%s1367 + $0x58] sm:$0xff]
      %v1380 = vld [vmem:[%s1367 + $0x60] sm:$0xff]
      %v1381 = vld [vmem:[%s1367 + $0x68] sm:$0xff]
      %v1382 = vld [vmem:[%s1367 + $0x70] sm:$0xff]
      %v1383 = vld [vmem:[%s1367 + $0x78] sm:$0xff]
      %v1384 = vld [vmem:[%s1367 + $0x80] sm:$0xff]
      %v1385 = vld [vmem:[%s1367 + $0x88] sm:$0xff]
      %v1386 = vld [vmem:[%s1367 + $0x90] sm:$0xff]
      %v1387 = vld [vmem:[%s1367 + $0x98] sm:$0xff]
      %v1388 = vld [vmem:[%s1367 + $0xa0] sm:$0xff]
      %v1389 = vld [vmem:[%s1367 + $0xa8] sm:$0xff]
      %v1390 = vld [vmem:[%s1367 + $0xb0] sm:$0xff]
      %v1391 = vld [vmem:[%s1367 + $0xb8] sm:$0xff]
      %v1392 = vld [vmem:[%s1367 + $0xc0] sm:$0xff]
      %v1393 = vld [vmem:[%s1367 + $0xc8] sm:$0xff]
      %v1394 = vld [vmem:[%s1367 + $0xd0] sm:$0xff]
      %v1395 = vld [vmem:[%s1367 + $0xd8] sm:$0xff]
      %v1396 = vld [vmem:[%s1367 + $0xe0] sm:$0xff]
      %v1397 = vld [vmem:[%s1367 + $0xe8] sm:$0xff]
      %v1398 = vld [vmem:[%s1367 + $0xf0] sm:$0xff]
      %v1399 = vld [vmem:[%s1367 + $0xf8] sm:$0xff]
      %v1400 = vpack.c.bf16 %v1369, %v1368
      %v1401 = vpack.c.bf16 %v1371, %v1370
      %v1402 = vpack.c.bf16 %v1373, %v1372
      %v1403 = vpack.c.bf16 %v1375, %v1374
      %v1404 = vpack.c.bf16 %v1377, %v1376
      %v1405 = vpack.c.bf16 %v1379, %v1378
      %v1406 = vpack.c.bf16 %v1381, %v1380
      %v1407 = vpack.c.bf16 %v1383, %v1382
      %v1408 = vpack.c.bf16 %v1385, %v1384
      %v1409 = vpack.c.bf16 %v1387, %v1386
      %v1410 = vpack.c.bf16 %v1389, %v1388
      %v1411 = vpack.c.bf16 %v1391, %v1390
      %v1412 = vpack.c.bf16 %v1393, %v1392
      %v1413 = vpack.c.bf16 %v1395, %v1394
      %v1414 = vpack.c.bf16 %v1397, %v1396
      %v1415 = vpack.c.bf16 %v1399, %v1398
      %s1416 = scalar_lea.vmem %s5, 8
      %v1417 = vld [vmem:[%s1416] sm:$0xf]
      %v1418 = vld [vmem:[%s1416 + $0x4] sm:$0x3]
      %v1421 = vunpack.c.l.b16 %v1417
      %v1422 = vunpack.c.l.b16 %v1418
      %v1423 = vpack.c.b16 %v1422, %v1421
      %v1425 = vsel %vm324, %v1400, 0
      %v1428 = vsel %vm324, %v1401, 0
      %v1431 = vsel %vm324, %v1402, 0
      %v1434 = vsel %vm324, %v1403, 0
      %v1437 = vsel %vm324, %v1404, 0
      %v1440 = vsel %vm324, %v1405, 0
      %v1443 = vsel %vm324, %v1406, 0
      %v1446 = vsel %vm324, %v1407, 0
      %v1449 = vsel %vm324, %v1408, 0
      %v1452 = vsel %vm324, %v1409, 0
      %v1455 = vsel %vm324, %v1410, 0
      %v1458 = vsel %vm324, %v1411, 0
      %v1461 = vsel %vm324, %v1412, 0
      %v1464 = vsel %vm324, %v1413, 0
      %v1467 = vsel %vm324, %v1414, 0
      %v1470 = vsel %vm324, %v1415, 0
      %vm1472 = vcmask 1045504
      %v1474 = vsel %vm1472, %v1423, 0
      %1476 = vmatprep.subr.bf16.mxu0 0
      %1477 = vmatpush1.bf16.msra.mxu0 0
      %1478 = vmatprep.subr.bf16.mxu0 0
      %1479 = vmatpush1.bf16.msra.mxu0 0
      %1480 = vmatprep.subr.bf16.mxu0 0
      %1481 = vmatpush1.bf16.msra.mxu0 0
      %1482 = vmatprep.subr.bf16.mxu0 0
      %1483 = vmatpush1.bf16.msra.mxu0 0
      %1484 = vmatprep.subr.bf16.mxu0 0
      %1485 = vmatpush1.bf16.msra.mxu0 0
      %1486 = vmatprep.subr.bf16.mxu0 0
      %1487 = vmatpush1.bf16.msra.mxu0 0
      %1488 = vmatprep.subr.bf16.mxu0 0
      %1489 = vmatpush1.bf16.msra.mxu0 0
      %1490 = vmatprep.subr.bf16.mxu0 0
      %1491 = vmatpush1.bf16.msra.mxu0 %v1474
      %1492 = vmatprep.subr.bf16.mxu0 0
      %1493 = vmatpush2.bf16.msra.mxu0 0
      %1494 = vmatprep.subr.bf16.mxu0 0
      %1495 = vmatpush2.bf16.msra.mxu0 0
      %1496 = vmatprep.subr.bf16.mxu0 0
      %1497 = vmatpush2.bf16.msra.mxu0 0
      %1498 = vmatprep.subr.bf16.mxu0 0
      %1499 = vmatpush2.bf16.msra.mxu0 0
      %1500 = vmatprep.subr.bf16.mxu0 0
      %1501 = vmatpush2.bf16.msra.mxu0 0
      %1502 = vmatprep.subr.bf16.mxu0 0
      %1503 = vmatpush2.bf16.msra.mxu0 0
      %1504 = vmatprep.subr.bf16.mxu0 0
      %1505 = vmatpush2.bf16.msra.mxu0 0
      %1506 = vmatprep.subr.bf16.mxu0 0
      %1507 = vmatpush2.bf16.msra.mxu0 0
      %1508 = vmatprep.mubr.bf16.mxu0 0
      %1509 = vmatmul.mubr.bf16.gmra.mxu0 %v1425
      %v1510 = vpop.f32.mrf.mxu0
      %v1511 = vadd.f32 0.0, %v1510
      %v1512 = vpop.f32.mrf.mxu0
      %v1513 = vpop.f32.mrf.mxu0
      %v1514 = vadd.f32 0.0, %v1513
      %v1515 = vpop.f32.mrf.mxu0
      %1516 = vmatprep.mubr.bf16.mxu0 0
      %1517 = vmatmul.mubr.bf16.gmra.mxu0 %v1428
      %v1518 = vpop.f32.mrf.mxu0
      %v1519 = vadd.f32 0.0, %v1518
      %v1520 = vpop.f32.mrf.mxu0
      %v1521 = vpop.f32.mrf.mxu0
      %v1522 = vadd.f32 0.0, %v1521
      %v1523 = vpop.f32.mrf.mxu0
      %1524 = vmatprep.mubr.bf16.mxu0 0
      %1525 = vmatmul.mubr.bf16.gmra.mxu0 %v1431
      %v1526 = vpop.f32.mrf.mxu0
      %v1527 = vadd.f32 0.0, %v1526
      %v1528 = vpop.f32.mrf.mxu0
      %v1529 = vpop.f32.mrf.mxu0
      %v1530 = vadd.f32 0.0, %v1529
      %v1531 = vpop.f32.mrf.mxu0
      %1532 = vmatprep.mubr.bf16.mxu0 0
      %1533 = vmatmul.mubr.bf16.gmra.mxu0 %v1434
      %v1534 = vpop.f32.mrf.mxu0
      %v1535 = vadd.f32 0.0, %v1534
      %v1536 = vpop.f32.mrf.mxu0
      %v1537 = vpop.f32.mrf.mxu0
      %v1538 = vadd.f32 0.0, %v1537
      %v1539 = vpop.f32.mrf.mxu0
      %1540 = vmatprep.mubr.bf16.mxu0 0
      %1541 = vmatmul.mubr.bf16.gmra.mxu0 %v1437
      %v1542 = vpop.f32.mrf.mxu0
      %v1543 = vadd.f32 0.0, %v1542
      %v1544 = vpop.f32.mrf.mxu0
      %v1545 = vpop.f32.mrf.mxu0
      %v1546 = vadd.f32 0.0, %v1545
      %v1547 = vpop.f32.mrf.mxu0
      %1548 = vmatprep.mubr.bf16.mxu0 0
      %1549 = vmatmul.mubr.bf16.gmra.mxu0 %v1440
      %v1550 = vpop.f32.mrf.mxu0
      %v1551 = vadd.f32 0.0, %v1550
      %v1552 = vpop.f32.mrf.mxu0
      %v1553 = vpop.f32.mrf.mxu0
      %v1554 = vadd.f32 0.0, %v1553
      %v1555 = vpop.f32.mrf.mxu0
      %1556 = vmatprep.mubr.bf16.mxu0 0
      %1557 = vmatmul.mubr.bf16.gmra.mxu0 %v1443
      %v1558 = vpop.f32.mrf.mxu0
      %v1559 = vadd.f32 0.0, %v1558
      %v1560 = vpop.f32.mrf.mxu0
      %v1561 = vpop.f32.mrf.mxu0
      %v1562 = vadd.f32 0.0, %v1561
      %v1563 = vpop.f32.mrf.mxu0
      %1564 = vmatprep.mubr.bf16.mxu0 0
      %1565 = vmatmul.mubr.bf16.gmra.mxu0 %v1446
      %v1566 = vpop.f32.mrf.mxu0
      %v1567 = vadd.f32 0.0, %v1566
      %v1568 = vpop.f32.mrf.mxu0
      %v1569 = vpop.f32.mrf.mxu0
      %v1570 = vadd.f32 0.0, %v1569
      %v1571 = vpop.f32.mrf.mxu0
      %1572 = vmatprep.mubr.bf16.mxu0 0
      %1573 = vmatmul.mubr.bf16.gmra.mxu0 %v1449
      %v1574 = vpop.f32.mrf.mxu0
      %v1575 = vadd.f32 0.0, %v1574
      %v1576 = vpop.f32.mrf.mxu0
      %v1577 = vpop.f32.mrf.mxu0
      %v1578 = vadd.f32 0.0, %v1577
      %v1579 = vpop.f32.mrf.mxu0
      %1580 = vmatprep.mubr.bf16.mxu0 0
      %1581 = vmatmul.mubr.bf16.gmra.mxu0 %v1452
      %v1582 = vpop.f32.mrf.mxu0
      %v1583 = vadd.f32 0.0, %v1582
      %v1584 = vpop.f32.mrf.mxu0
      %v1585 = vpop.f32.mrf.mxu0
      %v1586 = vadd.f32 0.0, %v1585
      %v1587 = vpop.f32.mrf.mxu0
      %1588 = vmatprep.mubr.bf16.mxu0 0
      %1589 = vmatmul.mubr.bf16.gmra.mxu0 %v1455
      %v1590 = vpop.f32.mrf.mxu0
      %v1591 = vadd.f32 0.0, %v1590
      %v1592 = vpop.f32.mrf.mxu0
      %v1593 = vpop.f32.mrf.mxu0
      %v1594 = vadd.f32 0.0, %v1593
      %v1595 = vpop.f32.mrf.mxu0
      %1596 = vmatprep.mubr.bf16.mxu0 0
      %1597 = vmatmul.mubr.bf16.gmra.mxu0 %v1458
      %v1598 = vpop.f32.mrf.mxu0
      %v1599 = vadd.f32 0.0, %v1598
      %v1600 = vpop.f32.mrf.mxu0
      %v1601 = vpop.f32.mrf.mxu0
      %v1602 = vadd.f32 0.0, %v1601
      %v1603 = vpop.f32.mrf.mxu0
      %1604 = vmatprep.mubr.bf16.mxu0 0
      %1605 = vmatmul.mubr.bf16.gmra.mxu0 %v1461
      %v1606 = vpop.f32.mrf.mxu0
      %v1607 = vadd.f32 0.0, %v1606
      %v1608 = vpop.f32.mrf.mxu0
      %v1609 = vpop.f32.mrf.mxu0
      %v1610 = vadd.f32 0.0, %v1609
      %v1611 = vpop.f32.mrf.mxu0
      %1612 = vmatprep.mubr.bf16.mxu0 0
      %1613 = vmatmul.mubr.bf16.gmra.mxu0 %v1464
      %v1614 = vpop.f32.mrf.mxu0
      %v1615 = vadd.f32 0.0, %v1614
      %v1616 = vpop.f32.mrf.mxu0
      %v1617 = vpop.f32.mrf.mxu0
      %v1618 = vadd.f32 0.0, %v1617
      %v1619 = vpop.f32.mrf.mxu0
      %1620 = vmatprep.mubr.bf16.mxu0 0
      %1621 = vmatmul.mubr.bf16.gmra.mxu0 %v1467
      %v1622 = vpop.f32.mrf.mxu0
      %v1623 = vadd.f32 0.0, %v1622
      %v1624 = vpop.f32.mrf.mxu0
      %v1625 = vpop.f32.mrf.mxu0
      %v1626 = vadd.f32 0.0, %v1625
      %v1627 = vpop.f32.mrf.mxu0
      %1628 = vmatprep.mubr.bf16.mxu0 0
      %1629 = vmatmul.mubr.bf16.gmra.mxu0 %v1470
      %v1630 = vpop.f32.mrf.mxu0
      %v1631 = vadd.f32 0.0, %v1630
      %v1632 = vpop.f32.mrf.mxu0
      %v1633 = vpop.f32.mrf.mxu0
      %v1634 = vadd.f32 0.0, %v1633
      %v1635 = vpop.f32.mrf.mxu0
      %1636 = vdwg.mxu0
      %v1639 = vunpack.c.l.b16 %v1364
      %v1640 = vunpack.c.l.b16 %v1365
      %v1641 = vpack.c.b16 %v1640, %v1639
      %v1643 = vsel %vm324, %v1348, 0
      %v1646 = vsel %vm324, %v1349, 0
      %v1649 = vsel %vm324, %v1350, 0
      %v1652 = vsel %vm324, %v1351, 0
      %v1655 = vsel %vm324, %v1352, 0
      %v1658 = vsel %vm324, %v1353, 0
      %v1661 = vsel %vm324, %v1354, 0
      %v1664 = vsel %vm324, %v1355, 0
      %v1667 = vsel %vm324, %v1356, 0
      %v1670 = vsel %vm324, %v1357, 0
      %v1673 = vsel %vm324, %v1358, 0
      %v1676 = vsel %vm324, %v1359, 0
      %v1679 = vsel %vm324, %v1360, 0
      %v1682 = vsel %vm324, %v1361, 0
      %v1685 = vsel %vm324, %v1362, 0
      %v1688 = vsel %vm324, %v1363, 0
      %v1691 = vsel %vm1472, %v1641, 0
      %1693 = vmatprep.subr.bf16.mxu0 0
      %1694 = vmatpush1.bf16.msra.mxu0 0
      %1695 = vmatprep.subr.bf16.mxu0 0
      %1696 = vmatpush1.bf16.msra.mxu0 0
      %1697 = vmatprep.subr.bf16.mxu0 0
      %1698 = vmatpush1.bf16.msra.mxu0 0
      %1699 = vmatprep.subr.bf16.mxu0 0
      %1700 = vmatpush1.bf16.msra.mxu0 0
      %1701 = vmatprep.subr.bf16.mxu0 0
      %1702 = vmatpush1.bf16.msra.mxu0 0
      %1703 = vmatprep.subr.bf16.mxu0 0
      %1704 = vmatpush1.bf16.msra.mxu0 0
      %1705 = vmatprep.subr.bf16.mxu0 0
      %1706 = vmatpush1.bf16.msra.mxu0 0
      %1707 = vmatprep.subr.bf16.mxu0 0
      %1708 = vmatpush1.bf16.msra.mxu0 %v1691
      %1709 = vmatprep.subr.bf16.mxu0 0
      %1710 = vmatpush2.bf16.msra.mxu0 0
      %1711 = vmatprep.subr.bf16.mxu0 0
      %1712 = vmatpush2.bf16.msra.mxu0 0
      %1713 = vmatprep.subr.bf16.mxu0 0
      %1714 = vmatpush2.bf16.msra.mxu0 0
      %1715 = vmatprep.subr.bf16.mxu0 0
      %1716 = vmatpush2.bf16.msra.mxu0 0
      %1717 = vmatprep.subr.bf16.mxu0 0
      %1718 = vmatpush2.bf16.msra.mxu0 0
      %1719 = vmatprep.subr.bf16.mxu0 0
      %1720 = vmatpush2.bf16.msra.mxu0 0
      %1721 = vmatprep.subr.bf16.mxu0 0
      %1722 = vmatpush2.bf16.msra.mxu0 0
      %1723 = vmatprep.subr.bf16.mxu0 0
      %1724 = vmatpush2.bf16.msra.mxu0 0
      %1725 = vmatprep.mubr.bf16.mxu0 0
      %1726 = vmatmul.mubr.bf16.gmra.mxu0 %v1643
      %v1727 = vpop.f32.mrf.mxu0
      %v1728 = vadd.f32 %v1511, %v1727
      %v1729 = vpop.f32.mrf.mxu0
      %v1730 = vpop.f32.mrf.mxu0
      %v1731 = vadd.f32 %v1514, %v1730
      %v1732 = vpop.f32.mrf.mxu0
      %1733 = vmatprep.mubr.bf16.mxu0 0
      %1734 = vmatmul.mubr.bf16.gmra.mxu0 %v1646
      %v1735 = vpop.f32.mrf.mxu0
      %v1736 = vadd.f32 %v1519, %v1735
      %v1737 = vpop.f32.mrf.mxu0
      %v1738 = vpop.f32.mrf.mxu0
      %v1739 = vadd.f32 %v1522, %v1738
      %v1740 = vpop.f32.mrf.mxu0
      %1741 = vmatprep.mubr.bf16.mxu0 0
      %1742 = vmatmul.mubr.bf16.gmra.mxu0 %v1649
      %v1743 = vpop.f32.mrf.mxu0
      %v1744 = vadd.f32 %v1527, %v1743
      %v1745 = vpop.f32.mrf.mxu0
      %v1746 = vpop.f32.mrf.mxu0
      %v1747 = vadd.f32 %v1530, %v1746
      %v1748 = vpop.f32.mrf.mxu0
      %1749 = vmatprep.mubr.bf16.mxu0 0
      %1750 = vmatmul.mubr.bf16.gmra.mxu0 %v1652
      %v1751 = vpop.f32.mrf.mxu0
      %v1752 = vadd.f32 %v1535, %v1751
      %v1753 = vpop.f32.mrf.mxu0
      %v1754 = vpop.f32.mrf.mxu0
      %v1755 = vadd.f32 %v1538, %v1754
      %v1756 = vpop.f32.mrf.mxu0
      %1757 = vmatprep.mubr.bf16.mxu0 0
      %1758 = vmatmul.mubr.bf16.gmra.mxu0 %v1655
      %v1759 = vpop.f32.mrf.mxu0
      %v1760 = vadd.f32 %v1543, %v1759
      %v1761 = vpop.f32.mrf.mxu0
      %v1762 = vpop.f32.mrf.mxu0
      %v1763 = vadd.f32 %v1546, %v1762
      %v1764 = vpop.f32.mrf.mxu0
      %1765 = vmatprep.mubr.bf16.mxu0 0
      %1766 = vmatmul.mubr.bf16.gmra.mxu0 %v1658
      %v1767 = vpop.f32.mrf.mxu0
      %v1768 = vadd.f32 %v1551, %v1767
      %v1769 = vpop.f32.mrf.mxu0
      %v1770 = vpop.f32.mrf.mxu0
      %v1771 = vadd.f32 %v1554, %v1770
      %v1772 = vpop.f32.mrf.mxu0
      %1773 = vmatprep.mubr.bf16.mxu0 0
      %1774 = vmatmul.mubr.bf16.gmra.mxu0 %v1661
      %v1775 = vpop.f32.mrf.mxu0
      %v1776 = vadd.f32 %v1559, %v1775
      %v1777 = vpop.f32.mrf.mxu0
      %v1778 = vpop.f32.mrf.mxu0
      %v1779 = vadd.f32 %v1562, %v1778
      %v1780 = vpop.f32.mrf.mxu0
      %1781 = vmatprep.mubr.bf16.mxu0 0
      %1782 = vmatmul.mubr.bf16.gmra.mxu0 %v1664
      %v1783 = vpop.f32.mrf.mxu0
      %v1784 = vadd.f32 %v1567, %v1783
      %v1785 = vpop.f32.mrf.mxu0
      %v1786 = vpop.f32.mrf.mxu0
      %v1787 = vadd.f32 %v1570, %v1786
      %v1788 = vpop.f32.mrf.mxu0
      %1789 = vmatprep.mubr.bf16.mxu0 0
      %1790 = vmatmul.mubr.bf16.gmra.mxu0 %v1667
      %v1791 = vpop.f32.mrf.mxu0
      %v1792 = vadd.f32 %v1575, %v1791
      %v1793 = vpop.f32.mrf.mxu0
      %v1794 = vpop.f32.mrf.mxu0
      %v1795 = vadd.f32 %v1578, %v1794
      %v1796 = vpop.f32.mrf.mxu0
      %1797 = vmatprep.mubr.bf16.mxu0 0
      %1798 = vmatmul.mubr.bf16.gmra.mxu0 %v1670
      %v1799 = vpop.f32.mrf.mxu0
      %v1800 = vadd.f32 %v1583, %v1799
      %v1801 = vpop.f32.mrf.mxu0
      %v1802 = vpop.f32.mrf.mxu0
      %v1803 = vadd.f32 %v1586, %v1802
      %v1804 = vpop.f32.mrf.mxu0
      %1805 = vmatprep.mubr.bf16.mxu0 0
      %1806 = vmatmul.mubr.bf16.gmra.mxu0 %v1673
      %v1807 = vpop.f32.mrf.mxu0
      %v1808 = vadd.f32 %v1591, %v1807
      %v1809 = vpop.f32.mrf.mxu0
      %v1810 = vpop.f32.mrf.mxu0
      %v1811 = vadd.f32 %v1594, %v1810
      %v1812 = vpop.f32.mrf.mxu0
      %1813 = vmatprep.mubr.bf16.mxu0 0
      %1814 = vmatmul.mubr.bf16.gmra.mxu0 %v1676
      %v1815 = vpop.f32.mrf.mxu0
      %v1816 = vadd.f32 %v1599, %v1815
      %v1817 = vpop.f32.mrf.mxu0
      %v1818 = vpop.f32.mrf.mxu0
      %v1819 = vadd.f32 %v1602, %v1818
      %v1820 = vpop.f32.mrf.mxu0
      %1821 = vmatprep.mubr.bf16.mxu0 0
      %1822 = vmatmul.mubr.bf16.gmra.mxu0 %v1679
      %v1823 = vpop.f32.mrf.mxu0
      %v1824 = vadd.f32 %v1607, %v1823
      %v1825 = vpop.f32.mrf.mxu0
      %v1826 = vpop.f32.mrf.mxu0
      %v1827 = vadd.f32 %v1610, %v1826
      %v1828 = vpop.f32.mrf.mxu0
      %1829 = vmatprep.mubr.bf16.mxu0 0
      %1830 = vmatmul.mubr.bf16.gmra.mxu0 %v1682
      %v1831 = vpop.f32.mrf.mxu0
      %v1832 = vadd.f32 %v1615, %v1831
      %v1833 = vpop.f32.mrf.mxu0
      %v1834 = vpop.f32.mrf.mxu0
      %v1835 = vadd.f32 %v1618, %v1834
      %v1836 = vpop.f32.mrf.mxu0
      %1837 = vmatprep.mubr.bf16.mxu0 0
      %1838 = vmatmul.mubr.bf16.gmra.mxu0 %v1685
      %v1839 = vpop.f32.mrf.mxu0
      %v1840 = vadd.f32 %v1623, %v1839
      %v1841 = vpop.f32.mrf.mxu0
      %v1842 = vpop.f32.mrf.mxu0
      %v1843 = vadd.f32 %v1626, %v1842
      %v1844 = vpop.f32.mrf.mxu0
      %1845 = vmatprep.mubr.bf16.mxu0 0
      %1846 = vmatmul.mubr.bf16.gmra.mxu0 %v1688
      %v1847 = vpop.f32.mrf.mxu0
      %v1848 = vadd.f32 %v1631, %v1847
      %v1849 = vpop.f32.mrf.mxu0
      %v1850 = vpop.f32.mrf.mxu0
      %v1851 = vadd.f32 %v1634, %v1850
      %v1852 = vpop.f32.mrf.mxu0
      %1853 = vdwg.mxu0
      %s1854 = sadd.s32 0, 40
      %s1855 = scalar_lea.vmem [#allocation2], %s1854
      %v1856 = vld [vmem:[%s1855] sm:$0xff]
      %v1857 = vld [vmem:[%s1855 + $0x8] sm:$0xff]
      %v1858 = vld [vmem:[%s1855 + $0x10] sm:$0xff]
      %v1859 = vld [vmem:[%s1855 + $0x18] sm:$0xff]
      %v1860 = vld [vmem:[%s1855 + $0x20] sm:$0xff]
      %v1861 = vld [vmem:[%s1855 + $0x28] sm:$0xff]
      %v1862 = vld [vmem:[%s1855 + $0x30] sm:$0xff]
      %v1863 = vld [vmem:[%s1855 + $0x38] sm:$0xff]
      %v1864 = vld [vmem:[%s1855 + $0x40] sm:$0xff]
      %v1865 = vld [vmem:[%s1855 + $0x48] sm:$0xff]
      %v1866 = vld [vmem:[%s1855 + $0x50] sm:$0xff]
      %v1867 = vld [vmem:[%s1855 + $0x58] sm:$0xff]
      %v1868 = vld [vmem:[%s1855 + $0x60] sm:$0xff]
      %v1869 = vld [vmem:[%s1855 + $0x68] sm:$0xff]
      %v1870 = vld [vmem:[%s1855 + $0x70] sm:$0xff]
      %v1871 = vld [vmem:[%s1855 + $0x78] sm:$0xff]
      %v1872 = vld [vmem:[%s1855 + $0x80] sm:$0xff]
      %v1873 = vld [vmem:[%s1855 + $0x88] sm:$0xff]
      %v1874 = vld [vmem:[%s1855 + $0x90] sm:$0xff]
      %v1875 = vld [vmem:[%s1855 + $0x98] sm:$0xff]
      %v1876 = vld [vmem:[%s1855 + $0xa0] sm:$0xff]
      %v1877 = vld [vmem:[%s1855 + $0xa8] sm:$0xff]
      %v1878 = vld [vmem:[%s1855 + $0xb0] sm:$0xff]
      %v1879 = vld [vmem:[%s1855 + $0xb8] sm:$0xff]
      %v1880 = vld [vmem:[%s1855 + $0xc0] sm:$0xff]
      %v1881 = vld [vmem:[%s1855 + $0xc8] sm:$0xff]
      %v1882 = vld [vmem:[%s1855 + $0xd0] sm:$0xff]
      %v1883 = vld [vmem:[%s1855 + $0xd8] sm:$0xff]
      %v1884 = vld [vmem:[%s1855 + $0xe0] sm:$0xff]
      %v1885 = vld [vmem:[%s1855 + $0xe8] sm:$0xff]
      %v1886 = vld [vmem:[%s1855 + $0xf0] sm:$0xff]
      %v1887 = vld [vmem:[%s1855 + $0xf8] sm:$0xff]
      %v1888 = vpack.c.bf16 %v1857, %v1856
      %v1889 = vpack.c.bf16 %v1859, %v1858
      %v1890 = vpack.c.bf16 %v1861, %v1860
      %v1891 = vpack.c.bf16 %v1863, %v1862
      %v1892 = vpack.c.bf16 %v1865, %v1864
      %v1893 = vpack.c.bf16 %v1867, %v1866
      %v1894 = vpack.c.bf16 %v1869, %v1868
      %v1895 = vpack.c.bf16 %v1871, %v1870
      %v1896 = vpack.c.bf16 %v1873, %v1872
      %v1897 = vpack.c.bf16 %v1875, %v1874
      %v1898 = vpack.c.bf16 %v1877, %v1876
      %v1899 = vpack.c.bf16 %v1879, %v1878
      %v1900 = vpack.c.bf16 %v1881, %v1880
      %v1901 = vpack.c.bf16 %v1883, %v1882
      %v1902 = vpack.c.bf16 %v1885, %v1884
      %v1903 = vpack.c.bf16 %v1887, %v1886
      %s1904 = scalar_lea.vmem %s5, 16
      %v1905 = vld [vmem:[%s1904] sm:$0xf]
      %v1906 = vld [vmem:[%s1904 + $0x4] sm:$0x3]
      %v1909 = vunpack.c.l.b16 %v1905
      %v1910 = vunpack.c.l.b16 %v1906
      %v1911 = vpack.c.b16 %v1910, %v1909
      %v1913 = vsel %vm324, %v1888, 0
      %v1916 = vsel %vm324, %v1889, 0
      %v1919 = vsel %vm324, %v1890, 0
      %v1922 = vsel %vm324, %v1891, 0
      %v1925 = vsel %vm324, %v1892, 0
      %v1928 = vsel %vm324, %v1893, 0
      %v1931 = vsel %vm324, %v1894, 0
      %v1934 = vsel %vm324, %v1895, 0
      %v1937 = vsel %vm324, %v1896, 0
      %v1940 = vsel %vm324, %v1897, 0
      %v1943 = vsel %vm324, %v1898, 0
      %v1946 = vsel %vm324, %v1899, 0
      %v1949 = vsel %vm324, %v1900, 0
      %v1952 = vsel %vm324, %v1901, 0
      %v1955 = vsel %vm324, %v1902, 0
      %v1958 = vsel %vm324, %v1903, 0
      %v1961 = vsel %vm1472, %v1911, 0
      %1963 = vmatprep.subr.bf16.mxu0 0
      %1964 = vmatpush1.bf16.msra.mxu0 0
      %1965 = vmatprep.subr.bf16.mxu0 0
      %1966 = vmatpush1.bf16.msra.mxu0 0
      %1967 = vmatprep.subr.bf16.mxu0 0
      %1968 = vmatpush1.bf16.msra.mxu0 0
      %1969 = vmatprep.subr.bf16.mxu0 0
      %1970 = vmatpush1.bf16.msra.mxu0 0
      %1971 = vmatprep.subr.bf16.mxu0 0
      %1972 = vmatpush1.bf16.msra.mxu0 0
      %1973 = vmatprep.subr.bf16.mxu0 0
      %1974 = vmatpush1.bf16.msra.mxu0 0
      %1975 = vmatprep.subr.bf16.mxu0 0
      %1976 = vmatpush1.bf16.msra.mxu0 0
      %1977 = vmatprep.subr.bf16.mxu0 0
      %1978 = vmatpush1.bf16.msra.mxu0 %v1961
      %1979 = vmatprep.subr.bf16.mxu0 0
      %1980 = vmatpush2.bf16.msra.mxu0 0
      %1981 = vmatprep.subr.bf16.mxu0 0
      %1982 = vmatpush2.bf16.msra.mxu0 0
      %1983 = vmatprep.subr.bf16.mxu0 0
      %1984 = vmatpush2.bf16.msra.mxu0 0
      %1985 = vmatprep.subr.bf16.mxu0 0
      %1986 = vmatpush2.bf16.msra.mxu0 0
      %1987 = vmatprep.subr.bf16.mxu0 0
      %1988 = vmatpush2.bf16.msra.mxu0 0
      %1989 = vmatprep.subr.bf16.mxu0 0
      %1990 = vmatpush2.bf16.msra.mxu0 0
      %1991 = vmatprep.subr.bf16.mxu0 0
      %1992 = vmatpush2.bf16.msra.mxu0 0
      %1993 = vmatprep.subr.bf16.mxu0 0
      %1994 = vmatpush2.bf16.msra.mxu0 0
      %1995 = vmatprep.mubr.bf16.mxu0 0
      %1996 = vmatmul.mubr.bf16.gmra.mxu0 %v1913
      %v1997 = vpop.f32.mrf.mxu0
      %v1998 = vadd.f32 0.0, %v1997
      %v1999 = vpop.f32.mrf.mxu0
      %v2000 = vpop.f32.mrf.mxu0
      %v2001 = vadd.f32 0.0, %v2000
      %v2002 = vpop.f32.mrf.mxu0
      %2003 = vmatprep.mubr.bf16.mxu0 0
      %2004 = vmatmul.mubr.bf16.gmra.mxu0 %v1916
      %v2005 = vpop.f32.mrf.mxu0
      %v2006 = vadd.f32 0.0, %v2005
      %v2007 = vpop.f32.mrf.mxu0
      %v2008 = vpop.f32.mrf.mxu0
      %v2009 = vadd.f32 0.0, %v2008
      %v2010 = vpop.f32.mrf.mxu0
      %2011 = vmatprep.mubr.bf16.mxu0 0
      %2012 = vmatmul.mubr.bf16.gmra.mxu0 %v1919
      %v2013 = vpop.f32.mrf.mxu0
      %v2014 = vadd.f32 0.0, %v2013
      %v2015 = vpop.f32.mrf.mxu0
      %v2016 = vpop.f32.mrf.mxu0
      %v2017 = vadd.f32 0.0, %v2016
      %v2018 = vpop.f32.mrf.mxu0
      %2019 = vmatprep.mubr.bf16.mxu0 0
      %2020 = vmatmul.mubr.bf16.gmra.mxu0 %v1922
      %v2021 = vpop.f32.mrf.mxu0
      %v2022 = vadd.f32 0.0, %v2021
      %v2023 = vpop.f32.mrf.mxu0
      %v2024 = vpop.f32.mrf.mxu0
      %v2025 = vadd.f32 0.0, %v2024
      %v2026 = vpop.f32.mrf.mxu0
      %2027 = vmatprep.mubr.bf16.mxu0 0
      %2028 = vmatmul.mubr.bf16.gmra.mxu0 %v1925
      %v2029 = vpop.f32.mrf.mxu0
      %v2030 = vadd.f32 0.0, %v2029
      %v2031 = vpop.f32.mrf.mxu0
      %v2032 = vpop.f32.mrf.mxu0
      %v2033 = vadd.f32 0.0, %v2032
      %v2034 = vpop.f32.mrf.mxu0
      %2035 = vmatprep.mubr.bf16.mxu0 0
      %2036 = vmatmul.mubr.bf16.gmra.mxu0 %v1928
      %v2037 = vpop.f32.mrf.mxu0
      %v2038 = vadd.f32 0.0, %v2037
      %v2039 = vpop.f32.mrf.mxu0
      %v2040 = vpop.f32.mrf.mxu0
      %v2041 = vadd.f32 0.0, %v2040
      %v2042 = vpop.f32.mrf.mxu0
      %2043 = vmatprep.mubr.bf16.mxu0 0
      %2044 = vmatmul.mubr.bf16.gmra.mxu0 %v1931
      %v2045 = vpop.f32.mrf.mxu0
      %v2046 = vadd.f32 0.0, %v2045
      %v2047 = vpop.f32.mrf.mxu0
      %v2048 = vpop.f32.mrf.mxu0
      %v2049 = vadd.f32 0.0, %v2048
      %v2050 = vpop.f32.mrf.mxu0
      %2051 = vmatprep.mubr.bf16.mxu0 0
      %2052 = vmatmul.mubr.bf16.gmra.mxu0 %v1934
      %v2053 = vpop.f32.mrf.mxu0
      %v2054 = vadd.f32 0.0, %v2053
      %v2055 = vpop.f32.mrf.mxu0
      %v2056 = vpop.f32.mrf.mxu0
      %v2057 = vadd.f32 0.0, %v2056
      %v2058 = vpop.f32.mrf.mxu0
      %2059 = vmatprep.mubr.bf16.mxu0 0
      %2060 = vmatmul.mubr.bf16.gmra.mxu0 %v1937
      %v2061 = vpop.f32.mrf.mxu0
      %v2062 = vadd.f32 0.0, %v2061
      %v2063 = vpop.f32.mrf.mxu0
      %v2064 = vpop.f32.mrf.mxu0
      %v2065 = vadd.f32 0.0, %v2064
      %v2066 = vpop.f32.mrf.mxu0
      %2067 = vmatprep.mubr.bf16.mxu0 0
      %2068 = vmatmul.mubr.bf16.gmra.mxu0 %v1940
      %v2069 = vpop.f32.mrf.mxu0
      %v2070 = vadd.f32 0.0, %v2069
      %v2071 = vpop.f32.mrf.mxu0
      %v2072 = vpop.f32.mrf.mxu0
      %v2073 = vadd.f32 0.0, %v2072
      %v2074 = vpop.f32.mrf.mxu0
      %2075 = vmatprep.mubr.bf16.mxu0 0
      %2076 = vmatmul.mubr.bf16.gmra.mxu0 %v1943
      %v2077 = vpop.f32.mrf.mxu0
      %v2078 = vadd.f32 0.0, %v2077
      %v2079 = vpop.f32.mrf.mxu0
      %v2080 = vpop.f32.mrf.mxu0
      %v2081 = vadd.f32 0.0, %v2080
      %v2082 = vpop.f32.mrf.mxu0
      %2083 = vmatprep.mubr.bf16.mxu0 0
      %2084 = vmatmul.mubr.bf16.gmra.mxu0 %v1946
      %v2085 = vpop.f32.mrf.mxu0
      %v2086 = vadd.f32 0.0, %v2085
      %v2087 = vpop.f32.mrf.mxu0
      %v2088 = vpop.f32.mrf.mxu0
      %v2089 = vadd.f32 0.0, %v2088
      %v2090 = vpop.f32.mrf.mxu0
      %2091 = vmatprep.mubr.bf16.mxu0 0
      %2092 = vmatmul.mubr.bf16.gmra.mxu0 %v1949
      %v2093 = vpop.f32.mrf.mxu0
      %v2094 = vadd.f32 0.0, %v2093
      %v2095 = vpop.f32.mrf.mxu0
      %v2096 = vpop.f32.mrf.mxu0
      %v2097 = vadd.f32 0.0, %v2096
      %v2098 = vpop.f32.mrf.mxu0
      %2099 = vmatprep.mubr.bf16.mxu0 0
      %2100 = vmatmul.mubr.bf16.gmra.mxu0 %v1952
      %v2101 = vpop.f32.mrf.mxu0
      %v2102 = vadd.f32 0.0, %v2101
      %v2103 = vpop.f32.mrf.mxu0
      %v2104 = vpop.f32.mrf.mxu0
      %v2105 = vadd.f32 0.0, %v2104
      %v2106 = vpop.f32.mrf.mxu0
      %2107 = vmatprep.mubr.bf16.mxu0 0
      %2108 = vmatmul.mubr.bf16.gmra.mxu0 %v1955
      %v2109 = vpop.f32.mrf.mxu0
      %v2110 = vadd.f32 0.0, %v2109
      %v2111 = vpop.f32.mrf.mxu0
      %v2112 = vpop.f32.mrf.mxu0
      %v2113 = vadd.f32 0.0, %v2112
      %v2114 = vpop.f32.mrf.mxu0
      %2115 = vmatprep.mubr.bf16.mxu0 0
      %2116 = vmatmul.mubr.bf16.gmra.mxu0 %v1958
      %v2117 = vpop.f32.mrf.mxu0
      %v2118 = vadd.f32 0.0, %v2117
      %v2119 = vpop.f32.mrf.mxu0
      %v2120 = vpop.f32.mrf.mxu0
      %v2121 = vadd.f32 0.0, %v2120
      %v2122 = vpop.f32.mrf.mxu0
      %2123 = vdwg.mxu0
      %v2124 = vadd.f32 %v1728, %v1998
      %v2125 = vadd.f32 %v1731, %v2001
      %v2126 = vadd.f32 %v1736, %v2006
      %v2127 = vadd.f32 %v1739, %v2009
      %v2128 = vadd.f32 %v1744, %v2014
      %v2129 = vadd.f32 %v1747, %v2017
      %v2130 = vadd.f32 %v1752, %v2022
      %v2131 = vadd.f32 %v1755, %v2025
      %v2132 = vadd.f32 %v1760, %v2030
      %v2133 = vadd.f32 %v1763, %v2033
      %v2134 = vadd.f32 %v1768, %v2038
      %v2135 = vadd.f32 %v1771, %v2041
      %v2136 = vadd.f32 %v1776, %v2046
      %v2137 = vadd.f32 %v1779, %v2049
      %v2138 = vadd.f32 %v1784, %v2054
      %v2139 = vadd.f32 %v1787, %v2057
      %v2140 = vadd.f32 %v1792, %v2062
      %v2141 = vadd.f32 %v1795, %v2065
      %v2142 = vadd.f32 %v1800, %v2070
      %v2143 = vadd.f32 %v1803, %v2073
      %v2144 = vadd.f32 %v1808, %v2078
      %v2145 = vadd.f32 %v1811, %v2081
      %v2146 = vadd.f32 %v1816, %v2086
      %v2147 = vadd.f32 %v1819, %v2089
      %v2148 = vadd.f32 %v1824, %v2094
      %v2149 = vadd.f32 %v1827, %v2097
      %v2150 = vadd.f32 %v1832, %v2102
      %v2151 = vadd.f32 %v1835, %v2105
      %v2152 = vadd.f32 %v1840, %v2110
      %v2153 = vadd.f32 %v1843, %v2113
      %v2154 = vadd.f32 %v1848, %v2118
      %v2155 = vadd.f32 %v1851, %v2121
      %v2156 = vpack.c.bf16 %v2125, %v2124
      %v2157 = vpack.c.bf16 %v2127, %v2126
      %v2158 = vpack.c.bf16 %v2129, %v2128
      %v2159 = vpack.c.bf16 %v2131, %v2130
      %v2160 = vpack.c.bf16 %v2133, %v2132
      %v2161 = vpack.c.bf16 %v2135, %v2134
      %v2162 = vpack.c.bf16 %v2137, %v2136
      %v2163 = vpack.c.bf16 %v2139, %v2138
      %v2164 = vpack.c.bf16 %v2141, %v2140
      %v2165 = vpack.c.bf16 %v2143, %v2142
      %v2166 = vpack.c.bf16 %v2145, %v2144
      %v2167 = vpack.c.bf16 %v2147, %v2146
      %v2168 = vpack.c.bf16 %v2149, %v2148
      %v2169 = vpack.c.bf16 %v2151, %v2150
      %v2170 = vpack.c.bf16 %v2153, %v2152
      %v2171 = vpack.c.bf16 %v2155, %v2154
      %v2188 = vunpack.c.l.b16 %v2156
      %v2189 = vunpack.c.h.b16 %v2156
      %v2190 = vunpack.c.l.b16 %v2157
      %v2191 = vunpack.c.h.b16 %v2157
      %v2192 = vunpack.c.l.b16 %v2158
      %v2193 = vunpack.c.h.b16 %v2158
      %v2194 = vunpack.c.l.b16 %v2159
      %v2195 = vunpack.c.h.b16 %v2159
      %v2196 = vunpack.c.l.b16 %v2160
      %v2197 = vunpack.c.h.b16 %v2160
      %v2198 = vunpack.c.l.b16 %v2161
      %v2199 = vunpack.c.h.b16 %v2161
      %v2200 = vunpack.c.l.b16 %v2162
      %v2201 = vunpack.c.h.b16 %v2162
      %v2202 = vunpack.c.l.b16 %v2163
      %v2203 = vunpack.c.h.b16 %v2163
      %v2204 = vunpack.c.l.b16 %v2164
      %v2205 = vunpack.c.h.b16 %v2164
      %v2206 = vunpack.c.l.b16 %v2165
      %v2207 = vunpack.c.h.b16 %v2165
      %v2208 = vunpack.c.l.b16 %v2166
      %v2209 = vunpack.c.h.b16 %v2166
      %v2210 = vunpack.c.l.b16 %v2167
      %v2211 = vunpack.c.h.b16 %v2167
      %v2212 = vunpack.c.l.b16 %v2168
      %v2213 = vunpack.c.h.b16 %v2168
      %v2214 = vunpack.c.l.b16 %v2169
      %v2215 = vunpack.c.h.b16 %v2169
      %v2216 = vunpack.c.l.b16 %v2170
      %v2217 = vunpack.c.h.b16 %v2170
      %v2218 = vunpack.c.l.b16 %v2171
      %v2219 = vunpack.c.h.b16 %v2171
      %v2220 = vpack.c.b16 %v2188, %v2188
      %v2221 = vpack.c.b16 %v2189, %v2189
      %v2222 = vpack.c.b16 %v2190, %v2190
      %v2223 = vpack.c.b16 %v2191, %v2191
      %v2224 = vpack.c.b16 %v2192, %v2192
      %v2225 = vpack.c.b16 %v2193, %v2193
      %v2226 = vpack.c.b16 %v2194, %v2194
      %v2227 = vpack.c.b16 %v2195, %v2195
      %v2228 = vpack.c.b16 %v2196, %v2196
      %v2229 = vpack.c.b16 %v2197, %v2197
      %v2230 = vpack.c.b16 %v2198, %v2198
      %v2231 = vpack.c.b16 %v2199, %v2199
      %v2232 = vpack.c.b16 %v2200, %v2200
      %v2233 = vpack.c.b16 %v2201, %v2201
      %v2234 = vpack.c.b16 %v2202, %v2202
      %v2235 = vpack.c.b16 %v2203, %v2203
      %v2236 = vpack.c.b16 %v2204, %v2204
      %v2237 = vpack.c.b16 %v2205, %v2205
      %v2238 = vpack.c.b16 %v2206, %v2206
      %v2239 = vpack.c.b16 %v2207, %v2207
      %v2240 = vpack.c.b16 %v2208, %v2208
      %v2241 = vpack.c.b16 %v2209, %v2209
      %v2242 = vpack.c.b16 %v2210, %v2210
      %v2243 = vpack.c.b16 %v2211, %v2211
      %v2244 = vpack.c.b16 %v2212, %v2212
      %v2245 = vpack.c.b16 %v2213, %v2213
      %v2246 = vpack.c.b16 %v2214, %v2214
      %v2247 = vpack.c.b16 %v2215, %v2215
      %v2248 = vpack.c.b16 %v2216, %v2216
      %v2249 = vpack.c.b16 %v2217, %v2217
      %v2250 = vpack.c.b16 %v2218, %v2218
      %v2251 = vpack.c.b16 %v2219, %v2219
      %vm2284 = vcmask 27648
      %2285 = vst.msk [vmem:[%s316] sm:$0xf] %vm2284, %v2220
      %2286 = vst.msk [vmem:[%s316 + $0x4] sm:$0xf] %vm2284, %v2221
      %2287 = vst.msk [vmem:[%s316 + $0x8] sm:$0xf] %vm2284, %v2222
      %2288 = vst.msk [vmem:[%s316 + $0xc] sm:$0xf] %vm2284, %v2223
      %2289 = vst.msk [vmem:[%s316 + $0x10] sm:$0xf] %vm2284, %v2224
      %2290 = vst.msk [vmem:[%s316 + $0x14] sm:$0xf] %vm2284, %v2225
      %2291 = vst.msk [vmem:[%s316 + $0x18] sm:$0xf] %vm2284, %v2226
      %2292 = vst.msk [vmem:[%s316 + $0x1c] sm:$0xf] %vm2284, %v2227
      %2293 = vst.msk [vmem:[%s316 + $0x20] sm:$0xf] %vm2284, %v2228
      %2294 = vst.msk [vmem:[%s316 + $0x24] sm:$0xf] %vm2284, %v2229
      %2295 = vst.msk [vmem:[%s316 + $0x28] sm:$0xf] %vm2284, %v2230
      %2296 = vst.msk [vmem:[%s316 + $0x2c] sm:$0xf] %vm2284, %v2231
      %2297 = vst.msk [vmem:[%s316 + $0x30] sm:$0xf] %vm2284, %v2232
      %2298 = vst.msk [vmem:[%s316 + $0x34] sm:$0xf] %vm2284, %v2233
      %2299 = vst.msk [vmem:[%s316 + $0x38] sm:$0xf] %vm2284, %v2234
      %2300 = vst.msk [vmem:[%s316 + $0x3c] sm:$0xf] %vm2284, %v2235
      %2301 = vst.msk [vmem:[%s316 + $0x40] sm:$0xf] %vm2284, %v2236
      %2302 = vst.msk [vmem:[%s316 + $0x44] sm:$0xf] %vm2284, %v2237
      %2303 = vst.msk [vmem:[%s316 + $0x48] sm:$0xf] %vm2284, %v2238
      %2304 = vst.msk [vmem:[%s316 + $0x4c] sm:$0xf] %vm2284, %v2239
      %2305 = vst.msk [vmem:[%s316 + $0x50] sm:$0xf] %vm2284, %v2240
      %2306 = vst.msk [vmem:[%s316 + $0x54] sm:$0xf] %vm2284, %v2241
      %2307 = vst.msk [vmem:[%s316 + $0x58] sm:$0xf] %vm2284, %v2242
      %2308 = vst.msk [vmem:[%s316 + $0x5c] sm:$0xf] %vm2284, %v2243
      %2309 = vst.msk [vmem:[%s316 + $0x60] sm:$0xf] %vm2284, %v2244
      %2310 = vst.msk [vmem:[%s316 + $0x64] sm:$0xf] %vm2284, %v2245
      %2311 = vst.msk [vmem:[%s316 + $0x68] sm:$0xf] %vm2284, %v2246
      %2312 = vst.msk [vmem:[%s316 + $0x6c] sm:$0xf] %vm2284, %v2247
      %2313 = vst.msk [vmem:[%s316 + $0x70] sm:$0xf] %vm2284, %v2248
      %2314 = vst.msk [vmem:[%s316 + $0x74] sm:$0xf] %vm2284, %v2249
      %2315 = vst.msk [vmem:[%s316 + $0x78] sm:$0xf] %vm2284, %v2250
      %2316 = vst.msk [vmem:[%s316 + $0x7c] sm:$0xf] %vm2284, %v2251
      %v2317 = vld [vmem:[%s319] sm:$0x1]
      %v2318 = vsel %vm732, %v2124, 0.0
      %v2319 = vsel %vm732, %v2125, 0.0
      %v2320 = vadd.f32 %v2318, %v2319
      %v2321 = vsel %vm732, %v2126, 0.0
      %v2322 = vadd.f32 %v2320, %v2321
      %v2323 = vsel %vm732, %v2127, 0.0
      %v2324 = vadd.f32 %v2322, %v2323
      %v2325 = vsel %vm732, %v2128, 0.0
      %v2326 = vadd.f32 %v2324, %v2325
      %v2327 = vsel %vm732, %v2129, 0.0
      %v2328 = vadd.f32 %v2326, %v2327
      %v2329 = vsel %vm732, %v2130, 0.0
      %v2330 = vadd.f32 %v2328, %v2329
      %v2331 = vsel %vm732, %v2131, 0.0
      %v2332 = vadd.f32 %v2330, %v2331
      %v2333 = vsel %vm732, %v2132, 0.0
      %v2334 = vadd.f32 %v2332, %v2333
      %v2335 = vsel %vm732, %v2133, 0.0
      %v2336 = vadd.f32 %v2334, %v2335
      %v2337 = vsel %vm732, %v2134, 0.0
      %v2338 = vadd.f32 %v2336, %v2337
      %v2339 = vsel %vm732, %v2135, 0.0
      %v2340 = vadd.f32 %v2338, %v2339
      %v2341 = vsel %vm732, %v2136, 0.0
      %v2342 = vadd.f32 %v2340, %v2341
      %v2343 = vsel %vm732, %v2137, 0.0
      %v2344 = vadd.f32 %v2342, %v2343
      %v2345 = vsel %vm732, %v2138, 0.0
      %v2346 = vadd.f32 %v2344, %v2345
      %v2347 = vsel %vm732, %v2139, 0.0
      %v2348 = vadd.f32 %v2346, %v2347
      %v2349 = vsel %vm732, %v2140, 0.0
      %v2350 = vadd.f32 %v2348, %v2349
      %v2351 = vsel %vm732, %v2141, 0.0
      %v2352 = vadd.f32 %v2350, %v2351
      %v2353 = vsel %vm732, %v2142, 0.0
      %v2354 = vadd.f32 %v2352, %v2353
      %v2355 = vsel %vm732, %v2143, 0.0
      %v2356 = vadd.f32 %v2354, %v2355
      %v2357 = vsel %vm732, %v2144, 0.0
      %v2358 = vadd.f32 %v2356, %v2357
      %v2359 = vsel %vm732, %v2145, 0.0
      %v2360 = vadd.f32 %v2358, %v2359
      %v2361 = vsel %vm732, %v2146, 0.0
      %v2362 = vadd.f32 %v2360, %v2361
      %v2363 = vsel %vm732, %v2147, 0.0
      %v2364 = vadd.f32 %v2362, %v2363
      %v2365 = vsel %vm732, %v2148, 0.0
      %v2366 = vadd.f32 %v2364, %v2365
      %v2367 = vsel %vm732, %v2149, 0.0
      %v2368 = vadd.f32 %v2366, %v2367
      %v2369 = vsel %vm732, %v2150, 0.0
      %v2370 = vadd.f32 %v2368, %v2369
      %v2371 = vsel %vm732, %v2151, 0.0
      %v2372 = vadd.f32 %v2370, %v2371
      %v2373 = vsel %vm732, %v2152, 0.0
      %v2374 = vadd.f32 %v2372, %v2373
      %v2375 = vsel %vm732, %v2153, 0.0
      %v2376 = vadd.f32 %v2374, %v2375
      %v2377 = vsel %vm732, %v2154, 0.0
      %v2378 = vadd.f32 %v2376, %v2377
      %v2379 = vsel %vm732, %v2155, 0.0
      %v2380 = vadd.f32 %v2378, %v2379
      %v2381 = vrot.slane %v2380, 4
      %v2382 = vadd.f32 %v2380, %v2381
      %v2383 = vrot.slane %v2382, 2
      %v2384 = vadd.f32 %v2382, %v2383
      %v2385 = vrot.slane %v2384, 1
      %v2386 = vadd.f32 %v2384, %v2385
      %v2387 = vadd.f32 %v2317, %v2386
      %2388 = vst.msk [vmem:[%s319] sm:$0x1] %vm1311, %v2387
      %v2389 = vld [vmem:[%s322] sm:$0x1]
      %v2390 = vmul.f32 %v2124, %v2124
      %v2391 = vmul.f32 %v2125, %v2125
      %v2392 = vmul.f32 %v2126, %v2126
      %v2393 = vmul.f32 %v2127, %v2127
      %v2394 = vmul.f32 %v2128, %v2128
      %v2395 = vmul.f32 %v2129, %v2129
      %v2396 = vmul.f32 %v2130, %v2130
      %v2397 = vmul.f32 %v2131, %v2131
      %v2398 = vmul.f32 %v2132, %v2132
      %v2399 = vmul.f32 %v2133, %v2133
      %v2400 = vmul.f32 %v2134, %v2134
      %v2401 = vmul.f32 %v2135, %v2135
      %v2402 = vmul.f32 %v2136, %v2136
      %v2403 = vmul.f32 %v2137, %v2137
      %v2404 = vmul.f32 %v2138, %v2138
      %v2405 = vmul.f32 %v2139, %v2139
      %v2406 = vmul.f32 %v2140, %v2140
      %v2407 = vmul.f32 %v2141, %v2141
      %v2408 = vmul.f32 %v2142, %v2142
      %v2409 = vmul.f32 %v2143, %v2143
      %v2410 = vmul.f32 %v2144, %v2144
      %v2411 = vmul.f32 %v2145, %v2145
      %v2412 = vmul.f32 %v2146, %v2146
      %v2413 = vmul.f32 %v2147, %v2147
      %v2414 = vmul.f32 %v2148, %v2148
      %v2415 = vmul.f32 %v2149, %v2149
      %v2416 = vmul.f32 %v2150, %v2150
      %v2417 = vmul.f32 %v2151, %v2151
      %v2418 = vmul.f32 %v2152, %v2152
      %v2419 = vmul.f32 %v2153, %v2153
      %v2420 = vmul.f32 %v2154, %v2154
      %v2421 = vmul.f32 %v2155, %v2155
      %v2422 = vsel %vm732, %v2390, 0.0
      %v2423 = vsel %vm732, %v2391, 0.0
      %v2424 = vadd.f32 %v2422, %v2423
      %v2425 = vsel %vm732, %v2392, 0.0
      %v2426 = vadd.f32 %v2424, %v2425
      %v2427 = vsel %vm732, %v2393, 0.0
      %v2428 = vadd.f32 %v2426, %v2427
      %v2429 = vsel %vm732, %v2394, 0.0
      %v2430 = vadd.f32 %v2428, %v2429
      %v2431 = vsel %vm732, %v2395, 0.0
      %v2432 = vadd.f32 %v2430, %v2431
      %v2433 = vsel %vm732, %v2396, 0.0
      %v2434 = vadd.f32 %v2432, %v2433
      %v2435 = vsel %vm732, %v2397, 0.0
      %v2436 = vadd.f32 %v2434, %v2435
      %v2437 = vsel %vm732, %v2398, 0.0
      %v2438 = vadd.f32 %v2436, %v2437
      %v2439 = vsel %vm732, %v2399, 0.0
      %v2440 = vadd.f32 %v2438, %v2439
      %v2441 = vsel %vm732, %v2400, 0.0
      %v2442 = vadd.f32 %v2440, %v2441
      %v2443 = vsel %vm732, %v2401, 0.0
      %v2444 = vadd.f32 %v2442, %v2443
      %v2445 = vsel %vm732, %v2402, 0.0
      %v2446 = vadd.f32 %v2444, %v2445
      %v2447 = vsel %vm732, %v2403, 0.0
      %v2448 = vadd.f32 %v2446, %v2447
      %v2449 = vsel %vm732, %v2404, 0.0
      %v2450 = vadd.f32 %v2448, %v2449
      %v2451 = vsel %vm732, %v2405, 0.0
      %v2452 = vadd.f32 %v2450, %v2451
      %v2453 = vsel %vm732, %v2406, 0.0
      %v2454 = vadd.f32 %v2452, %v2453
      %v2455 = vsel %vm732, %v2407, 0.0
      %v2456 = vadd.f32 %v2454, %v2455
      %v2457 = vsel %vm732, %v2408, 0.0
      %v2458 = vadd.f32 %v2456, %v2457
      %v2459 = vsel %vm732, %v2409, 0.0
      %v2460 = vadd.f32 %v2458, %v2459
      %v2461 = vsel %vm732, %v2410, 0.0
      %v2462 = vadd.f32 %v2460, %v2461
      %v2463 = vsel %vm732, %v2411, 0.0
      %v2464 = vadd.f32 %v2462, %v2463
      %v2465 = vsel %vm732, %v2412, 0.0
      %v2466 = vadd.f32 %v2464, %v2465
      %v2467 = vsel %vm732, %v2413, 0.0
      %v2468 = vadd.f32 %v2466, %v2467
      %v2469 = vsel %vm732, %v2414, 0.0
      %v2470 = vadd.f32 %v2468, %v2469
      %v2471 = vsel %vm732, %v2415, 0.0
      %v2472 = vadd.f32 %v2470, %v2471
      %v2473 = vsel %vm732, %v2416, 0.0
      %v2474 = vadd.f32 %v2472, %v2473
      %v2475 = vsel %vm732, %v2417, 0.0
      %v2476 = vadd.f32 %v2474, %v2475
      %v2477 = vsel %vm732, %v2418, 0.0
      %v2478 = vadd.f32 %v2476, %v2477
      %v2479 = vsel %vm732, %v2419, 0.0
      %v2480 = vadd.f32 %v2478, %v2479
      %v2481 = vsel %vm732, %v2420, 0.0
      %v2482 = vadd.f32 %v2480, %v2481
      %v2483 = vsel %vm732, %v2421, 0.0
      %v2484 = vadd.f32 %v2482, %v2483
      %v2485 = vrot.slane %v2484, 4
      %v2486 = vadd.f32 %v2484, %v2485
      %v2487 = vrot.slane %v2486, 2
      %v2488 = vadd.f32 %v2486, %v2487
      %v2489 = vrot.slane %v2488, 1
      %v2490 = vadd.f32 %v2488, %v2489
      %v2491 = vadd.f32 %v2389, %v2490
      %2492 = vst.msk [vmem:[%s322] sm:$0x1] %vm1311, %v2491
      %p2493 = scmp.lt.s32.totalorder %s20, 3
      %s2494 = scalar_select %p2493, %s20, 3
      %s2495 = smul.addr %s2494, 32
      %s2496 = smul.addr %s2495, 4
      %s2497 = scalar_lea.vmem %s6, %s2496
      %p2498 = scmp.lt.s32.totalorder %s20, 3
      %s2499 = scalar_select %p2498, %s20, 3
      %s2500 = scalar_lea.vmem %s7, %s2499
      %p2501 = scmp.lt.s32.totalorder %s20, 3
      %s2502 = scalar_select %p2501, %s20, 3
      %s2503 = scalar_lea.vmem %s8, %s2502
      // Predicated region
      $region45: #{bottleneck_forward.5} parent=43 // pred_check
        %p2504 = pneg %p169
      $region46: #{bottleneck_forward.5} parent=43 // pred_check_branch
        %2506 = sbr.rel (%p2504) target = $region48
      $region47: #{bottleneck_forward.5} parent=43 // pred_region
        _
      $region48: #{bottleneck_forward.5} parent=43 // pred_fallthru
        _
      // Predicated region
      $region49: #{bottleneck_forward.5} parent=43 // pred_check
        %p2507 = pneg %p195
      $region50: #{bottleneck_forward.5} parent=43 // pred_check_branch
        %2509 = sbr.rel (%p2507) target = $region52
      $region51: #{bottleneck_forward.5} parent=43 // pred_region
        _
      $region52: #{bottleneck_forward.5} parent=43 // pred_fallthru
        _
      // Predicated region
      $region53: #{bottleneck_forward.5} parent=43 // pred_check
        %p2510 = pneg %p221
      $region54: #{bottleneck_forward.5} parent=43 // pred_check_branch
        %2512 = sbr.rel (%p2510) target = $region56
      $region55: #{bottleneck_forward.5} parent=43 // pred_region
        _
      $region56: #{bottleneck_forward.5} parent=43 // pred_fallthru
        _
    $region44: #{bottleneck_forward.5} parent=5 // pred_fallthru
      _
    %p2513 = scmp.le.s32.totalorder 2, %s15
    // Predicated region
    $region57: #{bottleneck_forward.5} parent=5 // pred_check
      %p2514 = pneg %p2513
    $region58: #{bottleneck_forward.5} parent=5 // pred_check_branch
      %2516 = sbr.rel (%p2514) target = $region60
    $region59: #{bottleneck_forward.5} parent=5 // pred_region
      %s2517 = ssub.s32 %s15, 2
      // Predicated region
      $region61: #{bottleneck_forward.5} parent=59 // pred_check
        %p2518 = pneg %p175
      $region62: #{bottleneck_forward.5} parent=59 // pred_check_branch
        %2520 = sbr.rel (%p2518) target = $region64
      $region63: #{bottleneck_forward.5} parent=59 // pred_region
        %p2521 = scmp.lt.s32.totalorder %s21, 3
        %s2522 = scalar_select %p2521, %s21, 3
        %s2523 = smul.addr %s2522, 32
        %s2524 = smul.addr %s2523, 4
        %s2525 = scalar_lea.vmem %s6, %s2524
      $region64: #{bottleneck_forward.5} parent=59 // pred_fallthru
        _
      // Predicated region
      $region65: #{bottleneck_forward.5} parent=59 // pred_check
        %p2526 = pneg %p201
      $region66: #{bottleneck_forward.5} parent=59 // pred_check_branch
        %2528 = sbr.rel (%p2526) target = $region68
      $region67: #{bottleneck_forward.5} parent=59 // pred_region
        %p2529 = scmp.lt.s32.totalorder %s21, 3
        %s2530 = scalar_select %p2529, %s21, 3
        %s2531 = scalar_lea.vmem %s7, %s2530
      $region68: #{bottleneck_forward.5} parent=59 // pred_fallthru
        _
      // Predicated region
      $region69: #{bottleneck_forward.5} parent=59 // pred_check
        %p2532 = pneg %p227
      $region70: #{bottleneck_forward.5} parent=59 // pred_check_branch
        %2534 = sbr.rel (%p2532) target = $region72
      $region71: #{bottleneck_forward.5} parent=59 // pred_region
        %p2535 = scmp.lt.s32.totalorder %s21, 3
        %s2536 = scalar_select %p2535, %s21, 3
        %s2537 = scalar_lea.vmem %s8, %s2536
      $region72: #{bottleneck_forward.5} parent=59 // pred_fallthru
        _
    $region60: #{bottleneck_forward.5} parent=5 // pred_fallthru
      _
  $region6: #{bottleneck_forward.5} parent=0 // loop_footer
    %s19 = sadd.s32 1, %s15
  $region7: #{bottleneck_forward.5} parent=0 // loop_footer_branch
    %14 = sbr.rel target = $region3
  $region8: #{bottleneck_forward.5} parent=0 // loop_exit
    _

// kernel: bottleneck_forward.6
$region0: #{bottleneck_forward.6}
  #allocation0 [shape = 'u32[]', space=smem, size = 0x4, offset = 0x4, fixed_abs, tag = 'smem constant byte address 0x4 - core index']
  #allocation1 [shape = 'u32[144,128]{1,0:T(1,128)}', space=vmem, size = 0x12000, scoped, tag = 'internal scratch']
  %s0 = inlined_call_operand.vmem [shape: bf16[1024,4], index: 0, kind: input, shape index: {}]
  %s1 = inlined_call_operand.vmem [shape: f32[1,4], index: 1, kind: input, shape index: {}]
  %s2 = inlined_call_operand.vmem [shape: f32[1,4], index: 2, kind: input, shape index: {}]
  %s3 = inlined_call_operand.vmem [shape: bf16[4,16], index: 3, kind: input, shape index: {}]
  %s4 = inlined_call_operand.vmem [shape: f32[1024,16], index: 4, kind: output, shape index: {0}]
  %s5 = inlined_call_operand.vmem [shape: f32[1,1,16], index: 5, kind: output, shape index: {1}]
  %s6 = inlined_call_operand.vmem [shape: f32[1,1,16], index: 6, kind: output, shape index: {2}]
  %7 = xla_tuple %s4, %s5, %s6
  %s8 = sld [smem:[#allocation0]]
  $region42: #{bottleneck_forward.6} parent=0
    _
  %s10 = ssub.s32 1, %s8
  %s11 = scalar_select 0, %s10, %s8
  // Predicated region
  $region2: #{bottleneck_forward.6} parent=0 // pred_check
    _
  $region3: #{bottleneck_forward.6} parent=0 // pred_check_branch
    %13 = sbr.rel (0) target = $region5
  $region4: #{bottleneck_forward.6} parent=0 // pred_region
    _
  $region5: #{bottleneck_forward.6} parent=0 // pred_fallthru
    _
  // Predicated region
  $region6: #{bottleneck_forward.6} parent=0 // pred_check
    _
  $region7: #{bottleneck_forward.6} parent=0 // pred_check_branch
    %15 = sbr.rel (0) target = $region9
  $region8: #{bottleneck_forward.6} parent=0 // pred_region
    _
  $region9: #{bottleneck_forward.6} parent=0 // pred_fallthru
    _
  // Predicated region
  $region10: #{bottleneck_forward.6} parent=0 // pred_check
    _
  $region11: #{bottleneck_forward.6} parent=0 // pred_check_branch
    %17 = sbr.rel (0) target = $region13
  $region12: #{bottleneck_forward.6} parent=0 // pred_region
    _
  $region13: #{bottleneck_forward.6} parent=0 // pred_fallthru
    _
  // Predicated region
  $region14: #{bottleneck_forward.6} parent=0 // pred_check
    _
  $region15: #{bottleneck_forward.6} parent=0 // pred_check_branch
    %19 = sbr.rel (0) target = $region17
  $region16: #{bottleneck_forward.6} parent=0 // pred_region
    _
  $region17: #{bottleneck_forward.6} parent=0 // pred_fallthru
    _
  %v21 = vld [vmem:[%s0] sm:$0xf]
  %v22 = vld [vmem:[%s0 + $0x4] sm:$0xf]
  %v23 = vld [vmem:[%s0 + $0x8] sm:$0xf]
  %v24 = vld [vmem:[%s0 + $0xc] sm:$0xf]
  %v25 = vld [vmem:[%s0 + $0x10] sm:$0xf]
  %v26 = vld [vmem:[%s0 + $0x14] sm:$0xf]
  %v27 = vld [vmem:[%s0 + $0x18] sm:$0xf]
  %v28 = vld [vmem:[%s0 + $0x1c] sm:$0xf]
  %v29 = vld [vmem:[%s0 + $0x20] sm:$0xf]
  %v30 = vld [vmem:[%s0 + $0x24] sm:$0xf]
  %v31 = vld [vmem:[%s0 + $0x28] sm:$0xf]
  %v32 = vld [vmem:[%s0 + $0x2c] sm:$0xf]
  %v33 = vld [vmem:[%s0 + $0x30] sm:$0xf]
  %v34 = vld [vmem:[%s0 + $0x34] sm:$0xf]
  %v35 = vld [vmem:[%s0 + $0x38] sm:$0xf]
  %v36 = vld [vmem:[%s0 + $0x3c] sm:$0xf]
  %v37 = vld [vmem:[%s0 + $0x40] sm:$0xf]
  %v38 = vld [vmem:[%s0 + $0x44] sm:$0xf]
  %v39 = vld [vmem:[%s0 + $0x48] sm:$0xf]
  %v40 = vld [vmem:[%s0 + $0x4c] sm:$0xf]
  %v41 = vld [vmem:[%s0 + $0x50] sm:$0xf]
  %v42 = vld [vmem:[%s0 + $0x54] sm:$0xf]
  %v43 = vld [vmem:[%s0 + $0x58] sm:$0xf]
  %v44 = vld [vmem:[%s0 + $0x5c] sm:$0xf]
  %v45 = vld [vmem:[%s0 + $0x60] sm:$0xf]
  %v46 = vld [vmem:[%s0 + $0x64] sm:$0xf]
  %v47 = vld [vmem:[%s0 + $0x68] sm:$0xf]
  %v48 = vld [vmem:[%s0 + $0x6c] sm:$0xf]
  %v49 = vld [vmem:[%s0 + $0x70] sm:$0xf]
  %v50 = vld [vmem:[%s0 + $0x74] sm:$0xf]
  %v51 = vld [vmem:[%s0 + $0x78] sm:$0xf]
  %v52 = vld [vmem:[%s0 + $0x7c] sm:$0xf]
  %v53 = vld [vmem:[%s0 + $0x80] sm:$0xf]
  %v54 = vld [vmem:[%s0 + $0x84] sm:$0xf]
  %v55 = vld [vmem:[%s0 + $0x88] sm:$0xf]
  %v56 = vld [vmem:[%s0 + $0x8c] sm:$0xf]
  %v57 = vld [vmem:[%s0 + $0x90] sm:$0xf]
  %v58 = vld [vmem:[%s0 + $0x94] sm:$0xf]
  %v59 = vld [vmem:[%s0 + $0x98] sm:$0xf]
  %v60 = vld [vmem:[%s0 + $0x9c] sm:$0xf]
  %v61 = vld [vmem:[%s0 + $0xa0] sm:$0xf]
  %v62 = vld [vmem:[%s0 + $0xa4] sm:$0xf]
  %v63 = vld [vmem:[%s0 + $0xa8] sm:$0xf]
  %v64 = vld [vmem:[%s0 + $0xac] sm:$0xf]
  %v65 = vld [vmem:[%s0 + $0xb0] sm:$0xf]
  %v66 = vld [vmem:[%s0 + $0xb4] sm:$0xf]
  %v67 = vld [vmem:[%s0 + $0xb8] sm:$0xf]
  %v68 = vld [vmem:[%s0 + $0xbc] sm:$0xf]
  %v69 = vld [vmem:[%s0 + $0xc0] sm:$0xf]
  %v70 = vld [vmem:[%s0 + $0xc4] sm:$0xf]
  %v71 = vld [vmem:[%s0 + $0xc8] sm:$0xf]
  %v72 = vld [vmem:[%s0 + $0xcc] sm:$0xf]
  %v73 = vld [vmem:[%s0 + $0xd0] sm:$0xf]
  %v74 = vld [vmem:[%s0 + $0xd4] sm:$0xf]
  %v75 = vld [vmem:[%s0 + $0xd8] sm:$0xf]
  %v76 = vld [vmem:[%s0 + $0xdc] sm:$0xf]
  %v77 = vld [vmem:[%s0 + $0xe0] sm:$0xf]
  %v78 = vld [vmem:[%s0 + $0xe4] sm:$0xf]
  %v79 = vld [vmem:[%s0 + $0xe8] sm:$0xf]
  %v80 = vld [vmem:[%s0 + $0xec] sm:$0xf]
  %v81 = vld [vmem:[%s0 + $0xf0] sm:$0xf]
  %v82 = vld [vmem:[%s0 + $0xf4] sm:$0xf]
  %v83 = vld [vmem:[%s0 + $0xf8] sm:$0xf]
  %v84 = vld [vmem:[%s0 + $0xfc] sm:$0xf]
  %v85 = vld [vmem:[%s0 + $0x100] sm:$0xf]
  %v86 = vld [vmem:[%s0 + $0x104] sm:$0xf]
  %v87 = vld [vmem:[%s0 + $0x108] sm:$0xf]
  %v88 = vld [vmem:[%s0 + $0x10c] sm:$0xf]
  %v89 = vld [vmem:[%s0 + $0x110] sm:$0xf]
  %v90 = vld [vmem:[%s0 + $0x114] sm:$0xf]
  %v91 = vld [vmem:[%s0 + $0x118] sm:$0xf]
  %v92 = vld [vmem:[%s0 + $0x11c] sm:$0xf]
  %v93 = vld [vmem:[%s0 + $0x120] sm:$0xf]
  %v94 = vld [vmem:[%s0 + $0x124] sm:$0xf]
  %v95 = vld [vmem:[%s0 + $0x128] sm:$0xf]
  %v96 = vld [vmem:[%s0 + $0x12c] sm:$0xf]
  %v97 = vld [vmem:[%s0 + $0x130] sm:$0xf]
  %v98 = vld [vmem:[%s0 + $0x134] sm:$0xf]
  %v99 = vld [vmem:[%s0 + $0x138] sm:$0xf]
  %v100 = vld [vmem:[%s0 + $0x13c] sm:$0xf]
  %v101 = vld [vmem:[%s0 + $0x140] sm:$0xf]
  %v102 = vld [vmem:[%s0 + $0x144] sm:$0xf]
  %v103 = vld [vmem:[%s0 + $0x148] sm:$0xf]
  %v104 = vld [vmem:[%s0 + $0x14c] sm:$0xf]
  %v105 = vld [vmem:[%s0 + $0x150] sm:$0xf]
  %v106 = vld [vmem:[%s0 + $0x154] sm:$0xf]
  %v107 = vld [vmem:[%s0 + $0x158] sm:$0xf]
  %v108 = vld [vmem:[%s0 + $0x15c] sm:$0xf]
  %v109 = vld [vmem:[%s0 + $0x160] sm:$0xf]
  %v110 = vld [vmem:[%s0 + $0x164] sm:$0xf]
  %v111 = vld [vmem:[%s0 + $0x168] sm:$0xf]
  %v112 = vld [vmem:[%s0 + $0x16c] sm:$0xf]
  %v113 = vld [vmem:[%s0 + $0x170] sm:$0xf]
  %v114 = vld [vmem:[%s0 + $0x174] sm:$0xf]
  %v115 = vld [vmem:[%s0 + $0x178] sm:$0xf]
  %v116 = vld [vmem:[%s0 + $0x17c] sm:$0xf]
  %v117 = vld [vmem:[%s0 + $0x180] sm:$0xf]
  %v118 = vld [vmem:[%s0 + $0x184] sm:$0xf]
  %v119 = vld [vmem:[%s0 + $0x188] sm:$0xf]
  %v120 = vld [vmem:[%s0 + $0x18c] sm:$0xf]
  %v121 = vld [vmem:[%s0 + $0x190] sm:$0xf]
  %v122 = vld [vmem:[%s0 + $0x194] sm:$0xf]
  %v123 = vld [vmem:[%s0 + $0x198] sm:$0xf]
  %v124 = vld [vmem:[%s0 + $0x19c] sm:$0xf]
  %v125 = vld [vmem:[%s0 + $0x1a0] sm:$0xf]
  %v126 = vld [vmem:[%s0 + $0x1a4] sm:$0xf]
  %v127 = vld [vmem:[%s0 + $0x1a8] sm:$0xf]
  %v128 = vld [vmem:[%s0 + $0x1ac] sm:$0xf]
  %v129 = vld [vmem:[%s0 + $0x1b0] sm:$0xf]
  %v130 = vld [vmem:[%s0 + $0x1b4] sm:$0xf]
  %v131 = vld [vmem:[%s0 + $0x1b8] sm:$0xf]
  %v132 = vld [vmem:[%s0 + $0x1bc] sm:$0xf]
  %v133 = vld [vmem:[%s0 + $0x1c0] sm:$0xf]
  %v134 = vld [vmem:[%s0 + $0x1c4] sm:$0xf]
  %v135 = vld [vmem:[%s0 + $0x1c8] sm:$0xf]
  %v136 = vld [vmem:[%s0 + $0x1cc] sm:$0xf]
  %v137 = vld [vmem:[%s0 + $0x1d0] sm:$0xf]
  %v138 = vld [vmem:[%s0 + $0x1d4] sm:$0xf]
  %v139 = vld [vmem:[%s0 + $0x1d8] sm:$0xf]
  %v140 = vld [vmem:[%s0 + $0x1dc] sm:$0xf]
  %v141 = vld [vmem:[%s0 + $0x1e0] sm:$0xf]
  %v142 = vld [vmem:[%s0 + $0x1e4] sm:$0xf]
  %v143 = vld [vmem:[%s0 + $0x1e8] sm:$0xf]
  %v144 = vld [vmem:[%s0 + $0x1ec] sm:$0xf]
  %v145 = vld [vmem:[%s0 + $0x1f0] sm:$0xf]
  %v146 = vld [vmem:[%s0 + $0x1f4] sm:$0xf]
  %v147 = vld [vmem:[%s0 + $0x1f8] sm:$0xf]
  %v148 = vld [vmem:[%s0 + $0x1fc] sm:$0xf]
  %v149 = vunpack.c.l.bf16 %v21
  %v150 = vunpack.c.l.bf16 %v22
  %v151 = vunpack.c.l.bf16 %v23
  %v152 = vunpack.c.l.bf16 %v24
  %v153 = vunpack.c.l.bf16 %v25
  %v154 = vunpack.c.l.bf16 %v26
  %v155 = vunpack.c.l.bf16 %v27
  %v156 = vunpack.c.l.bf16 %v28
  %v157 = vunpack.c.l.bf16 %v29
  %v158 = vunpack.c.l.bf16 %v30
  %v159 = vunpack.c.l.bf16 %v31
  %v160 = vunpack.c.l.bf16 %v32
  %v161 = vunpack.c.l.bf16 %v33
  %v162 = vunpack.c.l.bf16 %v34
  %v163 = vunpack.c.l.bf16 %v35
  %v164 = vunpack.c.l.bf16 %v36
  %v165 = vunpack.c.l.bf16 %v37
  %v166 = vunpack.c.l.bf16 %v38
  %v167 = vunpack.c.l.bf16 %v39
  %v168 = vunpack.c.l.bf16 %v40
  %v169 = vunpack.c.l.bf16 %v41
  %v170 = vunpack.c.l.bf16 %v42
  %v171 = vunpack.c.l.bf16 %v43
  %v172 = vunpack.c.l.bf16 %v44
  %v173 = vunpack.c.l.bf16 %v45
  %v174 = vunpack.c.l.bf16 %v46
  %v175 = vunpack.c.l.bf16 %v47
  %v176 = vunpack.c.l.bf16 %v48
  %v177 = vunpack.c.l.bf16 %v49
  %v178 = vunpack.c.l.bf16 %v50
  %v179 = vunpack.c.l.bf16 %v51
  %v180 = vunpack.c.l.bf16 %v52
  %v181 = vunpack.c.l.bf16 %v53
  %v182 = vunpack.c.l.bf16 %v54
  %v183 = vunpack.c.l.bf16 %v55
  %v184 = vunpack.c.l.bf16 %v56
  %v185 = vunpack.c.l.bf16 %v57
  %v186 = vunpack.c.l.bf16 %v58
  %v187 = vunpack.c.l.bf16 %v59
  %v188 = vunpack.c.l.bf16 %v60
  %v189 = vunpack.c.l.bf16 %v61
  %v190 = vunpack.c.l.bf16 %v62
  %v191 = vunpack.c.l.bf16 %v63
  %v192 = vunpack.c.l.bf16 %v64
  %v193 = vunpack.c.l.bf16 %v65
  %v194 = vunpack.c.l.bf16 %v66
  %v195 = vunpack.c.l.bf16 %v67
  %v196 = vunpack.c.l.bf16 %v68
  %v197 = vunpack.c.l.bf16 %v69
  %v198 = vunpack.c.l.bf16 %v70
  %v199 = vunpack.c.l.bf16 %v71
  %v200 = vunpack.c.l.bf16 %v72
  %v201 = vunpack.c.l.bf16 %v73
  %v202 = vunpack.c.l.bf16 %v74
  %v203 = vunpack.c.l.bf16 %v75
  %v204 = vunpack.c.l.bf16 %v76
  %v205 = vunpack.c.l.bf16 %v77
  %v206 = vunpack.c.l.bf16 %v78
  %v207 = vunpack.c.l.bf16 %v79
  %v208 = vunpack.c.l.bf16 %v80
  %v209 = vunpack.c.l.bf16 %v81
  %v210 = vunpack.c.l.bf16 %v82
  %v211 = vunpack.c.l.bf16 %v83
  %v212 = vunpack.c.l.bf16 %v84
  %v213 = vunpack.c.l.bf16 %v85
  %v214 = vunpack.c.l.bf16 %v86
  %v215 = vunpack.c.l.bf16 %v87
  %v216 = vunpack.c.l.bf16 %v88
  %v217 = vunpack.c.l.bf16 %v89
  %v218 = vunpack.c.l.bf16 %v90
  %v219 = vunpack.c.l.bf16 %v91
  %v220 = vunpack.c.l.bf16 %v92
  %v221 = vunpack.c.l.bf16 %v93
  %v222 = vunpack.c.l.bf16 %v94
  %v223 = vunpack.c.l.bf16 %v95
  %v224 = vunpack.c.l.bf16 %v96
  %v225 = vunpack.c.l.bf16 %v97
  %v226 = vunpack.c.l.bf16 %v98
  %v227 = vunpack.c.l.bf16 %v99
  %v228 = vunpack.c.l.bf16 %v100
  %v229 = vunpack.c.l.bf16 %v101
  %v230 = vunpack.c.l.bf16 %v102
  %v231 = vunpack.c.l.bf16 %v103
  %v232 = vunpack.c.l.bf16 %v104
  %v233 = vunpack.c.l.bf16 %v105
  %v234 = vunpack.c.l.bf16 %v106
  %v235 = vunpack.c.l.bf16 %v107
  %v236 = vunpack.c.l.bf16 %v108
  %v237 = vunpack.c.l.bf16 %v109
  %v238 = vunpack.c.l.bf16 %v110
  %v239 = vunpack.c.l.bf16 %v111
  %v240 = vunpack.c.l.bf16 %v112
  %v241 = vunpack.c.l.bf16 %v113
  %v242 = vunpack.c.l.bf16 %v114
  %v243 = vunpack.c.l.bf16 %v115
  %v244 = vunpack.c.l.bf16 %v116
  %v245 = vunpack.c.l.bf16 %v117
  %v246 = vunpack.c.l.bf16 %v118
  %v247 = vunpack.c.l.bf16 %v119
  %v248 = vunpack.c.l.bf16 %v120
  %v249 = vunpack.c.l.bf16 %v121
  %v250 = vunpack.c.l.bf16 %v122
  %v251 = vunpack.c.l.bf16 %v123
  %v252 = vunpack.c.l.bf16 %v124
  %v253 = vunpack.c.l.bf16 %v125
  %v254 = vunpack.c.l.bf16 %v126
  %v255 = vunpack.c.l.bf16 %v127
  %v256 = vunpack.c.l.bf16 %v128
  %v257 = vunpack.c.l.bf16 %v129
  %v258 = vunpack.c.l.bf16 %v130
  %v259 = vunpack.c.l.bf16 %v131
  %v260 = vunpack.c.l.bf16 %v132
  %v261 = vunpack.c.l.bf16 %v133
  %v262 = vunpack.c.l.bf16 %v134
  %v263 = vunpack.c.l.bf16 %v135
  %v264 = vunpack.c.l.bf16 %v136
  %v265 = vunpack.c.l.bf16 %v137
  %v266 = vunpack.c.l.bf16 %v138
  %v267 = vunpack.c.l.bf16 %v139
  %v268 = vunpack.c.l.bf16 %v140
  %v269 = vunpack.c.l.bf16 %v141
  %v270 = vunpack.c.l.bf16 %v142
  %v271 = vunpack.c.l.bf16 %v143
  %v272 = vunpack.c.l.bf16 %v144
  %v273 = vunpack.c.l.bf16 %v145
  %v274 = vunpack.c.l.bf16 %v146
  %v275 = vunpack.c.l.bf16 %v147
  %v276 = vunpack.c.l.bf16 %v148
  %v277 = vld [vmem:[%s1] sm:$0x1]
  %v279 = vlaneseq
  %v280 = vshrl.u32 %v279, 7
  %v281 = vsub.s32 0, %v280
  %v282 = vrot.slane %v277, %v281
  %v284 = vmul.f32 %v149, %v282
  %v285 = vmul.f32 %v150, %v282
  %v286 = vmul.f32 %v151, %v282
  %v287 = vmul.f32 %v152, %v282
  %v288 = vmul.f32 %v153, %v282
  %v289 = vmul.f32 %v154, %v282
  %v290 = vmul.f32 %v155, %v282
  %v291 = vmul.f32 %v156, %v282
  %v292 = vmul.f32 %v157, %v282
  %v293 = vmul.f32 %v158, %v282
  %v294 = vmul.f32 %v159, %v282
  %v295 = vmul.f32 %v160, %v282
  %v296 = vmul.f32 %v161, %v282
  %v297 = vmul.f32 %v162, %v282
  %v298 = vmul.f32 %v163, %v282
  %v299 = vmul.f32 %v164, %v282
  %v300 = vmul.f32 %v165, %v282
  %v301 = vmul.f32 %v166, %v282
  %v302 = vmul.f32 %v167, %v282
  %v303 = vmul.f32 %v168, %v282
  %v304 = vmul.f32 %v169, %v282
  %v305 = vmul.f32 %v170, %v282
  %v306 = vmul.f32 %v171, %v282
  %v307 = vmul.f32 %v172, %v282
  %v308 = vmul.f32 %v173, %v282
  %v309 = vmul.f32 %v174, %v282
  %v310 = vmul.f32 %v175, %v282
  %v311 = vmul.f32 %v176, %v282
  %v312 = vmul.f32 %v177, %v282
  %v313 = vmul.f32 %v178, %v282
  %v314 = vmul.f32 %v179, %v282
  %v315 = vmul.f32 %v180, %v282
  %v316 = vmul.f32 %v181, %v282
  %v317 = vmul.f32 %v182, %v282
  %v318 = vmul.f32 %v183, %v282
  %v319 = vmul.f32 %v184, %v282
  %v320 = vmul.f32 %v185, %v282
  %v321 = vmul.f32 %v186, %v282
  %v322 = vmul.f32 %v187, %v282
  %v323 = vmul.f32 %v188, %v282
  %v324 = vmul.f32 %v189, %v282
  %v325 = vmul.f32 %v190, %v282
  %v326 = vmul.f32 %v191, %v282
  %v327 = vmul.f32 %v192, %v282
  %v328 = vmul.f32 %v193, %v282
  %v329 = vmul.f32 %v194, %v282
  %v330 = vmul.f32 %v195, %v282
  %v331 = vmul.f32 %v196, %v282
  %v332 = vmul.f32 %v197, %v282
  %v333 = vmul.f32 %v198, %v282
  %v334 = vmul.f32 %v199, %v282
  %v335 = vmul.f32 %v200, %v282
  %v336 = vmul.f32 %v201, %v282
  %v337 = vmul.f32 %v202, %v282
  %v338 = vmul.f32 %v203, %v282
  %v339 = vmul.f32 %v204, %v282
  %v340 = vmul.f32 %v205, %v282
  %v341 = vmul.f32 %v206, %v282
  %v342 = vmul.f32 %v207, %v282
  %v343 = vmul.f32 %v208, %v282
  %v344 = vmul.f32 %v209, %v282
  %v345 = vmul.f32 %v210, %v282
  %v346 = vmul.f32 %v211, %v282
  %v347 = vmul.f32 %v212, %v282
  %v348 = vmul.f32 %v213, %v282
  %v349 = vmul.f32 %v214, %v282
  %v350 = vmul.f32 %v215, %v282
  %v351 = vmul.f32 %v216, %v282
  %v352 = vmul.f32 %v217, %v282
  %v353 = vmul.f32 %v218, %v282
  %v354 = vmul.f32 %v219, %v282
  %v355 = vmul.f32 %v220, %v282
  %v356 = vmul.f32 %v221, %v282
  %v357 = vmul.f32 %v222, %v282
  %v358 = vmul.f32 %v223, %v282
  %v359 = vmul.f32 %v224, %v282
  %v360 = vmul.f32 %v225, %v282
  %v361 = vmul.f32 %v226, %v282
  %v362 = vmul.f32 %v227, %v282
  %v363 = vmul.f32 %v228, %v282
  %v364 = vmul.f32 %v229, %v282
  %v365 = vmul.f32 %v230, %v282
  %v366 = vmul.f32 %v231, %v282
  %v367 = vmul.f32 %v232, %v282
  %v368 = vmul.f32 %v233, %v282
  %v369 = vmul.f32 %v234, %v282
  %v370 = vmul.f32 %v235, %v282
  %v371 = vmul.f32 %v236, %v282
  %v372 = vmul.f32 %v237, %v282
  %v373 = vmul.f32 %v238, %v282
  %v374 = vmul.f32 %v239, %v282
  %v375 = vmul.f32 %v240, %v282
  %v376 = vmul.f32 %v241, %v282
  %v377 = vmul.f32 %v242, %v282
  %v378 = vmul.f32 %v243, %v282
  %v379 = vmul.f32 %v244, %v282
  %v380 = vmul.f32 %v245, %v282
  %v381 = vmul.f32 %v246, %v282
  %v382 = vmul.f32 %v247, %v282
  %v383 = vmul.f32 %v248, %v282
  %v384 = vmul.f32 %v249, %v282
  %v385 = vmul.f32 %v250, %v282
  %v386 = vmul.f32 %v251, %v282
  %v387 = vmul.f32 %v252, %v282
  %v388 = vmul.f32 %v253, %v282
  %v389 = vmul.f32 %v254, %v282
  %v390 = vmul.f32 %v255, %v282
  %v391 = vmul.f32 %v256, %v282
  %v392 = vmul.f32 %v257, %v282
  %v393 = vmul.f32 %v258, %v282
  %v394 = vmul.f32 %v259, %v282
  %v395 = vmul.f32 %v260, %v282
  %v396 = vmul.f32 %v261, %v282
  %v397 = vmul.f32 %v262, %v282
  %v398 = vmul.f32 %v263, %v282
  %v399 = vmul.f32 %v264, %v282
  %v400 = vmul.f32 %v265, %v282
  %v401 = vmul.f32 %v266, %v282
  %v402 = vmul.f32 %v267, %v282
  %v403 = vmul.f32 %v268, %v282
  %v404 = vmul.f32 %v269, %v282
  %v405 = vmul.f32 %v270, %v282
  %v406 = vmul.f32 %v271, %v282
  %v407 = vmul.f32 %v272, %v282
  %v408 = vmul.f32 %v273, %v282
  %v409 = vmul.f32 %v274, %v282
  %v410 = vmul.f32 %v275, %v282
  %v411 = vmul.f32 %v276, %v282
  %v412 = vld [vmem:[%s2] sm:$0x1]
  %v414 = vlaneseq
  %v415 = vshrl.u32 %v414, 7
  %v416 = vsub.s32 0, %v415
  %v417 = vrot.slane %v412, %v416
  %v419 = vadd.f32 %v284, %v417
  %v420 = vadd.f32 %v285, %v417
  %v421 = vadd.f32 %v286, %v417
  %v422 = vadd.f32 %v287, %v417
  %v423 = vadd.f32 %v288, %v417
  %v424 = vadd.f32 %v289, %v417
  %v425 = vadd.f32 %v290, %v417
  %v426 = vadd.f32 %v291, %v417
  %v427 = vadd.f32 %v292, %v417
  %v428 = vadd.f32 %v293, %v417
  %v429 = vadd.f32 %v294, %v417
  %v430 = vadd.f32 %v295, %v417
  %v431 = vadd.f32 %v296, %v417
  %v432 = vadd.f32 %v297, %v417
  %v433 = vadd.f32 %v298, %v417
  %v434 = vadd.f32 %v299, %v417
  %v435 = vadd.f32 %v300, %v417
  %v436 = vadd.f32 %v301, %v417
  %v437 = vadd.f32 %v302, %v417
  %v438 = vadd.f32 %v303, %v417
  %v439 = vadd.f32 %v304, %v417
  %v440 = vadd.f32 %v305, %v417
  %v441 = vadd.f32 %v306, %v417
  %v442 = vadd.f32 %v307, %v417
  %v443 = vadd.f32 %v308, %v417
  %v444 = vadd.f32 %v309, %v417
  %v445 = vadd.f32 %v310, %v417
  %v446 = vadd.f32 %v311, %v417
  %v447 = vadd.f32 %v312, %v417
  %v448 = vadd.f32 %v313, %v417
  %v449 = vadd.f32 %v314, %v417
  %v450 = vadd.f32 %v315, %v417
  %v451 = vadd.f32 %v316, %v417
  %v452 = vadd.f32 %v317, %v417
  %v453 = vadd.f32 %v318, %v417
  %v454 = vadd.f32 %v319, %v417
  %v455 = vadd.f32 %v320, %v417
  %v456 = vadd.f32 %v321, %v417
  %v457 = vadd.f32 %v322, %v417
  %v458 = vadd.f32 %v323, %v417
  %v459 = vadd.f32 %v324, %v417
  %v460 = vadd.f32 %v325, %v417
  %v461 = vadd.f32 %v326, %v417
  %v462 = vadd.f32 %v327, %v417
  %v463 = vadd.f32 %v328, %v417
  %v464 = vadd.f32 %v329, %v417
  %v465 = vadd.f32 %v330, %v417
  %v466 = vadd.f32 %v331, %v417
  %v467 = vadd.f32 %v332, %v417
  %v468 = vadd.f32 %v333, %v417
  %v469 = vadd.f32 %v334, %v417
  %v470 = vadd.f32 %v335, %v417
  %v471 = vadd.f32 %v336, %v417
  %v472 = vadd.f32 %v337, %v417
  %v473 = vadd.f32 %v338, %v417
  %v474 = vadd.f32 %v339, %v417
  %v475 = vadd.f32 %v340, %v417
  %v476 = vadd.f32 %v341, %v417
  %v477 = vadd.f32 %v342, %v417
  %v478 = vadd.f32 %v343, %v417
  %v479 = vadd.f32 %v344, %v417
  %v480 = vadd.f32 %v345, %v417
  %v481 = vadd.f32 %v346, %v417
  %v482 = vadd.f32 %v347, %v417
  %v483 = vadd.f32 %v348, %v417
  %v484 = vadd.f32 %v349, %v417
  %v485 = vadd.f32 %v350, %v417
  %v486 = vadd.f32 %v351, %v417
  %v487 = vadd.f32 %v352, %v417
  %v488 = vadd.f32 %v353, %v417
  %v489 = vadd.f32 %v354, %v417
  %v490 = vadd.f32 %v355, %v417
  %v491 = vadd.f32 %v356, %v417
  %v492 = vadd.f32 %v357, %v417
  %v493 = vadd.f32 %v358, %v417
  %v494 = vadd.f32 %v359, %v417
  %v495 = vadd.f32 %v360, %v417
  %v496 = vadd.f32 %v361, %v417
  %v497 = vadd.f32 %v362, %v417
  %v498 = vadd.f32 %v363, %v417
  %v499 = vadd.f32 %v364, %v417
  %v500 = vadd.f32 %v365, %v417
  %v501 = vadd.f32 %v366, %v417
  %v502 = vadd.f32 %v367, %v417
  %v503 = vadd.f32 %v368, %v417
  %v504 = vadd.f32 %v369, %v417
  %v505 = vadd.f32 %v370, %v417
  %v506 = vadd.f32 %v371, %v417
  %v507 = vadd.f32 %v372, %v417
  %v508 = vadd.f32 %v373, %v417
  %v509 = vadd.f32 %v374, %v417
  %v510 = vadd.f32 %v375, %v417
  %v511 = vadd.f32 %v376, %v417
  %v512 = vadd.f32 %v377, %v417
  %v513 = vadd.f32 %v378, %v417
  %v514 = vadd.f32 %v379, %v417
  %v515 = vadd.f32 %v380, %v417
  %v516 = vadd.f32 %v381, %v417
  %v517 = vadd.f32 %v382, %v417
  %v518 = vadd.f32 %v383, %v417
  %v519 = vadd.f32 %v384, %v417
  %v520 = vadd.f32 %v385, %v417
  %v521 = vadd.f32 %v386, %v417
  %v522 = vadd.f32 %v387, %v417
  %v523 = vadd.f32 %v388, %v417
  %v524 = vadd.f32 %v389, %v417
  %v525 = vadd.f32 %v390, %v417
  %v526 = vadd.f32 %v391, %v417
  %v527 = vadd.f32 %v392, %v417
  %v528 = vadd.f32 %v393, %v417
  %v529 = vadd.f32 %v394, %v417
  %v530 = vadd.f32 %v395, %v417
  %v531 = vadd.f32 %v396, %v417
  %v532 = vadd.f32 %v397, %v417
  %v533 = vadd.f32 %v398, %v417
  %v534 = vadd.f32 %v399, %v417
  %v535 = vadd.f32 %v400, %v417
  %v536 = vadd.f32 %v401, %v417
  %v537 = vadd.f32 %v402, %v417
  %v538 = vadd.f32 %v403, %v417
  %v539 = vadd.f32 %v404, %v417
  %v540 = vadd.f32 %v405, %v417
  %v541 = vadd.f32 %v406, %v417
  %v542 = vadd.f32 %v407, %v417
  %v543 = vadd.f32 %v408, %v417
  %v544 = vadd.f32 %v409, %v417
  %v545 = vadd.f32 %v410, %v417
  %v546 = vadd.f32 %v411, %v417
  %v547 = vmax.f32 %v419, 0.0
  %v548 = vmax.f32 %v420, 0.0
  %v549 = vmax.f32 %v421, 0.0
  %v550 = vmax.f32 %v422, 0.0
  %v551 = vmax.f32 %v423, 0.0
  %v552 = vmax.f32 %v424, 0.0
  %v553 = vmax.f32 %v425, 0.0
  %v554 = vmax.f32 %v426, 0.0
  %v555 = vmax.f32 %v427, 0.0
  %v556 = vmax.f32 %v428, 0.0
  %v557 = vmax.f32 %v429, 0.0
  %v558 = vmax.f32 %v430, 0.0
  %v559 = vmax.f32 %v431, 0.0
  %v560 = vmax.f32 %v432, 0.0
  %v561 = vmax.f32 %v433, 0.0
  %v562 = vmax.f32 %v434, 0.0
  %v563 = vmax.f32 %v435, 0.0
  %v564 = vmax.f32 %v436, 0.0
  %v565 = vmax.f32 %v437, 0.0
  %v566 = vmax.f32 %v438, 0.0
  %v567 = vmax.f32 %v439, 0.0
  %v568 = vmax.f32 %v440, 0.0
  %v569 = vmax.f32 %v441, 0.0
  %v570 = vmax.f32 %v442, 0.0
  %v571 = vmax.f32 %v443, 0.0
  %v572 = vmax.f32 %v444, 0.0
  %v573 = vmax.f32 %v445, 0.0
  %v574 = vmax.f32 %v446, 0.0
  %v575 = vmax.f32 %v447, 0.0
  %v576 = vmax.f32 %v448, 0.0
  %v577 = vmax.f32 %v449, 0.0
  %v578 = vmax.f32 %v450, 0.0
  %v579 = vmax.f32 %v451, 0.0
  %v580 = vmax.f32 %v452, 0.0
  %v581 = vmax.f32 %v453, 0.0
  %v582 = vmax.f32 %v454, 0.0
  %v583 = vmax.f32 %v455, 0.0
  %v584 = vmax.f32 %v456, 0.0
  %v585 = vmax.f32 %v457, 0.0
  %v586 = vmax.f32 %v458, 0.0
  %v587 = vmax.f32 %v459, 0.0
  %v588 = vmax.f32 %v460, 0.0
  %v589 = vmax.f32 %v461, 0.0
  %v590 = vmax.f32 %v462, 0.0
  %v591 = vmax.f32 %v463, 0.0
  %v592 = vmax.f32 %v464, 0.0
  %v593 = vmax.f32 %v465, 0.0
  %v594 = vmax.f32 %v466, 0.0
  %v595 = vmax.f32 %v467, 0.0
  %v596 = vmax.f32 %v468, 0.0
  %v597 = vmax.f32 %v469, 0.0
  %v598 = vmax.f32 %v470, 0.0
  %v599 = vmax.f32 %v471, 0.0
  %v600 = vmax.f32 %v472, 0.0
  %v601 = vmax.f32 %v473, 0.0
  %v602 = vmax.f32 %v474, 0.0
  %v603 = vmax.f32 %v475, 0.0
  %v604 = vmax.f32 %v476, 0.0
  %v605 = vmax.f32 %v477, 0.0
  %v606 = vmax.f32 %v478, 0.0
  %v607 = vmax.f32 %v479, 0.0
  %v608 = vmax.f32 %v480, 0.0
  %v609 = vmax.f32 %v481, 0.0
  %v610 = vmax.f32 %v482, 0.0
  %v611 = vmax.f32 %v483, 0.0
  %v612 = vmax.f32 %v484, 0.0
  %v613 = vmax.f32 %v485, 0.0
  %v614 = vmax.f32 %v486, 0.0
  %v615 = vmax.f32 %v487, 0.0
  %v616 = vmax.f32 %v488, 0.0
  %v617 = vmax.f32 %v489, 0.0
  %v618 = vmax.f32 %v490, 0.0
  %v619 = vmax.f32 %v491, 0.0
  %v620 = vmax.f32 %v492, 0.0
  %v621 = vmax.f32 %v493, 0.0
  %v622 = vmax.f32 %v494, 0.0
  %v623 = vmax.f32 %v495, 0.0
  %v624 = vmax.f32 %v496, 0.0
  %v625 = vmax.f32 %v497, 0.0
  %v626 = vmax.f32 %v498, 0.0
  %v627 = vmax.f32 %v499, 0.0
  %v628 = vmax.f32 %v500, 0.0
  %v629 = vmax.f32 %v501, 0.0
  %v630 = vmax.f32 %v502, 0.0
  %v631 = vmax.f32 %v503, 0.0
  %v632 = vmax.f32 %v504, 0.0
  %v633 = vmax.f32 %v505, 0.0
  %v634 = vmax.f32 %v506, 0.0
  %v635 = vmax.f32 %v507, 0.0
  %v636 = vmax.f32 %v508, 0.0
  %v637 = vmax.f32 %v509, 0.0
  %v638 = vmax.f32 %v510, 0.0
  %v639 = vmax.f32 %v511, 0.0
  %v640 = vmax.f32 %v512, 0.0
  %v641 = vmax.f32 %v513, 0.0
  %v642 = vmax.f32 %v514, 0.0
  %v643 = vmax.f32 %v515, 0.0
  %v644 = vmax.f32 %v516, 0.0
  %v645 = vmax.f32 %v517, 0.0
  %v646 = vmax.f32 %v518, 0.0
  %v647 = vmax.f32 %v519, 0.0
  %v648 = vmax.f32 %v520, 0.0
  %v649 = vmax.f32 %v521, 0.0
  %v650 = vmax.f32 %v522, 0.0
  %v651 = vmax.f32 %v523, 0.0
  %v652 = vmax.f32 %v524, 0.0
  %v653 = vmax.f32 %v525, 0.0
  %v654 = vmax.f32 %v526, 0.0
  %v655 = vmax.f32 %v527, 0.0
  %v656 = vmax.f32 %v528, 0.0
  %v657 = vmax.f32 %v529, 0.0
  %v658 = vmax.f32 %v530, 0.0
  %v659 = vmax.f32 %v531, 0.0
  %v660 = vmax.f32 %v532, 0.0
  %v661 = vmax.f32 %v533, 0.0
  %v662 = vmax.f32 %v534, 0.0
  %v663 = vmax.f32 %v535, 0.0
  %v664 = vmax.f32 %v536, 0.0
  %v665 = vmax.f32 %v537, 0.0
  %v666 = vmax.f32 %v538, 0.0
  %v667 = vmax.f32 %v539, 0.0
  %v668 = vmax.f32 %v540, 0.0
  %v669 = vmax.f32 %v541, 0.0
  %v670 = vmax.f32 %v542, 0.0
  %v671 = vmax.f32 %v543, 0.0
  %v672 = vmax.f32 %v544, 0.0
  %v673 = vmax.f32 %v545, 0.0
  %v674 = vmax.f32 %v546, 0.0
  %v675 = vpack.c.bf16 %v548, %v547
  %v676 = vpack.c.bf16 %v550, %v549
  %v677 = vpack.c.bf16 %v552, %v551
  %v678 = vpack.c.bf16 %v554, %v553
  %v679 = vpack.c.bf16 %v556, %v555
  %v680 = vpack.c.bf16 %v558, %v557
  %v681 = vpack.c.bf16 %v560, %v559
  %v682 = vpack.c.bf16 %v562, %v561
  %v683 = vpack.c.bf16 %v564, %v563
  %v684 = vpack.c.bf16 %v566, %v565
  %v685 = vpack.c.bf16 %v568, %v567
  %v686 = vpack.c.bf16 %v570, %v569
  %v687 = vpack.c.bf16 %v572, %v571
  %v688 = vpack.c.bf16 %v574, %v573
  %v689 = vpack.c.bf16 %v576, %v575
  %v690 = vpack.c.bf16 %v578, %v577
  %v691 = vpack.c.bf16 %v580, %v579
  %v692 = vpack.c.bf16 %v582, %v581
  %v693 = vpack.c.bf16 %v584, %v583
  %v694 = vpack.c.bf16 %v586, %v585
  %v695 = vpack.c.bf16 %v588, %v587
  %v696 = vpack.c.bf16 %v590, %v589
  %v697 = vpack.c.bf16 %v592, %v591
  %v698 = vpack.c.bf16 %v594, %v593
  %v699 = vpack.c.bf16 %v596, %v595
  %v700 = vpack.c.bf16 %v598, %v597
  %v701 = vpack.c.bf16 %v600, %v599
  %v702 = vpack.c.bf16 %v602, %v601
  %v703 = vpack.c.bf16 %v604, %v603
  %v704 = vpack.c.bf16 %v606, %v605
  %v705 = vpack.c.bf16 %v608, %v607
  %v706 = vpack.c.bf16 %v610, %v609
  %v707 = vpack.c.bf16 %v612, %v611
  %v708 = vpack.c.bf16 %v614, %v613
  %v709 = vpack.c.bf16 %v616, %v615
  %v710 = vpack.c.bf16 %v618, %v617
  %v711 = vpack.c.bf16 %v620, %v619
  %v712 = vpack.c.bf16 %v622, %v621
  %v713 = vpack.c.bf16 %v624, %v623
  %v714 = vpack.c.bf16 %v626, %v625
  %v715 = vpack.c.bf16 %v628, %v627
  %v716 = vpack.c.bf16 %v630, %v629
  %v717 = vpack.c.bf16 %v632, %v631
  %v718 = vpack.c.bf16 %v634, %v633
  %v719 = vpack.c.bf16 %v636, %v635
  %v720 = vpack.c.bf16 %v638, %v637
  %v721 = vpack.c.bf16 %v640, %v639
  %v722 = vpack.c.bf16 %v642, %v641
  %v723 = vpack.c.bf16 %v644, %v643
  %v724 = vpack.c.bf16 %v646, %v645
  %v725 = vpack.c.bf16 %v648, %v647
  %v726 = vpack.c.bf16 %v650, %v649
  %v727 = vpack.c.bf16 %v652, %v651
  %v728 = vpack.c.bf16 %v654, %v653
  %v729 = vpack.c.bf16 %v656, %v655
  %v730 = vpack.c.bf16 %v658, %v657
  %v731 = vpack.c.bf16 %v660, %v659
  %v732 = vpack.c.bf16 %v662, %v661
  %v733 = vpack.c.bf16 %v664, %v663
  %v734 = vpack.c.bf16 %v666, %v665
  %v735 = vpack.c.bf16 %v668, %v667
  %v736 = vpack.c.bf16 %v670, %v669
  %v737 = vpack.c.bf16 %v672, %v671
  %v738 = vpack.c.bf16 %v674, %v673
  %v739 = vld [vmem:[%s3] sm:$0x3]
  %vm740 = vcmask 31744
  %v742 = vsel %vm740, %v675, 0
  %v745 = vsel %vm740, %v676, 0
  %v748 = vsel %vm740, %v677, 0
  %v751 = vsel %vm740, %v678, 0
  %v754 = vsel %vm740, %v679, 0
  %v757 = vsel %vm740, %v680, 0
  %v760 = vsel %vm740, %v681, 0
  %v763 = vsel %vm740, %v682, 0
  %v766 = vsel %vm740, %v683, 0
  %v769 = vsel %vm740, %v684, 0
  %v772 = vsel %vm740, %v685, 0
  %v775 = vsel %vm740, %v686, 0
  %v778 = vsel %vm740, %v687, 0
  %v781 = vsel %vm740, %v688, 0
  %v784 = vsel %vm740, %v689, 0
  %v787 = vsel %vm740, %v690, 0
  %v790 = vsel %vm740, %v691, 0
  %v793 = vsel %vm740, %v692, 0
  %v796 = vsel %vm740, %v693, 0
  %v799 = vsel %vm740, %v694, 0
  %v802 = vsel %vm740, %v695, 0
  %v805 = vsel %vm740, %v696, 0
  %v808 = vsel %vm740, %v697, 0
  %v811 = vsel %vm740, %v698, 0
  %v814 = vsel %vm740, %v699, 0
  %v817 = vsel %vm740, %v700, 0
  %v820 = vsel %vm740, %v701, 0
  %v823 = vsel %vm740, %v702, 0
  %v826 = vsel %vm740, %v703, 0
  %v829 = vsel %vm740, %v704, 0
  %v832 = vsel %vm740, %v705, 0
  %v835 = vsel %vm740, %v706, 0
  %v838 = vsel %vm740, %v707, 0
  %v841 = vsel %vm740, %v708, 0
  %v844 = vsel %vm740, %v709, 0
  %v847 = vsel %vm740, %v710, 0
  %v850 = vsel %vm740, %v711, 0
  %v853 = vsel %vm740, %v712, 0
  %v856 = vsel %vm740, %v713, 0
  %v859 = vsel %vm740, %v714, 0
  %v862 = vsel %vm740, %v715, 0
  %v865 = vsel %vm740, %v716, 0
  %v868 = vsel %vm740, %v717, 0
  %v871 = vsel %vm740, %v718, 0
  %v874 = vsel %vm740, %v719, 0
  %v877 = vsel %vm740, %v720, 0
  %v880 = vsel %vm740, %v721, 0
  %v883 = vsel %vm740, %v722, 0
  %v886 = vsel %vm740, %v723, 0
  %v889 = vsel %vm740, %v724, 0
  %v892 = vsel %vm740, %v725, 0
  %v895 = vsel %vm740, %v726, 0
  %v898 = vsel %vm740, %v727, 0
  %v901 = vsel %vm740, %v728, 0
  %v904 = vsel %vm740, %v729, 0
  %v907 = vsel %vm740, %v730, 0
  %v910 = vsel %vm740, %v731, 0
  %v913 = vsel %vm740, %v732, 0
  %v916 = vsel %vm740, %v733, 0
  %v919 = vsel %vm740, %v734, 0
  %v922 = vsel %vm740, %v735, 0
  %v925 = vsel %vm740, %v736, 0
  %v928 = vsel %vm740, %v737, 0
  %v931 = vsel %vm740, %v738, 0
  %vm933 = vcmask 1041408
  %v935 = vsel %vm933, %v739, 0
  %937 = vmatprep.subr.bf16.mxu0 0
  %938 = vmatpush1.bf16.msra.mxu0 0
  %939 = vmatprep.subr.bf16.mxu0 0
  %940 = vmatpush1.bf16.msra.mxu0 0
  %941 = vmatprep.subr.bf16.mxu0 0
  %942 = vmatpush1.bf16.msra.mxu0 0
  %943 = vmatprep.subr.bf16.mxu0 0
  %944 = vmatpush1.bf16.msra.mxu0 0
  %945 = vmatprep.subr.bf16.mxu0 0
  %946 = vmatpush1.bf16.msra.mxu0 0
  %947 = vmatprep.subr.bf16.mxu0 0
  %948 = vmatpush1.bf16.msra.mxu0 0
  %949 = vmatprep.subr.bf16.mxu0 0
  %950 = vmatpush1.bf16.msra.mxu0 0
  %951 = vmatprep.subr.bf16.mxu0 0
  %952 = vmatpush1.bf16.msra.mxu0 %v935
  %953 = vmatprep.subr.bf16.mxu0 0
  %954 = vmatpush2.bf16.msra.mxu0 0
  %955 = vmatprep.subr.bf16.mxu0 0
  %956 = vmatpush2.bf16.msra.mxu0 0
  %957 = vmatprep.subr.bf16.mxu0 0
  %958 = vmatpush2.bf16.msra.mxu0 0
  %959 = vmatprep.subr.bf16.mxu0 0
  %960 = vmatpush2.bf16.msra.mxu0 0
  %961 = vmatprep.subr.bf16.mxu0 0
  %962 = vmatpush2.bf16.msra.mxu0 0
  %963 = vmatprep.subr.bf16.mxu0 0
  %964 = vmatpush2.bf16.msra.mxu0 0
  %965 = vmatprep.subr.bf16.mxu0 0
  %966 = vmatpush2.bf16.msra.mxu0 0
  %967 = vmatprep.subr.bf16.mxu0 0
  %968 = vmatpush2.bf16.msra.mxu0 0
  %969 = vmatprep.mubr.bf16.mxu0 0
  %970 = vmatmul.mubr.bf16.gmra.mxu0 %v742
  %v971 = vpop.f32.mrf.mxu0
  %v972 = vadd.f32 0.0, %v971
  %v973 = vpop.f32.mrf.mxu0
  %v974 = vpop.f32.mrf.mxu0
  %v975 = vadd.f32 0.0, %v974
  %v976 = vpop.f32.mrf.mxu0
  %977 = vmatprep.mubr.bf16.mxu0 0
  %978 = vmatmul.mubr.bf16.gmra.mxu0 %v745
  %v979 = vpop.f32.mrf.mxu0
  %v980 = vadd.f32 0.0, %v979
  %v981 = vpop.f32.mrf.mxu0
  %v982 = vpop.f32.mrf.mxu0
  %v983 = vadd.f32 0.0, %v982
  %v984 = vpop.f32.mrf.mxu0
  %985 = vmatprep.mubr.bf16.mxu0 0
  %986 = vmatmul.mubr.bf16.gmra.mxu0 %v748
  %v987 = vpop.f32.mrf.mxu0
  %v988 = vadd.f32 0.0, %v987
  %v989 = vpop.f32.mrf.mxu0
  %v990 = vpop.f32.mrf.mxu0
  %v991 = vadd.f32 0.0, %v990
  %v992 = vpop.f32.mrf.mxu0
  %993 = vmatprep.mubr.bf16.mxu0 0
  %994 = vmatmul.mubr.bf16.gmra.mxu0 %v751
  %v995 = vpop.f32.mrf.mxu0
  %v996 = vadd.f32 0.0, %v995
  %v997 = vpop.f32.mrf.mxu0
  %v998 = vpop.f32.mrf.mxu0
  %v999 = vadd.f32 0.0, %v998
  %v1000 = vpop.f32.mrf.mxu0
  %1001 = vmatprep.mubr.bf16.mxu0 0
  %1002 = vmatmul.mubr.bf16.gmra.mxu0 %v754
  %v1003 = vpop.f32.mrf.mxu0
  %v1004 = vadd.f32 0.0, %v1003
  %v1005 = vpop.f32.mrf.mxu0
  %v1006 = vpop.f32.mrf.mxu0
  %v1007 = vadd.f32 0.0, %v1006
  %v1008 = vpop.f32.mrf.mxu0
  %1009 = vmatprep.mubr.bf16.mxu0 0
  %1010 = vmatmul.mubr.bf16.gmra.mxu0 %v757
  %v1011 = vpop.f32.mrf.mxu0
  %v1012 = vadd.f32 0.0, %v1011
  %v1013 = vpop.f32.mrf.mxu0
  %v1014 = vpop.f32.mrf.mxu0
  %v1015 = vadd.f32 0.0, %v1014
  %v1016 = vpop.f32.mrf.mxu0
  %1017 = vmatprep.mubr.bf16.mxu0 0
  %1018 = vmatmul.mubr.bf16.gmra.mxu0 %v760
  %v1019 = vpop.f32.mrf.mxu0
  %v1020 = vadd.f32 0.0, %v1019
  %v1021 = vpop.f32.mrf.mxu0
  %v1022 = vpop.f32.mrf.mxu0
  %v1023 = vadd.f32 0.0, %v1022
  %v1024 = vpop.f32.mrf.mxu0
  %1025 = vmatprep.mubr.bf16.mxu0 0
  %1026 = vmatmul.mubr.bf16.gmra.mxu0 %v763
  %v1027 = vpop.f32.mrf.mxu0
  %v1028 = vadd.f32 0.0, %v1027
  %v1029 = vpop.f32.mrf.mxu0
  %v1030 = vpop.f32.mrf.mxu0
  %v1031 = vadd.f32 0.0, %v1030
  %v1032 = vpop.f32.mrf.mxu0
  %1033 = vmatprep.mubr.bf16.mxu0 0
  %1034 = vmatmul.mubr.bf16.gmra.mxu0 %v766
  %v1035 = vpop.f32.mrf.mxu0
  %v1036 = vadd.f32 0.0, %v1035
  %v1037 = vpop.f32.mrf.mxu0
  %v1038 = vpop.f32.mrf.mxu0
  %v1039 = vadd.f32 0.0, %v1038
  %v1040 = vpop.f32.mrf.mxu0
  %1041 = vmatprep.mubr.bf16.mxu0 0
  %1042 = vmatmul.mubr.bf16.gmra.mxu0 %v769
  %v1043 = vpop.f32.mrf.mxu0
  %v1044 = vadd.f32 0.0, %v1043
  %v1045 = vpop.f32.mrf.mxu0
  %v1046 = vpop.f32.mrf.mxu0
  %v1047 = vadd.f32 0.0, %v1046
  %v1048 = vpop.f32.mrf.mxu0
  %1049 = vmatprep.mubr.bf16.mxu0 0
  %1050 = vmatmul.mubr.bf16.gmra.mxu0 %v772
  %v1051 = vpop.f32.mrf.mxu0
  %v1052 = vadd.f32 0.0, %v1051
  %v1053 = vpop.f32.mrf.mxu0
  %v1054 = vpop.f32.mrf.mxu0
  %v1055 = vadd.f32 0.0, %v1054
  %v1056 = vpop.f32.mrf.mxu0
  %1057 = vmatprep.mubr.bf16.mxu0 0
  %1058 = vmatmul.mubr.bf16.gmra.mxu0 %v775
  %v1059 = vpop.f32.mrf.mxu0
  %v1060 = vadd.f32 0.0, %v1059
  %v1061 = vpop.f32.mrf.mxu0
  %v1062 = vpop.f32.mrf.mxu0
  %v1063 = vadd.f32 0.0, %v1062
  %v1064 = vpop.f32.mrf.mxu0
  %1065 = vmatprep.mubr.bf16.mxu0 0
  %1066 = vmatmul.mubr.bf16.gmra.mxu0 %v778
  %v1067 = vpop.f32.mrf.mxu0
  %v1068 = vadd.f32 0.0, %v1067
  %v1069 = vpop.f32.mrf.mxu0
  %v1070 = vpop.f32.mrf.mxu0
  %v1071 = vadd.f32 0.0, %v1070
  %v1072 = vpop.f32.mrf.mxu0
  %1073 = vmatprep.mubr.bf16.mxu0 0
  %1074 = vmatmul.mubr.bf16.gmra.mxu0 %v781
  %v1075 = vpop.f32.mrf.mxu0
  %v1076 = vadd.f32 0.0, %v1075
  %v1077 = vpop.f32.mrf.mxu0
  %v1078 = vpop.f32.mrf.mxu0
  %v1079 = vadd.f32 0.0, %v1078
  %v1080 = vpop.f32.mrf.mxu0
  %1081 = vmatprep.mubr.bf16.mxu0 0
  %1082 = vmatmul.mubr.bf16.gmra.mxu0 %v784
  %v1083 = vpop.f32.mrf.mxu0
  %v1084 = vadd.f32 0.0, %v1083
  %v1085 = vpop.f32.mrf.mxu0
  %v1086 = vpop.f32.mrf.mxu0
  %v1087 = vadd.f32 0.0, %v1086
  %v1088 = vpop.f32.mrf.mxu0
  %1089 = vmatprep.mubr.bf16.mxu0 0
  %1090 = vmatmul.mubr.bf16.gmra.mxu0 %v787
  %v1091 = vpop.f32.mrf.mxu0
  %v1092 = vadd.f32 0.0, %v1091
  %v1093 = vpop.f32.mrf.mxu0
  %v1094 = vpop.f32.mrf.mxu0
  %v1095 = vadd.f32 0.0, %v1094
  %v1096 = vpop.f32.mrf.mxu0
  %1097 = vmatprep.mubr.bf16.mxu0 0
  %1098 = vmatmul.mubr.bf16.gmra.mxu0 %v790
  %v1099 = vpop.f32.mrf.mxu0
  %v1100 = vadd.f32 0.0, %v1099
  %v1101 = vpop.f32.mrf.mxu0
  %v1102 = vpop.f32.mrf.mxu0
  %v1103 = vadd.f32 0.0, %v1102
  %v1104 = vpop.f32.mrf.mxu0
  %1105 = vmatprep.mubr.bf16.mxu0 0
  %1106 = vmatmul.mubr.bf16.gmra.mxu0 %v793
  %v1107 = vpop.f32.mrf.mxu0
  %v1108 = vadd.f32 0.0, %v1107
  %v1109 = vpop.f32.mrf.mxu0
  %v1110 = vpop.f32.mrf.mxu0
  %v1111 = vadd.f32 0.0, %v1110
  %v1112 = vpop.f32.mrf.mxu0
  %1113 = vmatprep.mubr.bf16.mxu0 0
  %1114 = vmatmul.mubr.bf16.gmra.mxu0 %v796
  %v1115 = vpop.f32.mrf.mxu0
  %v1116 = vadd.f32 0.0, %v1115
  %v1117 = vpop.f32.mrf.mxu0
  %v1118 = vpop.f32.mrf.mxu0
  %v1119 = vadd.f32 0.0, %v1118
  %v1120 = vpop.f32.mrf.mxu0
  %1121 = vmatprep.mubr.bf16.mxu0 0
  %1122 = vmatmul.mubr.bf16.gmra.mxu0 %v799
  %v1123 = vpop.f32.mrf.mxu0
  %v1124 = vadd.f32 0.0, %v1123
  %v1125 = vpop.f32.mrf.mxu0
  %v1126 = vpop.f32.mrf.mxu0
  %v1127 = vadd.f32 0.0, %v1126
  %v1128 = vpop.f32.mrf.mxu0
  %1129 = vmatprep.mubr.bf16.mxu0 0
  %1130 = vmatmul.mubr.bf16.gmra.mxu0 %v802
  %v1131 = vpop.f32.mrf.mxu0
  %v1132 = vadd.f32 0.0, %v1131
  %v1133 = vpop.f32.mrf.mxu0
  %v1134 = vpop.f32.mrf.mxu0
  %v1135 = vadd.f32 0.0, %v1134
  %v1136 = vpop.f32.mrf.mxu0
  %1137 = vmatprep.mubr.bf16.mxu0 0
  %1138 = vmatmul.mubr.bf16.gmra.mxu0 %v805
  %v1139 = vpop.f32.mrf.mxu0
  %v1140 = vadd.f32 0.0, %v1139
  %v1141 = vpop.f32.mrf.mxu0
  %v1142 = vpop.f32.mrf.mxu0
  %v1143 = vadd.f32 0.0, %v1142
  %v1144 = vpop.f32.mrf.mxu0
  %1145 = vmatprep.mubr.bf16.mxu0 0
  %1146 = vmatmul.mubr.bf16.gmra.mxu0 %v808
  %v1147 = vpop.f32.mrf.mxu0
  %v1148 = vadd.f32 0.0, %v1147
  %v1149 = vpop.f32.mrf.mxu0
  %v1150 = vpop.f32.mrf.mxu0
  %v1151 = vadd.f32 0.0, %v1150
  %v1152 = vpop.f32.mrf.mxu0
  %1153 = vmatprep.mubr.bf16.mxu0 0
  %1154 = vmatmul.mubr.bf16.gmra.mxu0 %v811
  %v1155 = vpop.f32.mrf.mxu0
  %v1156 = vadd.f32 0.0, %v1155
  %v1157 = vpop.f32.mrf.mxu0
  %v1158 = vpop.f32.mrf.mxu0
  %v1159 = vadd.f32 0.0, %v1158
  %v1160 = vpop.f32.mrf.mxu0
  %1161 = vmatprep.mubr.bf16.mxu0 0
  %1162 = vmatmul.mubr.bf16.gmra.mxu0 %v814
  %v1163 = vpop.f32.mrf.mxu0
  %v1164 = vadd.f32 0.0, %v1163
  %v1165 = vpop.f32.mrf.mxu0
  %v1166 = vpop.f32.mrf.mxu0
  %v1167 = vadd.f32 0.0, %v1166
  %v1168 = vpop.f32.mrf.mxu0
  %1169 = vmatprep.mubr.bf16.mxu0 0
  %1170 = vmatmul.mubr.bf16.gmra.mxu0 %v817
  %v1171 = vpop.f32.mrf.mxu0
  %v1172 = vadd.f32 0.0, %v1171
  %v1173 = vpop.f32.mrf.mxu0
  %v1174 = vpop.f32.mrf.mxu0
  %v1175 = vadd.f32 0.0, %v1174
  %v1176 = vpop.f32.mrf.mxu0
  %1177 = vmatprep.mubr.bf16.mxu0 0
  %1178 = vmatmul.mubr.bf16.gmra.mxu0 %v820
  %v1179 = vpop.f32.mrf.mxu0
  %v1180 = vadd.f32 0.0, %v1179
  %v1181 = vpop.f32.mrf.mxu0
  %v1182 = vpop.f32.mrf.mxu0
  %v1183 = vadd.f32 0.0, %v1182
  %v1184 = vpop.f32.mrf.mxu0
  %1185 = vmatprep.mubr.bf16.mxu0 0
  %1186 = vmatmul.mubr.bf16.gmra.mxu0 %v823
  %v1187 = vpop.f32.mrf.mxu0
  %v1188 = vadd.f32 0.0, %v1187
  %v1189 = vpop.f32.mrf.mxu0
  %v1190 = vpop.f32.mrf.mxu0
  %v1191 = vadd.f32 0.0, %v1190
  %v1192 = vpop.f32.mrf.mxu0
  %1193 = vmatprep.mubr.bf16.mxu0 0
  %1194 = vmatmul.mubr.bf16.gmra.mxu0 %v826
  %v1195 = vpop.f32.mrf.mxu0
  %v1196 = vadd.f32 0.0, %v1195
  %v1197 = vpop.f32.mrf.mxu0
  %v1198 = vpop.f32.mrf.mxu0
  %v1199 = vadd.f32 0.0, %v1198
  %v1200 = vpop.f32.mrf.mxu0
  %1201 = vmatprep.mubr.bf16.mxu0 0
  %1202 = vmatmul.mubr.bf16.gmra.mxu0 %v829
  %v1203 = vpop.f32.mrf.mxu0
  %v1204 = vadd.f32 0.0, %v1203
  %v1205 = vpop.f32.mrf.mxu0
  %v1206 = vpop.f32.mrf.mxu0
  %v1207 = vadd.f32 0.0, %v1206
  %v1208 = vpop.f32.mrf.mxu0
  %1209 = vmatprep.mubr.bf16.mxu0 0
  %1210 = vmatmul.mubr.bf16.gmra.mxu0 %v832
  %v1211 = vpop.f32.mrf.mxu0
  %v1212 = vadd.f32 0.0, %v1211
  %v1213 = vpop.f32.mrf.mxu0
  %v1214 = vpop.f32.mrf.mxu0
  %v1215 = vadd.f32 0.0, %v1214
  %v1216 = vpop.f32.mrf.mxu0
  %1217 = vmatprep.mubr.bf16.mxu0 0
  %1218 = vmatmul.mubr.bf16.gmra.mxu0 %v835
  %v1219 = vpop.f32.mrf.mxu0
  %v1220 = vadd.f32 0.0, %v1219
  %v1221 = vpop.f32.mrf.mxu0
  %v1222 = vpop.f32.mrf.mxu0
  %v1223 = vadd.f32 0.0, %v1222
  %v1224 = vpop.f32.mrf.mxu0
  %1225 = vmatprep.mubr.bf16.mxu0 0
  %1226 = vmatmul.mubr.bf16.gmra.mxu0 %v838
  %v1227 = vpop.f32.mrf.mxu0
  %v1228 = vadd.f32 0.0, %v1227
  %v1229 = vpop.f32.mrf.mxu0
  %v1230 = vpop.f32.mrf.mxu0
  %v1231 = vadd.f32 0.0, %v1230
  %v1232 = vpop.f32.mrf.mxu0
  %1233 = vmatprep.mubr.bf16.mxu0 0
  %1234 = vmatmul.mubr.bf16.gmra.mxu0 %v841
  %v1235 = vpop.f32.mrf.mxu0
  %v1236 = vadd.f32 0.0, %v1235
  %v1237 = vpop.f32.mrf.mxu0
  %v1238 = vpop.f32.mrf.mxu0
  %v1239 = vadd.f32 0.0, %v1238
  %v1240 = vpop.f32.mrf.mxu0
  %1241 = vmatprep.mubr.bf16.mxu0 0
  %1242 = vmatmul.mubr.bf16.gmra.mxu0 %v844
  %v1243 = vpop.f32.mrf.mxu0
  %v1244 = vadd.f32 0.0, %v1243
  %v1245 = vpop.f32.mrf.mxu0
  %v1246 = vpop.f32.mrf.mxu0
  %v1247 = vadd.f32 0.0, %v1246
  %v1248 = vpop.f32.mrf.mxu0
  %1249 = vmatprep.mubr.bf16.mxu0 0
  %1250 = vmatmul.mubr.bf16.gmra.mxu0 %v847
  %v1251 = vpop.f32.mrf.mxu0
  %v1252 = vadd.f32 0.0, %v1251
  %v1253 = vpop.f32.mrf.mxu0
  %v1254 = vpop.f32.mrf.mxu0
  %v1255 = vadd.f32 0.0, %v1254
  %v1256 = vpop.f32.mrf.mxu0
  %1257 = vmatprep.mubr.bf16.mxu0 0
  %1258 = vmatmul.mubr.bf16.gmra.mxu0 %v850
  %v1259 = vpop.f32.mrf.mxu0
  %v1260 = vadd.f32 0.0, %v1259
  %v1261 = vpop.f32.mrf.mxu0
  %v1262 = vpop.f32.mrf.mxu0
  %v1263 = vadd.f32 0.0, %v1262
  %v1264 = vpop.f32.mrf.mxu0
  %1265 = vmatprep.mubr.bf16.mxu0 0
  %1266 = vmatmul.mubr.bf16.gmra.mxu0 %v853
  %v1267 = vpop.f32.mrf.mxu0
  %v1268 = vadd.f32 0.0, %v1267
  %v1269 = vpop.f32.mrf.mxu0
  %v1270 = vpop.f32.mrf.mxu0
  %v1271 = vadd.f32 0.0, %v1270
  %v1272 = vpop.f32.mrf.mxu0
  %1273 = vmatprep.mubr.bf16.mxu0 0
  %1274 = vmatmul.mubr.bf16.gmra.mxu0 %v856
  %v1275 = vpop.f32.mrf.mxu0
  %v1276 = vadd.f32 0.0, %v1275
  %v1277 = vpop.f32.mrf.mxu0
  %v1278 = vpop.f32.mrf.mxu0
  %v1279 = vadd.f32 0.0, %v1278
  %v1280 = vpop.f32.mrf.mxu0
  %1281 = vmatprep.mubr.bf16.mxu0 0
  %1282 = vmatmul.mubr.bf16.gmra.mxu0 %v859
  %v1283 = vpop.f32.mrf.mxu0
  %v1284 = vadd.f32 0.0, %v1283
  %v1285 = vpop.f32.mrf.mxu0
  %v1286 = vpop.f32.mrf.mxu0
  %v1287 = vadd.f32 0.0, %v1286
  %v1288 = vpop.f32.mrf.mxu0
  %1289 = vmatprep.mubr.bf16.mxu0 0
  %1290 = vmatmul.mubr.bf16.gmra.mxu0 %v862
  %v1291 = vpop.f32.mrf.mxu0
  %v1292 = vadd.f32 0.0, %v1291
  %v1293 = vpop.f32.mrf.mxu0
  %v1294 = vpop.f32.mrf.mxu0
  %v1295 = vadd.f32 0.0, %v1294
  %v1296 = vpop.f32.mrf.mxu0
  %1297 = vmatprep.mubr.bf16.mxu0 0
  %1298 = vmatmul.mubr.bf16.gmra.mxu0 %v865
  %v1299 = vpop.f32.mrf.mxu0
  %v1300 = vadd.f32 0.0, %v1299
  %v1301 = vpop.f32.mrf.mxu0
  %v1302 = vpop.f32.mrf.mxu0
  %v1303 = vadd.f32 0.0, %v1302
  %v1304 = vpop.f32.mrf.mxu0
  %1305 = vmatprep.mubr.bf16.mxu0 0
  %1306 = vmatmul.mubr.bf16.gmra.mxu0 %v868
  %v1307 = vpop.f32.mrf.mxu0
  %v1308 = vadd.f32 0.0, %v1307
  %v1309 = vpop.f32.mrf.mxu0
  %v1310 = vpop.f32.mrf.mxu0
  %v1311 = vadd.f32 0.0, %v1310
  %v1312 = vpop.f32.mrf.mxu0
  %1313 = vmatprep.mubr.bf16.mxu0 0
  %1314 = vmatmul.mubr.bf16.gmra.mxu0 %v871
  %v1315 = vpop.f32.mrf.mxu0
  %v1316 = vadd.f32 0.0, %v1315
  %v1317 = vpop.f32.mrf.mxu0
  %v1318 = vpop.f32.mrf.mxu0
  %v1319 = vadd.f32 0.0, %v1318
  %v1320 = vpop.f32.mrf.mxu0
  %1321 = vmatprep.mubr.bf16.mxu0 0
  %1322 = vmatmul.mubr.bf16.gmra.mxu0 %v874
  %v1323 = vpop.f32.mrf.mxu0
  %v1324 = vadd.f32 0.0, %v1323
  %v1325 = vpop.f32.mrf.mxu0
  %v1326 = vpop.f32.mrf.mxu0
  %v1327 = vadd.f32 0.0, %v1326
  %v1328 = vpop.f32.mrf.mxu0
  %1329 = vmatprep.mubr.bf16.mxu0 0
  %1330 = vmatmul.mubr.bf16.gmra.mxu0 %v877
  %v1331 = vpop.f32.mrf.mxu0
  %v1332 = vadd.f32 0.0, %v1331
  %v1333 = vpop.f32.mrf.mxu0
  %v1334 = vpop.f32.mrf.mxu0
  %v1335 = vadd.f32 0.0, %v1334
  %v1336 = vpop.f32.mrf.mxu0
  %1337 = vmatprep.mubr.bf16.mxu0 0
  %1338 = vmatmul.mubr.bf16.gmra.mxu0 %v880
  %v1339 = vpop.f32.mrf.mxu0
  %v1340 = vadd.f32 0.0, %v1339
  %v1341 = vpop.f32.mrf.mxu0
  %v1342 = vpop.f32.mrf.mxu0
  %v1343 = vadd.f32 0.0, %v1342
  %v1344 = vpop.f32.mrf.mxu0
  %1345 = vmatprep.mubr.bf16.mxu0 0
  %1346 = vmatmul.mubr.bf16.gmra.mxu0 %v883
  %v1347 = vpop.f32.mrf.mxu0
  %v1348 = vadd.f32 0.0, %v1347
  %v1349 = vpop.f32.mrf.mxu0
  %v1350 = vpop.f32.mrf.mxu0
  %v1351 = vadd.f32 0.0, %v1350
  %v1352 = vpop.f32.mrf.mxu0
  %1353 = vmatprep.mubr.bf16.mxu0 0
  %1354 = vmatmul.mubr.bf16.gmra.mxu0 %v886
  %v1355 = vpop.f32.mrf.mxu0
  %v1356 = vadd.f32 0.0, %v1355
  %v1357 = vpop.f32.mrf.mxu0
  %v1358 = vpop.f32.mrf.mxu0
  %v1359 = vadd.f32 0.0, %v1358
  %v1360 = vpop.f32.mrf.mxu0
  %1361 = vmatprep.mubr.bf16.mxu0 0
  %1362 = vmatmul.mubr.bf16.gmra.mxu0 %v889
  %v1363 = vpop.f32.mrf.mxu0
  %v1364 = vadd.f32 0.0, %v1363
  %v1365 = vpop.f32.mrf.mxu0
  %v1366 = vpop.f32.mrf.mxu0
  %v1367 = vadd.f32 0.0, %v1366
  %v1368 = vpop.f32.mrf.mxu0
  %1369 = vmatprep.mubr.bf16.mxu0 0
  %1370 = vmatmul.mubr.bf16.gmra.mxu0 %v892
  %v1371 = vpop.f32.mrf.mxu0
  %v1372 = vadd.f32 0.0, %v1371
  %v1373 = vpop.f32.mrf.mxu0
  %v1374 = vpop.f32.mrf.mxu0
  %v1375 = vadd.f32 0.0, %v1374
  %v1376 = vpop.f32.mrf.mxu0
  %1377 = vmatprep.mubr.bf16.mxu0 0
  %1378 = vmatmul.mubr.bf16.gmra.mxu0 %v895
  %v1379 = vpop.f32.mrf.mxu0
  %v1380 = vadd.f32 0.0, %v1379
  %v1381 = vpop.f32.mrf.mxu0
  %v1382 = vpop.f32.mrf.mxu0
  %v1383 = vadd.f32 0.0, %v1382
  %v1384 = vpop.f32.mrf.mxu0
  %1385 = vmatprep.mubr.bf16.mxu0 0
  %1386 = vmatmul.mubr.bf16.gmra.mxu0 %v898
  %v1387 = vpop.f32.mrf.mxu0
  %v1388 = vadd.f32 0.0, %v1387
  %v1389 = vpop.f32.mrf.mxu0
  %v1390 = vpop.f32.mrf.mxu0
  %v1391 = vadd.f32 0.0, %v1390
  %v1392 = vpop.f32.mrf.mxu0
  %1393 = vmatprep.mubr.bf16.mxu0 0
  %1394 = vmatmul.mubr.bf16.gmra.mxu0 %v901
  %v1395 = vpop.f32.mrf.mxu0
  %v1396 = vadd.f32 0.0, %v1395
  %v1397 = vpop.f32.mrf.mxu0
  %v1398 = vpop.f32.mrf.mxu0
  %v1399 = vadd.f32 0.0, %v1398
  %v1400 = vpop.f32.mrf.mxu0
  %1401 = vmatprep.mubr.bf16.mxu0 0
  %1402 = vmatmul.mubr.bf16.gmra.mxu0 %v904
  %v1403 = vpop.f32.mrf.mxu0
  %v1404 = vadd.f32 0.0, %v1403
  %v1405 = vpop.f32.mrf.mxu0
  %v1406 = vpop.f32.mrf.mxu0
  %v1407 = vadd.f32 0.0, %v1406
  %v1408 = vpop.f32.mrf.mxu0
  %1409 = vmatprep.mubr.bf16.mxu0 0
  %1410 = vmatmul.mubr.bf16.gmra.mxu0 %v907
  %v1411 = vpop.f32.mrf.mxu0
  %v1412 = vadd.f32 0.0, %v1411
  %v1413 = vpop.f32.mrf.mxu0
  %v1414 = vpop.f32.mrf.mxu0
  %v1415 = vadd.f32 0.0, %v1414
  %v1416 = vpop.f32.mrf.mxu0
  %1417 = vmatprep.mubr.bf16.mxu0 0
  %1418 = vmatmul.mubr.bf16.gmra.mxu0 %v910
  %v1419 = vpop.f32.mrf.mxu0
  %v1420 = vadd.f32 0.0, %v1419
  %v1421 = vpop.f32.mrf.mxu0
  %v1422 = vpop.f32.mrf.mxu0
  %v1423 = vadd.f32 0.0, %v1422
  %v1424 = vpop.f32.mrf.mxu0
  %1425 = vmatprep.mubr.bf16.mxu0 0
  %1426 = vmatmul.mubr.bf16.gmra.mxu0 %v913
  %v1427 = vpop.f32.mrf.mxu0
  %v1428 = vadd.f32 0.0, %v1427
  %v1429 = vpop.f32.mrf.mxu0
  %v1430 = vpop.f32.mrf.mxu0
  %v1431 = vadd.f32 0.0, %v1430
  %v1432 = vpop.f32.mrf.mxu0
  %1433 = vmatprep.mubr.bf16.mxu0 0
  %1434 = vmatmul.mubr.bf16.gmra.mxu0 %v916
  %v1435 = vpop.f32.mrf.mxu0
  %v1436 = vadd.f32 0.0, %v1435
  %v1437 = vpop.f32.mrf.mxu0
  %v1438 = vpop.f32.mrf.mxu0
  %v1439 = vadd.f32 0.0, %v1438
  %v1440 = vpop.f32.mrf.mxu0
  %1441 = vmatprep.mubr.bf16.mxu0 0
  %1442 = vmatmul.mubr.bf16.gmra.mxu0 %v919
  %v1443 = vpop.f32.mrf.mxu0
  %v1444 = vadd.f32 0.0, %v1443
  %v1445 = vpop.f32.mrf.mxu0
  %v1446 = vpop.f32.mrf.mxu0
  %v1447 = vadd.f32 0.0, %v1446
  %v1448 = vpop.f32.mrf.mxu0
  %1449 = vmatprep.mubr.bf16.mxu0 0
  %1450 = vmatmul.mubr.bf16.gmra.mxu0 %v922
  %v1451 = vpop.f32.mrf.mxu0
  %v1452 = vadd.f32 0.0, %v1451
  %v1453 = vpop.f32.mrf.mxu0
  %v1454 = vpop.f32.mrf.mxu0
  %v1455 = vadd.f32 0.0, %v1454
  %v1456 = vpop.f32.mrf.mxu0
  %1457 = vmatprep.mubr.bf16.mxu0 0
  %1458 = vmatmul.mubr.bf16.gmra.mxu0 %v925
  %v1459 = vpop.f32.mrf.mxu0
  %v1460 = vadd.f32 0.0, %v1459
  %v1461 = vpop.f32.mrf.mxu0
  %v1462 = vpop.f32.mrf.mxu0
  %v1463 = vadd.f32 0.0, %v1462
  %v1464 = vpop.f32.mrf.mxu0
  %1465 = vmatprep.mubr.bf16.mxu0 0
  %1466 = vmatmul.mubr.bf16.gmra.mxu0 %v928
  %v1467 = vpop.f32.mrf.mxu0
  %v1468 = vadd.f32 0.0, %v1467
  %v1469 = vpop.f32.mrf.mxu0
  %v1470 = vpop.f32.mrf.mxu0
  %v1471 = vadd.f32 0.0, %v1470
  %v1472 = vpop.f32.mrf.mxu0
  %1473 = vmatprep.mubr.bf16.mxu0 0
  %1474 = vmatmul.mubr.bf16.gmra.mxu0 %v931
  %v1475 = vpop.f32.mrf.mxu0
  %v1476 = vadd.f32 0.0, %v1475
  %v1477 = vpop.f32.mrf.mxu0
  %v1478 = vpop.f32.mrf.mxu0
  %v1479 = vadd.f32 0.0, %v1478
  %v1480 = vpop.f32.mrf.mxu0
  %1481 = vdwg.mxu0
  %vm1482 = vcmask 130048
  %1483 = vst.msk [vmem:[%s4] sm:$0xff] %vm1482, %v972
  %1484 = vst.msk [vmem:[%s4 + $0x8] sm:$0xff] %vm1482, %v975
  %1485 = vst.msk [vmem:[%s4 + $0x10] sm:$0xff] %vm1482, %v980
  %1486 = vst.msk [vmem:[%s4 + $0x18] sm:$0xff] %vm1482, %v983
  %1487 = vst.msk [vmem:[%s4 + $0x20] sm:$0xff] %vm1482, %v988
  %1488 = vst.msk [vmem:[%s4 + $0x28] sm:$0xff] %vm1482, %v991
  %1489 = vst.msk [vmem:[%s4 + $0x30] sm:$0xff] %vm1482, %v996
  %1490 = vst.msk [vmem:[%s4 + $0x38] sm:$0xff] %vm1482, %v999
  %1491 = vst.msk [vmem:[%s4 + $0x40] sm:$0xff] %vm1482, %v1004
  %1492 = vst.msk [vmem:[%s4 + $0x48] sm:$0xff] %vm1482, %v1007
  %1493 = vst.msk [vmem:[%s4 + $0x50] sm:$0xff] %vm1482, %v1012
  %1494 = vst.msk [vmem:[%s4 + $0x58] sm:$0xff] %vm1482, %v1015
  %1495 = vst.msk [vmem:[%s4 + $0x60] sm:$0xff] %vm1482, %v1020
  %1496 = vst.msk [vmem:[%s4 + $0x68] sm:$0xff] %vm1482, %v1023
  %1497 = vst.msk [vmem:[%s4 + $0x70] sm:$0xff] %vm1482, %v1028
  %1498 = vst.msk [vmem:[%s4 + $0x78] sm:$0xff] %vm1482, %v1031
  %1499 = vst.msk [vmem:[%s4 + $0x80] sm:$0xff] %vm1482, %v1036
  %1500 = vst.msk [vmem:[%s4 + $0x88] sm:$0xff] %vm1482, %v1039
  %1501 = vst.msk [vmem:[%s4 + $0x90] sm:$0xff] %vm1482, %v1044
  %1502 = vst.msk [vmem:[%s4 + $0x98] sm:$0xff] %vm1482, %v1047
  %1503 = vst.msk [vmem:[%s4 + $0xa0] sm:$0xff] %vm1482, %v1052
  %1504 = vst.msk [vmem:[%s4 + $0xa8] sm:$0xff] %vm1482, %v1055
  %1505 = vst.msk [vmem:[%s4 + $0xb0] sm:$0xff] %vm1482, %v1060
  %1506 = vst.msk [vmem:[%s4 + $0xb8] sm:$0xff] %vm1482, %v1063
  %1507 = vst.msk [vmem:[%s4 + $0xc0] sm:$0xff] %vm1482, %v1068
  %1508 = vst.msk [vmem:[%s4 + $0xc8] sm:$0xff] %vm1482, %v1071
  %1509 = vst.msk [vmem:[%s4 + $0xd0] sm:$0xff] %vm1482, %v1076
  %1510 = vst.msk [vmem:[%s4 + $0xd8] sm:$0xff] %vm1482, %v1079
  %1511 = vst.msk [vmem:[%s4 + $0xe0] sm:$0xff] %vm1482, %v1084
  %1512 = vst.msk [vmem:[%s4 + $0xe8] sm:$0xff] %vm1482, %v1087
  %1513 = vst.msk [vmem:[%s4 + $0xf0] sm:$0xff] %vm1482, %v1092
  %1514 = vst.msk [vmem:[%s4 + $0xf8] sm:$0xff] %vm1482, %v1095
  %1515 = vst.msk [vmem:[%s4 + $0x100] sm:$0xff] %vm1482, %v1100
  %1516 = vst.msk [vmem:[%s4 + $0x108] sm:$0xff] %vm1482, %v1103
  %1517 = vst.msk [vmem:[%s4 + $0x110] sm:$0xff] %vm1482, %v1108
  %1518 = vst.msk [vmem:[%s4 + $0x118] sm:$0xff] %vm1482, %v1111
  %1519 = vst.msk [vmem:[%s4 + $0x120] sm:$0xff] %vm1482, %v1116
  %1520 = vst.msk [vmem:[%s4 + $0x128] sm:$0xff] %vm1482, %v1119
  %1521 = vst.msk [vmem:[%s4 + $0x130] sm:$0xff] %vm1482, %v1124
  %1522 = vst.msk [vmem:[%s4 + $0x138] sm:$0xff] %vm1482, %v1127
  %1523 = vst.msk [vmem:[%s4 + $0x140] sm:$0xff] %vm1482, %v1132
  %1524 = vst.msk [vmem:[%s4 + $0x148] sm:$0xff] %vm1482, %v1135
  %1525 = vst.msk [vmem:[%s4 + $0x150] sm:$0xff] %vm1482, %v1140
  %1526 = vst.msk [vmem:[%s4 + $0x158] sm:$0xff] %vm1482, %v1143
  %1527 = vst.msk [vmem:[%s4 + $0x160] sm:$0xff] %vm1482, %v1148
  %1528 = vst.msk [vmem:[%s4 + $0x168] sm:$0xff] %vm1482, %v1151
  %1529 = vst.msk [vmem:[%s4 + $0x170] sm:$0xff] %vm1482, %v1156
  %1530 = vst.msk [vmem:[%s4 + $0x178] sm:$0xff] %vm1482, %v1159
  %1531 = vst.msk [vmem:[%s4 + $0x180] sm:$0xff] %vm1482, %v1164
  %1532 = vst.msk [vmem:[%s4 + $0x188] sm:$0xff] %vm1482, %v1167
  %1533 = vst.msk [vmem:[%s4 + $0x190] sm:$0xff] %vm1482, %v1172
  %1534 = vst.msk [vmem:[%s4 + $0x198] sm:$0xff] %vm1482, %v1175
  %1535 = vst.msk [vmem:[%s4 + $0x1a0] sm:$0xff] %vm1482, %v1180
  %1536 = vst.msk [vmem:[%s4 + $0x1a8] sm:$0xff] %vm1482, %v1183
  %1537 = vst.msk [vmem:[%s4 + $0x1b0] sm:$0xff] %vm1482, %v1188
  %1538 = vst.msk [vmem:[%s4 + $0x1b8] sm:$0xff] %vm1482, %v1191
  %1539 = vst.msk [vmem:[%s4 + $0x1c0] sm:$0xff] %vm1482, %v1196
  %1540 = vst.msk [vmem:[%s4 + $0x1c8] sm:$0xff] %vm1482, %v1199
  %1541 = vst.msk [vmem:[%s4 + $0x1d0] sm:$0xff] %vm1482, %v1204
  %1542 = vst.msk [vmem:[%s4 + $0x1d8] sm:$0xff] %vm1482, %v1207
  %1543 = vst.msk [vmem:[%s4 + $0x1e0] sm:$0xff] %vm1482, %v1212
  %1544 = vst.msk [vmem:[%s4 + $0x1e8] sm:$0xff] %vm1482, %v1215
  %1545 = vst.msk [vmem:[%s4 + $0x1f0] sm:$0xff] %vm1482, %v1220
  %1546 = vst.msk [vmem:[%s4 + $0x1f8] sm:$0xff] %vm1482, %v1223
  %1547 = vst.msk [vmem:[%s4 + $0x200] sm:$0xff] %vm1482, %v1228
  %1548 = vst.msk [vmem:[%s4 + $0x208] sm:$0xff] %vm1482, %v1231
  %1549 = vst.msk [vmem:[%s4 + $0x210] sm:$0xff] %vm1482, %v1236
  %1550 = vst.msk [vmem:[%s4 + $0x218] sm:$0xff] %vm1482, %v1239
  %1551 = vst.msk [vmem:[%s4 + $0x220] sm:$0xff] %vm1482, %v1244
  %1552 = vst.msk [vmem:[%s4 + $0x228] sm:$0xff] %vm1482, %v1247
  %1553 = vst.msk [vmem:[%s4 + $0x230] sm:$0xff] %vm1482, %v1252
  %1554 = vst.msk [vmem:[%s4 + $0x238] sm:$0xff] %vm1482, %v1255
  %1555 = vst.msk [vmem:[%s4 + $0x240] sm:$0xff] %vm1482, %v1260
  %1556 = vst.msk [vmem:[%s4 + $0x248] sm:$0xff] %vm1482, %v1263
  %1557 = vst.msk [vmem:[%s4 + $0x250] sm:$0xff] %vm1482, %v1268
  %1558 = vst.msk [vmem:[%s4 + $0x258] sm:$0xff] %vm1482, %v1271
  %1559 = vst.msk [vmem:[%s4 + $0x260] sm:$0xff] %vm1482, %v1276
  %1560 = vst.msk [vmem:[%s4 + $0x268] sm:$0xff] %vm1482, %v1279
  %1561 = vst.msk [vmem:[%s4 + $0x270] sm:$0xff] %vm1482, %v1284
  %1562 = vst.msk [vmem:[%s4 + $0x278] sm:$0xff] %vm1482, %v1287
  %1563 = vst.msk [vmem:[%s4 + $0x280] sm:$0xff] %vm1482, %v1292
  %1564 = vst.msk [vmem:[%s4 + $0x288] sm:$0xff] %vm1482, %v1295
  %1565 = vst.msk [vmem:[%s4 + $0x290] sm:$0xff] %vm1482, %v1300
  %1566 = vst.msk [vmem:[%s4 + $0x298] sm:$0xff] %vm1482, %v1303
  %1567 = vst.msk [vmem:[%s4 + $0x2a0] sm:$0xff] %vm1482, %v1308
  %1568 = vst.msk [vmem:[%s4 + $0x2a8] sm:$0xff] %vm1482, %v1311
  %1569 = vst.msk [vmem:[%s4 + $0x2b0] sm:$0xff] %vm1482, %v1316
  %1570 = vst.msk [vmem:[%s4 + $0x2b8] sm:$0xff] %vm1482, %v1319
  %1571 = vst.msk [vmem:[%s4 + $0x2c0] sm:$0xff] %vm1482, %v1324
  %1572 = vst.msk [vmem:[%s4 + $0x2c8] sm:$0xff] %vm1482, %v1327
  %1573 = vst.msk [vmem:[%s4 + $0x2d0] sm:$0xff] %vm1482, %v1332
  %1574 = vst.msk [vmem:[%s4 + $0x2d8] sm:$0xff] %vm1482, %v1335
  %1575 = vst.msk [vmem:[%s4 + $0x2e0] sm:$0xff] %vm1482, %v1340
  %1576 = vst.msk [vmem:[%s4 + $0x2e8] sm:$0xff] %vm1482, %v1343
  %1577 = vst.msk [vmem:[%s4 + $0x2f0] sm:$0xff] %vm1482, %v1348
  %1578 = vst.msk [vmem:[%s4 + $0x2f8] sm:$0xff] %vm1482, %v1351
  %1579 = vst.msk [vmem:[%s4 + $0x300] sm:$0xff] %vm1482, %v1356
  %1580 = vst.msk [vmem:[%s4 + $0x308] sm:$0xff] %vm1482, %v1359
  %1581 = vst.msk [vmem:[%s4 + $0x310] sm:$0xff] %vm1482, %v1364
  %1582 = vst.msk [vmem:[%s4 + $0x318] sm:$0xff] %vm1482, %v1367
  %1583 = vst.msk [vmem:[%s4 + $0x320] sm:$0xff] %vm1482, %v1372
  %1584 = vst.msk [vmem:[%s4 + $0x328] sm:$0xff] %vm1482, %v1375
  %1585 = vst.msk [vmem:[%s4 + $0x330] sm:$0xff] %vm1482, %v1380
  %1586 = vst.msk [vmem:[%s4 + $0x338] sm:$0xff] %vm1482, %v1383
  %1587 = vst.msk [vmem:[%s4 + $0x340] sm:$0xff] %vm1482, %v1388
  %1588 = vst.msk [vmem:[%s4 + $0x348] sm:$0xff] %vm1482, %v1391
  %1589 = vst.msk [vmem:[%s4 + $0x350] sm:$0xff] %vm1482, %v1396
  %1590 = vst.msk [vmem:[%s4 + $0x358] sm:$0xff] %vm1482, %v1399
  %1591 = vst.msk [vmem:[%s4 + $0x360] sm:$0xff] %vm1482, %v1404
  %1592 = vst.msk [vmem:[%s4 + $0x368] sm:$0xff] %vm1482, %v1407
  %1593 = vst.msk [vmem:[%s4 + $0x370] sm:$0xff] %vm1482, %v1412
  %1594 = vst.msk [vmem:[%s4 + $0x378] sm:$0xff] %vm1482, %v1415
  %1595 = vst.msk [vmem:[%s4 + $0x380] sm:$0xff] %vm1482, %v1420
  %1596 = vst.msk [vmem:[%s4 + $0x388] sm:$0xff] %vm1482, %v1423
  %1597 = vst.msk [vmem:[%s4 + $0x390] sm:$0xff] %vm1482, %v1428
  %1598 = vst.msk [vmem:[%s4 + $0x398] sm:$0xff] %vm1482, %v1431
  %1599 = vst.msk [vmem:[%s4 + $0x3a0] sm:$0xff] %vm1482, %v1436
  %1600 = vst.msk [vmem:[%s4 + $0x3a8] sm:$0xff] %vm1482, %v1439
  %1601 = vst.msk [vmem:[%s4 + $0x3b0] sm:$0xff] %vm1482, %v1444
  %1602 = vst.msk [vmem:[%s4 + $0x3b8] sm:$0xff] %vm1482, %v1447
  %1603 = vst.msk [vmem:[%s4 + $0x3c0] sm:$0xff] %vm1482, %v1452
  %1604 = vst.msk [vmem:[%s4 + $0x3c8] sm:$0xff] %vm1482, %v1455
  %1605 = vst.msk [vmem:[%s4 + $0x3d0] sm:$0xff] %vm1482, %v1460
  %1606 = vst.msk [vmem:[%s4 + $0x3d8] sm:$0xff] %vm1482, %v1463
  %1607 = vst.msk [vmem:[%s4 + $0x3e0] sm:$0xff] %vm1482, %v1468
  %1608 = vst.msk [vmem:[%s4 + $0x3e8] sm:$0xff] %vm1482, %v1471
  %1609 = vst.msk [vmem:[%s4 + $0x3f0] sm:$0xff] %vm1482, %v1476
  %1610 = vst.msk [vmem:[%s4 + $0x3f8] sm:$0xff] %vm1482, %v1479
  %v1611 = vsel %vm1482, %v972, 0.0
  %v1612 = vsel %vm1482, %v975, 0.0
  %v1613 = vadd.f32 %v1611, %v1612
  %v1614 = vsel %vm1482, %v980, 0.0
  %v1615 = vadd.f32 %v1613, %v1614
  %v1616 = vsel %vm1482, %v983, 0.0
  %v1617 = vadd.f32 %v1615, %v1616
  %v1618 = vsel %vm1482, %v988, 0.0
  %v1619 = vadd.f32 %v1617, %v1618
  %v1620 = vsel %vm1482, %v991, 0.0
  %v1621 = vadd.f32 %v1619, %v1620
  %v1622 = vsel %vm1482, %v996, 0.0
  %v1623 = vadd.f32 %v1621, %v1622
  %v1624 = vsel %vm1482, %v999, 0.0
  %v1625 = vadd.f32 %v1623, %v1624
  %v1626 = vsel %vm1482, %v1004, 0.0
  %v1627 = vadd.f32 %v1625, %v1626
  %v1628 = vsel %vm1482, %v1007, 0.0
  %v1629 = vadd.f32 %v1627, %v1628
  %v1630 = vsel %vm1482, %v1012, 0.0
  %v1631 = vadd.f32 %v1629, %v1630
  %v1632 = vsel %vm1482, %v1015, 0.0
  %v1633 = vadd.f32 %v1631, %v1632
  %v1634 = vsel %vm1482, %v1020, 0.0
  %v1635 = vadd.f32 %v1633, %v1634
  %v1636 = vsel %vm1482, %v1023, 0.0
  %v1637 = vadd.f32 %v1635, %v1636
  %v1638 = vsel %vm1482, %v1028, 0.0
  %v1639 = vadd.f32 %v1637, %v1638
  %v1640 = vsel %vm1482, %v1031, 0.0
  %v1641 = vadd.f32 %v1639, %v1640
  %v1642 = vsel %vm1482, %v1036, 0.0
  %v1643 = vadd.f32 %v1641, %v1642
  %v1644 = vsel %vm1482, %v1039, 0.0
  %v1645 = vadd.f32 %v1643, %v1644
  %v1646 = vsel %vm1482, %v1044, 0.0
  %v1647 = vadd.f32 %v1645, %v1646
  %v1648 = vsel %vm1482, %v1047, 0.0
  %v1649 = vadd.f32 %v1647, %v1648
  %v1650 = vsel %vm1482, %v1052, 0.0
  %v1651 = vadd.f32 %v1649, %v1650
  %v1652 = vsel %vm1482, %v1055, 0.0
  %v1653 = vadd.f32 %v1651, %v1652
  %v1654 = vsel %vm1482, %v1060, 0.0
  %v1655 = vadd.f32 %v1653, %v1654
  %v1656 = vsel %vm1482, %v1063, 0.0
  %v1657 = vadd.f32 %v1655, %v1656
  %v1658 = vsel %vm1482, %v1068, 0.0
  %v1659 = vadd.f32 %v1657, %v1658
  %v1660 = vsel %vm1482, %v1071, 0.0
  %v1661 = vadd.f32 %v1659, %v1660
  %v1662 = vsel %vm1482, %v1076, 0.0
  %v1663 = vadd.f32 %v1661, %v1662
  %v1664 = vsel %vm1482, %v1079, 0.0
  %v1665 = vadd.f32 %v1663, %v1664
  %v1666 = vsel %vm1482, %v1084, 0.0
  %v1667 = vadd.f32 %v1665, %v1666
  %v1668 = vsel %vm1482, %v1087, 0.0
  %v1669 = vadd.f32 %v1667, %v1668
  %v1670 = vsel %vm1482, %v1092, 0.0
  %v1671 = vadd.f32 %v1669, %v1670
  %v1672 = vsel %vm1482, %v1095, 0.0
  %v1673 = vadd.f32 %v1671, %v1672
  %v1674 = vsel %vm1482, %v1100, 0.0
  %v1675 = vadd.f32 %v1673, %v1674
  %v1676 = vsel %vm1482, %v1103, 0.0
  %v1677 = vadd.f32 %v1675, %v1676
  %v1678 = vsel %vm1482, %v1108, 0.0
  %v1679 = vadd.f32 %v1677, %v1678
  %v1680 = vsel %vm1482, %v1111, 0.0
  %v1681 = vadd.f32 %v1679, %v1680
  %v1682 = vsel %vm1482, %v1116, 0.0
  %v1683 = vadd.f32 %v1681, %v1682
  %v1684 = vsel %vm1482, %v1119, 0.0
  %v1685 = vadd.f32 %v1683, %v1684
  %v1686 = vsel %vm1482, %v1124, 0.0
  %v1687 = vadd.f32 %v1685, %v1686
  %v1688 = vsel %vm1482, %v1127, 0.0
  %v1689 = vadd.f32 %v1687, %v1688
  %v1690 = vsel %vm1482, %v1132, 0.0
  %v1691 = vadd.f32 %v1689, %v1690
  %v1692 = vsel %vm1482, %v1135, 0.0
  %v1693 = vadd.f32 %v1691, %v1692
  %v1694 = vsel %vm1482, %v1140, 0.0
  %v1695 = vadd.f32 %v1693, %v1694
  %v1696 = vsel %vm1482, %v1143, 0.0
  %v1697 = vadd.f32 %v1695, %v1696
  %v1698 = vsel %vm1482, %v1148, 0.0
  %v1699 = vadd.f32 %v1697, %v1698
  %v1700 = vsel %vm1482, %v1151, 0.0
  %v1701 = vadd.f32 %v1699, %v1700
  %v1702 = vsel %vm1482, %v1156, 0.0
  %v1703 = vadd.f32 %v1701, %v1702
  %v1704 = vsel %vm1482, %v1159, 0.0
  %v1705 = vadd.f32 %v1703, %v1704
  %v1706 = vsel %vm1482, %v1164, 0.0
  %v1707 = vadd.f32 %v1705, %v1706
  %v1708 = vsel %vm1482, %v1167, 0.0
  %v1709 = vadd.f32 %v1707, %v1708
  %v1710 = vsel %vm1482, %v1172, 0.0
  %v1711 = vadd.f32 %v1709, %v1710
  %v1712 = vsel %vm1482, %v1175, 0.0
  %v1713 = vadd.f32 %v1711, %v1712
  %v1714 = vsel %vm1482, %v1180, 0.0
  %v1715 = vadd.f32 %v1713, %v1714
  %v1716 = vsel %vm1482, %v1183, 0.0
  %v1717 = vadd.f32 %v1715, %v1716
  %v1718 = vsel %vm1482, %v1188, 0.0
  %v1719 = vadd.f32 %v1717, %v1718
  %v1720 = vsel %vm1482, %v1191, 0.0
  %v1721 = vadd.f32 %v1719, %v1720
  %v1722 = vsel %vm1482, %v1196, 0.0
  %v1723 = vadd.f32 %v1721, %v1722
  %v1724 = vsel %vm1482, %v1199, 0.0
  %v1725 = vadd.f32 %v1723, %v1724
  %v1726 = vsel %vm1482, %v1204, 0.0
  %v1727 = vadd.f32 %v1725, %v1726
  %v1728 = vsel %vm1482, %v1207, 0.0
  %v1729 = vadd.f32 %v1727, %v1728
  %v1730 = vsel %vm1482, %v1212, 0.0
  %v1731 = vadd.f32 %v1729, %v1730
  %v1732 = vsel %vm1482, %v1215, 0.0
  %v1733 = vadd.f32 %v1731, %v1732
  %v1734 = vsel %vm1482, %v1220, 0.0
  %v1735 = vadd.f32 %v1733, %v1734
  %v1736 = vsel %vm1482, %v1223, 0.0
  %v1737 = vadd.f32 %v1735, %v1736
  %v1738 = vsel %vm1482, %v1228, 0.0
  %v1739 = vadd.f32 %v1737, %v1738
  %v1740 = vsel %vm1482, %v1231, 0.0
  %v1741 = vadd.f32 %v1739, %v1740
  %v1742 = vsel %vm1482, %v1236, 0.0
  %v1743 = vadd.f32 %v1741, %v1742
  %v1744 = vsel %vm1482, %v1239, 0.0
  %v1745 = vadd.f32 %v1743, %v1744
  %v1746 = vsel %vm1482, %v1244, 0.0
  %v1747 = vadd.f32 %v1745, %v1746
  %v1748 = vsel %vm1482, %v1247, 0.0
  %v1749 = vadd.f32 %v1747, %v1748
  %v1750 = vsel %vm1482, %v1252, 0.0
  %v1751 = vadd.f32 %v1749, %v1750
  %v1752 = vsel %vm1482, %v1255, 0.0
  %v1753 = vadd.f32 %v1751, %v1752
  %v1754 = vsel %vm1482, %v1260, 0.0
  %v1755 = vadd.f32 %v1753, %v1754
  %v1756 = vsel %vm1482, %v1263, 0.0
  %v1757 = vadd.f32 %v1755, %v1756
  %v1758 = vsel %vm1482, %v1268, 0.0
  %v1759 = vadd.f32 %v1757, %v1758
  %v1760 = vsel %vm1482, %v1271, 0.0
  %v1761 = vadd.f32 %v1759, %v1760
  %v1762 = vsel %vm1482, %v1276, 0.0
  %v1763 = vadd.f32 %v1761, %v1762
  %v1764 = vsel %vm1482, %v1279, 0.0
  %v1765 = vadd.f32 %v1763, %v1764
  %v1766 = vsel %vm1482, %v1284, 0.0
  %v1767 = vadd.f32 %v1765, %v1766
  %v1768 = vsel %vm1482, %v1287, 0.0
  %v1769 = vadd.f32 %v1767, %v1768
  %v1770 = vsel %vm1482, %v1292, 0.0
  %v1771 = vadd.f32 %v1769, %v1770
  %v1772 = vsel %vm1482, %v1295, 0.0
  %v1773 = vadd.f32 %v1771, %v1772
  %v1774 = vsel %vm1482, %v1300, 0.0
  %v1775 = vadd.f32 %v1773, %v1774
  %v1776 = vsel %vm1482, %v1303, 0.0
  %v1777 = vadd.f32 %v1775, %v1776
  %v1778 = vsel %vm1482, %v1308, 0.0
  %v1779 = vadd.f32 %v1777, %v1778
  %v1780 = vsel %vm1482, %v1311, 0.0
  %v1781 = vadd.f32 %v1779, %v1780
  %v1782 = vsel %vm1482, %v1316, 0.0
  %v1783 = vadd.f32 %v1781, %v1782
  %v1784 = vsel %vm1482, %v1319, 0.0
  %v1785 = vadd.f32 %v1783, %v1784
  %v1786 = vsel %vm1482, %v1324, 0.0
  %v1787 = vadd.f32 %v1785, %v1786
  %v1788 = vsel %vm1482, %v1327, 0.0
  %v1789 = vadd.f32 %v1787, %v1788
  %v1790 = vsel %vm1482, %v1332, 0.0
  %v1791 = vadd.f32 %v1789, %v1790
  %v1792 = vsel %vm1482, %v1335, 0.0
  %v1793 = vadd.f32 %v1791, %v1792
  %v1794 = vsel %vm1482, %v1340, 0.0
  %v1795 = vadd.f32 %v1793, %v1794
  %v1796 = vsel %vm1482, %v1343, 0.0
  %v1797 = vadd.f32 %v1795, %v1796
  %v1798 = vsel %vm1482, %v1348, 0.0
  %v1799 = vadd.f32 %v1797, %v1798
  %v1800 = vsel %vm1482, %v1351, 0.0
  %v1801 = vadd.f32 %v1799, %v1800
  %v1802 = vsel %vm1482, %v1356, 0.0
  %v1803 = vadd.f32 %v1801, %v1802
  %v1804 = vsel %vm1482, %v1359, 0.0
  %v1805 = vadd.f32 %v1803, %v1804
  %v1806 = vsel %vm1482, %v1364, 0.0
  %v1807 = vadd.f32 %v1805, %v1806
  %v1808 = vsel %vm1482, %v1367, 0.0
  %v1809 = vadd.f32 %v1807, %v1808
  %v1810 = vsel %vm1482, %v1372, 0.0
  %v1811 = vadd.f32 %v1809, %v1810
  %v1812 = vsel %vm1482, %v1375, 0.0
  %v1813 = vadd.f32 %v1811, %v1812
  %v1814 = vsel %vm1482, %v1380, 0.0
  %v1815 = vadd.f32 %v1813, %v1814
  %v1816 = vsel %vm1482, %v1383, 0.0
  %v1817 = vadd.f32 %v1815, %v1816
  %v1818 = vsel %vm1482, %v1388, 0.0
  %v1819 = vadd.f32 %v1817, %v1818
  %v1820 = vsel %vm1482, %v1391, 0.0
  %v1821 = vadd.f32 %v1819, %v1820
  %v1822 = vsel %vm1482, %v1396, 0.0
  %v1823 = vadd.f32 %v1821, %v1822
  %v1824 = vsel %vm1482, %v1399, 0.0
  %v1825 = vadd.f32 %v1823, %v1824
  %v1826 = vsel %vm1482, %v1404, 0.0
  %v1827 = vadd.f32 %v1825, %v1826
  %v1828 = vsel %vm1482, %v1407, 0.0
  %v1829 = vadd.f32 %v1827, %v1828
  %v1830 = vsel %vm1482, %v1412, 0.0
  %v1831 = vadd.f32 %v1829, %v1830
  %v1832 = vsel %vm1482, %v1415, 0.0
  %v1833 = vadd.f32 %v1831, %v1832
  %v1834 = vsel %vm1482, %v1420, 0.0
  %v1835 = vadd.f32 %v1833, %v1834
  %v1836 = vsel %vm1482, %v1423, 0.0
  %v1837 = vadd.f32 %v1835, %v1836
  %v1838 = vsel %vm1482, %v1428, 0.0
  %v1839 = vadd.f32 %v1837, %v1838
  %v1840 = vsel %vm1482, %v1431, 0.0
  %v1841 = vadd.f32 %v1839, %v1840
  %v1842 = vsel %vm1482, %v1436, 0.0
  %v1843 = vadd.f32 %v1841, %v1842
  %v1844 = vsel %vm1482, %v1439, 0.0
  %v1845 = vadd.f32 %v1843, %v1844
  %v1846 = vsel %vm1482, %v1444, 0.0
  %v1847 = vadd.f32 %v1845, %v1846
  %v1848 = vsel %vm1482, %v1447, 0.0
  %v1849 = vadd.f32 %v1847, %v1848
  %v1850 = vsel %vm1482, %v1452, 0.0
  %v1851 = vadd.f32 %v1849, %v1850
  %v1852 = vsel %vm1482, %v1455, 0.0
  %v1853 = vadd.f32 %v1851, %v1852
  %v1854 = vsel %vm1482, %v1460, 0.0
  %v1855 = vadd.f32 %v1853, %v1854
  %v1856 = vsel %vm1482, %v1463, 0.0
  %v1857 = vadd.f32 %v1855, %v1856
  %v1858 = vsel %vm1482, %v1468, 0.0
  %v1859 = vadd.f32 %v1857, %v1858
  %v1860 = vsel %vm1482, %v1471, 0.0
  %v1861 = vadd.f32 %v1859, %v1860
  %v1862 = vsel %vm1482, %v1476, 0.0
  %v1863 = vadd.f32 %v1861, %v1862
  %v1864 = vsel %vm1482, %v1479, 0.0
  %v1865 = vadd.f32 %v1863, %v1864
  %v1866 = vrot.slane %v1865, 4
  %v1867 = vadd.f32 %v1865, %v1866
  %v1868 = vrot.slane %v1867, 2
  %v1869 = vadd.f32 %v1867, %v1868
  %v1870 = vrot.slane %v1869, 1
  %v1871 = vadd.f32 %v1869, %v1870
  %vm1872 = vcmask 122880
  %1873 = vst.msk [vmem:[%s5] sm:$0x1] %vm1872, %v1871
  %v1874 = vmul.f32 %v972, %v972
  %v1875 = vmul.f32 %v975, %v975
  %v1876 = vmul.f32 %v980, %v980
  %v1877 = vmul.f32 %v983, %v983
  %v1878 = vmul.f32 %v988, %v988
  %v1879 = vmul.f32 %v991, %v991
  %v1880 = vmul.f32 %v996, %v996
  %v1881 = vmul.f32 %v999, %v999
  %v1882 = vmul.f32 %v1004, %v1004
  %v1883 = vmul.f32 %v1007, %v1007
  %v1884 = vmul.f32 %v1012, %v1012
  %v1885 = vmul.f32 %v1015, %v1015
  %v1886 = vmul.f32 %v1020, %v1020
  %v1887 = vmul.f32 %v1023, %v1023
  %v1888 = vmul.f32 %v1028, %v1028
  %v1889 = vmul.f32 %v1031, %v1031
  %v1890 = vmul.f32 %v1036, %v1036
  %v1891 = vmul.f32 %v1039, %v1039
  %v1892 = vmul.f32 %v1044, %v1044
  %v1893 = vmul.f32 %v1047, %v1047
  %v1894 = vmul.f32 %v1052, %v1052
  %v1895 = vmul.f32 %v1055, %v1055
  %v1896 = vmul.f32 %v1060, %v1060
  %v1897 = vmul.f32 %v1063, %v1063
  %v1898 = vmul.f32 %v1068, %v1068
  %v1899 = vmul.f32 %v1071, %v1071
  %v1900 = vmul.f32 %v1076, %v1076
  %v1901 = vmul.f32 %v1079, %v1079
  %v1902 = vmul.f32 %v1084, %v1084
  %v1903 = vmul.f32 %v1087, %v1087
  %v1904 = vmul.f32 %v1092, %v1092
  %v1905 = vmul.f32 %v1095, %v1095
  %v1906 = vmul.f32 %v1100, %v1100
  %v1907 = vmul.f32 %v1103, %v1103
  %v1908 = vmul.f32 %v1108, %v1108
  %v1909 = vmul.f32 %v1111, %v1111
  %v1910 = vmul.f32 %v1116, %v1116
  %v1911 = vmul.f32 %v1119, %v1119
  %v1912 = vmul.f32 %v1124, %v1124
  %v1913 = vmul.f32 %v1127, %v1127
  %v1914 = vmul.f32 %v1132, %v1132
  %v1915 = vmul.f32 %v1135, %v1135
  %v1916 = vmul.f32 %v1140, %v1140
  %v1917 = vmul.f32 %v1143, %v1143
  %v1918 = vmul.f32 %v1148, %v1148
  %v1919 = vmul.f32 %v1151, %v1151
  %v1920 = vmul.f32 %v1156, %v1156
  %v1921 = vmul.f32 %v1159, %v1159
  %v1922 = vmul.f32 %v1164, %v1164
  %v1923 = vmul.f32 %v1167, %v1167
  %v1924 = vmul.f32 %v1172, %v1172
  %v1925 = vmul.f32 %v1175, %v1175
  %v1926 = vmul.f32 %v1180, %v1180
  %v1927 = vmul.f32 %v1183, %v1183
  %v1928 = vmul.f32 %v1188, %v1188
  %v1929 = vmul.f32 %v1191, %v1191
  %v1930 = vmul.f32 %v1196, %v1196
  %v1931 = vmul.f32 %v1199, %v1199
  %v1932 = vmul.f32 %v1204, %v1204
  %v1933 = vmul.f32 %v1207, %v1207
  %v1934 = vmul.f32 %v1212, %v1212
  %v1935 = vmul.f32 %v1215, %v1215
  %v1936 = vmul.f32 %v1220, %v1220
  %v1937 = vmul.f32 %v1223, %v1223
  %v1938 = vmul.f32 %v1228, %v1228
  %v1939 = vmul.f32 %v1231, %v1231
  %v1940 = vmul.f32 %v1236, %v1236
  %v1941 = vmul.f32 %v1239, %v1239
  %v1942 = vmul.f32 %v1244, %v1244
  %v1943 = vmul.f32 %v1247, %v1247
  %v1944 = vmul.f32 %v1252, %v1252
  %v1945 = vmul.f32 %v1255, %v1255
  %v1946 = vmul.f32 %v1260, %v1260
  %v1947 = vmul.f32 %v1263, %v1263
  %v1948 = vmul.f32 %v1268, %v1268
  %v1949 = vmul.f32 %v1271, %v1271
  %v1950 = vmul.f32 %v1276, %v1276
  %v1951 = vmul.f32 %v1279, %v1279
  %v1952 = vmul.f32 %v1284, %v1284
  %v1953 = vmul.f32 %v1287, %v1287
  %v1954 = vmul.f32 %v1292, %v1292
  %v1955 = vmul.f32 %v1295, %v1295
  %v1956 = vmul.f32 %v1300, %v1300
  %v1957 = vmul.f32 %v1303, %v1303
  %v1958 = vmul.f32 %v1308, %v1308
  %v1959 = vmul.f32 %v1311, %v1311
  %v1960 = vmul.f32 %v1316, %v1316
  %v1961 = vmul.f32 %v1319, %v1319
  %v1962 = vmul.f32 %v1324, %v1324
  %v1963 = vmul.f32 %v1327, %v1327
  %v1964 = vmul.f32 %v1332, %v1332
  %v1965 = vmul.f32 %v1335, %v1335
  %v1966 = vmul.f32 %v1340, %v1340
  %v1967 = vmul.f32 %v1343, %v1343
  %v1968 = vmul.f32 %v1348, %v1348
  %v1969 = vmul.f32 %v1351, %v1351
  %v1970 = vmul.f32 %v1356, %v1356
  %v1971 = vmul.f32 %v1359, %v1359
  %v1972 = vmul.f32 %v1364, %v1364
  %v1973 = vmul.f32 %v1367, %v1367
  %v1974 = vmul.f32 %v1372, %v1372
  %v1975 = vmul.f32 %v1375, %v1375
  %v1976 = vmul.f32 %v1380, %v1380
  %v1977 = vmul.f32 %v1383, %v1383
  %v1978 = vmul.f32 %v1388, %v1388
  %v1979 = vmul.f32 %v1391, %v1391
  %v1980 = vmul.f32 %v1396, %v1396
  %v1981 = vmul.f32 %v1399, %v1399
  %v1982 = vmul.f32 %v1404, %v1404
  %v1983 = vmul.f32 %v1407, %v1407
  %v1984 = vmul.f32 %v1412, %v1412
  %v1985 = vmul.f32 %v1415, %v1415
  %v1986 = vmul.f32 %v1420, %v1420
  %v1987 = vmul.f32 %v1423, %v1423
  %v1988 = vmul.f32 %v1428, %v1428
  %v1989 = vmul.f32 %v1431, %v1431
  %v1990 = vmul.f32 %v1436, %v1436
  %v1991 = vmul.f32 %v1439, %v1439
  %v1992 = vmul.f32 %v1444, %v1444
  %v1993 = vmul.f32 %v1447, %v1447
  %v1994 = vmul.f32 %v1452, %v1452
  %v1995 = vmul.f32 %v1455, %v1455
  %v1996 = vmul.f32 %v1460, %v1460
  %v1997 = vmul.f32 %v1463, %v1463
  %v1998 = vmul.f32 %v1468, %v1468
  %v1999 = vmul.f32 %v1471, %v1471
  %v2000 = vmul.f32 %v1476, %v1476
  %v2001 = vmul.f32 %v1479, %v1479
  %v2002 = vsel %vm1482, %v1874, 0.0
  %v2003 = vsel %vm1482, %v1875, 0.0
  %v2004 = vadd.f32 %v2002, %v2003
  %v2005 = vsel %vm1482, %v1876, 0.0
  %v2006 = vadd.f32 %v2004, %v2005
  %v2007 = vsel %vm1482, %v1877, 0.0
  %v2008 = vadd.f32 %v2006, %v2007
  %v2009 = vsel %vm1482, %v1878, 0.0
  %v2010 = vadd.f32 %v2008, %v2009
  %v2011 = vsel %vm1482, %v1879, 0.0
  %v2012 = vadd.f32 %v2010, %v2011
  %v2013 = vsel %vm1482, %v1880, 0.0
  %v2014 = vadd.f32 %v2012, %v2013
  %v2015 = vsel %vm1482, %v1881, 0.0
  %v2016 = vadd.f32 %v2014, %v2015
  %v2017 = vsel %vm1482, %v1882, 0.0
  %v2018 = vadd.f32 %v2016, %v2017
  %v2019 = vsel %vm1482, %v1883, 0.0
  %v2020 = vadd.f32 %v2018, %v2019
  %v2021 = vsel %vm1482, %v1884, 0.0
  %v2022 = vadd.f32 %v2020, %v2021
  %v2023 = vsel %vm1482, %v1885, 0.0
  %v2024 = vadd.f32 %v2022, %v2023
  %v2025 = vsel %vm1482, %v1886, 0.0
  %v2026 = vadd.f32 %v2024, %v2025
  %v2027 = vsel %vm1482, %v1887, 0.0
  %v2028 = vadd.f32 %v2026, %v2027
  %v2029 = vsel %vm1482, %v1888, 0.0
  %v2030 = vadd.f32 %v2028, %v2029
  %v2031 = vsel %vm1482, %v1889, 0.0
  %v2032 = vadd.f32 %v2030, %v2031
  %v2033 = vsel %vm1482, %v1890, 0.0
  %v2034 = vadd.f32 %v2032, %v2033
  %v2035 = vsel %vm1482, %v1891, 0.0
  %v2036 = vadd.f32 %v2034, %v2035
  %v2037 = vsel %vm1482, %v1892, 0.0
  %v2038 = vadd.f32 %v2036, %v2037
  %v2039 = vsel %vm1482, %v1893, 0.0
  %v2040 = vadd.f32 %v2038, %v2039
  %v2041 = vsel %vm1482, %v1894, 0.0
  %v2042 = vadd.f32 %v2040, %v2041
  %v2043 = vsel %vm1482, %v1895, 0.0
  %v2044 = vadd.f32 %v2042, %v2043
  %v2045 = vsel %vm1482, %v1896, 0.0
  %v2046 = vadd.f32 %v2044, %v2045
  %v2047 = vsel %vm1482, %v1897, 0.0
  %v2048 = vadd.f32 %v2046, %v2047
  %v2049 = vsel %vm1482, %v1898, 0.0
  %v2050 = vadd.f32 %v2048, %v2049
  %v2051 = vsel %vm1482, %v1899, 0.0
  %v2052 = vadd.f32 %v2050, %v2051
  %v2053 = vsel %vm1482, %v1900, 0.0
  %v2054 = vadd.f32 %v2052, %v2053
  %v2055 = vsel %vm1482, %v1901, 0.0
  %v2056 = vadd.f32 %v2054, %v2055
  %v2057 = vsel %vm1482, %v1902, 0.0
  %v2058 = vadd.f32 %v2056, %v2057
  %v2059 = vsel %vm1482, %v1903, 0.0
  %v2060 = vadd.f32 %v2058, %v2059
  %v2061 = vsel %vm1482, %v1904, 0.0
  %v2062 = vadd.f32 %v2060, %v2061
  %v2063 = vsel %vm1482, %v1905, 0.0
  %v2064 = vadd.f32 %v2062, %v2063
  %v2065 = vsel %vm1482, %v1906, 0.0
  %v2066 = vadd.f32 %v2064, %v2065
  %v2067 = vsel %vm1482, %v1907, 0.0
  %v2068 = vadd.f32 %v2066, %v2067
  %v2069 = vsel %vm1482, %v1908, 0.0
  %v2070 = vadd.f32 %v2068, %v2069
  %v2071 = vsel %vm1482, %v1909, 0.0
  %v2072 = vadd.f32 %v2070, %v2071
  %v2073 = vsel %vm1482, %v1910, 0.0
  %v2074 = vadd.f32 %v2072, %v2073
  %v2075 = vsel %vm1482, %v1911, 0.0
  %v2076 = vadd.f32 %v2074, %v2075
  %v2077 = vsel %vm1482, %v1912, 0.0
  %v2078 = vadd.f32 %v2076, %v2077
  %v2079 = vsel %vm1482, %v1913, 0.0
  %v2080 = vadd.f32 %v2078, %v2079
  %v2081 = vsel %vm1482, %v1914, 0.0
  %v2082 = vadd.f32 %v2080, %v2081
  %v2083 = vsel %vm1482, %v1915, 0.0
  %v2084 = vadd.f32 %v2082, %v2083
  %v2085 = vsel %vm1482, %v1916, 0.0
  %v2086 = vadd.f32 %v2084, %v2085
  %v2087 = vsel %vm1482, %v1917, 0.0
  %v2088 = vadd.f32 %v2086, %v2087
  %v2089 = vsel %vm1482, %v1918, 0.0
  %v2090 = vadd.f32 %v2088, %v2089
  %v2091 = vsel %vm1482, %v1919, 0.0
  %v2092 = vadd.f32 %v2090, %v2091
  %v2093 = vsel %vm1482, %v1920, 0.0
  %v2094 = vadd.f32 %v2092, %v2093
  %v2095 = vsel %vm1482, %v1921, 0.0
  %v2096 = vadd.f32 %v2094, %v2095
  %v2097 = vsel %vm1482, %v1922, 0.0
  %v2098 = vadd.f32 %v2096, %v2097
  %v2099 = vsel %vm1482, %v1923, 0.0
  %v2100 = vadd.f32 %v2098, %v2099
  %v2101 = vsel %vm1482, %v1924, 0.0
  %v2102 = vadd.f32 %v2100, %v2101
  %v2103 = vsel %vm1482, %v1925, 0.0
  %v2104 = vadd.f32 %v2102, %v2103
  %v2105 = vsel %vm1482, %v1926, 0.0
  %v2106 = vadd.f32 %v2104, %v2105
  %v2107 = vsel %vm1482, %v1927, 0.0
  %v2108 = vadd.f32 %v2106, %v2107
  %v2109 = vsel %vm1482, %v1928, 0.0
  %v2110 = vadd.f32 %v2108, %v2109
  %v2111 = vsel %vm1482, %v1929, 0.0
  %v2112 = vadd.f32 %v2110, %v2111
  %v2113 = vsel %vm1482, %v1930, 0.0
  %v2114 = vadd.f32 %v2112, %v2113
  %v2115 = vsel %vm1482, %v1931, 0.0
  %v2116 = vadd.f32 %v2114, %v2115
  %v2117 = vsel %vm1482, %v1932, 0.0
  %v2118 = vadd.f32 %v2116, %v2117
  %v2119 = vsel %vm1482, %v1933, 0.0
  %v2120 = vadd.f32 %v2118, %v2119
  %v2121 = vsel %vm1482, %v1934, 0.0
  %v2122 = vadd.f32 %v2120, %v2121
  %v2123 = vsel %vm1482, %v1935, 0.0
  %v2124 = vadd.f32 %v2122, %v2123
  %v2125 = vsel %vm1482, %v1936, 0.0
  %v2126 = vadd.f32 %v2124, %v2125
  %v2127 = vsel %vm1482, %v1937, 0.0
  %v2128 = vadd.f32 %v2126, %v2127
  %v2129 = vsel %vm1482, %v1938, 0.0
  %v2130 = vadd.f32 %v2128, %v2129
  %v2131 = vsel %vm1482, %v1939, 0.0
  %v2132 = vadd.f32 %v2130, %v2131
  %v2133 = vsel %vm1482, %v1940, 0.0
  %v2134 = vadd.f32 %v2132, %v2133
  %v2135 = vsel %vm1482, %v1941, 0.0
  %v2136 = vadd.f32 %v2134, %v2135
  %v2137 = vsel %vm1482, %v1942, 0.0
  %v2138 = vadd.f32 %v2136, %v2137
  %v2139 = vsel %vm1482, %v1943, 0.0
  %v2140 = vadd.f32 %v2138, %v2139
  %v2141 = vsel %vm1482, %v1944, 0.0
  %v2142 = vadd.f32 %v2140, %v2141
  %v2143 = vsel %vm1482, %v1945, 0.0
  %v2144 = vadd.f32 %v2142, %v2143
  %v2145 = vsel %vm1482, %v1946, 0.0
  %v2146 = vadd.f32 %v2144, %v2145
  %v2147 = vsel %vm1482, %v1947, 0.0
  %v2148 = vadd.f32 %v2146, %v2147
  %v2149 = vsel %vm1482, %v1948, 0.0
  %v2150 = vadd.f32 %v2148, %v2149
  %v2151 = vsel %vm1482, %v1949, 0.0
  %v2152 = vadd.f32 %v2150, %v2151
  %v2153 = vsel %vm1482, %v1950, 0.0
  %v2154 = vadd.f32 %v2152, %v2153
  %v2155 = vsel %vm1482, %v1951, 0.0
  %v2156 = vadd.f32 %v2154, %v2155
  %v2157 = vsel %vm1482, %v1952, 0.0
  %v2158 = vadd.f32 %v2156, %v2157
  %v2159 = vsel %vm1482, %v1953, 0.0
  %v2160 = vadd.f32 %v2158, %v2159
  %v2161 = vsel %vm1482, %v1954, 0.0
  %v2162 = vadd.f32 %v2160, %v2161
  %v2163 = vsel %vm1482, %v1955, 0.0
  %v2164 = vadd.f32 %v2162, %v2163
  %v2165 = vsel %vm1482, %v1956, 0.0
  %v2166 = vadd.f32 %v2164, %v2165
  %v2167 = vsel %vm1482, %v1957, 0.0
  %v2168 = vadd.f32 %v2166, %v2167
  %v2169 = vsel %vm1482, %v1958, 0.0
  %v2170 = vadd.f32 %v2168, %v2169
  %v2171 = vsel %vm1482, %v1959, 0.0
  %v2172 = vadd.f32 %v2170, %v2171
  %v2173 = vsel %vm1482, %v1960, 0.0
  %v2174 = vadd.f32 %v2172, %v2173
  %v2175 = vsel %vm1482, %v1961, 0.0
  %v2176 = vadd.f32 %v2174, %v2175
  %v2177 = vsel %vm1482, %v1962, 0.0
  %v2178 = vadd.f32 %v2176, %v2177
  %v2179 = vsel %vm1482, %v1963, 0.0
  %v2180 = vadd.f32 %v2178, %v2179
  %v2181 = vsel %vm1482, %v1964, 0.0
  %v2182 = vadd.f32 %v2180, %v2181
  %v2183 = vsel %vm1482, %v1965, 0.0
  %v2184 = vadd.f32 %v2182, %v2183
  %v2185 = vsel %vm1482, %v1966, 0.0
  %v2186 = vadd.f32 %v2184, %v2185
  %v2187 = vsel %vm1482, %v1967, 0.0
  %v2188 = vadd.f32 %v2186, %v2187
  %v2189 = vsel %vm1482, %v1968, 0.0
  %v2190 = vadd.f32 %v2188, %v2189
  %v2191 = vsel %vm1482, %v1969, 0.0
  %v2192 = vadd.f32 %v2190, %v2191
  %v2193 = vsel %vm1482, %v1970, 0.0
  %v2194 = vadd.f32 %v2192, %v2193
  %v2195 = vsel %vm1482, %v1971, 0.0
  %v2196 = vadd.f32 %v2194, %v2195
  %v2197 = vsel %vm1482, %v1972, 0.0
  %v2198 = vadd.f32 %v2196, %v2197
  %v2199 = vsel %vm1482, %v1973, 0.0
  %v2200 = vadd.f32 %v2198, %v2199
  %v2201 = vsel %vm1482, %v1974, 0.0
  %v2202 = vadd.f32 %v2200, %v2201
  %v2203 = vsel %vm1482, %v1975, 0.0
  %v2204 = vadd.f32 %v2202, %v2203
  %v2205 = vsel %vm1482, %v1976, 0.0
  %v2206 = vadd.f32 %v2204, %v2205
  %v2207 = vsel %vm1482, %v1977, 0.0
  %v2208 = vadd.f32 %v2206, %v2207
  %v2209 = vsel %vm1482, %v1978, 0.0
  %v2210 = vadd.f32 %v2208, %v2209
  %v2211 = vsel %vm1482, %v1979, 0.0
  %v2212 = vadd.f32 %v2210, %v2211
  %v2213 = vsel %vm1482, %v1980, 0.0
  %v2214 = vadd.f32 %v2212, %v2213
  %v2215 = vsel %vm1482, %v1981, 0.0
  %v2216 = vadd.f32 %v2214, %v2215
  %v2217 = vsel %vm1482, %v1982, 0.0
  %v2218 = vadd.f32 %v2216, %v2217
  %v2219 = vsel %vm1482, %v1983, 0.0
  %v2220 = vadd.f32 %v2218, %v2219
  %v2221 = vsel %vm1482, %v1984, 0.0
  %v2222 = vadd.f32 %v2220, %v2221
  %v2223 = vsel %vm1482, %v1985, 0.0
  %v2224 = vadd.f32 %v2222, %v2223
  %v2225 = vsel %vm1482, %v1986, 0.0
  %v2226 = vadd.f32 %v2224, %v2225
  %v2227 = vsel %vm1482, %v1987, 0.0
  %v2228 = vadd.f32 %v2226, %v2227
  %v2229 = vsel %vm1482, %v1988, 0.0
  %v2230 = vadd.f32 %v2228, %v2229
  %v2231 = vsel %vm1482, %v1989, 0.0
  %v2232 = vadd.f32 %v2230, %v2231
  %v2233 = vsel %vm1482, %v1990, 0.0
  %v2234 = vadd.f32 %v2232, %v2233
  %v2235 = vsel %vm1482, %v1991, 0.0
  %v2236 = vadd.f32 %v2234, %v2235
  %v2237 = vsel %vm1482, %v1992, 0.0
  %v2238 = vadd.f32 %v2236, %v2237
  %v2239 = vsel %vm1482, %v1993, 0.0
  %v2240 = vadd.f32 %v2238, %v2239
  %v2241 = vsel %vm1482, %v1994, 0.0
  %v2242 = vadd.f32 %v2240, %v2241
  %v2243 = vsel %vm1482, %v1995, 0.0
  %v2244 = vadd.f32 %v2242, %v2243
  %v2245 = vsel %vm1482, %v1996, 0.0
  %v2246 = vadd.f32 %v2244, %v2245
  %v2247 = vsel %vm1482, %v1997, 0.0
  %v2248 = vadd.f32 %v2246, %v2247
  %v2249 = vsel %vm1482, %v1998, 0.0
  %v2250 = vadd.f32 %v2248, %v2249
  %v2251 = vsel %vm1482, %v1999, 0.0
  %v2252 = vadd.f32 %v2250, %v2251
  %v2253 = vsel %vm1482, %v2000, 0.0
  %v2254 = vadd.f32 %v2252, %v2253
  %v2255 = vsel %vm1482, %v2001, 0.0
  %v2256 = vadd.f32 %v2254, %v2255
  %v2257 = vrot.slane %v2256, 4
  %v2258 = vadd.f32 %v2256, %v2257
  %v2259 = vrot.slane %v2258, 2
  %v2260 = vadd.f32 %v2258, %v2259
  %v2261 = vrot.slane %v2260, 1
  %v2262 = vadd.f32 %v2260, %v2261
  %2263 = vst.msk [vmem:[%s6] sm:$0x1] %vm1872, %v2262
  // Predicated region
  $region18: #{bottleneck_forward.6} parent=0 // pred_check
    _
  $region19: #{bottleneck_forward.6} parent=0 // pred_check_branch
    %2265 = sbr.rel (0) target = $region21
  $region20: #{bottleneck_forward.6} parent=0 // pred_region
    _
  $region21: #{bottleneck_forward.6} parent=0 // pred_fallthru
    _
  // Predicated region
  $region22: #{bottleneck_forward.6} parent=0 // pred_check
    _
  $region23: #{bottleneck_forward.6} parent=0 // pred_check_branch
    %2267 = sbr.rel (0) target = $region25
  $region24: #{bottleneck_forward.6} parent=0 // pred_region
    _
  $region25: #{bottleneck_forward.6} parent=0 // pred_fallthru
    _
  // Predicated region
  $region26: #{bottleneck_forward.6} parent=0 // pred_check
    _
  $region27: #{bottleneck_forward.6} parent=0 // pred_check_branch
    %2269 = sbr.rel (0) target = $region29
  $region28: #{bottleneck_forward.6} parent=0 // pred_region
    _
  $region29: #{bottleneck_forward.6} parent=0 // pred_fallthru
    _
  // Predicated region
  $region30: #{bottleneck_forward.6} parent=0 // pred_check
    _
  $region31: #{bottleneck_forward.6} parent=0 // pred_check_branch
    %2271 = sbr.rel (0) target = $region33
  $region32: #{bottleneck_forward.6} parent=0 // pred_region
    _
  $region33: #{bottleneck_forward.6} parent=0 // pred_fallthru
    _
  // Predicated region
  $region34: #{bottleneck_forward.6} parent=0 // pred_check
    _
  $region35: #{bottleneck_forward.6} parent=0 // pred_check_branch
    %2273 = sbr.rel (0) target = $region37
  $region36: #{bottleneck_forward.6} parent=0 // pred_region
    _
  $region37: #{bottleneck_forward.6} parent=0 // pred_fallthru
    _
  // Predicated region
  $region38: #{bottleneck_forward.6} parent=0 // pred_check
    _
  $region39: #{bottleneck_forward.6} parent=0 // pred_check_branch
    %2275 = sbr.rel (0) target = $region41
  $region40: #{bottleneck_forward.6} parent=0 // pred_region
    _
  $region41: #{bottleneck_forward.6} parent=0 // pred_fallthru
    _

// kernel: bottleneck_forward.7
$region0: #{bottleneck_forward.7}
  #allocation0 [shape = 'u32[]', space=smem, size = 0x4, offset = 0x4, fixed_abs, tag = 'smem constant byte address 0x4 - core index']
  #allocation1 [shape = 'u32[144,128]{1,0:T(1,128)}', space=vmem, size = 0x12000, scoped, tag = 'internal scratch']
  %s0 = inlined_call_operand.vmem [shape: f32[1024,16], index: 0, kind: input, shape index: {}]
  %s1 = inlined_call_operand.vmem [shape: f32[1,16], index: 1, kind: input, shape index: {}]
  %s2 = inlined_call_operand.vmem [shape: f32[1,16], index: 2, kind: input, shape index: {}]
  %s3 = inlined_call_operand.vmem [shape: f32[1024,16], index: 3, kind: input, shape index: {}]
  %s4 = inlined_call_operand.vmem [shape: f32[1024,16], index: 4, kind: output, shape index: {}]
  %s5 = sld [smem:[#allocation0]]
  $region26: #{bottleneck_forward.7} parent=0
    _
  %s7 = ssub.s32 1, %s5
  %s8 = scalar_select 0, %s7, %s5
  // Predicated region
  $region2: #{bottleneck_forward.7} parent=0 // pred_check
    _
  $region3: #{bottleneck_forward.7} parent=0 // pred_check_branch
    %10 = sbr.rel (0) target = $region5
  $region4: #{bottleneck_forward.7} parent=0 // pred_region
    _
  $region5: #{bottleneck_forward.7} parent=0 // pred_fallthru
    _
  // Predicated region
  $region6: #{bottleneck_forward.7} parent=0 // pred_check
    _
  $region7: #{bottleneck_forward.7} parent=0 // pred_check_branch
    %12 = sbr.rel (0) target = $region9
  $region8: #{bottleneck_forward.7} parent=0 // pred_region
    _
  $region9: #{bottleneck_forward.7} parent=0 // pred_fallthru
    _
  // Predicated region
  $region10: #{bottleneck_forward.7} parent=0 // pred_check
    _
  $region11: #{bottleneck_forward.7} parent=0 // pred_check_branch
    %14 = sbr.rel (0) target = $region13
  $region12: #{bottleneck_forward.7} parent=0 // pred_region
    _
  $region13: #{bottleneck_forward.7} parent=0 // pred_fallthru
    _
  // Predicated region
  $region14: #{bottleneck_forward.7} parent=0 // pred_check
    _
  $region15: #{bottleneck_forward.7} parent=0 // pred_check_branch
    %16 = sbr.rel (0) target = $region17
  $region16: #{bottleneck_forward.7} parent=0 // pred_region
    _
  $region17: #{bottleneck_forward.7} parent=0 // pred_fallthru
    _
  %v17 = vld [vmem:[%s0] sm:$0xff]
  %v18 = vld [vmem:[%s0 + $0x8] sm:$0xff]
  %v19 = vld [vmem:[%s0 + $0x10] sm:$0xff]
  %v20 = vld [vmem:[%s0 + $0x18] sm:$0xff]
  %v21 = vld [vmem:[%s0 + $0x20] sm:$0xff]
  %v22 = vld [vmem:[%s0 + $0x28] sm:$0xff]
  %v23 = vld [vmem:[%s0 + $0x30] sm:$0xff]
  %v24 = vld [vmem:[%s0 + $0x38] sm:$0xff]
  %v25 = vld [vmem:[%s0 + $0x40] sm:$0xff]
  %v26 = vld [vmem:[%s0 + $0x48] sm:$0xff]
  %v27 = vld [vmem:[%s0 + $0x50] sm:$0xff]
  %v28 = vld [vmem:[%s0 + $0x58] sm:$0xff]
  %v29 = vld [vmem:[%s0 + $0x60] sm:$0xff]
  %v30 = vld [vmem:[%s0 + $0x68] sm:$0xff]
  %v31 = vld [vmem:[%s0 + $0x70] sm:$0xff]
  %v32 = vld [vmem:[%s0 + $0x78] sm:$0xff]
  %v33 = vld [vmem:[%s0 + $0x80] sm:$0xff]
  %v34 = vld [vmem:[%s0 + $0x88] sm:$0xff]
  %v35 = vld [vmem:[%s0 + $0x90] sm:$0xff]
  %v36 = vld [vmem:[%s0 + $0x98] sm:$0xff]
  %v37 = vld [vmem:[%s0 + $0xa0] sm:$0xff]
  %v38 = vld [vmem:[%s0 + $0xa8] sm:$0xff]
  %v39 = vld [vmem:[%s0 + $0xb0] sm:$0xff]
  %v40 = vld [vmem:[%s0 + $0xb8] sm:$0xff]
  %v41 = vld [vmem:[%s0 + $0xc0] sm:$0xff]
  %v42 = vld [vmem:[%s0 + $0xc8] sm:$0xff]
  %v43 = vld [vmem:[%s0 + $0xd0] sm:$0xff]
  %v44 = vld [vmem:[%s0 + $0xd8] sm:$0xff]
  %v45 = vld [vmem:[%s0 + $0xe0] sm:$0xff]
  %v46 = vld [vmem:[%s0 + $0xe8] sm:$0xff]
  %v47 = vld [vmem:[%s0 + $0xf0] sm:$0xff]
  %v48 = vld [vmem:[%s0 + $0xf8] sm:$0xff]
  %v49 = vld [vmem:[%s0 + $0x100] sm:$0xff]
  %v50 = vld [vmem:[%s0 + $0x108] sm:$0xff]
  %v51 = vld [vmem:[%s0 + $0x110] sm:$0xff]
  %v52 = vld [vmem:[%s0 + $0x118] sm:$0xff]
  %v53 = vld [vmem:[%s0 + $0x120] sm:$0xff]
  %v54 = vld [vmem:[%s0 + $0x128] sm:$0xff]
  %v55 = vld [vmem:[%s0 + $0x130] sm:$0xff]
  %v56 = vld [vmem:[%s0 + $0x138] sm:$0xff]
  %v57 = vld [vmem:[%s0 + $0x140] sm:$0xff]
  %v58 = vld [vmem:[%s0 + $0x148] sm:$0xff]
  %v59 = vld [vmem:[%s0 + $0x150] sm:$0xff]
  %v60 = vld [vmem:[%s0 + $0x158] sm:$0xff]
  %v61 = vld [vmem:[%s0 + $0x160] sm:$0xff]
  %v62 = vld [vmem:[%s0 + $0x168] sm:$0xff]
  %v63 = vld [vmem:[%s0 + $0x170] sm:$0xff]
  %v64 = vld [vmem:[%s0 + $0x178] sm:$0xff]
  %v65 = vld [vmem:[%s0 + $0x180] sm:$0xff]
  %v66 = vld [vmem:[%s0 + $0x188] sm:$0xff]
  %v67 = vld [vmem:[%s0 + $0x190] sm:$0xff]
  %v68 = vld [vmem:[%s0 + $0x198] sm:$0xff]
  %v69 = vld [vmem:[%s0 + $0x1a0] sm:$0xff]
  %v70 = vld [vmem:[%s0 + $0x1a8] sm:$0xff]
  %v71 = vld [vmem:[%s0 + $0x1b0] sm:$0xff]
  %v72 = vld [vmem:[%s0 + $0x1b8] sm:$0xff]
  %v73 = vld [vmem:[%s0 + $0x1c0] sm:$0xff]
  %v74 = vld [vmem:[%s0 + $0x1c8] sm:$0xff]
  %v75 = vld [vmem:[%s0 + $0x1d0] sm:$0xff]
  %v76 = vld [vmem:[%s0 + $0x1d8] sm:$0xff]
  %v77 = vld [vmem:[%s0 + $0x1e0] sm:$0xff]
  %v78 = vld [vmem:[%s0 + $0x1e8] sm:$0xff]
  %v79 = vld [vmem:[%s0 + $0x1f0] sm:$0xff]
  %v80 = vld [vmem:[%s0 + $0x1f8] sm:$0xff]
  %v81 = vld [vmem:[%s0 + $0x200] sm:$0xff]
  %v82 = vld [vmem:[%s0 + $0x208] sm:$0xff]
  %v83 = vld [vmem:[%s0 + $0x210] sm:$0xff]
  %v84 = vld [vmem:[%s0 + $0x218] sm:$0xff]
  %v85 = vld [vmem:[%s0 + $0x220] sm:$0xff]
  %v86 = vld [vmem:[%s0 + $0x228] sm:$0xff]
  %v87 = vld [vmem:[%s0 + $0x230] sm:$0xff]
  %v88 = vld [vmem:[%s0 + $0x238] sm:$0xff]
  %v89 = vld [vmem:[%s0 + $0x240] sm:$0xff]
  %v90 = vld [vmem:[%s0 + $0x248] sm:$0xff]
  %v91 = vld [vmem:[%s0 + $0x250] sm:$0xff]
  %v92 = vld [vmem:[%s0 + $0x258] sm:$0xff]
  %v93 = vld [vmem:[%s0 + $0x260] sm:$0xff]
  %v94 = vld [vmem:[%s0 + $0x268] sm:$0xff]
  %v95 = vld [vmem:[%s0 + $0x270] sm:$0xff]
  %v96 = vld [vmem:[%s0 + $0x278] sm:$0xff]
  %v97 = vld [vmem:[%s0 + $0x280] sm:$0xff]
  %v98 = vld [vmem:[%s0 + $0x288] sm:$0xff]
  %v99 = vld [vmem:[%s0 + $0x290] sm:$0xff]
  %v100 = vld [vmem:[%s0 + $0x298] sm:$0xff]
  %v101 = vld [vmem:[%s0 + $0x2a0] sm:$0xff]
  %v102 = vld [vmem:[%s0 + $0x2a8] sm:$0xff]
  %v103 = vld [vmem:[%s0 + $0x2b0] sm:$0xff]
  %v104 = vld [vmem:[%s0 + $0x2b8] sm:$0xff]
  %v105 = vld [vmem:[%s0 + $0x2c0] sm:$0xff]
  %v106 = vld [vmem:[%s0 + $0x2c8] sm:$0xff]
  %v107 = vld [vmem:[%s0 + $0x2d0] sm:$0xff]
  %v108 = vld [vmem:[%s0 + $0x2d8] sm:$0xff]
  %v109 = vld [vmem:[%s0 + $0x2e0] sm:$0xff]
  %v110 = vld [vmem:[%s0 + $0x2e8] sm:$0xff]
  %v111 = vld [vmem:[%s0 + $0x2f0] sm:$0xff]
  %v112 = vld [vmem:[%s0 + $0x2f8] sm:$0xff]
  %v113 = vld [vmem:[%s0 + $0x300] sm:$0xff]
  %v114 = vld [vmem:[%s0 + $0x308] sm:$0xff]
  %v115 = vld [vmem:[%s0 + $0x310] sm:$0xff]
  %v116 = vld [vmem:[%s0 + $0x318] sm:$0xff]
  %v117 = vld [vmem:[%s0 + $0x320] sm:$0xff]
  %v118 = vld [vmem:[%s0 + $0x328] sm:$0xff]
  %v119 = vld [vmem:[%s0 + $0x330] sm:$0xff]
  %v120 = vld [vmem:[%s0 + $0x338] sm:$0xff]
  %v121 = vld [vmem:[%s0 + $0x340] sm:$0xff]
  %v122 = vld [vmem:[%s0 + $0x348] sm:$0xff]
  %v123 = vld [vmem:[%s0 + $0x350] sm:$0xff]
  %v124 = vld [vmem:[%s0 + $0x358] sm:$0xff]
  %v125 = vld [vmem:[%s0 + $0x360] sm:$0xff]
  %v126 = vld [vmem:[%s0 + $0x368] sm:$0xff]
  %v127 = vld [vmem:[%s0 + $0x370] sm:$0xff]
  %v128 = vld [vmem:[%s0 + $0x378] sm:$0xff]
  %v129 = vld [vmem:[%s0 + $0x380] sm:$0xff]
  %v130 = vld [vmem:[%s0 + $0x388] sm:$0xff]
  %v131 = vld [vmem:[%s0 + $0x390] sm:$0xff]
  %v132 = vld [vmem:[%s0 + $0x398] sm:$0xff]
  %v133 = vld [vmem:[%s0 + $0x3a0] sm:$0xff]
  %v134 = vld [vmem:[%s0 + $0x3a8] sm:$0xff]
  %v135 = vld [vmem:[%s0 + $0x3b0] sm:$0xff]
  %v136 = vld [vmem:[%s0 + $0x3b8] sm:$0xff]
  %v137 = vld [vmem:[%s0 + $0x3c0] sm:$0xff]
  %v138 = vld [vmem:[%s0 + $0x3c8] sm:$0xff]
  %v139 = vld [vmem:[%s0 + $0x3d0] sm:$0xff]
  %v140 = vld [vmem:[%s0 + $0x3d8] sm:$0xff]
  %v141 = vld [vmem:[%s0 + $0x3e0] sm:$0xff]
  %v142 = vld [vmem:[%s0 + $0x3e8] sm:$0xff]
  %v143 = vld [vmem:[%s0 + $0x3f0] sm:$0xff]
  %v144 = vld [vmem:[%s0 + $0x3f8] sm:$0xff]
  %v145 = vld [vmem:[%s1] sm:$0x1]
  %v147 = vlaneseq
  %v148 = vshrl.u32 %v147, 7
  %v149 = vsub.s32 0, %v148
  %v150 = vrot.slane %v145, %v149
  %v152 = vmul.f32 %v17, %v150
  %v153 = vmul.f32 %v18, %v150
  %v154 = vmul.f32 %v19, %v150
  %v155 = vmul.f32 %v20, %v150
  %v156 = vmul.f32 %v21, %v150
  %v157 = vmul.f32 %v22, %v150
  %v158 = vmul.f32 %v23, %v150
  %v159 = vmul.f32 %v24, %v150
  %v160 = vmul.f32 %v25, %v150
  %v161 = vmul.f32 %v26, %v150
  %v162 = vmul.f32 %v27, %v150
  %v163 = vmul.f32 %v28, %v150
  %v164 = vmul.f32 %v29, %v150
  %v165 = vmul.f32 %v30, %v150
  %v166 = vmul.f32 %v31, %v150
  %v167 = vmul.f32 %v32, %v150
  %v168 = vmul.f32 %v33, %v150
  %v169 = vmul.f32 %v34, %v150
  %v170 = vmul.f32 %v35, %v150
  %v171 = vmul.f32 %v36, %v150
  %v172 = vmul.f32 %v37, %v150
  %v173 = vmul.f32 %v38, %v150
  %v174 = vmul.f32 %v39, %v150
  %v175 = vmul.f32 %v40, %v150
  %v176 = vmul.f32 %v41, %v150
  %v177 = vmul.f32 %v42, %v150
  %v178 = vmul.f32 %v43, %v150
  %v179 = vmul.f32 %v44, %v150
  %v180 = vmul.f32 %v45, %v150
  %v181 = vmul.f32 %v46, %v150
  %v182 = vmul.f32 %v47, %v150
  %v183 = vmul.f32 %v48, %v150
  %v184 = vmul.f32 %v49, %v150
  %v185 = vmul.f32 %v50, %v150
  %v186 = vmul.f32 %v51, %v150
  %v187 = vmul.f32 %v52, %v150
  %v188 = vmul.f32 %v53, %v150
  %v189 = vmul.f32 %v54, %v150
  %v190 = vmul.f32 %v55, %v150
  %v191 = vmul.f32 %v56, %v150
  %v192 = vmul.f32 %v57, %v150
  %v193 = vmul.f32 %v58, %v150
  %v194 = vmul.f32 %v59, %v150
  %v195 = vmul.f32 %v60, %v150
  %v196 = vmul.f32 %v61, %v150
  %v197 = vmul.f32 %v62, %v150
  %v198 = vmul.f32 %v63, %v150
  %v199 = vmul.f32 %v64, %v150
  %v200 = vmul.f32 %v65, %v150
  %v201 = vmul.f32 %v66, %v150
  %v202 = vmul.f32 %v67, %v150
  %v203 = vmul.f32 %v68, %v150
  %v204 = vmul.f32 %v69, %v150
  %v205 = vmul.f32 %v70, %v150
  %v206 = vmul.f32 %v71, %v150
  %v207 = vmul.f32 %v72, %v150
  %v208 = vmul.f32 %v73, %v150
  %v209 = vmul.f32 %v74, %v150
  %v210 = vmul.f32 %v75, %v150
  %v211 = vmul.f32 %v76, %v150
  %v212 = vmul.f32 %v77, %v150
  %v213 = vmul.f32 %v78, %v150
  %v214 = vmul.f32 %v79, %v150
  %v215 = vmul.f32 %v80, %v150
  %v216 = vmul.f32 %v81, %v150
  %v217 = vmul.f32 %v82, %v150
  %v218 = vmul.f32 %v83, %v150
  %v219 = vmul.f32 %v84, %v150
  %v220 = vmul.f32 %v85, %v150
  %v221 = vmul.f32 %v86, %v150
  %v222 = vmul.f32 %v87, %v150
  %v223 = vmul.f32 %v88, %v150
  %v224 = vmul.f32 %v89, %v150
  %v225 = vmul.f32 %v90, %v150
  %v226 = vmul.f32 %v91, %v150
  %v227 = vmul.f32 %v92, %v150
  %v228 = vmul.f32 %v93, %v150
  %v229 = vmul.f32 %v94, %v150
  %v230 = vmul.f32 %v95, %v150
  %v231 = vmul.f32 %v96, %v150
  %v232 = vmul.f32 %v97, %v150
  %v233 = vmul.f32 %v98, %v150
  %v234 = vmul.f32 %v99, %v150
  %v235 = vmul.f32 %v100, %v150
  %v236 = vmul.f32 %v101, %v150
  %v237 = vmul.f32 %v102, %v150
  %v238 = vmul.f32 %v103, %v150
  %v239 = vmul.f32 %v104, %v150
  %v240 = vmul.f32 %v105, %v150
  %v241 = vmul.f32 %v106, %v150
  %v242 = vmul.f32 %v107, %v150
  %v243 = vmul.f32 %v108, %v150
  %v244 = vmul.f32 %v109, %v150
  %v245 = vmul.f32 %v110, %v150
  %v246 = vmul.f32 %v111, %v150
  %v247 = vmul.f32 %v112, %v150
  %v248 = vmul.f32 %v113, %v150
  %v249 = vmul.f32 %v114, %v150
  %v250 = vmul.f32 %v115, %v150
  %v251 = vmul.f32 %v116, %v150
  %v252 = vmul.f32 %v117, %v150
  %v253 = vmul.f32 %v118, %v150
  %v254 = vmul.f32 %v119, %v150
  %v255 = vmul.f32 %v120, %v150
  %v256 = vmul.f32 %v121, %v150
  %v257 = vmul.f32 %v122, %v150
  %v258 = vmul.f32 %v123, %v150
  %v259 = vmul.f32 %v124, %v150
  %v260 = vmul.f32 %v125, %v150
  %v261 = vmul.f32 %v126, %v150
  %v262 = vmul.f32 %v127, %v150
  %v263 = vmul.f32 %v128, %v150
  %v264 = vmul.f32 %v129, %v150
  %v265 = vmul.f32 %v130, %v150
  %v266 = vmul.f32 %v131, %v150
  %v267 = vmul.f32 %v132, %v150
  %v268 = vmul.f32 %v133, %v150
  %v269 = vmul.f32 %v134, %v150
  %v270 = vmul.f32 %v135, %v150
  %v271 = vmul.f32 %v136, %v150
  %v272 = vmul.f32 %v137, %v150
  %v273 = vmul.f32 %v138, %v150
  %v274 = vmul.f32 %v139, %v150
  %v275 = vmul.f32 %v140, %v150
  %v276 = vmul.f32 %v141, %v150
  %v277 = vmul.f32 %v142, %v150
  %v278 = vmul.f32 %v143, %v150
  %v279 = vmul.f32 %v144, %v150
  %v280 = vld [vmem:[%s2] sm:$0x1]
  %v282 = vlaneseq
  %v283 = vshrl.u32 %v282, 7
  %v284 = vsub.s32 0, %v283
  %v285 = vrot.slane %v280, %v284
  %v287 = vadd.f32 %v152, %v285
  %v288 = vadd.f32 %v153, %v285
  %v289 = vadd.f32 %v154, %v285
  %v290 = vadd.f32 %v155, %v285
  %v291 = vadd.f32 %v156, %v285
  %v292 = vadd.f32 %v157, %v285
  %v293 = vadd.f32 %v158, %v285
  %v294 = vadd.f32 %v159, %v285
  %v295 = vadd.f32 %v160, %v285
  %v296 = vadd.f32 %v161, %v285
  %v297 = vadd.f32 %v162, %v285
  %v298 = vadd.f32 %v163, %v285
  %v299 = vadd.f32 %v164, %v285
  %v300 = vadd.f32 %v165, %v285
  %v301 = vadd.f32 %v166, %v285
  %v302 = vadd.f32 %v167, %v285
  %v303 = vadd.f32 %v168, %v285
  %v304 = vadd.f32 %v169, %v285
  %v305 = vadd.f32 %v170, %v285
  %v306 = vadd.f32 %v171, %v285
  %v307 = vadd.f32 %v172, %v285
  %v308 = vadd.f32 %v173, %v285
  %v309 = vadd.f32 %v174, %v285
  %v310 = vadd.f32 %v175, %v285
  %v311 = vadd.f32 %v176, %v285
  %v312 = vadd.f32 %v177, %v285
  %v313 = vadd.f32 %v178, %v285
  %v314 = vadd.f32 %v179, %v285
  %v315 = vadd.f32 %v180, %v285
  %v316 = vadd.f32 %v181, %v285
  %v317 = vadd.f32 %v182, %v285
  %v318 = vadd.f32 %v183, %v285
  %v319 = vadd.f32 %v184, %v285
  %v320 = vadd.f32 %v185, %v285
  %v321 = vadd.f32 %v186, %v285
  %v322 = vadd.f32 %v187, %v285
  %v323 = vadd.f32 %v188, %v285
  %v324 = vadd.f32 %v189, %v285
  %v325 = vadd.f32 %v190, %v285
  %v326 = vadd.f32 %v191, %v285
  %v327 = vadd.f32 %v192, %v285
  %v328 = vadd.f32 %v193, %v285
  %v329 = vadd.f32 %v194, %v285
  %v330 = vadd.f32 %v195, %v285
  %v331 = vadd.f32 %v196, %v285
  %v332 = vadd.f32 %v197, %v285
  %v333 = vadd.f32 %v198, %v285
  %v334 = vadd.f32 %v199, %v285
  %v335 = vadd.f32 %v200, %v285
  %v336 = vadd.f32 %v201, %v285
  %v337 = vadd.f32 %v202, %v285
  %v338 = vadd.f32 %v203, %v285
  %v339 = vadd.f32 %v204, %v285
  %v340 = vadd.f32 %v205, %v285
  %v341 = vadd.f32 %v206, %v285
  %v342 = vadd.f32 %v207, %v285
  %v343 = vadd.f32 %v208, %v285
  %v344 = vadd.f32 %v209, %v285
  %v345 = vadd.f32 %v210, %v285
  %v346 = vadd.f32 %v211, %v285
  %v347 = vadd.f32 %v212, %v285
  %v348 = vadd.f32 %v213, %v285
  %v349 = vadd.f32 %v214, %v285
  %v350 = vadd.f32 %v215, %v285
  %v351 = vadd.f32 %v216, %v285
  %v352 = vadd.f32 %v217, %v285
  %v353 = vadd.f32 %v218, %v285
  %v354 = vadd.f32 %v219, %v285
  %v355 = vadd.f32 %v220, %v285
  %v356 = vadd.f32 %v221, %v285
  %v357 = vadd.f32 %v222, %v285
  %v358 = vadd.f32 %v223, %v285
  %v359 = vadd.f32 %v224, %v285
  %v360 = vadd.f32 %v225, %v285
  %v361 = vadd.f32 %v226, %v285
  %v362 = vadd.f32 %v227, %v285
  %v363 = vadd.f32 %v228, %v285
  %v364 = vadd.f32 %v229, %v285
  %v365 = vadd.f32 %v230, %v285
  %v366 = vadd.f32 %v231, %v285
  %v367 = vadd.f32 %v232, %v285
  %v368 = vadd.f32 %v233, %v285
  %v369 = vadd.f32 %v234, %v285
  %v370 = vadd.f32 %v235, %v285
  %v371 = vadd.f32 %v236, %v285
  %v372 = vadd.f32 %v237, %v285
  %v373 = vadd.f32 %v238, %v285
  %v374 = vadd.f32 %v239, %v285
  %v375 = vadd.f32 %v240, %v285
  %v376 = vadd.f32 %v241, %v285
  %v377 = vadd.f32 %v242, %v285
  %v378 = vadd.f32 %v243, %v285
  %v379 = vadd.f32 %v244, %v285
  %v380 = vadd.f32 %v245, %v285
  %v381 = vadd.f32 %v246, %v285
  %v382 = vadd.f32 %v247, %v285
  %v383 = vadd.f32 %v248, %v285
  %v384 = vadd.f32 %v249, %v285
  %v385 = vadd.f32 %v250, %v285
  %v386 = vadd.f32 %v251, %v285
  %v387 = vadd.f32 %v252, %v285
  %v388 = vadd.f32 %v253, %v285
  %v389 = vadd.f32 %v254, %v285
  %v390 = vadd.f32 %v255, %v285
  %v391 = vadd.f32 %v256, %v285
  %v392 = vadd.f32 %v257, %v285
  %v393 = vadd.f32 %v258, %v285
  %v394 = vadd.f32 %v259, %v285
  %v395 = vadd.f32 %v260, %v285
  %v396 = vadd.f32 %v261, %v285
  %v397 = vadd.f32 %v262, %v285
  %v398 = vadd.f32 %v263, %v285
  %v399 = vadd.f32 %v264, %v285
  %v400 = vadd.f32 %v265, %v285
  %v401 = vadd.f32 %v266, %v285
  %v402 = vadd.f32 %v267, %v285
  %v403 = vadd.f32 %v268, %v285
  %v404 = vadd.f32 %v269, %v285
  %v405 = vadd.f32 %v270, %v285
  %v406 = vadd.f32 %v271, %v285
  %v407 = vadd.f32 %v272, %v285
  %v408 = vadd.f32 %v273, %v285
  %v409 = vadd.f32 %v274, %v285
  %v410 = vadd.f32 %v275, %v285
  %v411 = vadd.f32 %v276, %v285
  %v412 = vadd.f32 %v277, %v285
  %v413 = vadd.f32 %v278, %v285
  %v414 = vadd.f32 %v279, %v285
  %v415 = vld [vmem:[%s3] sm:$0xff]
  %v416 = vld [vmem:[%s3 + $0x8] sm:$0xff]
  %v417 = vld [vmem:[%s3 + $0x10] sm:$0xff]
  %v418 = vld [vmem:[%s3 + $0x18] sm:$0xff]
  %v419 = vld [vmem:[%s3 + $0x20] sm:$0xff]
  %v420 = vld [vmem:[%s3 + $0x28] sm:$0xff]
  %v421 = vld [vmem:[%s3 + $0x30] sm:$0xff]
  %v422 = vld [vmem:[%s3 + $0x38] sm:$0xff]
  %v423 = vld [vmem:[%s3 + $0x40] sm:$0xff]
  %v424 = vld [vmem:[%s3 + $0x48] sm:$0xff]
  %v425 = vld [vmem:[%s3 + $0x50] sm:$0xff]
  %v426 = vld [vmem:[%s3 + $0x58] sm:$0xff]
  %v427 = vld [vmem:[%s3 + $0x60] sm:$0xff]
  %v428 = vld [vmem:[%s3 + $0x68] sm:$0xff]
  %v429 = vld [vmem:[%s3 + $0x70] sm:$0xff]
  %v430 = vld [vmem:[%s3 + $0x78] sm:$0xff]
  %v431 = vld [vmem:[%s3 + $0x80] sm:$0xff]
  %v432 = vld [vmem:[%s3 + $0x88] sm:$0xff]
  %v433 = vld [vmem:[%s3 + $0x90] sm:$0xff]
  %v434 = vld [vmem:[%s3 + $0x98] sm:$0xff]
  %v435 = vld [vmem:[%s3 + $0xa0] sm:$0xff]
  %v436 = vld [vmem:[%s3 + $0xa8] sm:$0xff]
  %v437 = vld [vmem:[%s3 + $0xb0] sm:$0xff]
  %v438 = vld [vmem:[%s3 + $0xb8] sm:$0xff]
  %v439 = vld [vmem:[%s3 + $0xc0] sm:$0xff]
  %v440 = vld [vmem:[%s3 + $0xc8] sm:$0xff]
  %v441 = vld [vmem:[%s3 + $0xd0] sm:$0xff]
  %v442 = vld [vmem:[%s3 + $0xd8] sm:$0xff]
  %v443 = vld [vmem:[%s3 + $0xe0] sm:$0xff]
  %v444 = vld [vmem:[%s3 + $0xe8] sm:$0xff]
  %v445 = vld [vmem:[%s3 + $0xf0] sm:$0xff]
  %v446 = vld [vmem:[%s3 + $0xf8] sm:$0xff]
  %v447 = vld [vmem:[%s3 + $0x100] sm:$0xff]
  %v448 = vld [vmem:[%s3 + $0x108] sm:$0xff]
  %v449 = vld [vmem:[%s3 + $0x110] sm:$0xff]
  %v450 = vld [vmem:[%s3 + $0x118] sm:$0xff]
  %v451 = vld [vmem:[%s3 + $0x120] sm:$0xff]
  %v452 = vld [vmem:[%s3 + $0x128] sm:$0xff]
  %v453 = vld [vmem:[%s3 + $0x130] sm:$0xff]
  %v454 = vld [vmem:[%s3 + $0x138] sm:$0xff]
  %v455 = vld [vmem:[%s3 + $0x140] sm:$0xff]
  %v456 = vld [vmem:[%s3 + $0x148] sm:$0xff]
  %v457 = vld [vmem:[%s3 + $0x150] sm:$0xff]
  %v458 = vld [vmem:[%s3 + $0x158] sm:$0xff]
  %v459 = vld [vmem:[%s3 + $0x160] sm:$0xff]
  %v460 = vld [vmem:[%s3 + $0x168] sm:$0xff]
  %v461 = vld [vmem:[%s3 + $0x170] sm:$0xff]
  %v462 = vld [vmem:[%s3 + $0x178] sm:$0xff]
  %v463 = vld [vmem:[%s3 + $0x180] sm:$0xff]
  %v464 = vld [vmem:[%s3 + $0x188] sm:$0xff]
  %v465 = vld [vmem:[%s3 + $0x190] sm:$0xff]
  %v466 = vld [vmem:[%s3 + $0x198] sm:$0xff]
  %v467 = vld [vmem:[%s3 + $0x1a0] sm:$0xff]
  %v468 = vld [vmem:[%s3 + $0x1a8] sm:$0xff]
  %v469 = vld [vmem:[%s3 + $0x1b0] sm:$0xff]
  %v470 = vld [vmem:[%s3 + $0x1b8] sm:$0xff]
  %v471 = vld [vmem:[%s3 + $0x1c0] sm:$0xff]
  %v472 = vld [vmem:[%s3 + $0x1c8] sm:$0xff]
  %v473 = vld [vmem:[%s3 + $0x1d0] sm:$0xff]
  %v474 = vld [vmem:[%s3 + $0x1d8] sm:$0xff]
  %v475 = vld [vmem:[%s3 + $0x1e0] sm:$0xff]
  %v476 = vld [vmem:[%s3 + $0x1e8] sm:$0xff]
  %v477 = vld [vmem:[%s3 + $0x1f0] sm:$0xff]
  %v478 = vld [vmem:[%s3 + $0x1f8] sm:$0xff]
  %v479 = vld [vmem:[%s3 + $0x200] sm:$0xff]
  %v480 = vld [vmem:[%s3 + $0x208] sm:$0xff]
  %v481 = vld [vmem:[%s3 + $0x210] sm:$0xff]
  %v482 = vld [vmem:[%s3 + $0x218] sm:$0xff]
  %v483 = vld [vmem:[%s3 + $0x220] sm:$0xff]
  %v484 = vld [vmem:[%s3 + $0x228] sm:$0xff]
  %v485 = vld [vmem:[%s3 + $0x230] sm:$0xff]
  %v486 = vld [vmem:[%s3 + $0x238] sm:$0xff]
  %v487 = vld [vmem:[%s3 + $0x240] sm:$0xff]
  %v488 = vld [vmem:[%s3 + $0x248] sm:$0xff]
  %v489 = vld [vmem:[%s3 + $0x250] sm:$0xff]
  %v490 = vld [vmem:[%s3 + $0x258] sm:$0xff]
  %v491 = vld [vmem:[%s3 + $0x260] sm:$0xff]
  %v492 = vld [vmem:[%s3 + $0x268] sm:$0xff]
  %v493 = vld [vmem:[%s3 + $0x270] sm:$0xff]
  %v494 = vld [vmem:[%s3 + $0x278] sm:$0xff]
  %v495 = vld [vmem:[%s3 + $0x280] sm:$0xff]
  %v496 = vld [vmem:[%s3 + $0x288] sm:$0xff]
  %v497 = vld [vmem:[%s3 + $0x290] sm:$0xff]
  %v498 = vld [vmem:[%s3 + $0x298] sm:$0xff]
  %v499 = vld [vmem:[%s3 + $0x2a0] sm:$0xff]
  %v500 = vld [vmem:[%s3 + $0x2a8] sm:$0xff]
  %v501 = vld [vmem:[%s3 + $0x2b0] sm:$0xff]
  %v502 = vld [vmem:[%s3 + $0x2b8] sm:$0xff]
  %v503 = vld [vmem:[%s3 + $0x2c0] sm:$0xff]
  %v504 = vld [vmem:[%s3 + $0x2c8] sm:$0xff]
  %v505 = vld [vmem:[%s3 + $0x2d0] sm:$0xff]
  %v506 = vld [vmem:[%s3 + $0x2d8] sm:$0xff]
  %v507 = vld [vmem:[%s3 + $0x2e0] sm:$0xff]
  %v508 = vld [vmem:[%s3 + $0x2e8] sm:$0xff]
  %v509 = vld [vmem:[%s3 + $0x2f0] sm:$0xff]
  %v510 = vld [vmem:[%s3 + $0x2f8] sm:$0xff]
  %v511 = vld [vmem:[%s3 + $0x300] sm:$0xff]
  %v512 = vld [vmem:[%s3 + $0x308] sm:$0xff]
  %v513 = vld [vmem:[%s3 + $0x310] sm:$0xff]
  %v514 = vld [vmem:[%s3 + $0x318] sm:$0xff]
  %v515 = vld [vmem:[%s3 + $0x320] sm:$0xff]
  %v516 = vld [vmem:[%s3 + $0x328] sm:$0xff]
  %v517 = vld [vmem:[%s3 + $0x330] sm:$0xff]
  %v518 = vld [vmem:[%s3 + $0x338] sm:$0xff]
  %v519 = vld [vmem:[%s3 + $0x340] sm:$0xff]
  %v520 = vld [vmem:[%s3 + $0x348] sm:$0xff]
  %v521 = vld [vmem:[%s3 + $0x350] sm:$0xff]
  %v522 = vld [vmem:[%s3 + $0x358] sm:$0xff]
  %v523 = vld [vmem:[%s3 + $0x360] sm:$0xff]
  %v524 = vld [vmem:[%s3 + $0x368] sm:$0xff]
  %v525 = vld [vmem:[%s3 + $0x370] sm:$0xff]
  %v526 = vld [vmem:[%s3 + $0x378] sm:$0xff]
  %v527 = vld [vmem:[%s3 + $0x380] sm:$0xff]
  %v528 = vld [vmem:[%s3 + $0x388] sm:$0xff]
  %v529 = vld [vmem:[%s3 + $0x390] sm:$0xff]
  %v530 = vld [vmem:[%s3 + $0x398] sm:$0xff]
  %v531 = vld [vmem:[%s3 + $0x3a0] sm:$0xff]
  %v532 = vld [vmem:[%s3 + $0x3a8] sm:$0xff]
  %v533 = vld [vmem:[%s3 + $0x3b0] sm:$0xff]
  %v534 = vld [vmem:[%s3 + $0x3b8] sm:$0xff]
  %v535 = vld [vmem:[%s3 + $0x3c0] sm:$0xff]
  %v536 = vld [vmem:[%s3 + $0x3c8] sm:$0xff]
  %v537 = vld [vmem:[%s3 + $0x3d0] sm:$0xff]
  %v538 = vld [vmem:[%s3 + $0x3d8] sm:$0xff]
  %v539 = vld [vmem:[%s3 + $0x3e0] sm:$0xff]
  %v540 = vld [vmem:[%s3 + $0x3e8] sm:$0xff]
  %v541 = vld [vmem:[%s3 + $0x3f0] sm:$0xff]
  %v542 = vld [vmem:[%s3 + $0x3f8] sm:$0xff]
  %v543 = vadd.f32 %v287, %v415
  %v544 = vadd.f32 %v288, %v416
  %v545 = vadd.f32 %v289, %v417
  %v546 = vadd.f32 %v290, %v418
  %v547 = vadd.f32 %v291, %v419
  %v548 = vadd.f32 %v292, %v420
  %v549 = vadd.f32 %v293, %v421
  %v550 = vadd.f32 %v294, %v422
  %v551 = vadd.f32 %v295, %v423
  %v552 = vadd.f32 %v296, %v424
  %v553 = vadd.f32 %v297, %v425
  %v554 = vadd.f32 %v298, %v426
  %v555 = vadd.f32 %v299, %v427
  %v556 = vadd.f32 %v300, %v428
  %v557 = vadd.f32 %v301, %v429
  %v558 = vadd.f32 %v302, %v430
  %v559 = vadd.f32 %v303, %v431
  %v560 = vadd.f32 %v304, %v432
  %v561 = vadd.f32 %v305, %v433
  %v562 = vadd.f32 %v306, %v434
  %v563 = vadd.f32 %v307, %v435
  %v564 = vadd.f32 %v308, %v436
  %v565 = vadd.f32 %v309, %v437
  %v566 = vadd.f32 %v310, %v438
  %v567 = vadd.f32 %v311, %v439
  %v568 = vadd.f32 %v312, %v440
  %v569 = vadd.f32 %v313, %v441
  %v570 = vadd.f32 %v314, %v442
  %v571 = vadd.f32 %v315, %v443
  %v572 = vadd.f32 %v316, %v444
  %v573 = vadd.f32 %v317, %v445
  %v574 = vadd.f32 %v318, %v446
  %v575 = vadd.f32 %v319, %v447
  %v576 = vadd.f32 %v320, %v448
  %v577 = vadd.f32 %v321, %v449
  %v578 = vadd.f32 %v322, %v450
  %v579 = vadd.f32 %v323, %v451
  %v580 = vadd.f32 %v324, %v452
  %v581 = vadd.f32 %v325, %v453
  %v582 = vadd.f32 %v326, %v454
  %v583 = vadd.f32 %v327, %v455
  %v584 = vadd.f32 %v328, %v456
  %v585 = vadd.f32 %v329, %v457
  %v586 = vadd.f32 %v330, %v458
  %v587 = vadd.f32 %v331, %v459
  %v588 = vadd.f32 %v332, %v460
  %v589 = vadd.f32 %v333, %v461
  %v590 = vadd.f32 %v334, %v462
  %v591 = vadd.f32 %v335, %v463
  %v592 = vadd.f32 %v336, %v464
  %v593 = vadd.f32 %v337, %v465
  %v594 = vadd.f32 %v338, %v466
  %v595 = vadd.f32 %v339, %v467
  %v596 = vadd.f32 %v340, %v468
  %v597 = vadd.f32 %v341, %v469
  %v598 = vadd.f32 %v342, %v470
  %v599 = vadd.f32 %v343, %v471
  %v600 = vadd.f32 %v344, %v472
  %v601 = vadd.f32 %v345, %v473
  %v602 = vadd.f32 %v346, %v474
  %v603 = vadd.f32 %v347, %v475
  %v604 = vadd.f32 %v348, %v476
  %v605 = vadd.f32 %v349, %v477
  %v606 = vadd.f32 %v350, %v478
  %v607 = vadd.f32 %v351, %v479
  %v608 = vadd.f32 %v352, %v480
  %v609 = vadd.f32 %v353, %v481
  %v610 = vadd.f32 %v354, %v482
  %v611 = vadd.f32 %v355, %v483
  %v612 = vadd.f32 %v356, %v484
  %v613 = vadd.f32 %v357, %v485
  %v614 = vadd.f32 %v358, %v486
  %v615 = vadd.f32 %v359, %v487
  %v616 = vadd.f32 %v360, %v488
  %v617 = vadd.f32 %v361, %v489
  %v618 = vadd.f32 %v362, %v490
  %v619 = vadd.f32 %v363, %v491
  %v620 = vadd.f32 %v364, %v492
  %v621 = vadd.f32 %v365, %v493
  %v622 = vadd.f32 %v366, %v494
  %v623 = vadd.f32 %v367, %v495
  %v624 = vadd.f32 %v368, %v496
  %v625 = vadd.f32 %v369, %v497
  %v626 = vadd.f32 %v370, %v498
  %v627 = vadd.f32 %v371, %v499
  %v628 = vadd.f32 %v372, %v500
  %v629 = vadd.f32 %v373, %v501
  %v630 = vadd.f32 %v374, %v502
  %v631 = vadd.f32 %v375, %v503
  %v632 = vadd.f32 %v376, %v504
  %v633 = vadd.f32 %v377, %v505
  %v634 = vadd.f32 %v378, %v506
  %v635 = vadd.f32 %v379, %v507
  %v636 = vadd.f32 %v380, %v508
  %v637 = vadd.f32 %v381, %v509
  %v638 = vadd.f32 %v382, %v510
  %v639 = vadd.f32 %v383, %v511
  %v640 = vadd.f32 %v384, %v512
  %v641 = vadd.f32 %v385, %v513
  %v642 = vadd.f32 %v386, %v514
  %v643 = vadd.f32 %v387, %v515
  %v644 = vadd.f32 %v388, %v516
  %v645 = vadd.f32 %v389, %v517
  %v646 = vadd.f32 %v390, %v518
  %v647 = vadd.f32 %v391, %v519
  %v648 = vadd.f32 %v392, %v520
  %v649 = vadd.f32 %v393, %v521
  %v650 = vadd.f32 %v394, %v522
  %v651 = vadd.f32 %v395, %v523
  %v652 = vadd.f32 %v396, %v524
  %v653 = vadd.f32 %v397, %v525
  %v654 = vadd.f32 %v398, %v526
  %v655 = vadd.f32 %v399, %v527
  %v656 = vadd.f32 %v400, %v528
  %v657 = vadd.f32 %v401, %v529
  %v658 = vadd.f32 %v402, %v530
  %v659 = vadd.f32 %v403, %v531
  %v660 = vadd.f32 %v404, %v532
  %v661 = vadd.f32 %v405, %v533
  %v662 = vadd.f32 %v406, %v534
  %v663 = vadd.f32 %v407, %v535
  %v664 = vadd.f32 %v408, %v536
  %v665 = vadd.f32 %v409, %v537
  %v666 = vadd.f32 %v410, %v538
  %v667 = vadd.f32 %v411, %v539
  %v668 = vadd.f32 %v412, %v540
  %v669 = vadd.f32 %v413, %v541
  %v670 = vadd.f32 %v414, %v542
  %v671 = vmax.f32 %v543, 0.0
  %v672 = vmax.f32 %v544, 0.0
  %v673 = vmax.f32 %v545, 0.0
  %v674 = vmax.f32 %v546, 0.0
  %v675 = vmax.f32 %v547, 0.0
  %v676 = vmax.f32 %v548, 0.0
  %v677 = vmax.f32 %v549, 0.0
  %v678 = vmax.f32 %v550, 0.0
  %v679 = vmax.f32 %v551, 0.0
  %v680 = vmax.f32 %v552, 0.0
  %v681 = vmax.f32 %v553, 0.0
  %v682 = vmax.f32 %v554, 0.0
  %v683 = vmax.f32 %v555, 0.0
  %v684 = vmax.f32 %v556, 0.0
  %v685 = vmax.f32 %v557, 0.0
  %v686 = vmax.f32 %v558, 0.0
  %v687 = vmax.f32 %v559, 0.0
  %v688 = vmax.f32 %v560, 0.0
  %v689 = vmax.f32 %v561, 0.0
  %v690 = vmax.f32 %v562, 0.0
  %v691 = vmax.f32 %v563, 0.0
  %v692 = vmax.f32 %v564, 0.0
  %v693 = vmax.f32 %v565, 0.0
  %v694 = vmax.f32 %v566, 0.0
  %v695 = vmax.f32 %v567, 0.0
  %v696 = vmax.f32 %v568, 0.0
  %v697 = vmax.f32 %v569, 0.0
  %v698 = vmax.f32 %v570, 0.0
  %v699 = vmax.f32 %v571, 0.0
  %v700 = vmax.f32 %v572, 0.0
  %v701 = vmax.f32 %v573, 0.0
  %v702 = vmax.f32 %v574, 0.0
  %v703 = vmax.f32 %v575, 0.0
  %v704 = vmax.f32 %v576, 0.0
  %v705 = vmax.f32 %v577, 0.0
  %v706 = vmax.f32 %v578, 0.0
  %v707 = vmax.f32 %v579, 0.0
  %v708 = vmax.f32 %v580, 0.0
  %v709 = vmax.f32 %v581, 0.0
  %v710 = vmax.f32 %v582, 0.0
  %v711 = vmax.f32 %v583, 0.0
  %v712 = vmax.f32 %v584, 0.0
  %v713 = vmax.f32 %v585, 0.0
  %v714 = vmax.f32 %v586, 0.0
  %v715 = vmax.f32 %v587, 0.0
  %v716 = vmax.f32 %v588, 0.0
  %v717 = vmax.f32 %v589, 0.0
  %v718 = vmax.f32 %v590, 0.0
  %v719 = vmax.f32 %v591, 0.0
  %v720 = vmax.f32 %v592, 0.0
  %v721 = vmax.f32 %v593, 0.0
  %v722 = vmax.f32 %v594, 0.0
  %v723 = vmax.f32 %v595, 0.0
  %v724 = vmax.f32 %v596, 0.0
  %v725 = vmax.f32 %v597, 0.0
  %v726 = vmax.f32 %v598, 0.0
  %v727 = vmax.f32 %v599, 0.0
  %v728 = vmax.f32 %v600, 0.0
  %v729 = vmax.f32 %v601, 0.0
  %v730 = vmax.f32 %v602, 0.0
  %v731 = vmax.f32 %v603, 0.0
  %v732 = vmax.f32 %v604, 0.0
  %v733 = vmax.f32 %v605, 0.0
  %v734 = vmax.f32 %v606, 0.0
  %v735 = vmax.f32 %v607, 0.0
  %v736 = vmax.f32 %v608, 0.0
  %v737 = vmax.f32 %v609, 0.0
  %v738 = vmax.f32 %v610, 0.0
  %v739 = vmax.f32 %v611, 0.0
  %v740 = vmax.f32 %v612, 0.0
  %v741 = vmax.f32 %v613, 0.0
  %v742 = vmax.f32 %v614, 0.0
  %v743 = vmax.f32 %v615, 0.0
  %v744 = vmax.f32 %v616, 0.0
  %v745 = vmax.f32 %v617, 0.0
  %v746 = vmax.f32 %v618, 0.0
  %v747 = vmax.f32 %v619, 0.0
  %v748 = vmax.f32 %v620, 0.0
  %v749 = vmax.f32 %v621, 0.0
  %v750 = vmax.f32 %v622, 0.0
  %v751 = vmax.f32 %v623, 0.0
  %v752 = vmax.f32 %v624, 0.0
  %v753 = vmax.f32 %v625, 0.0
  %v754 = vmax.f32 %v626, 0.0
  %v755 = vmax.f32 %v627, 0.0
  %v756 = vmax.f32 %v628, 0.0
  %v757 = vmax.f32 %v629, 0.0
  %v758 = vmax.f32 %v630, 0.0
  %v759 = vmax.f32 %v631, 0.0
  %v760 = vmax.f32 %v632, 0.0
  %v761 = vmax.f32 %v633, 0.0
  %v762 = vmax.f32 %v634, 0.0
  %v763 = vmax.f32 %v635, 0.0
  %v764 = vmax.f32 %v636, 0.0
  %v765 = vmax.f32 %v637, 0.0
  %v766 = vmax.f32 %v638, 0.0
  %v767 = vmax.f32 %v639, 0.0
  %v768 = vmax.f32 %v640, 0.0
  %v769 = vmax.f32 %v641, 0.0
  %v770 = vmax.f32 %v642, 0.0
  %v771 = vmax.f32 %v643, 0.0
  %v772 = vmax.f32 %v644, 0.0
  %v773 = vmax.f32 %v645, 0.0
  %v774 = vmax.f32 %v646, 0.0
  %v775 = vmax.f32 %v647, 0.0
  %v776 = vmax.f32 %v648, 0.0
  %v777 = vmax.f32 %v649, 0.0
  %v778 = vmax.f32 %v650, 0.0
  %v779 = vmax.f32 %v651, 0.0
  %v780 = vmax.f32 %v652, 0.0
  %v781 = vmax.f32 %v653, 0.0
  %v782 = vmax.f32 %v654, 0.0
  %v783 = vmax.f32 %v655, 0.0
  %v784 = vmax.f32 %v656, 0.0
  %v785 = vmax.f32 %v657, 0.0
  %v786 = vmax.f32 %v658, 0.0
  %v787 = vmax.f32 %v659, 0.0
  %v788 = vmax.f32 %v660, 0.0
  %v789 = vmax.f32 %v661, 0.0
  %v790 = vmax.f32 %v662, 0.0
  %v791 = vmax.f32 %v663, 0.0
  %v792 = vmax.f32 %v664, 0.0
  %v793 = vmax.f32 %v665, 0.0
  %v794 = vmax.f32 %v666, 0.0
  %v795 = vmax.f32 %v667, 0.0
  %v796 = vmax.f32 %v668, 0.0
  %v797 = vmax.f32 %v669, 0.0
  %v798 = vmax.f32 %v670, 0.0
  %vm799 = vcmask 130048
  %800 = vst.msk [vmem:[%s4] sm:$0xff] %vm799, %v671
  %801 = vst.msk [vmem:[%s4 + $0x8] sm:$0xff] %vm799, %v672
  %802 = vst.msk [vmem:[%s4 + $0x10] sm:$0xff] %vm799, %v673
  %803 = vst.msk [vmem:[%s4 + $0x18] sm:$0xff] %vm799, %v674
  %804 = vst.msk [vmem:[%s4 + $0x20] sm:$0xff] %vm799, %v675
  %805 = vst.msk [vmem:[%s4 + $0x28] sm:$0xff] %vm799, %v676
  %806 = vst.msk [vmem:[%s4 + $0x30] sm:$0xff] %vm799, %v677
  %807 = vst.msk [vmem:[%s4 + $0x38] sm:$0xff] %vm799, %v678
  %808 = vst.msk [vmem:[%s4 + $0x40] sm:$0xff] %vm799, %v679
  %809 = vst.msk [vmem:[%s4 + $0x48] sm:$0xff] %vm799, %v680
  %810 = vst.msk [vmem:[%s4 + $0x50] sm:$0xff] %vm799, %v681
  %811 = vst.msk [vmem:[%s4 + $0x58] sm:$0xff] %vm799, %v682
  %812 = vst.msk [vmem:[%s4 + $0x60] sm:$0xff] %vm799, %v683
  %813 = vst.msk [vmem:[%s4 + $0x68] sm:$0xff] %vm799, %v684
  %814 = vst.msk [vmem:[%s4 + $0x70] sm:$0xff] %vm799, %v685
  %815 = vst.msk [vmem:[%s4 + $0x78] sm:$0xff] %vm799, %v686
  %816 = vst.msk [vmem:[%s4 + $0x80] sm:$0xff] %vm799, %v687
  %817 = vst.msk [vmem:[%s4 + $0x88] sm:$0xff] %vm799, %v688
  %818 = vst.msk [vmem:[%s4 + $0x90] sm:$0xff] %vm799, %v689
  %819 = vst.msk [vmem:[%s4 + $0x98] sm:$0xff] %vm799, %v690
  %820 = vst.msk [vmem:[%s4 + $0xa0] sm:$0xff] %vm799, %v691
  %821 = vst.msk [vmem:[%s4 + $0xa8] sm:$0xff] %vm799, %v692
  %822 = vst.msk [vmem:[%s4 + $0xb0] sm:$0xff] %vm799, %v693
  %823 = vst.msk [vmem:[%s4 + $0xb8] sm:$0xff] %vm799, %v694
  %824 = vst.msk [vmem:[%s4 + $0xc0] sm:$0xff] %vm799, %v695
  %825 = vst.msk [vmem:[%s4 + $0xc8] sm:$0xff] %vm799, %v696
  %826 = vst.msk [vmem:[%s4 + $0xd0] sm:$0xff] %vm799, %v697
  %827 = vst.msk [vmem:[%s4 + $0xd8] sm:$0xff] %vm799, %v698
  %828 = vst.msk [vmem:[%s4 + $0xe0] sm:$0xff] %vm799, %v699
  %829 = vst.msk [vmem:[%s4 + $0xe8] sm:$0xff] %vm799, %v700
  %830 = vst.msk [vmem:[%s4 + $0xf0] sm:$0xff] %vm799, %v701
  %831 = vst.msk [vmem:[%s4 + $0xf8] sm:$0xff] %vm799, %v702
  %832 = vst.msk [vmem:[%s4 + $0x100] sm:$0xff] %vm799, %v703
  %833 = vst.msk [vmem:[%s4 + $0x108] sm:$0xff] %vm799, %v704
  %834 = vst.msk [vmem:[%s4 + $0x110] sm:$0xff] %vm799, %v705
  %835 = vst.msk [vmem:[%s4 + $0x118] sm:$0xff] %vm799, %v706
  %836 = vst.msk [vmem:[%s4 + $0x120] sm:$0xff] %vm799, %v707
  %837 = vst.msk [vmem:[%s4 + $0x128] sm:$0xff] %vm799, %v708
  %838 = vst.msk [vmem:[%s4 + $0x130] sm:$0xff] %vm799, %v709
  %839 = vst.msk [vmem:[%s4 + $0x138] sm:$0xff] %vm799, %v710
  %840 = vst.msk [vmem:[%s4 + $0x140] sm:$0xff] %vm799, %v711
  %841 = vst.msk [vmem:[%s4 + $0x148] sm:$0xff] %vm799, %v712
  %842 = vst.msk [vmem:[%s4 + $0x150] sm:$0xff] %vm799, %v713
  %843 = vst.msk [vmem:[%s4 + $0x158] sm:$0xff] %vm799, %v714
  %844 = vst.msk [vmem:[%s4 + $0x160] sm:$0xff] %vm799, %v715
  %845 = vst.msk [vmem:[%s4 + $0x168] sm:$0xff] %vm799, %v716
  %846 = vst.msk [vmem:[%s4 + $0x170] sm:$0xff] %vm799, %v717
  %847 = vst.msk [vmem:[%s4 + $0x178] sm:$0xff] %vm799, %v718
  %848 = vst.msk [vmem:[%s4 + $0x180] sm:$0xff] %vm799, %v719
  %849 = vst.msk [vmem:[%s4 + $0x188] sm:$0xff] %vm799, %v720
  %850 = vst.msk [vmem:[%s4 + $0x190] sm:$0xff] %vm799, %v721
  %851 = vst.msk [vmem:[%s4 + $0x198] sm:$0xff] %vm799, %v722
  %852 = vst.msk [vmem:[%s4 + $0x1a0] sm:$0xff] %vm799, %v723
  %853 = vst.msk [vmem:[%s4 + $0x1a8] sm:$0xff] %vm799, %v724
  %854 = vst.msk [vmem:[%s4 + $0x1b0] sm:$0xff] %vm799, %v725
  %855 = vst.msk [vmem:[%s4 + $0x1b8] sm:$0xff] %vm799, %v726
  %856 = vst.msk [vmem:[%s4 + $0x1c0] sm:$0xff] %vm799, %v727
  %857 = vst.msk [vmem:[%s4 + $0x1c8] sm:$0xff] %vm799, %v728
  %858 = vst.msk [vmem:[%s4 + $0x1d0] sm:$0xff] %vm799, %v729
  %859 = vst.msk [vmem:[%s4 + $0x1d8] sm:$0xff] %vm799, %v730
  %860 = vst.msk [vmem:[%s4 + $0x1e0] sm:$0xff] %vm799, %v731
  %861 = vst.msk [vmem:[%s4 + $0x1e8] sm:$0xff] %vm799, %v732
  %862 = vst.msk [vmem:[%s4 + $0x1f0] sm:$0xff] %vm799, %v733
  %863 = vst.msk [vmem:[%s4 + $0x1f8] sm:$0xff] %vm799, %v734
  %864 = vst.msk [vmem:[%s4 + $0x200] sm:$0xff] %vm799, %v735
  %865 = vst.msk [vmem:[%s4 + $0x208] sm:$0xff] %vm799, %v736
  %866 = vst.msk [vmem:[%s4 + $0x210] sm:$0xff] %vm799, %v737
  %867 = vst.msk [vmem:[%s4 + $0x218] sm:$0xff] %vm799, %v738
  %868 = vst.msk [vmem:[%s4 + $0x220] sm:$0xff] %vm799, %v739
  %869 = vst.msk [vmem:[%s4 + $0x228] sm:$0xff] %vm799, %v740
  %870 = vst.msk [vmem:[%s4 + $0x230] sm:$0xff] %vm799, %v741
  %871 = vst.msk [vmem:[%s4 + $0x238] sm:$0xff] %vm799, %v742
  %872 = vst.msk [vmem:[%s4 + $0x240] sm:$0xff] %vm799, %v743
  %873 = vst.msk [vmem:[%s4 + $0x248] sm:$0xff] %vm799, %v744
  %874 = vst.msk [vmem:[%s4 + $0x250] sm:$0xff] %vm799, %v745
  %875 = vst.msk [vmem:[%s4 + $0x258] sm:$0xff] %vm799, %v746
  %876 = vst.msk [vmem:[%s4 + $0x260] sm:$0xff] %vm799, %v747
  %877 = vst.msk [vmem:[%s4 + $0x268] sm:$0xff] %vm799, %v748
  %878 = vst.msk [vmem:[%s4 + $0x270] sm:$0xff] %vm799, %v749
  %879 = vst.msk [vmem:[%s4 + $0x278] sm:$0xff] %vm799, %v750
  %880 = vst.msk [vmem:[%s4 + $0x280] sm:$0xff] %vm799, %v751
  %881 = vst.msk [vmem:[%s4 + $0x288] sm:$0xff] %vm799, %v752
  %882 = vst.msk [vmem:[%s4 + $0x290] sm:$0xff] %vm799, %v753
  %883 = vst.msk [vmem:[%s4 + $0x298] sm:$0xff] %vm799, %v754
  %884 = vst.msk [vmem:[%s4 + $0x2a0] sm:$0xff] %vm799, %v755
  %885 = vst.msk [vmem:[%s4 + $0x2a8] sm:$0xff] %vm799, %v756
  %886 = vst.msk [vmem:[%s4 + $0x2b0] sm:$0xff] %vm799, %v757
  %887 = vst.msk [vmem:[%s4 + $0x2b8] sm:$0xff] %vm799, %v758
  %888 = vst.msk [vmem:[%s4 + $0x2c0] sm:$0xff] %vm799, %v759
  %889 = vst.msk [vmem:[%s4 + $0x2c8] sm:$0xff] %vm799, %v760
  %890 = vst.msk [vmem:[%s4 + $0x2d0] sm:$0xff] %vm799, %v761
  %891 = vst.msk [vmem:[%s4 + $0x2d8] sm:$0xff] %vm799, %v762
  %892 = vst.msk [vmem:[%s4 + $0x2e0] sm:$0xff] %vm799, %v763
  %893 = vst.msk [vmem:[%s4 + $0x2e8] sm:$0xff] %vm799, %v764
  %894 = vst.msk [vmem:[%s4 + $0x2f0] sm:$0xff] %vm799, %v765
  %895 = vst.msk [vmem:[%s4 + $0x2f8] sm:$0xff] %vm799, %v766
  %896 = vst.msk [vmem:[%s4 + $0x300] sm:$0xff] %vm799, %v767
  %897 = vst.msk [vmem:[%s4 + $0x308] sm:$0xff] %vm799, %v768
  %898 = vst.msk [vmem:[%s4 + $0x310] sm:$0xff] %vm799, %v769
  %899 = vst.msk [vmem:[%s4 + $0x318] sm:$0xff] %vm799, %v770
  %900 = vst.msk [vmem:[%s4 + $0x320] sm:$0xff] %vm799, %v771
  %901 = vst.msk [vmem:[%s4 + $0x328] sm:$0xff] %vm799, %v772
  %902 = vst.msk [vmem:[%s4 + $0x330] sm:$0xff] %vm799, %v773
  %903 = vst.msk [vmem:[%s4 + $0x338] sm:$0xff] %vm799, %v774
  %904 = vst.msk [vmem:[%s4 + $0x340] sm:$0xff] %vm799, %v775
  %905 = vst.msk [vmem:[%s4 + $0x348] sm:$0xff] %vm799, %v776
  %906 = vst.msk [vmem:[%s4 + $0x350] sm:$0xff] %vm799, %v777
  %907 = vst.msk [vmem:[%s4 + $0x358] sm:$0xff] %vm799, %v778
  %908 = vst.msk [vmem:[%s4 + $0x360] sm:$0xff] %vm799, %v779
  %909 = vst.msk [vmem:[%s4 + $0x368] sm:$0xff] %vm799, %v780
  %910 = vst.msk [vmem:[%s4 + $0x370] sm:$0xff] %vm799, %v781
  %911 = vst.msk [vmem:[%s4 + $0x378] sm:$0xff] %vm799, %v782
  %912 = vst.msk [vmem:[%s4 + $0x380] sm:$0xff] %vm799, %v783
  %913 = vst.msk [vmem:[%s4 + $0x388] sm:$0xff] %vm799, %v784
  %914 = vst.msk [vmem:[%s4 + $0x390] sm:$0xff] %vm799, %v785
  %915 = vst.msk [vmem:[%s4 + $0x398] sm:$0xff] %vm799, %v786
  %916 = vst.msk [vmem:[%s4 + $0x3a0] sm:$0xff] %vm799, %v787
  %917 = vst.msk [vmem:[%s4 + $0x3a8] sm:$0xff] %vm799, %v788
  %918 = vst.msk [vmem:[%s4 + $0x3b0] sm:$0xff] %vm799, %v789
  %919 = vst.msk [vmem:[%s4 + $0x3b8] sm:$0xff] %vm799, %v790
  %920 = vst.msk [vmem:[%s4 + $0x3c0] sm:$0xff] %vm799, %v791
  %921 = vst.msk [vmem:[%s4 + $0x3c8] sm:$0xff] %vm799, %v792
  %922 = vst.msk [vmem:[%s4 + $0x3d0] sm:$0xff] %vm799, %v793
  %923 = vst.msk [vmem:[%s4 + $0x3d8] sm:$0xff] %vm799, %v794
  %924 = vst.msk [vmem:[%s4 + $0x3e0] sm:$0xff] %vm799, %v795
  %925 = vst.msk [vmem:[%s4 + $0x3e8] sm:$0xff] %vm799, %v796
  %926 = vst.msk [vmem:[%s4 + $0x3f0] sm:$0xff] %vm799, %v797
  %927 = vst.msk [vmem:[%s4 + $0x3f8] sm:$0xff] %vm799, %v798
  // Predicated region
  $region18: #{bottleneck_forward.7} parent=0 // pred_check
    _
  $region19: #{bottleneck_forward.7} parent=0 // pred_check_branch
    %929 = sbr.rel (0) target = $region21
  $region20: #{bottleneck_forward.7} parent=0 // pred_region
    _
  $region21: #{bottleneck_forward.7} parent=0 // pred_fallthru
    _
  // Predicated region
  $region22: #{bottleneck_forward.7} parent=0 // pred_check
    _
  $region23: #{bottleneck_forward.7} parent=0 // pred_check_branch
    %931 = sbr.rel (0) target = $region25
  $region24: #{bottleneck_forward.7} parent=0 // pred_region
    _
  $region25: #{bottleneck_forward.7} parent=0 // pred_fallthru
    _

</llo_original>
